<compile_context>
chip_gen: v6e
topology: v6e:2x2x1
jax: 0.10.0
libtpu: 0.0.40
codegen_flags: <defaults>
</compile_context>

<pallas_src>
import numpy as np
import jax
import jax.numpy as jnp
from jax.experimental import pallas as pl
from jax.experimental.pallas import tpu as pltpu

KERNEL_SIZE = 5
NUM_LEVELS = 6


# ---------------------------------------------------------------------------
# In-kernel helpers (operate on traced VMEM values; all shapes/offsets static).
# ---------------------------------------------------------------------------
def _shift_rows(h, d):
    """G with G[r] = h[r + d] and zeros outside [0, L).  `d` is a python int."""
    L, C = h.shape
    if d == 0:
        return h
    if d >= L or -d >= L:
        return jnp.zeros((L, C), jnp.float32)
    if d > 0:
        return jnp.concatenate([h[d:], jnp.zeros((d, C), jnp.float32)], axis=0)
    return jnp.concatenate([jnp.zeros((-d, C), jnp.float32), h[:L + d]], axis=0)


def _conv_down(hs, w_ref, b_ref, spacing):
    """Conv1d(k=5, s=2, p=2) + ReLU, a-trous form, one im2col matmul.

    hs: per-sample (L, Cin) activations, valid on rows r % spacing == 0.
    w_ref: (5*Cin, Cout) tap-major packed weight; b_ref: (1, Cout).
    Returns per-sample (L, Cout), valid on rows r % (2*spacing) == 0.
    """
    L = hs[0].shape[0]
    tb = len(hs)
    cols = []
    for h in hs:
        taps = [_shift_rows(h, (k - 2) * spacing) for k in range(KERNEL_SIZE)]
        cols.append(jnp.concatenate(taps, axis=-1))
    col = cols[0] if tb == 1 else jnp.concatenate(cols, axis=0)
    y = jnp.dot(col, w_ref[...], preferred_element_type=jnp.float32)
    y = jnp.maximum(y + b_ref[...], 0.0)
    if tb == 1:
        return [y]
    return [y[b * L:(b + 1) * L] for b in range(tb)]


def _conv_up(parts_list, we_ref, wo_ref, b_ref, mask_ref, spacing):
    """ConvTranspose1d(k=5, s=2, p=2, op=1) + ReLU, a-trous form.

    parts_list[b]: channel-parts (skip, prev) of sample b; the channel concat
    of the skip connection is folded into the pre-split packed weights.
    Inputs valid on rows r % spacing == 0; outputs on r % (spacing//2) == 0.
    we_ref: (3*Cin_total, Cout) even-phase weight, wo_ref: (2*Cin_total, Cout)
    odd-phase weight, mask_ref: (TB*L, 1) f32, 1.0 on even-phase output rows.
    """
    half = spacing // 2
    L = parts_list[0][0].shape[0]
    tb = len(parts_list)
    cols_e, cols_o = [], []
    for parts in parts_list:
        be, bo = [], []
        for h in parts:
            be += [_shift_rows(h, -spacing), h, _shift_rows(h, spacing)]
            bo += [_shift_rows(h, -half), _shift_rows(h, half)]
        cols_e.append(jnp.concatenate(be, axis=-1))
        cols_o.append(jnp.concatenate(bo, axis=-1))
    col_e = cols_e[0] if tb == 1 else jnp.concatenate(cols_e, axis=0)
    col_o = cols_o[0] if tb == 1 else jnp.concatenate(cols_o, axis=0)
    ye = jnp.dot(col_e, we_ref[...], preferred_element_type=jnp.float32)
    yo = jnp.dot(col_o, wo_ref[...], preferred_element_type=jnp.float32)
    m = mask_ref[...]                                    # (TB*L, 1)
    y = m * ye + (1.0 - m) * yo
    y = jnp.maximum(y + b_ref[...], 0.0)
    if tb == 1:
        return [y]
    return [y[b * L:(b + 1) * L] for b in range(tb)]


def _unet_kernel(x_ref, *refs):
    """Whole UNet forward for one batch chunk (all activations VMEM-resident)."""
    o_ref = refs[-1]
    wr = refs[:-1]
    tb = x_ref.shape[0]

    # Native NCL input; work channels-last internally.
    h = [x_ref[b].T for b in range(tb)]                  # per-sample (L, C_in)

    # Encoder: 6 x (Conv1d k5 s2 p2 + ReLU), a-trous.
    enc = []
    for i in range(NUM_LEVELS):
        h = _conv_down(h, wr[2 * i], wr[2 * i + 1], spacing=2 ** i)
        enc.append(h)                                    # h1 .. h6

    # Decoder: 6 x (ConvTranspose1d k5 s2 p2 op1 + ReLU); pad_concat skip
    # connections are folded into the pre-split packed weights.
    prev = enc[5]                                        # h6
    for j in range(NUM_LEVELS):
        we, wo, bias, mask = wr[12 + 4 * j: 12 + 4 * j + 4]
        spacing = 2 ** (NUM_LEVELS - j)
        if j == 0:
            parts = [[prev[b]] for b in range(tb)]
        else:
            skip = enc[5 - j]                            # h5, h4, h3, h2, h1
            parts = [[skip[b], prev[b]] for b in range(tb)]
        prev = _conv_up(parts, we, wo, bias, mask, spacing)

    for b in range(tb):
        o_ref[b] = prev[b].T                             # back to (C_in, L)


# ---------------------------------------------------------------------------
# Wrapper: static weight packing + pallas_call.
# ---------------------------------------------------------------------------
def _pack_down_weight(w):
    """(5, Cin, Cout) tap-major -> (5*Cin, Cout), row blocks [W0..W4]."""
    k, cin, cout = w.shape
    return w.reshape(k * cin, cout)


def _pack_up_weights(w, split):
    """(5, Cin_total, Cout) -> even-phase (3*Cin, Cout), odd-phase (2*Cin, Cout).

    Row-block order matches the kernel's im2col lane order:
      even: per part [W4 (shift -S), W2 (shift 0), W0 (shift +S)]
      odd : per part [W3 (shift -S/2), W1 (shift +S/2)]
    `split` = channel count of the skip part (None for layer 7).
    """
    parts = [w] if split is None else [w[:, :split, :], w[:, split:, :]]
    we = jnp.concatenate(
        [jnp.concatenate([p[4], p[2], p[0]], axis=0) for p in parts], axis=0)
    wo = jnp.concatenate(
        [jnp.concatenate([p[3], p[1]], axis=0) for p in parts], axis=0)
    return we, wo


def _phase_mask(rows, spacing):
    """f32 (rows, 1): 1.0 on rows holding the even output phase of an up-conv."""
    r = np.arange(rows)
    even = ((r // (spacing // 2)) % 2) == 0
    return jnp.asarray(even.astype(np.float32).reshape(rows, 1))


@jax.jit
def unet_forward(x, params):
    """x: (B, C_in, L) float32 NCL (like the PyTorch module) -> (B, 2*C_in, L)."""
    B, C_in, L = x.shape
    if L % (2 ** NUM_LEVELS) != 0:
        # TODO(synk): reflect-padding branch of pad_concat (only needed when the
        # six stride-2 halvings do not divide L exactly) is not implemented.
        raise ValueError("unet_forward requires L to be a multiple of 64")

    # Batch chunking: keep the grid at length 2 when possible (both v7x
    # TensorCores busy); the rest of the batch is folded into the matmul M dim.
    tb = B // 2 if (B % 2 == 0 and B >= 2) else 1
    grid = (B // tb,)

    enc_out_ch = [p[0].shape[2] for p in params[:NUM_LEVELS]]    # h1..h6 chans

    flat = []
    for i in range(NUM_LEVELS):                                  # encoder
        w, bias = params[i]
        flat += [_pack_down_weight(w), bias.reshape(1, -1)]
    for j in range(NUM_LEVELS):                                  # decoder
        w, bias = params[NUM_LEVELS + j]
        split = None if j == 0 else enc_out_ch[5 - j]
        we, wo = _pack_up_weights(w, split)
        flat += [we, wo, bias.reshape(1, -1),
                 _phase_mask(tb * L, 2 ** (NUM_LEVELS - j))]

    in_specs = [pl.BlockSpec((tb, C_in, L), lambda i: (i, 0, 0))]
    for arr in flat:
        in_specs.append(pl.BlockSpec(arr.shape, lambda i: (0, 0)))

    h12 = pl.pallas_call(
        _unet_kernel,
        out_shape=jax.ShapeDtypeStruct((B, C_in, L), x.dtype),
        grid=grid,
        in_specs=in_specs,
        out_specs=pl.BlockSpec((tb, C_in, L), lambda i: (i, 0, 0)),
        compiler_params=pltpu.CompilerParams(
            dimension_semantics=("parallel",),
            vmem_limit_bytes=32 * 1024 * 1024,
        ),
    )(x, *flat)

    # pad_concat(x, h12): lengths match exactly when L % 64 == 0.
    return jnp.concatenate([x, h12], axis=1)


# ---------------------------------------------------------------------------
# Parameters (deterministic init) and a pure-JAX reference for verification.
# Weight layout: tap-major (K, C_in, C_out).
# ---------------------------------------------------------------------------
def init_params(key, in_channels=8):
    C = in_channels
    layer_channels = [
        (C, C), (C, 2 * C), (2 * C, 2 * C), (2 * C, 4 * C),
        (4 * C, 4 * C), (4 * C, 8 * C),                      # encoder l1..l6
        (8 * C, 4 * C), (8 * C, 4 * C), (8 * C, 2 * C),
        (4 * C, 2 * C), (4 * C, C), (2 * C, C),              # decoder l7..l12
    ]
    params = []
    for ci, co in layer_channels:
        key, wk, bk = jax.random.split(key, 3)
        limit = (6.0 / (KERNEL_SIZE * (ci + co))) ** 0.5
        w = jax.random.uniform(wk, (KERNEL_SIZE, ci, co), jnp.float32, -limit, limit)
        b = 0.1 * jax.random.normal(bk, (co,), jnp.float32)
        params.append((w, b))
    return params


def _reference_forward(x, params):
    def down(h, w, bias):
        w_oiw = jnp.transpose(w, (2, 1, 0))                  # (Cout, Cin, K)
        y = jax.lax.conv_general_dilated(
            h, w_oiw, window_strides=(2,), padding=((2, 2),),
            dimension_numbers=("NCH", "OIH", "NCH"))
        return jnp.maximum(y + bias[None, :, None], 0.0)

    def up(h, w, bias):
        # ConvTranspose1d(k=5, s=2, p=2, output_padding=1) == dilated conv with
        # the tap-reversed kernel and padding (k-1-p, k-1-p+op) = (2, 3).
        w_oiw = jnp.transpose(w[::-1], (2, 1, 0))            # (Cout, Cin, K)
        y = jax.lax.conv_general_dilated(
            h, w_oiw, window_strides=(1,), padding=((2, 3),),
            lhs_dilation=(2,), dimension_numbers=("NCH", "OIH", "NCH"))
        return jnp.maximum(y + bias[None, :, None], 0.0)

    (w1, b1), (w2, b2), (w3, b3), (w4, b4), (w5, b5), (w6, b6), \
        (w7, b7), (w8, b8), (w9, b9), (w10, b10), (w11, b11), (w12, b12) = params

    h1 = down(x, w1, b1)
    h2 = down(h1, w2, b2)
    h3 = down(h2, w3, b3)
    h4 = down(h3, w4, b4)
    h5 = down(h4, w5, b5)
    h6 = down(h5, w6, b6)
    h7 = up(h6, w7, b7)
    h7 = jnp.concatenate([h5, h7], axis=1)
    h8 = up(h7, w8, b8)
    h8 = jnp.concatenate([h4, h8], axis=1)
    h9 = up(h8, w9, b9)
    h9 = jnp.concatenate([h3, h9], axis=1)
    h10 = up(h9, w10, b10)
    h10 = jnp.concatenate([h2, h10], axis=1)
    h11 = up(h10, w11, b11)
    h11 = jnp.concatenate([h1, h11], axis=1)
    h12 = up(h11, w12, b12)
    return jnp.concatenate([x, h12], axis=1)


if __name__ == "__main__":
    key = jax.random.PRNGKey(0)
    key, xk = jax.random.split(key)

    # L=64 is the smallest length for which all 6 stride-2 halvings are exact.
    B, C_IN, L = 2, 8, 64
    x = jax.random.normal(xk, (B, C_IN, L), dtype=jnp.float32)
    params = init_params(key, in_channels=C_IN)

    out = jax.block_until_ready(unet_forward(x, params))

    ref = _reference_forward(x, params)
    assert out.shape == (B, 2 * C_IN, L), out.shape
    max_err = float(jnp.max(jnp.abs(out - ref)))
    assert jnp.allclose(out, ref, atol=1e-3, rtol=1e-3), f"mismatch: {max_err}"

    print("KERNEL_OK")
</pallas_src>

<mosaic_0001>
module attributes {stable_mosaic.version = 11 : i64} {
  func.func @_unet_kernel(%arg0: i32, %arg1: memref<1x8x64xf32, #tpu.memory_space<vmem>>, %arg2: memref<40x8xf32, #tpu.memory_space<vmem>>, %arg3: memref<1x8xf32, #tpu.memory_space<vmem>>, %arg4: memref<40x16xf32, #tpu.memory_space<vmem>>, %arg5: memref<1x16xf32, #tpu.memory_space<vmem>>, %arg6: memref<80x16xf32, #tpu.memory_space<vmem>>, %arg7: memref<1x16xf32, #tpu.memory_space<vmem>>, %arg8: memref<80x32xf32, #tpu.memory_space<vmem>>, %arg9: memref<1x32xf32, #tpu.memory_space<vmem>>, %arg10: memref<160x32xf32, #tpu.memory_space<vmem>>, %arg11: memref<1x32xf32, #tpu.memory_space<vmem>>, %arg12: memref<160x64xf32, #tpu.memory_space<vmem>>, %arg13: memref<1x64xf32, #tpu.memory_space<vmem>>, %arg14: memref<192x32xf32, #tpu.memory_space<vmem>>, %arg15: memref<128x32xf32, #tpu.memory_space<vmem>>, %arg16: memref<1x32xf32, #tpu.memory_space<vmem>>, %arg17: memref<64x1xf32, #tpu.memory_space<vmem>>, %arg18: memref<192x32xf32, #tpu.memory_space<vmem>>, %arg19: memref<128x32xf32, #tpu.memory_space<vmem>>, %arg20: memref<1x32xf32, #tpu.memory_space<vmem>>, %arg21: memref<64x1xf32, #tpu.memory_space<vmem>>, %arg22: memref<192x16xf32, #tpu.memory_space<vmem>>, %arg23: memref<128x16xf32, #tpu.memory_space<vmem>>, %arg24: memref<1x16xf32, #tpu.memory_space<vmem>>, %arg25: memref<64x1xf32, #tpu.memory_space<vmem>>, %arg26: memref<96x16xf32, #tpu.memory_space<vmem>>, %arg27: memref<64x16xf32, #tpu.memory_space<vmem>>, %arg28: memref<1x16xf32, #tpu.memory_space<vmem>>, %arg29: memref<64x1xf32, #tpu.memory_space<vmem>>, %arg30: memref<96x8xf32, #tpu.memory_space<vmem>>, %arg31: memref<64x8xf32, #tpu.memory_space<vmem>>, %arg32: memref<1x8xf32, #tpu.memory_space<vmem>>, %arg33: memref<64x1xf32, #tpu.memory_space<vmem>>, %arg34: memref<48x8xf32, #tpu.memory_space<vmem>>, %arg35: memref<32x8xf32, #tpu.memory_space<vmem>>, %arg36: memref<1x8xf32, #tpu.memory_space<vmem>>, %arg37: memref<64x1xf32, #tpu.memory_space<vmem>>, %arg38: memref<1x8x64xf32, #tpu.memory_space<vmem>>) attributes {dimension_semantics = [#tpu.dimension_semantics<parallel>], iteration_bounds = array<i64: 2>, scalar_prefetch = 0 : i64, scratch_operands = 0 : i64, tpu.core_type = #tpu.core_type<tc>, window_params = [{transform_indices = @transform_0, window_bounds = array<i64: 1, 8, 64>}, {pipeline_mode = #tpu.pipeline_mode<synchronous>, transform_indices = @transform_1, window_bounds = array<i64: 40, 8>}, {pipeline_mode = #tpu.pipeline_mode<synchronous>, transform_indices = @transform_2, window_bounds = array<i64: 1, 8>}, {pipeline_mode = #tpu.pipeline_mode<synchronous>, transform_indices = @transform_3, window_bounds = array<i64: 40, 16>}, {pipeline_mode = #tpu.pipeline_mode<synchronous>, transform_indices = @transform_4, window_bounds = array<i64: 1, 16>}, {pipeline_mode = #tpu.pipeline_mode<synchronous>, transform_indices = @transform_5, window_bounds = array<i64: 80, 16>}, {pipeline_mode = #tpu.pipeline_mode<synchronous>, transform_indices = @transform_6, window_bounds = array<i64: 1, 16>}, {pipeline_mode = #tpu.pipeline_mode<synchronous>, transform_indices = @transform_7, window_bounds = array<i64: 80, 32>}, {pipeline_mode = #tpu.pipeline_mode<synchronous>, transform_indices = @transform_8, window_bounds = array<i64: 1, 32>}, {pipeline_mode = #tpu.pipeline_mode<synchronous>, transform_indices = @transform_9, window_bounds = array<i64: 160, 32>}, {pipeline_mode = #tpu.pipeline_mode<synchronous>, transform_indices = @transform_10, window_bounds = array<i64: 1, 32>}, {pipeline_mode = #tpu.pipeline_mode<synchronous>, transform_indices = @transform_11, window_bounds = array<i64: 160, 64>}, {pipeline_mode = #tpu.pipeline_mode<synchronous>, transform_indices = @transform_12, window_bounds = array<i64: 1, 64>}, {pipeline_mode = #tpu.pipeline_mode<synchronous>, transform_indices = @transform_13, window_bounds = array<i64: 192, 32>}, {pipeline_mode = #tpu.pipeline_mode<synchronous>, transform_indices = @transform_14, window_bounds = array<i64: 128, 32>}, {pipeline_mode = #tpu.pipeline_mode<synchronous>, transform_indices = @transform_15, window_bounds = array<i64: 1, 32>}, {pipeline_mode = #tpu.pipeline_mode<synchronous>, transform_indices = @transform_16, window_bounds = array<i64: 64, 1>}, {pipeline_mode = #tpu.pipeline_mode<synchronous>, transform_indices = @transform_17, window_bounds = array<i64: 192, 32>}, {pipeline_mode = #tpu.pipeline_mode<synchronous>, transform_indices = @transform_18, window_bounds = array<i64: 128, 32>}, {pipeline_mode = #tpu.pipeline_mode<synchronous>, transform_indices = @transform_19, window_bounds = array<i64: 1, 32>}, {pipeline_mode = #tpu.pipeline_mode<synchronous>, transform_indices = @transform_20, window_bounds = array<i64: 64, 1>}, {pipeline_mode = #tpu.pipeline_mode<synchronous>, transform_indices = @transform_21, window_bounds = array<i64: 192, 16>}, {pipeline_mode = #tpu.pipeline_mode<synchronous>, transform_indices = @transform_22, window_bounds = array<i64: 128, 16>}, {pipeline_mode = #tpu.pipeline_mode<synchronous>, transform_indices = @transform_23, window_bounds = array<i64: 1, 16>}, {pipeline_mode = #tpu.pipeline_mode<synchronous>, transform_indices = @transform_24, window_bounds = array<i64: 64, 1>}, {pipeline_mode = #tpu.pipeline_mode<synchronous>, transform_indices = @transform_25, window_bounds = array<i64: 96, 16>}, {pipeline_mode = #tpu.pipeline_mode<synchronous>, transform_indices = @transform_26, window_bounds = array<i64: 64, 16>}, {pipeline_mode = #tpu.pipeline_mode<synchronous>, transform_indices = @transform_27, window_bounds = array<i64: 1, 16>}, {pipeline_mode = #tpu.pipeline_mode<synchronous>, transform_indices = @transform_28, window_bounds = array<i64: 64, 1>}, {pipeline_mode = #tpu.pipeline_mode<synchronous>, transform_indices = @transform_29, window_bounds = array<i64: 96, 8>}, {pipeline_mode = #tpu.pipeline_mode<synchronous>, transform_indices = @transform_30, window_bounds = array<i64: 64, 8>}, {pipeline_mode = #tpu.pipeline_mode<synchronous>, transform_indices = @transform_31, window_bounds = array<i64: 1, 8>}, {pipeline_mode = #tpu.pipeline_mode<synchronous>, transform_indices = @transform_32, window_bounds = array<i64: 64, 1>}, {pipeline_mode = #tpu.pipeline_mode<synchronous>, transform_indices = @transform_33, window_bounds = array<i64: 48, 8>}, {pipeline_mode = #tpu.pipeline_mode<synchronous>, transform_indices = @transform_34, window_bounds = array<i64: 32, 8>}, {pipeline_mode = #tpu.pipeline_mode<synchronous>, transform_indices = @transform_35, window_bounds = array<i64: 1, 8>}, {pipeline_mode = #tpu.pipeline_mode<synchronous>, transform_indices = @transform_36, window_bounds = array<i64: 64, 1>}, {transform_indices = @transform_37, window_bounds = array<i64: 1, 8, 64>}]} {
    %c0 = arith.constant 0 : index
    %c0_0 = arith.constant 0 : index
    %c0_1 = arith.constant 0 : index
    %0 = vector.load %arg1[%c0, %c0_0, %c0_1] : memref<1x8x64xf32, #tpu.memory_space<vmem>>, vector<1x8x64xf32>
    %1 = vector.shape_cast %0 : vector<1x8x64xf32> to vector<8x64xf32>
    %2 = tpu.transpose %1, [1, 0] : vector<8x64xf32> -> vector<64x8xf32>
    %cst = arith.constant 0.000000e+00 : f32
    %3 = vector.broadcast %cst : f32 to vector<2x8xf32>
    %4 = vector.extract_strided_slice %2 {offsets = [0, 0], sizes = [62, 8], strides = [1, 1]} : vector<64x8xf32> to vector<62x8xf32>
    %5 = tpu.concatenate %3, %4 in 0 : vector<2x8xf32>, vector<62x8xf32> -> vector<64x8xf32>
    %cst_2 = arith.constant 0.000000e+00 : f32
    %6 = vector.broadcast %cst_2 : f32 to vector<1x8xf32>
    %7 = vector.extract_strided_slice %2 {offsets = [0, 0], sizes = [63, 8], strides = [1, 1]} : vector<64x8xf32> to vector<63x8xf32>
    %8 = tpu.concatenate %6, %7 in 0 : vector<1x8xf32>, vector<63x8xf32> -> vector<64x8xf32>
    %9 = vector.extract_strided_slice %2 {offsets = [1, 0], sizes = [63, 8], strides = [1, 1]} : vector<64x8xf32> to vector<63x8xf32>
    %cst_3 = arith.constant 0.000000e+00 : f32
    %10 = vector.broadcast %cst_3 : f32 to vector<1x8xf32>
    %11 = tpu.concatenate %9, %10 in 0 : vector<63x8xf32>, vector<1x8xf32> -> vector<64x8xf32>
    %12 = vector.extract_strided_slice %2 {offsets = [2, 0], sizes = [62, 8], strides = [1, 1]} : vector<64x8xf32> to vector<62x8xf32>
    %cst_4 = arith.constant 0.000000e+00 : f32
    %13 = vector.broadcast %cst_4 : f32 to vector<2x8xf32>
    %14 = tpu.concatenate %12, %13 in 0 : vector<62x8xf32>, vector<2x8xf32> -> vector<64x8xf32>
    %15 = tpu.concatenate %5, %8, %2, %11, %14 in 1 : vector<64x8xf32>, vector<64x8xf32>, vector<64x8xf32>, vector<64x8xf32>, vector<64x8xf32> -> vector<64x40xf32>
    %c0_5 = arith.constant 0 : index
    %c0_6 = arith.constant 0 : index
    %16 = vector.load %arg2[%c0_5, %c0_6] : memref<40x8xf32, #tpu.memory_space<vmem>>, vector<40x8xf32>
    %cst_7 = arith.constant dense<0.000000e+00> : vector<64x8xf32>
    %17 = tpu.matmul %15, %16, %cst_7 {dimension_numbers = #tpu.dot_dimension_numbers<[1], [0], [0], [1], [0, 0, 1, 1], [], []>} : vector<64x40xf32>, vector<40x8xf32>, vector<64x8xf32> -> vector<64x8xf32>
    %c0_8 = arith.constant 0 : index
    %c0_9 = arith.constant 0 : index
    %18 = vector.load %arg3[%c0_8, %c0_9] : memref<1x8xf32, #tpu.memory_space<vmem>>, vector<1x8xf32>
    %19 = vector.broadcast %18 : vector<1x8xf32> to vector<64x8xf32>
    %20 = arith.addf %17, %19 : vector<64x8xf32>
    %cst_10 = arith.constant 0.000000e+00 : f32
    %21 = vector.broadcast %cst_10 : f32 to vector<64x8xf32>
    %22 = arith.maximumf %20, %21 : vector<64x8xf32>
    %cst_11 = arith.constant 0.000000e+00 : f32
    %23 = vector.broadcast %cst_11 : f32 to vector<4x8xf32>
    %24 = vector.extract_strided_slice %22 {offsets = [0, 0], sizes = [60, 8], strides = [1, 1]} : vector<64x8xf32> to vector<60x8xf32>
    %25 = tpu.concatenate %23, %24 in 0 : vector<4x8xf32>, vector<60x8xf32> -> vector<64x8xf32>
    %cst_12 = arith.constant 0.000000e+00 : f32
    %26 = vector.broadcast %cst_12 : f32 to vector<2x8xf32>
    %27 = vector.extract_strided_slice %22 {offsets = [0, 0], sizes = [62, 8], strides = [1, 1]} : vector<64x8xf32> to vector<62x8xf32>
    %28 = tpu.concatenate %26, %27 in 0 : vector<2x8xf32>, vector<62x8xf32> -> vector<64x8xf32>
    %29 = vector.extract_strided_slice %22 {offsets = [2, 0], sizes = [62, 8], strides = [1, 1]} : vector<64x8xf32> to vector<62x8xf32>
    %cst_13 = arith.constant 0.000000e+00 : f32
    %30 = vector.broadcast %cst_13 : f32 to vector<2x8xf32>
    %31 = tpu.concatenate %29, %30 in 0 : vector<62x8xf32>, vector<2x8xf32> -> vector<64x8xf32>
    %32 = vector.extract_strided_slice %22 {offsets = [4, 0], sizes = [60, 8], strides = [1, 1]} : vector<64x8xf32> to vector<60x8xf32>
    %cst_14 = arith.constant 0.000000e+00 : f32
    %33 = vector.broadcast %cst_14 : f32 to vector<4x8xf32>
    %34 = tpu.concatenate %32, %33 in 0 : vector<60x8xf32>, vector<4x8xf32> -> vector<64x8xf32>
    %35 = tpu.concatenate %25, %28, %22, %31, %34 in 1 : vector<64x8xf32>, vector<64x8xf32>, vector<64x8xf32>, vector<64x8xf32>, vector<64x8xf32> -> vector<64x40xf32>
    %c0_15 = arith.constant 0 : index
    %c0_16 = arith.constant 0 : index
    %36 = vector.load %arg4[%c0_15, %c0_16] : memref<40x16xf32, #tpu.memory_space<vmem>>, vector<40x16xf32>
    %cst_17 = arith.constant dense<0.000000e+00> : vector<64x16xf32>
    %37 = tpu.matmul %35, %36, %cst_17 {dimension_numbers = #tpu.dot_dimension_numbers<[1], [0], [0], [1], [0, 0, 1, 1], [], []>} : vector<64x40xf32>, vector<40x16xf32>, vector<64x16xf32> -> vector<64x16xf32>
    %c0_18 = arith.constant 0 : index
    %c0_19 = arith.constant 0 : index
    %38 = vector.load %arg5[%c0_18, %c0_19] : memref<1x16xf32, #tpu.memory_space<vmem>>, vector<1x16xf32>
    %39 = vector.broadcast %38 : vector<1x16xf32> to vector<64x16xf32>
    %40 = arith.addf %37, %39 : vector<64x16xf32>
    %cst_20 = arith.constant 0.000000e+00 : f32
    %41 = vector.broadcast %cst_20 : f32 to vector<64x16xf32>
    %42 = arith.maximumf %40, %41 : vector<64x16xf32>
    %cst_21 = arith.constant 0.000000e+00 : f32
    %43 = vector.broadcast %cst_21 : f32 to vector<8x16xf32>
    %44 = vector.extract_strided_slice %42 {offsets = [0, 0], sizes = [56, 16], strides = [1, 1]} : vector<64x16xf32> to vector<56x16xf32>
    %45 = tpu.concatenate %43, %44 in 0 : vector<8x16xf32>, vector<56x16xf32> -> vector<64x16xf32>
    %cst_22 = arith.constant 0.000000e+00 : f32
    %46 = vector.broadcast %cst_22 : f32 to vector<4x16xf32>
    %47 = vector.extract_strided_slice %42 {offsets = [0, 0], sizes = [60, 16], strides = [1, 1]} : vector<64x16xf32> to vector<60x16xf32>
    %48 = tpu.concatenate %46, %47 in 0 : vector<4x16xf32>, vector<60x16xf32> -> vector<64x16xf32>
    %49 = vector.extract_strided_slice %42 {offsets = [4, 0], sizes = [60, 16], strides = [1, 1]} : vector<64x16xf32> to vector<60x16xf32>
    %cst_23 = arith.constant 0.000000e+00 : f32
    %50 = vector.broadcast %cst_23 : f32 to vector<4x16xf32>
    %51 = tpu.concatenate %49, %50 in 0 : vector<60x16xf32>, vector<4x16xf32> -> vector<64x16xf32>
    %52 = vector.extract_strided_slice %42 {offsets = [8, 0], sizes = [56, 16], strides = [1, 1]} : vector<64x16xf32> to vector<56x16xf32>
    %cst_24 = arith.constant 0.000000e+00 : f32
    %53 = vector.broadcast %cst_24 : f32 to vector<8x16xf32>
    %54 = tpu.concatenate %52, %53 in 0 : vector<56x16xf32>, vector<8x16xf32> -> vector<64x16xf32>
    %55 = tpu.concatenate %45, %48, %42, %51, %54 in 1 : vector<64x16xf32>, vector<64x16xf32>, vector<64x16xf32>, vector<64x16xf32>, vector<64x16xf32> -> vector<64x80xf32>
    %c0_25 = arith.constant 0 : index
    %c0_26 = arith.constant 0 : index
    %56 = vector.load %arg6[%c0_25, %c0_26] : memref<80x16xf32, #tpu.memory_space<vmem>>, vector<80x16xf32>
    %cst_27 = arith.constant dense<0.000000e+00> : vector<64x16xf32>
    %57 = tpu.matmul %55, %56, %cst_27 {dimension_numbers = #tpu.dot_dimension_numbers<[1], [0], [0], [1], [0, 0, 1, 1], [], []>} : vector<64x80xf32>, vector<80x16xf32>, vector<64x16xf32> -> vector<64x16xf32>
    %c0_28 = arith.constant 0 : index
    %c0_29 = arith.constant 0 : index
    %58 = vector.load %arg7[%c0_28, %c0_29] : memref<1x16xf32, #tpu.memory_space<vmem>>, vector<1x16xf32>
    %59 = vector.broadcast %58 : vector<1x16xf32> to vector<64x16xf32>
    %60 = arith.addf %57, %59 : vector<64x16xf32>
    %cst_30 = arith.constant 0.000000e+00 : f32
    %61 = vector.broadcast %cst_30 : f32 to vector<64x16xf32>
    %62 = arith.maximumf %60, %61 : vector<64x16xf32>
    %cst_31 = arith.constant 0.000000e+00 : f32
    %63 = vector.broadcast %cst_31 : f32 to vector<16x16xf32>
    %64 = vector.extract_strided_slice %62 {offsets = [0, 0], sizes = [48, 16], strides = [1, 1]} : vector<64x16xf32> to vector<48x16xf32>
    %65 = tpu.concatenate %63, %64 in 0 : vector<16x16xf32>, vector<48x16xf32> -> vector<64x16xf32>
    %cst_32 = arith.constant 0.000000e+00 : f32
    %66 = vector.broadcast %cst_32 : f32 to vector<8x16xf32>
    %67 = vector.extract_strided_slice %62 {offsets = [0, 0], sizes = [56, 16], strides = [1, 1]} : vector<64x16xf32> to vector<56x16xf32>
    %68 = tpu.concatenate %66, %67 in 0 : vector<8x16xf32>, vector<56x16xf32> -> vector<64x16xf32>
    %69 = vector.extract_strided_slice %62 {offsets = [8, 0], sizes = [56, 16], strides = [1, 1]} : vector<64x16xf32> to vector<56x16xf32>
    %cst_33 = arith.constant 0.000000e+00 : f32
    %70 = vector.broadcast %cst_33 : f32 to vector<8x16xf32>
    %71 = tpu.concatenate %69, %70 in 0 : vector<56x16xf32>, vector<8x16xf32> -> vector<64x16xf32>
    %72 = vector.extract_strided_slice %62 {offsets = [16, 0], sizes = [48, 16], strides = [1, 1]} : vector<64x16xf32> to vector<48x16xf32>
    %cst_34 = arith.constant 0.000000e+00 : f32
    %73 = vector.broadcast %cst_34 : f32 to vector<16x16xf32>
    %74 = tpu.concatenate %72, %73 in 0 : vector<48x16xf32>, vector<16x16xf32> -> vector<64x16xf32>
    %75 = tpu.concatenate %65, %68, %62, %71, %74 in 1 : vector<64x16xf32>, vector<64x16xf32>, vector<64x16xf32>, vector<64x16xf32>, vector<64x16xf32> -> vector<64x80xf32>
    %c0_35 = arith.constant 0 : index
    %c0_36 = arith.constant 0 : index
    %76 = vector.load %arg8[%c0_35, %c0_36] : memref<80x32xf32, #tpu.memory_space<vmem>>, vector<80x32xf32>
    %cst_37 = arith.constant dense<0.000000e+00> : vector<64x32xf32>
    %77 = tpu.matmul %75, %76, %cst_37 {dimension_numbers = #tpu.dot_dimension_numbers<[1], [0], [0], [1], [0, 0, 1, 1], [], []>} : vector<64x80xf32>, vector<80x32xf32>, vector<64x32xf32> -> vector<64x32xf32>
    %c0_38 = arith.constant 0 : index
    %c0_39 = arith.constant 0 : index
    %78 = vector.load %arg9[%c0_38, %c0_39] : memref<1x32xf32, #tpu.memory_space<vmem>>, vector<1x32xf32>
    %79 = vector.broadcast %78 : vector<1x32xf32> to vector<64x32xf32>
    %80 = arith.addf %77, %79 : vector<64x32xf32>
    %cst_40 = arith.constant 0.000000e+00 : f32
    %81 = vector.broadcast %cst_40 : f32 to vector<64x32xf32>
    %82 = arith.maximumf %80, %81 : vector<64x32xf32>
    %cst_41 = arith.constant 0.000000e+00 : f32
    %83 = vector.broadcast %cst_41 : f32 to vector<32x32xf32>
    %84 = vector.extract_strided_slice %82 {offsets = [0, 0], sizes = [32, 32], strides = [1, 1]} : vector<64x32xf32> to vector<32x32xf32>
    %85 = tpu.concatenate %83, %84 in 0 : vector<32x32xf32>, vector<32x32xf32> -> vector<64x32xf32>
    %cst_42 = arith.constant 0.000000e+00 : f32
    %86 = vector.broadcast %cst_42 : f32 to vector<16x32xf32>
    %87 = vector.extract_strided_slice %82 {offsets = [0, 0], sizes = [48, 32], strides = [1, 1]} : vector<64x32xf32> to vector<48x32xf32>
    %88 = tpu.concatenate %86, %87 in 0 : vector<16x32xf32>, vector<48x32xf32> -> vector<64x32xf32>
    %89 = vector.extract_strided_slice %82 {offsets = [16, 0], sizes = [48, 32], strides = [1, 1]} : vector<64x32xf32> to vector<48x32xf32>
    %cst_43 = arith.constant 0.000000e+00 : f32
    %90 = vector.broadcast %cst_43 : f32 to vector<16x32xf32>
    %91 = tpu.concatenate %89, %90 in 0 : vector<48x32xf32>, vector<16x32xf32> -> vector<64x32xf32>
    %92 = vector.extract_strided_slice %82 {offsets = [32, 0], sizes = [32, 32], strides = [1, 1]} : vector<64x32xf32> to vector<32x32xf32>
    %cst_44 = arith.constant 0.000000e+00 : f32
    %93 = vector.broadcast %cst_44 : f32 to vector<32x32xf32>
    %94 = tpu.concatenate %92, %93 in 0 : vector<32x32xf32>, vector<32x32xf32> -> vector<64x32xf32>
    %95 = tpu.concatenate %85, %88, %82, %91, %94 in 1 : vector<64x32xf32>, vector<64x32xf32>, vector<64x32xf32>, vector<64x32xf32>, vector<64x32xf32> -> vector<64x160xf32>
    %c0_45 = arith.constant 0 : index
    %c0_46 = arith.constant 0 : index
    %96 = vector.load %arg10[%c0_45, %c0_46] : memref<160x32xf32, #tpu.memory_space<vmem>>, vector<160x32xf32>
    %cst_47 = arith.constant dense<0.000000e+00> : vector<64x32xf32>
    %97 = tpu.matmul %95, %96, %cst_47 {dimension_numbers = #tpu.dot_dimension_numbers<[1], [0], [0], [1], [0, 0, 1, 1], [], []>} : vector<64x160xf32>, vector<160x32xf32>, vector<64x32xf32> -> vector<64x32xf32>
    %c0_48 = arith.constant 0 : index
    %c0_49 = arith.constant 0 : index
    %98 = vector.load %arg11[%c0_48, %c0_49] : memref<1x32xf32, #tpu.memory_space<vmem>>, vector<1x32xf32>
    %99 = vector.broadcast %98 : vector<1x32xf32> to vector<64x32xf32>
    %100 = arith.addf %97, %99 : vector<64x32xf32>
    %cst_50 = arith.constant 0.000000e+00 : f32
    %101 = vector.broadcast %cst_50 : f32 to vector<64x32xf32>
    %102 = arith.maximumf %100, %101 : vector<64x32xf32>
    %cst_51 = arith.constant 0.000000e+00 : f32
    %103 = vector.broadcast %cst_51 : f32 to vector<64x32xf32>
    %cst_52 = arith.constant 0.000000e+00 : f32
    %104 = vector.broadcast %cst_52 : f32 to vector<32x32xf32>
    %105 = vector.extract_strided_slice %102 {offsets = [0, 0], sizes = [32, 32], strides = [1, 1]} : vector<64x32xf32> to vector<32x32xf32>
    %106 = tpu.concatenate %104, %105 in 0 : vector<32x32xf32>, vector<32x32xf32> -> vector<64x32xf32>
    %107 = vector.extract_strided_slice %102 {offsets = [32, 0], sizes = [32, 32], strides = [1, 1]} : vector<64x32xf32> to vector<32x32xf32>
    %cst_53 = arith.constant 0.000000e+00 : f32
    %108 = vector.broadcast %cst_53 : f32 to vector<32x32xf32>
    %109 = tpu.concatenate %107, %108 in 0 : vector<32x32xf32>, vector<32x32xf32> -> vector<64x32xf32>
    %cst_54 = arith.constant 0.000000e+00 : f32
    %110 = vector.broadcast %cst_54 : f32 to vector<64x32xf32>
    %111 = tpu.concatenate %103, %106, %102, %109, %110 in 1 : vector<64x32xf32>, vector<64x32xf32>, vector<64x32xf32>, vector<64x32xf32>, vector<64x32xf32> -> vector<64x160xf32>
    %c0_55 = arith.constant 0 : index
    %c0_56 = arith.constant 0 : index
    %112 = vector.load %arg12[%c0_55, %c0_56] : memref<160x64xf32, #tpu.memory_space<vmem>>, vector<160x64xf32>
    %cst_57 = arith.constant dense<0.000000e+00> : vector<64x64xf32>
    %113 = tpu.matmul %111, %112, %cst_57 {dimension_numbers = #tpu.dot_dimension_numbers<[1], [0], [0], [1], [0, 0, 1, 1], [], []>} : vector<64x160xf32>, vector<160x64xf32>, vector<64x64xf32> -> vector<64x64xf32>
    %c0_58 = arith.constant 0 : index
    %c0_59 = arith.constant 0 : index
    %114 = vector.load %arg13[%c0_58, %c0_59] : memref<1x64xf32, #tpu.memory_space<vmem>>, vector<1x64xf32>
    %115 = vector.broadcast %114 : vector<1x64xf32> to vector<64x64xf32>
    %116 = arith.addf %113, %115 : vector<64x64xf32>
    %cst_60 = arith.constant 0.000000e+00 : f32
    %117 = vector.broadcast %cst_60 : f32 to vector<64x64xf32>
    %118 = arith.maximumf %116, %117 : vector<64x64xf32>
    %cst_61 = arith.constant 0.000000e+00 : f32
    %119 = vector.broadcast %cst_61 : f32 to vector<64x64xf32>
    %cst_62 = arith.constant 0.000000e+00 : f32
    %120 = vector.broadcast %cst_62 : f32 to vector<64x64xf32>
    %cst_63 = arith.constant 0.000000e+00 : f32
    %121 = vector.broadcast %cst_63 : f32 to vector<32x64xf32>
    %122 = vector.extract_strided_slice %118 {offsets = [0, 0], sizes = [32, 64], strides = [1, 1]} : vector<64x64xf32> to vector<32x64xf32>
    %123 = tpu.concatenate %121, %122 in 0 : vector<32x64xf32>, vector<32x64xf32> -> vector<64x64xf32>
    %124 = vector.extract_strided_slice %118 {offsets = [32, 0], sizes = [32, 64], strides = [1, 1]} : vector<64x64xf32> to vector<32x64xf32>
    %cst_64 = arith.constant 0.000000e+00 : f32
    %125 = vector.broadcast %cst_64 : f32 to vector<32x64xf32>
    %126 = tpu.concatenate %124, %125 in 0 : vector<32x64xf32>, vector<32x64xf32> -> vector<64x64xf32>
    %127 = tpu.concatenate %119, %118, %120 in 1 : vector<64x64xf32>, vector<64x64xf32>, vector<64x64xf32> -> vector<64x192xf32>
    %128 = tpu.concatenate %123, %126 in 1 : vector<64x64xf32>, vector<64x64xf32> -> vector<64x128xf32>
    %c0_65 = arith.constant 0 : index
    %c0_66 = arith.constant 0 : index
    %129 = vector.load %arg14[%c0_65, %c0_66] : memref<192x32xf32, #tpu.memory_space<vmem>>, vector<192x32xf32>
    %cst_67 = arith.constant dense<0.000000e+00> : vector<64x32xf32>
    %130 = tpu.matmul %127, %129, %cst_67 {dimension_numbers = #tpu.dot_dimension_numbers<[1], [0], [0], [1], [0, 0, 1, 1], [], []>} : vector<64x192xf32>, vector<192x32xf32>, vector<64x32xf32> -> vector<64x32xf32>
    %c0_68 = arith.constant 0 : index
    %c0_69 = arith.constant 0 : index
    %131 = vector.load %arg15[%c0_68, %c0_69] : memref<128x32xf32, #tpu.memory_space<vmem>>, vector<128x32xf32>
    %cst_70 = arith.constant dense<0.000000e+00> : vector<64x32xf32>
    %132 = tpu.matmul %128, %131, %cst_70 {dimension_numbers = #tpu.dot_dimension_numbers<[1], [0], [0], [1], [0, 0, 1, 1], [], []>} : vector<64x128xf32>, vector<128x32xf32>, vector<64x32xf32> -> vector<64x32xf32>
    %c0_71 = arith.constant 0 : index
    %c0_72 = arith.constant 0 : index
    %133 = vector.load %arg17[%c0_71, %c0_72] : memref<64x1xf32, #tpu.memory_space<vmem>>, vector<64x1xf32>
    %134 = vector.broadcast %133 : vector<64x1xf32> to vector<64x32xf32>
    %135 = arith.mulf %134, %130 : vector<64x32xf32>
    %cst_73 = arith.constant 1.000000e+00 : f32
    %136 = vector.broadcast %cst_73 : f32 to vector<64x1xf32>
    %137 = arith.subf %136, %133 : vector<64x1xf32>
    %138 = vector.broadcast %137 : vector<64x1xf32> to vector<64x32xf32>
    %139 = arith.mulf %138, %132 : vector<64x32xf32>
    %140 = arith.addf %135, %139 : vector<64x32xf32>
    %c0_74 = arith.constant 0 : index
    %c0_75 = arith.constant 0 : index
    %141 = vector.load %arg16[%c0_74, %c0_75] : memref<1x32xf32, #tpu.memory_space<vmem>>, vector<1x32xf32>
    %142 = vector.broadcast %141 : vector<1x32xf32> to vector<64x32xf32>
    %143 = arith.addf %140, %142 : vector<64x32xf32>
    %cst_76 = arith.constant 0.000000e+00 : f32
    %144 = vector.broadcast %cst_76 : f32 to vector<64x32xf32>
    %145 = arith.maximumf %143, %144 : vector<64x32xf32>
    %cst_77 = arith.constant 0.000000e+00 : f32
    %146 = vector.broadcast %cst_77 : f32 to vector<32x32xf32>
    %147 = vector.extract_strided_slice %102 {offsets = [0, 0], sizes = [32, 32], strides = [1, 1]} : vector<64x32xf32> to vector<32x32xf32>
    %148 = tpu.concatenate %146, %147 in 0 : vector<32x32xf32>, vector<32x32xf32> -> vector<64x32xf32>
    %149 = vector.extract_strided_slice %102 {offsets = [32, 0], sizes = [32, 32], strides = [1, 1]} : vector<64x32xf32> to vector<32x32xf32>
    %cst_78 = arith.constant 0.000000e+00 : f32
    %150 = vector.broadcast %cst_78 : f32 to vector<32x32xf32>
    %151 = tpu.concatenate %149, %150 in 0 : vector<32x32xf32>, vector<32x32xf32> -> vector<64x32xf32>
    %cst_79 = arith.constant 0.000000e+00 : f32
    %152 = vector.broadcast %cst_79 : f32 to vector<16x32xf32>
    %153 = vector.extract_strided_slice %102 {offsets = [0, 0], sizes = [48, 32], strides = [1, 1]} : vector<64x32xf32> to vector<48x32xf32>
    %154 = tpu.concatenate %152, %153 in 0 : vector<16x32xf32>, vector<48x32xf32> -> vector<64x32xf32>
    %155 = vector.extract_strided_slice %102 {offsets = [16, 0], sizes = [48, 32], strides = [1, 1]} : vector<64x32xf32> to vector<48x32xf32>
    %cst_80 = arith.constant 0.000000e+00 : f32
    %156 = vector.broadcast %cst_80 : f32 to vector<16x32xf32>
    %157 = tpu.concatenate %155, %156 in 0 : vector<48x32xf32>, vector<16x32xf32> -> vector<64x32xf32>
    %cst_81 = arith.constant 0.000000e+00 : f32
    %158 = vector.broadcast %cst_81 : f32 to vector<32x32xf32>
    %159 = vector.extract_strided_slice %145 {offsets = [0, 0], sizes = [32, 32], strides = [1, 1]} : vector<64x32xf32> to vector<32x32xf32>
    %160 = tpu.concatenate %158, %159 in 0 : vector<32x32xf32>, vector<32x32xf32> -> vector<64x32xf32>
    %161 = vector.extract_strided_slice %145 {offsets = [32, 0], sizes = [32, 32], strides = [1, 1]} : vector<64x32xf32> to vector<32x32xf32>
    %cst_82 = arith.constant 0.000000e+00 : f32
    %162 = vector.broadcast %cst_82 : f32 to vector<32x32xf32>
    %163 = tpu.concatenate %161, %162 in 0 : vector<32x32xf32>, vector<32x32xf32> -> vector<64x32xf32>
    %cst_83 = arith.constant 0.000000e+00 : f32
    %164 = vector.broadcast %cst_83 : f32 to vector<16x32xf32>
    %165 = vector.extract_strided_slice %145 {offsets = [0, 0], sizes = [48, 32], strides = [1, 1]} : vector<64x32xf32> to vector<48x32xf32>
    %166 = tpu.concatenate %164, %165 in 0 : vector<16x32xf32>, vector<48x32xf32> -> vector<64x32xf32>
    %167 = vector.extract_strided_slice %145 {offsets = [16, 0], sizes = [48, 32], strides = [1, 1]} : vector<64x32xf32> to vector<48x32xf32>
    %cst_84 = arith.constant 0.000000e+00 : f32
    %168 = vector.broadcast %cst_84 : f32 to vector<16x32xf32>
    %169 = tpu.concatenate %167, %168 in 0 : vector<48x32xf32>, vector<16x32xf32> -> vector<64x32xf32>
    %170 = tpu.concatenate %148, %102, %151, %160, %145, %163 in 1 : vector<64x32xf32>, vector<64x32xf32>, vector<64x32xf32>, vector<64x32xf32>, vector<64x32xf32>, vector<64x32xf32> -> vector<64x192xf32>
    %171 = tpu.concatenate %154, %157, %166, %169 in 1 : vector<64x32xf32>, vector<64x32xf32>, vector<64x32xf32>, vector<64x32xf32> -> vector<64x128xf32>
    %c0_85 = arith.constant 0 : index
    %c0_86 = arith.constant 0 : index
    %172 = vector.load %arg18[%c0_85, %c0_86] : memref<192x32xf32, #tpu.memory_space<vmem>>, vector<192x32xf32>
    %cst_87 = arith.constant dense<0.000000e+00> : vector<64x32xf32>
    %173 = tpu.matmul %170, %172, %cst_87 {dimension_numbers = #tpu.dot_dimension_numbers<[1], [0], [0], [1], [0, 0, 1, 1], [], []>} : vector<64x192xf32>, vector<192x32xf32>, vector<64x32xf32> -> vector<64x32xf32>
    %c0_88 = arith.constant 0 : index
    %c0_89 = arith.constant 0 : index
    %174 = vector.load %arg19[%c0_88, %c0_89] : memref<128x32xf32, #tpu.memory_space<vmem>>, vector<128x32xf32>
    %cst_90 = arith.constant dense<0.000000e+00> : vector<64x32xf32>
    %175 = tpu.matmul %171, %174, %cst_90 {dimension_numbers = #tpu.dot_dimension_numbers<[1], [0], [0], [1], [0, 0, 1, 1], [], []>} : vector<64x128xf32>, vector<128x32xf32>, vector<64x32xf32> -> vector<64x32xf32>
    %c0_91 = arith.constant 0 : index
    %c0_92 = arith.constant 0 : index
    %176 = vector.load %arg21[%c0_91, %c0_92] : memref<64x1xf32, #tpu.memory_space<vmem>>, vector<64x1xf32>
    %177 = vector.broadcast %176 : vector<64x1xf32> to vector<64x32xf32>
    %178 = arith.mulf %177, %173 : vector<64x32xf32>
    %cst_93 = arith.constant 1.000000e+00 : f32
    %179 = vector.broadcast %cst_93 : f32 to vector<64x1xf32>
    %180 = arith.subf %179, %176 : vector<64x1xf32>
    %181 = vector.broadcast %180 : vector<64x1xf32> to vector<64x32xf32>
    %182 = arith.mulf %181, %175 : vector<64x32xf32>
    %183 = arith.addf %178, %182 : vector<64x32xf32>
    %c0_94 = arith.constant 0 : index
    %c0_95 = arith.constant 0 : index
    %184 = vector.load %arg20[%c0_94, %c0_95] : memref<1x32xf32, #tpu.memory_space<vmem>>, vector<1x32xf32>
    %185 = vector.broadcast %184 : vector<1x32xf32> to vector<64x32xf32>
    %186 = arith.addf %183, %185 : vector<64x32xf32>
    %cst_96 = arith.constant 0.000000e+00 : f32
    %187 = vector.broadcast %cst_96 : f32 to vector<64x32xf32>
    %188 = arith.maximumf %186, %187 : vector<64x32xf32>
    %cst_97 = arith.constant 0.000000e+00 : f32
    %189 = vector.broadcast %cst_97 : f32 to vector<16x32xf32>
    %190 = vector.extract_strided_slice %82 {offsets = [0, 0], sizes = [48, 32], strides = [1, 1]} : vector<64x32xf32> to vector<48x32xf32>
    %191 = tpu.concatenate %189, %190 in 0 : vector<16x32xf32>, vector<48x32xf32> -> vector<64x32xf32>
    %192 = vector.extract_strided_slice %82 {offsets = [16, 0], sizes = [48, 32], strides = [1, 1]} : vector<64x32xf32> to vector<48x32xf32>
    %cst_98 = arith.constant 0.000000e+00 : f32
    %193 = vector.broadcast %cst_98 : f32 to vector<16x32xf32>
    %194 = tpu.concatenate %192, %193 in 0 : vector<48x32xf32>, vector<16x32xf32> -> vector<64x32xf32>
    %cst_99 = arith.constant 0.000000e+00 : f32
    %195 = vector.broadcast %cst_99 : f32 to vector<8x32xf32>
    %196 = vector.extract_strided_slice %82 {offsets = [0, 0], sizes = [56, 32], strides = [1, 1]} : vector<64x32xf32> to vector<56x32xf32>
    %197 = tpu.concatenate %195, %196 in 0 : vector<8x32xf32>, vector<56x32xf32> -> vector<64x32xf32>
    %198 = vector.extract_strided_slice %82 {offsets = [8, 0], sizes = [56, 32], strides = [1, 1]} : vector<64x32xf32> to vector<56x32xf32>
    %cst_100 = arith.constant 0.000000e+00 : f32
    %199 = vector.broadcast %cst_100 : f32 to vector<8x32xf32>
    %200 = tpu.concatenate %198, %199 in 0 : vector<56x32xf32>, vector<8x32xf32> -> vector<64x32xf32>
    %cst_101 = arith.constant 0.000000e+00 : f32
    %201 = vector.broadcast %cst_101 : f32 to vector<16x32xf32>
    %202 = vector.extract_strided_slice %188 {offsets = [0, 0], sizes = [48, 32], strides = [1, 1]} : vector<64x32xf32> to vector<48x32xf32>
    %203 = tpu.concatenate %201, %202 in 0 : vector<16x32xf32>, vector<48x32xf32> -> vector<64x32xf32>
    %204 = vector.extract_strided_slice %188 {offsets = [16, 0], sizes = [48, 32], strides = [1, 1]} : vector<64x32xf32> to vector<48x32xf32>
    %cst_102 = arith.constant 0.000000e+00 : f32
    %205 = vector.broadcast %cst_102 : f32 to vector<16x32xf32>
    %206 = tpu.concatenate %204, %205 in 0 : vector<48x32xf32>, vector<16x32xf32> -> vector<64x32xf32>
    %cst_103 = arith.constant 0.000000e+00 : f32
    %207 = vector.broadcast %cst_103 : f32 to vector<8x32xf32>
    %208 = vector.extract_strided_slice %188 {offsets = [0, 0], sizes = [56, 32], strides = [1, 1]} : vector<64x32xf32> to vector<56x32xf32>
    %209 = tpu.concatenate %207, %208 in 0 : vector<8x32xf32>, vector<56x32xf32> -> vector<64x32xf32>
    %210 = vector.extract_strided_slice %188 {offsets = [8, 0], sizes = [56, 32], strides = [1, 1]} : vector<64x32xf32> to vector<56x32xf32>
    %cst_104 = arith.constant 0.000000e+00 : f32
    %211 = vector.broadcast %cst_104 : f32 to vector<8x32xf32>
    %212 = tpu.concatenate %210, %211 in 0 : vector<56x32xf32>, vector<8x32xf32> -> vector<64x32xf32>
    %213 = tpu.concatenate %191, %82, %194, %203, %188, %206 in 1 : vector<64x32xf32>, vector<64x32xf32>, vector<64x32xf32>, vector<64x32xf32>, vector<64x32xf32>, vector<64x32xf32> -> vector<64x192xf32>
    %214 = tpu.concatenate %197, %200, %209, %212 in 1 : vector<64x32xf32>, vector<64x32xf32>, vector<64x32xf32>, vector<64x32xf32> -> vector<64x128xf32>
    %c0_105 = arith.constant 0 : index
    %c0_106 = arith.constant 0 : index
    %215 = vector.load %arg22[%c0_105, %c0_106] : memref<192x16xf32, #tpu.memory_space<vmem>>, vector<192x16xf32>
    %cst_107 = arith.constant dense<0.000000e+00> : vector<64x16xf32>
    %216 = tpu.matmul %213, %215, %cst_107 {dimension_numbers = #tpu.dot_dimension_numbers<[1], [0], [0], [1], [0, 0, 1, 1], [], []>} : vector<64x192xf32>, vector<192x16xf32>, vector<64x16xf32> -> vector<64x16xf32>
    %c0_108 = arith.constant 0 : index
    %c0_109 = arith.constant 0 : index
    %217 = vector.load %arg23[%c0_108, %c0_109] : memref<128x16xf32, #tpu.memory_space<vmem>>, vector<128x16xf32>
    %cst_110 = arith.constant dense<0.000000e+00> : vector<64x16xf32>
    %218 = tpu.matmul %214, %217, %cst_110 {dimension_numbers = #tpu.dot_dimension_numbers<[1], [0], [0], [1], [0, 0, 1, 1], [], []>} : vector<64x128xf32>, vector<128x16xf32>, vector<64x16xf32> -> vector<64x16xf32>
    %c0_111 = arith.constant 0 : index
    %c0_112 = arith.constant 0 : index
    %219 = vector.load %arg25[%c0_111, %c0_112] : memref<64x1xf32, #tpu.memory_space<vmem>>, vector<64x1xf32>
    %220 = vector.broadcast %219 : vector<64x1xf32> to vector<64x16xf32>
    %221 = arith.mulf %220, %216 : vector<64x16xf32>
    %cst_113 = arith.constant 1.000000e+00 : f32
    %222 = vector.broadcast %cst_113 : f32 to vector<64x1xf32>
    %223 = arith.subf %222, %219 : vector<64x1xf32>
    %224 = vector.broadcast %223 : vector<64x1xf32> to vector<64x16xf32>
    %225 = arith.mulf %224, %218 : vector<64x16xf32>
    %226 = arith.addf %221, %225 : vector<64x16xf32>
    %c0_114 = arith.constant 0 : index
    %c0_115 = arith.constant 0 : index
    %227 = vector.load %arg24[%c0_114, %c0_115] : memref<1x16xf32, #tpu.memory_space<vmem>>, vector<1x16xf32>
    %228 = vector.broadcast %227 : vector<1x16xf32> to vector<64x16xf32>
    %229 = arith.addf %226, %228 : vector<64x16xf32>
    %cst_116 = arith.constant 0.000000e+00 : f32
    %230 = vector.broadcast %cst_116 : f32 to vector<64x16xf32>
    %231 = arith.maximumf %229, %230 : vector<64x16xf32>
    %cst_117 = arith.constant 0.000000e+00 : f32
    %232 = vector.broadcast %cst_117 : f32 to vector<8x16xf32>
    %233 = vector.extract_strided_slice %62 {offsets = [0, 0], sizes = [56, 16], strides = [1, 1]} : vector<64x16xf32> to vector<56x16xf32>
    %234 = tpu.concatenate %232, %233 in 0 : vector<8x16xf32>, vector<56x16xf32> -> vector<64x16xf32>
    %235 = vector.extract_strided_slice %62 {offsets = [8, 0], sizes = [56, 16], strides = [1, 1]} : vector<64x16xf32> to vector<56x16xf32>
    %cst_118 = arith.constant 0.000000e+00 : f32
    %236 = vector.broadcast %cst_118 : f32 to vector<8x16xf32>
    %237 = tpu.concatenate %235, %236 in 0 : vector<56x16xf32>, vector<8x16xf32> -> vector<64x16xf32>
    %cst_119 = arith.constant 0.000000e+00 : f32
    %238 = vector.broadcast %cst_119 : f32 to vector<4x16xf32>
    %239 = vector.extract_strided_slice %62 {offsets = [0, 0], sizes = [60, 16], strides = [1, 1]} : vector<64x16xf32> to vector<60x16xf32>
    %240 = tpu.concatenate %238, %239 in 0 : vector<4x16xf32>, vector<60x16xf32> -> vector<64x16xf32>
    %241 = vector.extract_strided_slice %62 {offsets = [4, 0], sizes = [60, 16], strides = [1, 1]} : vector<64x16xf32> to vector<60x16xf32>
    %cst_120 = arith.constant 0.000000e+00 : f32
    %242 = vector.broadcast %cst_120 : f32 to vector<4x16xf32>
    %243 = tpu.concatenate %241, %242 in 0 : vector<60x16xf32>, vector<4x16xf32> -> vector<64x16xf32>
    %cst_121 = arith.constant 0.000000e+00 : f32
    %244 = vector.broadcast %cst_121 : f32 to vector<8x16xf32>
    %245 = vector.extract_strided_slice %231 {offsets = [0, 0], sizes = [56, 16], strides = [1, 1]} : vector<64x16xf32> to vector<56x16xf32>
    %246 = tpu.concatenate %244, %245 in 0 : vector<8x16xf32>, vector<56x16xf32> -> vector<64x16xf32>
    %247 = vector.extract_strided_slice %231 {offsets = [8, 0], sizes = [56, 16], strides = [1, 1]} : vector<64x16xf32> to vector<56x16xf32>
    %cst_122 = arith.constant 0.000000e+00 : f32
    %248 = vector.broadcast %cst_122 : f32 to vector<8x16xf32>
    %249 = tpu.concatenate %247, %248 in 0 : vector<56x16xf32>, vector<8x16xf32> -> vector<64x16xf32>
    %cst_123 = arith.constant 0.000000e+00 : f32
    %250 = vector.broadcast %cst_123 : f32 to vector<4x16xf32>
    %251 = vector.extract_strided_slice %231 {offsets = [0, 0], sizes = [60, 16], strides = [1, 1]} : vector<64x16xf32> to vector<60x16xf32>
    %252 = tpu.concatenate %250, %251 in 0 : vector<4x16xf32>, vector<60x16xf32> -> vector<64x16xf32>
    %253 = vector.extract_strided_slice %231 {offsets = [4, 0], sizes = [60, 16], strides = [1, 1]} : vector<64x16xf32> to vector<60x16xf32>
    %cst_124 = arith.constant 0.000000e+00 : f32
    %254 = vector.broadcast %cst_124 : f32 to vector<4x16xf32>
    %255 = tpu.concatenate %253, %254 in 0 : vector<60x16xf32>, vector<4x16xf32> -> vector<64x16xf32>
    %256 = tpu.concatenate %234, %62, %237, %246, %231, %249 in 1 : vector<64x16xf32>, vector<64x16xf32>, vector<64x16xf32>, vector<64x16xf32>, vector<64x16xf32>, vector<64x16xf32> -> vector<64x96xf32>
    %257 = tpu.concatenate %240, %243, %252, %255 in 1 : vector<64x16xf32>, vector<64x16xf32>, vector<64x16xf32>, vector<64x16xf32> -> vector<64x64xf32>
    %c0_125 = arith.constant 0 : index
    %c0_126 = arith.constant 0 : index
    %258 = vector.load %arg26[%c0_125, %c0_126] : memref<96x16xf32, #tpu.memory_space<vmem>>, vector<96x16xf32>
    %cst_127 = arith.constant dense<0.000000e+00> : vector<64x16xf32>
    %259 = tpu.matmul %256, %258, %cst_127 {dimension_numbers = #tpu.dot_dimension_numbers<[1], [0], [0], [1], [0, 0, 1, 1], [], []>} : vector<64x96xf32>, vector<96x16xf32>, vector<64x16xf32> -> vector<64x16xf32>
    %c0_128 = arith.constant 0 : index
    %c0_129 = arith.constant 0 : index
    %260 = vector.load %arg27[%c0_128, %c0_129] : memref<64x16xf32, #tpu.memory_space<vmem>>, vector<64x16xf32>
    %cst_130 = arith.constant dense<0.000000e+00> : vector<64x16xf32>
    %261 = tpu.matmul %257, %260, %cst_130 {dimension_numbers = #tpu.dot_dimension_numbers<[1], [0], [0], [1], [0, 0, 1, 1], [], []>} : vector<64x64xf32>, vector<64x16xf32>, vector<64x16xf32> -> vector<64x16xf32>
    %c0_131 = arith.constant 0 : index
    %c0_132 = arith.constant 0 : index
    %262 = vector.load %arg29[%c0_131, %c0_132] : memref<64x1xf32, #tpu.memory_space<vmem>>, vector<64x1xf32>
    %263 = vector.broadcast %262 : vector<64x1xf32> to vector<64x16xf32>
    %264 = arith.mulf %263, %259 : vector<64x16xf32>
    %cst_133 = arith.constant 1.000000e+00 : f32
    %265 = vector.broadcast %cst_133 : f32 to vector<64x1xf32>
    %266 = arith.subf %265, %262 : vector<64x1xf32>
    %267 = vector.broadcast %266 : vector<64x1xf32> to vector<64x16xf32>
    %268 = arith.mulf %267, %261 : vector<64x16xf32>
    %269 = arith.addf %264, %268 : vector<64x16xf32>
    %c0_134 = arith.constant 0 : index
    %c0_135 = arith.constant 0 : index
    %270 = vector.load %arg28[%c0_134, %c0_135] : memref<1x16xf32, #tpu.memory_space<vmem>>, vector<1x16xf32>
    %271 = vector.broadcast %270 : vector<1x16xf32> to vector<64x16xf32>
    %272 = arith.addf %269, %271 : vector<64x16xf32>
    %cst_136 = arith.constant 0.000000e+00 : f32
    %273 = vector.broadcast %cst_136 : f32 to vector<64x16xf32>
    %274 = arith.maximumf %272, %273 : vector<64x16xf32>
    %cst_137 = arith.constant 0.000000e+00 : f32
    %275 = vector.broadcast %cst_137 : f32 to vector<4x16xf32>
    %276 = vector.extract_strided_slice %42 {offsets = [0, 0], sizes = [60, 16], strides = [1, 1]} : vector<64x16xf32> to vector<60x16xf32>
    %277 = tpu.concatenate %275, %276 in 0 : vector<4x16xf32>, vector<60x16xf32> -> vector<64x16xf32>
    %278 = vector.extract_strided_slice %42 {offsets = [4, 0], sizes = [60, 16], strides = [1, 1]} : vector<64x16xf32> to vector<60x16xf32>
    %cst_138 = arith.constant 0.000000e+00 : f32
    %279 = vector.broadcast %cst_138 : f32 to vector<4x16xf32>
    %280 = tpu.concatenate %278, %279 in 0 : vector<60x16xf32>, vector<4x16xf32> -> vector<64x16xf32>
    %cst_139 = arith.constant 0.000000e+00 : f32
    %281 = vector.broadcast %cst_139 : f32 to vector<2x16xf32>
    %282 = vector.extract_strided_slice %42 {offsets = [0, 0], sizes = [62, 16], strides = [1, 1]} : vector<64x16xf32> to vector<62x16xf32>
    %283 = tpu.concatenate %281, %282 in 0 : vector<2x16xf32>, vector<62x16xf32> -> vector<64x16xf32>
    %284 = vector.extract_strided_slice %42 {offsets = [2, 0], sizes = [62, 16], strides = [1, 1]} : vector<64x16xf32> to vector<62x16xf32>
    %cst_140 = arith.constant 0.000000e+00 : f32
    %285 = vector.broadcast %cst_140 : f32 to vector<2x16xf32>
    %286 = tpu.concatenate %284, %285 in 0 : vector<62x16xf32>, vector<2x16xf32> -> vector<64x16xf32>
    %cst_141 = arith.constant 0.000000e+00 : f32
    %287 = vector.broadcast %cst_141 : f32 to vector<4x16xf32>
    %288 = vector.extract_strided_slice %274 {offsets = [0, 0], sizes = [60, 16], strides = [1, 1]} : vector<64x16xf32> to vector<60x16xf32>
    %289 = tpu.concatenate %287, %288 in 0 : vector<4x16xf32>, vector<60x16xf32> -> vector<64x16xf32>
    %290 = vector.extract_strided_slice %274 {offsets = [4, 0], sizes = [60, 16], strides = [1, 1]} : vector<64x16xf32> to vector<60x16xf32>
    %cst_142 = arith.constant 0.000000e+00 : f32
    %291 = vector.broadcast %cst_142 : f32 to vector<4x16xf32>
    %292 = tpu.concatenate %290, %291 in 0 : vector<60x16xf32>, vector<4x16xf32> -> vector<64x16xf32>
    %cst_143 = arith.constant 0.000000e+00 : f32
    %293 = vector.broadcast %cst_143 : f32 to vector<2x16xf32>
    %294 = vector.extract_strided_slice %274 {offsets = [0, 0], sizes = [62, 16], strides = [1, 1]} : vector<64x16xf32> to vector<62x16xf32>
    %295 = tpu.concatenate %293, %294 in 0 : vector<2x16xf32>, vector<62x16xf32> -> vector<64x16xf32>
    %296 = vector.extract_strided_slice %274 {offsets = [2, 0], sizes = [62, 16], strides = [1, 1]} : vector<64x16xf32> to vector<62x16xf32>
    %cst_144 = arith.constant 0.000000e+00 : f32
    %297 = vector.broadcast %cst_144 : f32 to vector<2x16xf32>
    %298 = tpu.concatenate %296, %297 in 0 : vector<62x16xf32>, vector<2x16xf32> -> vector<64x16xf32>
    %299 = tpu.concatenate %277, %42, %280, %289, %274, %292 in 1 : vector<64x16xf32>, vector<64x16xf32>, vector<64x16xf32>, vector<64x16xf32>, vector<64x16xf32>, vector<64x16xf32> -> vector<64x96xf32>
    %300 = tpu.concatenate %283, %286, %295, %298 in 1 : vector<64x16xf32>, vector<64x16xf32>, vector<64x16xf32>, vector<64x16xf32> -> vector<64x64xf32>
    %c0_145 = arith.constant 0 : index
    %c0_146 = arith.constant 0 : index
    %301 = vector.load %arg30[%c0_145, %c0_146] : memref<96x8xf32, #tpu.memory_space<vmem>>, vector<96x8xf32>
    %cst_147 = arith.constant dense<0.000000e+00> : vector<64x8xf32>
    %302 = tpu.matmul %299, %301, %cst_147 {dimension_numbers = #tpu.dot_dimension_numbers<[1], [0], [0], [1], [0, 0, 1, 1], [], []>} : vector<64x96xf32>, vector<96x8xf32>, vector<64x8xf32> -> vector<64x8xf32>
    %c0_148 = arith.constant 0 : index
    %c0_149 = arith.constant 0 : index
    %303 = vector.load %arg31[%c0_148, %c0_149] : memref<64x8xf32, #tpu.memory_space<vmem>>, vector<64x8xf32>
    %cst_150 = arith.constant dense<0.000000e+00> : vector<64x8xf32>
    %304 = tpu.matmul %300, %303, %cst_150 {dimension_numbers = #tpu.dot_dimension_numbers<[1], [0], [0], [1], [0, 0, 1, 1], [], []>} : vector<64x64xf32>, vector<64x8xf32>, vector<64x8xf32> -> vector<64x8xf32>
    %c0_151 = arith.constant 0 : index
    %c0_152 = arith.constant 0 : index
    %305 = vector.load %arg33[%c0_151, %c0_152] : memref<64x1xf32, #tpu.memory_space<vmem>>, vector<64x1xf32>
    %306 = vector.broadcast %305 : vector<64x1xf32> to vector<64x8xf32>
    %307 = arith.mulf %306, %302 : vector<64x8xf32>
    %cst_153 = arith.constant 1.000000e+00 : f32
    %308 = vector.broadcast %cst_153 : f32 to vector<64x1xf32>
    %309 = arith.subf %308, %305 : vector<64x1xf32>
    %310 = vector.broadcast %309 : vector<64x1xf32> to vector<64x8xf32>
    %311 = arith.mulf %310, %304 : vector<64x8xf32>
    %312 = arith.addf %307, %311 : vector<64x8xf32>
    %c0_154 = arith.constant 0 : index
    %c0_155 = arith.constant 0 : index
    %313 = vector.load %arg32[%c0_154, %c0_155] : memref<1x8xf32, #tpu.memory_space<vmem>>, vector<1x8xf32>
    %314 = vector.broadcast %313 : vector<1x8xf32> to vector<64x8xf32>
    %315 = arith.addf %312, %314 : vector<64x8xf32>
    %cst_156 = arith.constant 0.000000e+00 : f32
    %316 = vector.broadcast %cst_156 : f32 to vector<64x8xf32>
    %317 = arith.maximumf %315, %316 : vector<64x8xf32>
    %cst_157 = arith.constant 0.000000e+00 : f32
    %318 = vector.broadcast %cst_157 : f32 to vector<2x8xf32>
    %319 = vector.extract_strided_slice %22 {offsets = [0, 0], sizes = [62, 8], strides = [1, 1]} : vector<64x8xf32> to vector<62x8xf32>
    %320 = tpu.concatenate %318, %319 in 0 : vector<2x8xf32>, vector<62x8xf32> -> vector<64x8xf32>
    %321 = vector.extract_strided_slice %22 {offsets = [2, 0], sizes = [62, 8], strides = [1, 1]} : vector<64x8xf32> to vector<62x8xf32>
    %cst_158 = arith.constant 0.000000e+00 : f32
    %322 = vector.broadcast %cst_158 : f32 to vector<2x8xf32>
    %323 = tpu.concatenate %321, %322 in 0 : vector<62x8xf32>, vector<2x8xf32> -> vector<64x8xf32>
    %cst_159 = arith.constant 0.000000e+00 : f32
    %324 = vector.broadcast %cst_159 : f32 to vector<1x8xf32>
    %325 = vector.extract_strided_slice %22 {offsets = [0, 0], sizes = [63, 8], strides = [1, 1]} : vector<64x8xf32> to vector<63x8xf32>
    %326 = tpu.concatenate %324, %325 in 0 : vector<1x8xf32>, vector<63x8xf32> -> vector<64x8xf32>
    %327 = vector.extract_strided_slice %22 {offsets = [1, 0], sizes = [63, 8], strides = [1, 1]} : vector<64x8xf32> to vector<63x8xf32>
    %cst_160 = arith.constant 0.000000e+00 : f32
    %328 = vector.broadcast %cst_160 : f32 to vector<1x8xf32>
    %329 = tpu.concatenate %327, %328 in 0 : vector<63x8xf32>, vector<1x8xf32> -> vector<64x8xf32>
    %cst_161 = arith.constant 0.000000e+00 : f32
    %330 = vector.broadcast %cst_161 : f32 to vector<2x8xf32>
    %331 = vector.extract_strided_slice %317 {offsets = [0, 0], sizes = [62, 8], strides = [1, 1]} : vector<64x8xf32> to vector<62x8xf32>
    %332 = tpu.concatenate %330, %331 in 0 : vector<2x8xf32>, vector<62x8xf32> -> vector<64x8xf32>
    %333 = vector.extract_strided_slice %317 {offsets = [2, 0], sizes = [62, 8], strides = [1, 1]} : vector<64x8xf32> to vector<62x8xf32>
    %cst_162 = arith.constant 0.000000e+00 : f32
    %334 = vector.broadcast %cst_162 : f32 to vector<2x8xf32>
    %335 = tpu.concatenate %333, %334 in 0 : vector<62x8xf32>, vector<2x8xf32> -> vector<64x8xf32>
    %cst_163 = arith.constant 0.000000e+00 : f32
    %336 = vector.broadcast %cst_163 : f32 to vector<1x8xf32>
    %337 = vector.extract_strided_slice %317 {offsets = [0, 0], sizes = [63, 8], strides = [1, 1]} : vector<64x8xf32> to vector<63x8xf32>
    %338 = tpu.concatenate %336, %337 in 0 : vector<1x8xf32>, vector<63x8xf32> -> vector<64x8xf32>
    %339 = vector.extract_strided_slice %317 {offsets = [1, 0], sizes = [63, 8], strides = [1, 1]} : vector<64x8xf32> to vector<63x8xf32>
    %cst_164 = arith.constant 0.000000e+00 : f32
    %340 = vector.broadcast %cst_164 : f32 to vector<1x8xf32>
    %341 = tpu.concatenate %339, %340 in 0 : vector<63x8xf32>, vector<1x8xf32> -> vector<64x8xf32>
    %342 = tpu.concatenate %320, %22, %323, %332, %317, %335 in 1 : vector<64x8xf32>, vector<64x8xf32>, vector<64x8xf32>, vector<64x8xf32>, vector<64x8xf32>, vector<64x8xf32> -> vector<64x48xf32>
    %343 = tpu.concatenate %326, %329, %338, %341 in 1 : vector<64x8xf32>, vector<64x8xf32>, vector<64x8xf32>, vector<64x8xf32> -> vector<64x32xf32>
    %c0_165 = arith.constant 0 : index
    %c0_166 = arith.constant 0 : index
    %344 = vector.load %arg34[%c0_165, %c0_166] : memref<48x8xf32, #tpu.memory_space<vmem>>, vector<48x8xf32>
    %cst_167 = arith.constant dense<0.000000e+00> : vector<64x8xf32>
    %345 = tpu.matmul %342, %344, %cst_167 {dimension_numbers = #tpu.dot_dimension_numbers<[1], [0], [0], [1], [0, 0, 1, 1], [], []>} : vector<64x48xf32>, vector<48x8xf32>, vector<64x8xf32> -> vector<64x8xf32>
    %c0_168 = arith.constant 0 : index
    %c0_169 = arith.constant 0 : index
    %346 = vector.load %arg35[%c0_168, %c0_169] : memref<32x8xf32, #tpu.memory_space<vmem>>, vector<32x8xf32>
    %cst_170 = arith.constant dense<0.000000e+00> : vector<64x8xf32>
    %347 = tpu.matmul %343, %346, %cst_170 {dimension_numbers = #tpu.dot_dimension_numbers<[1], [0], [0], [1], [0, 0, 1, 1], [], []>} : vector<64x32xf32>, vector<32x8xf32>, vector<64x8xf32> -> vector<64x8xf32>
    %c0_171 = arith.constant 0 : index
    %c0_172 = arith.constant 0 : index
    %348 = vector.load %arg37[%c0_171, %c0_172] : memref<64x1xf32, #tpu.memory_space<vmem>>, vector<64x1xf32>
    %349 = vector.broadcast %348 : vector<64x1xf32> to vector<64x8xf32>
    %350 = arith.mulf %349, %345 : vector<64x8xf32>
    %cst_173 = arith.constant 1.000000e+00 : f32
    %351 = vector.broadcast %cst_173 : f32 to vector<64x1xf32>
    %352 = arith.subf %351, %348 : vector<64x1xf32>
    %353 = vector.broadcast %352 : vector<64x1xf32> to vector<64x8xf32>
    %354 = arith.mulf %353, %347 : vector<64x8xf32>
    %355 = arith.addf %350, %354 : vector<64x8xf32>
    %c0_174 = arith.constant 0 : index
    %c0_175 = arith.constant 0 : index
    %356 = vector.load %arg36[%c0_174, %c0_175] : memref<1x8xf32, #tpu.memory_space<vmem>>, vector<1x8xf32>
    %357 = vector.broadcast %356 : vector<1x8xf32> to vector<64x8xf32>
    %358 = arith.addf %355, %357 : vector<64x8xf32>
    %cst_176 = arith.constant 0.000000e+00 : f32
    %359 = vector.broadcast %cst_176 : f32 to vector<64x8xf32>
    %360 = arith.maximumf %358, %359 : vector<64x8xf32>
    %361 = tpu.transpose %360, [1, 0] : vector<64x8xf32> -> vector<8x64xf32>
    %c0_177 = arith.constant 0 : index
    %c0_178 = arith.constant 0 : index
    %c0_179 = arith.constant 0 : index
    %362 = vector.load %arg38[%c0_177, %c0_178, %c0_179] : memref<1x8x64xf32, #tpu.memory_space<vmem>>, vector<1x8x64xf32>
    %363 = vector.shape_cast %362 : vector<1x8x64xf32> to vector<8x64xf32>
    %364 = vector.shape_cast %361 : vector<8x64xf32> to vector<1x8x64xf32>
    tpu.vector_store %arg38[%c0_177, %c0_178, %c0_179], %364 {strides = array<i32>} : memref<1x8x64xf32, #tpu.memory_space<vmem>>, vector<1x8x64xf32>,
    return
  }
  func.func @transform_0(%arg0: i32) -> (i32, i32, i32) {
    %c0_i32 = arith.constant 0 : i32
    %c0_i32_0 = arith.constant 0 : i32
    %c0_i32_1 = arith.constant 0 : i32
    return %arg0, %c0_i32, %c0_i32_0 : i32, i32, i32
  }
  func.func @transform_1(%arg0: i32) -> (i32, i32) {
    %c0_i32 = arith.constant 0 : i32
    %c0_i32_0 = arith.constant 0 : i32
    %c0_i32_1 = arith.constant 0 : i32
    return %c0_i32, %c0_i32_0 : i32, i32
  }
  func.func @transform_2(%arg0: i32) -> (i32, i32) {
    %c0_i32 = arith.constant 0 : i32
    %c0_i32_0 = arith.constant 0 : i32
    %c0_i32_1 = arith.constant 0 : i32
    return %c0_i32, %c0_i32_0 : i32, i32
  }
  func.func @transform_3(%arg0: i32) -> (i32, i32) {
    %c0_i32 = arith.constant 0 : i32
    %c0_i32_0 = arith.constant 0 : i32
    %c0_i32_1 = arith.constant 0 : i32
    return %c0_i32, %c0_i32_0 : i32, i32
  }
  func.func @transform_4(%arg0: i32) -> (i32, i32) {
    %c0_i32 = arith.constant 0 : i32
    %c0_i32_0 = arith.constant 0 : i32
    %c0_i32_1 = arith.constant 0 : i32
    return %c0_i32, %c0_i32_0 : i32, i32
  }
  func.func @transform_5(%arg0: i32) -> (i32, i32) {
    %c0_i32 = arith.constant 0 : i32
    %c0_i32_0 = arith.constant 0 : i32
    %c0_i32_1 = arith.constant 0 : i32
    return %c0_i32, %c0_i32_0 : i32, i32
  }
  func.func @transform_6(%arg0: i32) -> (i32, i32) {
    %c0_i32 = arith.constant 0 : i32
    %c0_i32_0 = arith.constant 0 : i32
    %c0_i32_1 = arith.constant 0 : i32
    return %c0_i32, %c0_i32_0 : i32, i32
  }
  func.func @transform_7(%arg0: i32) -> (i32, i32) {
    %c0_i32 = arith.constant 0 : i32
    %c0_i32_0 = arith.constant 0 : i32
    %c0_i32_1 = arith.constant 0 : i32
    return %c0_i32, %c0_i32_0 : i32, i32
  }
  func.func @transform_8(%arg0: i32) -> (i32, i32) {
    %c0_i32 = arith.constant 0 : i32
    %c0_i32_0 = arith.constant 0 : i32
    %c0_i32_1 = arith.constant 0 : i32
    return %c0_i32, %c0_i32_0 : i32, i32
  }
  func.func @transform_9(%arg0: i32) -> (i32, i32) {
    %c0_i32 = arith.constant 0 : i32
    %c0_i32_0 = arith.constant 0 : i32
    %c0_i32_1 = arith.constant 0 : i32
    return %c0_i32, %c0_i32_0 : i32, i32
  }
  func.func @transform_10(%arg0: i32) -> (i32, i32) {
    %c0_i32 = arith.constant 0 : i32
    %c0_i32_0 = arith.constant 0 : i32
    %c0_i32_1 = arith.constant 0 : i32
    return %c0_i32, %c0_i32_0 : i32, i32
  }
  func.func @transform_11(%arg0: i32) -> (i32, i32) {
    %c0_i32 = arith.constant 0 : i32
    %c0_i32_0 = arith.constant 0 : i32
    %c0_i32_1 = arith.constant 0 : i32
    return %c0_i32, %c0_i32_0 : i32, i32
  }
  func.func @transform_12(%arg0: i32) -> (i32, i32) {
    %c0_i32 = arith.constant 0 : i32
    %c0_i32_0 = arith.constant 0 : i32
    %c0_i32_1 = arith.constant 0 : i32
    return %c0_i32, %c0_i32_0 : i32, i32
  }
  func.func @transform_13(%arg0: i32) -> (i32, i32) {
    %c0_i32 = arith.constant 0 : i32
    %c0_i32_0 = arith.constant 0 : i32
    %c0_i32_1 = arith.constant 0 : i32
    return %c0_i32, %c0_i32_0 : i32, i32
  }
  func.func @transform_14(%arg0: i32) -> (i32, i32) {
    %c0_i32 = arith.constant 0 : i32
    %c0_i32_0 = arith.constant 0 : i32
    %c0_i32_1 = arith.constant 0 : i32
    return %c0_i32, %c0_i32_0 : i32, i32
  }
  func.func @transform_15(%arg0: i32) -> (i32, i32) {
    %c0_i32 = arith.constant 0 : i32
    %c0_i32_0 = arith.constant 0 : i32
    %c0_i32_1 = arith.constant 0 : i32
    return %c0_i32, %c0_i32_0 : i32, i32
  }
  func.func @transform_16(%arg0: i32) -> (i32, i32) {
    %c0_i32 = arith.constant 0 : i32
    %c0_i32_0 = arith.constant 0 : i32
    %c0_i32_1 = arith.constant 0 : i32
    return %c0_i32, %c0_i32_0 : i32, i32
  }
  func.func @transform_17(%arg0: i32) -> (i32, i32) {
    %c0_i32 = arith.constant 0 : i32
    %c0_i32_0 = arith.constant 0 : i32
    %c0_i32_1 = arith.constant 0 : i32
    return %c0_i32, %c0_i32_0 : i32, i32
  }
  func.func @transform_18(%arg0: i32) -> (i32, i32) {
    %c0_i32 = arith.constant 0 : i32
    %c0_i32_0 = arith.constant 0 : i32
    %c0_i32_1 = arith.constant 0 : i32
    return %c0_i32, %c0_i32_0 : i32, i32
  }
  func.func @transform_19(%arg0: i32) -> (i32, i32) {
    %c0_i32 = arith.constant 0 : i32
    %c0_i32_0 = arith.constant 0 : i32
    %c0_i32_1 = arith.constant 0 : i32
    return %c0_i32, %c0_i32_0 : i32, i32
  }
  func.func @transform_20(%arg0: i32) -> (i32, i32) {
    %c0_i32 = arith.constant 0 : i32
    %c0_i32_0 = arith.constant 0 : i32
    %c0_i32_1 = arith.constant 0 : i32
    return %c0_i32, %c0_i32_0 : i32, i32
  }
  func.func @transform_21(%arg0: i32) -> (i32, i32) {
    %c0_i32 = arith.constant 0 : i32
    %c0_i32_0 = arith.constant 0 : i32
    %c0_i32_1 = arith.constant 0 : i32
    return %c0_i32, %c0_i32_0 : i32, i32
  }
  func.func @transform_22(%arg0: i32) -> (i32, i32) {
    %c0_i32 = arith.constant 0 : i32
    %c0_i32_0 = arith.constant 0 : i32
    %c0_i32_1 = arith.constant 0 : i32
    return %c0_i32, %c0_i32_0 : i32, i32
  }
  func.func @transform_23(%arg0: i32) -> (i32, i32) {
    %c0_i32 = arith.constant 0 : i32
    %c0_i32_0 = arith.constant 0 : i32
    %c0_i32_1 = arith.constant 0 : i32
    return %c0_i32, %c0_i32_0 : i32, i32
  }
  func.func @transform_24(%arg0: i32) -> (i32, i32) {
    %c0_i32 = arith.constant 0 : i32
    %c0_i32_0 = arith.constant 0 : i32
    %c0_i32_1 = arith.constant 0 : i32
    return %c0_i32, %c0_i32_0 : i32, i32
  }
  func.func @transform_25(%arg0: i32) -> (i32, i32) {
    %c0_i32 = arith.constant 0 : i32
    %c0_i32_0 = arith.constant 0 : i32
    %c0_i32_1 = arith.constant 0 : i32
    return %c0_i32, %c0_i32_0 : i32, i32
  }
  func.func @transform_26(%arg0: i32) -> (i32, i32) {
    %c0_i32 = arith.constant 0 : i32
    %c0_i32_0 = arith.constant 0 : i32
    %c0_i32_1 = arith.constant 0 : i32
    return %c0_i32, %c0_i32_0 : i32, i32
  }
  func.func @transform_27(%arg0: i32) -> (i32, i32) {
    %c0_i32 = arith.constant 0 : i32
    %c0_i32_0 = arith.constant 0 : i32
    %c0_i32_1 = arith.constant 0 : i32
    return %c0_i32, %c0_i32_0 : i32, i32
  }
  func.func @transform_28(%arg0: i32) -> (i32, i32) {
    %c0_i32 = arith.constant 0 : i32
    %c0_i32_0 = arith.constant 0 : i32
    %c0_i32_1 = arith.constant 0 : i32
    return %c0_i32, %c0_i32_0 : i32, i32
  }
  func.func @transform_29(%arg0: i32) -> (i32, i32) {
    %c0_i32 = arith.constant 0 : i32
    %c0_i32_0 = arith.constant 0 : i32
    %c0_i32_1 = arith.constant 0 : i32
    return %c0_i32, %c0_i32_0 : i32, i32
  }
  func.func @transform_30(%arg0: i32) -> (i32, i32) {
    %c0_i32 = arith.constant 0 : i32
    %c0_i32_0 = arith.constant 0 : i32
    %c0_i32_1 = arith.constant 0 : i32
    return %c0_i32, %c0_i32_0 : i32, i32
  }
  func.func @transform_31(%arg0: i32) -> (i32, i32) {
    %c0_i32 = arith.constant 0 : i32
    %c0_i32_0 = arith.constant 0 : i32
    %c0_i32_1 = arith.constant 0 : i32
    return %c0_i32, %c0_i32_0 : i32, i32
  }
  func.func @transform_32(%arg0: i32) -> (i32, i32) {
    %c0_i32 = arith.constant 0 : i32
    %c0_i32_0 = arith.constant 0 : i32
    %c0_i32_1 = arith.constant 0 : i32
    return %c0_i32, %c0_i32_0 : i32, i32
  }
  func.func @transform_33(%arg0: i32) -> (i32, i32) {
    %c0_i32 = arith.constant 0 : i32
    %c0_i32_0 = arith.constant 0 : i32
    %c0_i32_1 = arith.constant 0 : i32
    return %c0_i32, %c0_i32_0 : i32, i32
  }
  func.func @transform_34(%arg0: i32) -> (i32, i32) {
    %c0_i32 = arith.constant 0 : i32
    %c0_i32_0 = arith.constant 0 : i32
    %c0_i32_1 = arith.constant 0 : i32
    return %c0_i32, %c0_i32_0 : i32, i32
  }
  func.func @transform_35(%arg0: i32) -> (i32, i32) {
    %c0_i32 = arith.constant 0 : i32
    %c0_i32_0 = arith.constant 0 : i32
    %c0_i32_1 = arith.constant 0 : i32
    return %c0_i32, %c0_i32_0 : i32, i32
  }
  func.func @transform_36(%arg0: i32) -> (i32, i32) {
    %c0_i32 = arith.constant 0 : i32
    %c0_i32_0 = arith.constant 0 : i32
    %c0_i32_1 = arith.constant 0 : i32
    return %c0_i32, %c0_i32_0 : i32, i32
  }
  func.func @transform_37(%arg0: i32) -> (i32, i32, i32) {
    %c0_i32 = arith.constant 0 : i32
    %c0_i32_0 = arith.constant 0 : i32
    %c0_i32_1 = arith.constant 0 : i32
    return %arg0, %c0_i32, %c0_i32_0 : i32, i32, i32
  }
}

</mosaic_0001>

<llo_original>
// kernel: unet_forward.1
$region0: #{unet_forward.1}
  #allocation0 [shape = 'u32[]', space=smem, size = 0x4, offset = 0x4, fixed_abs, tag = 'smem constant byte address 0x4 - core index']
  #allocation1 [shape = 'u32[144,128]{1,0:T(1,128)}', space=vmem, size = 0x12000, scoped, tag = 'internal scratch']
  %s0 = inlined_call_operand.smem [shape: u32[38], index: -1, kind: input, shape index: {}]
  %s1 = sld [smem:[%s0]]
  %s2 = scalar_lea.smem %s0, 1
  %s3 = sld [smem:[%s2]]
  %s4 = scalar_lea.smem %s0, 2
  %s5 = sld [smem:[%s4]]
  %s6 = scalar_lea.smem %s0, 3
  %s7 = sld [smem:[%s6]]
  %s8 = scalar_lea.smem %s0, 4
  %s9 = sld [smem:[%s8]]
  %s10 = scalar_lea.smem %s0, 5
  %s11 = sld [smem:[%s10]]
  %s12 = scalar_lea.smem %s0, 6
  %s13 = sld [smem:[%s12]]
  %s14 = scalar_lea.smem %s0, 7
  %s15 = sld [smem:[%s14]]
  %s16 = scalar_lea.smem %s0, 8
  %s17 = sld [smem:[%s16]]
  %s18 = scalar_lea.smem %s0, 9
  %s19 = sld [smem:[%s18]]
  %s20 = scalar_lea.smem %s0, 10
  %s21 = sld [smem:[%s20]]
  %s22 = scalar_lea.smem %s0, 11
  %s23 = sld [smem:[%s22]]
  %s24 = scalar_lea.smem %s0, 12
  %s25 = sld [smem:[%s24]]
  %s26 = scalar_lea.smem %s0, 13
  %s27 = sld [smem:[%s26]]
  %s28 = scalar_lea.smem %s0, 14
  %s29 = sld [smem:[%s28]]
  %s30 = scalar_lea.smem %s0, 15
  %s31 = sld [smem:[%s30]]
  %s32 = scalar_lea.smem %s0, 16
  %s33 = sld [smem:[%s32]]
  %s34 = scalar_lea.smem %s0, 17
  %s35 = sld [smem:[%s34]]
  %s36 = scalar_lea.smem %s0, 18
  %s37 = sld [smem:[%s36]]
  %s38 = scalar_lea.smem %s0, 19
  %s39 = sld [smem:[%s38]]
  %s40 = scalar_lea.smem %s0, 20
  %s41 = sld [smem:[%s40]]
  %s42 = scalar_lea.smem %s0, 21
  %s43 = sld [smem:[%s42]]
  %s44 = scalar_lea.smem %s0, 22
  %s45 = sld [smem:[%s44]]
  %s46 = scalar_lea.smem %s0, 23
  %s47 = sld [smem:[%s46]]
  %s48 = scalar_lea.smem %s0, 24
  %s49 = sld [smem:[%s48]]
  %s50 = scalar_lea.smem %s0, 25
  %s51 = sld [smem:[%s50]]
  %s52 = scalar_lea.smem %s0, 26
  %s53 = sld [smem:[%s52]]
  %s54 = scalar_lea.smem %s0, 27
  %s55 = sld [smem:[%s54]]
  %s56 = scalar_lea.smem %s0, 28
  %s57 = sld [smem:[%s56]]
  %s58 = scalar_lea.smem %s0, 29
  %s59 = sld [smem:[%s58]]
  %s60 = scalar_lea.smem %s0, 30
  %s61 = sld [smem:[%s60]]
  %s62 = scalar_lea.smem %s0, 31
  %s63 = sld [smem:[%s62]]
  %s64 = scalar_lea.smem %s0, 32
  %s65 = sld [smem:[%s64]]
  %s66 = scalar_lea.smem %s0, 33
  %s67 = sld [smem:[%s66]]
  %s68 = scalar_lea.smem %s0, 34
  %s69 = sld [smem:[%s68]]
  %s70 = scalar_lea.smem %s0, 35
  %s71 = sld [smem:[%s70]]
  %s72 = scalar_lea.smem %s0, 36
  %s73 = sld [smem:[%s72]]
  %s74 = scalar_lea.smem %s0, 37
  %s75 = sld [smem:[%s74]]
  %s76 = sld [smem:[#allocation0]]
  $region181: #{unet_forward.1} parent=0
    _
  %s78 = ssub.s32 1, %s76
  %s79 = scalar_select 0, %s78, %s76
  loop: start=0, step=1, limit=4
  $region2: #{unet_forward.1} parent=0 // loop_pre_header
    _
  $region3: #{unet_forward.1} parent=0 // loop_header
    %s81 = sphi 0, %s85
    %p82 = scmp.ge.s32.totalorder %s81, 4
    %s91 = sphi 0, %s93
    %s94 = sphi 0, %s91
    %s95 = sphi 0, %s94
    %s111 = sphi 0, %s95
    %s115 = sphi 0, %s115
    %s117 = sphi 0, %s115
    %s118 = sphi 0, %s117
    %s132 = sphi 0, %s118
    %s136 = sphi 0, %s136
    %s138 = sphi 0, %s136
    %s139 = sphi 0, %s138
    %s153 = sphi 0, %s139
    %s157 = sphi 0, %s157
    %s159 = sphi 0, %s157
    %s160 = sphi 0, %s159
    %s174 = sphi 0, %s160
    %s178 = sphi 0, %s178
    %s180 = sphi 0, %s178
    %s181 = sphi 0, %s180
    %s195 = sphi 0, %s181
    %s199 = sphi 0, %s199
    %s201 = sphi 0, %s199
    %s202 = sphi 0, %s201
    %s216 = sphi 0, %s202
    %s220 = sphi 0, %s220
    %s222 = sphi 0, %s220
    %s223 = sphi 0, %s222
    %s237 = sphi 0, %s223
    %s241 = sphi 0, %s241
    %s243 = sphi 0, %s241
    %s244 = sphi 0, %s243
    %s258 = sphi 0, %s244
    %s262 = sphi 0, %s262
    %s264 = sphi 0, %s262
    %s265 = sphi 0, %s264
    %s279 = sphi 0, %s265
    %s283 = sphi 0, %s283
    %s285 = sphi 0, %s283
    %s286 = sphi 0, %s285
    %s300 = sphi 0, %s286
    %s304 = sphi 0, %s304
    %s306 = sphi 0, %s304
    %s307 = sphi 0, %s306
    %s321 = sphi 0, %s307
    %s325 = sphi 0, %s325
    %s327 = sphi 0, %s325
    %s328 = sphi 0, %s327
    %s342 = sphi 0, %s328
    %s346 = sphi 0, %s346
    %s348 = sphi 0, %s346
    %s349 = sphi 0, %s348
    %s363 = sphi 0, %s349
    %s367 = sphi 0, %s367
    %s369 = sphi 0, %s367
    %s370 = sphi 0, %s369
    %s384 = sphi 0, %s370
    %s388 = sphi 0, %s388
    %s390 = sphi 0, %s388
    %s391 = sphi 0, %s390
    %s405 = sphi 0, %s391
    %s409 = sphi 0, %s409
    %s411 = sphi 0, %s409
    %s412 = sphi 0, %s411
    %s426 = sphi 0, %s412
    %s430 = sphi 0, %s430
    %s432 = sphi 0, %s430
    %s433 = sphi 0, %s432
    %s447 = sphi 0, %s433
    %s451 = sphi 0, %s451
    %s453 = sphi 0, %s451
    %s454 = sphi 0, %s453
    %s468 = sphi 0, %s454
    %s472 = sphi 0, %s472
    %s474 = sphi 0, %s472
    %s475 = sphi 0, %s474
    %s489 = sphi 0, %s475
    %s493 = sphi 0, %s493
    %s495 = sphi 0, %s493
    %s496 = sphi 0, %s495
    %s510 = sphi 0, %s496
    %s514 = sphi 0, %s514
    %s516 = sphi 0, %s514
    %s517 = sphi 0, %s516
    %s531 = sphi 0, %s517
    %s535 = sphi 0, %s535
    %s537 = sphi 0, %s535
    %s538 = sphi 0, %s537
    %s552 = sphi 0, %s538
    %s556 = sphi 0, %s556
    %s558 = sphi 0, %s556
    %s559 = sphi 0, %s558
    %s573 = sphi 0, %s559
    %s577 = sphi 0, %s577
    %s579 = sphi 0, %s577
    %s580 = sphi 0, %s579
    %s594 = sphi 0, %s580
    %s598 = sphi 0, %s598
    %s600 = sphi 0, %s598
    %s601 = sphi 0, %s600
    %s615 = sphi 0, %s601
    %s619 = sphi 0, %s619
    %s621 = sphi 0, %s619
    %s622 = sphi 0, %s621
    %s636 = sphi 0, %s622
    %s640 = sphi 0, %s640
    %s642 = sphi 0, %s640
    %s643 = sphi 0, %s642
    %s657 = sphi 0, %s643
    %s661 = sphi 0, %s661
    %s663 = sphi 0, %s661
    %s664 = sphi 0, %s663
    %s678 = sphi 0, %s664
    %s682 = sphi 0, %s682
    %s684 = sphi 0, %s682
    %s685 = sphi 0, %s684
    %s699 = sphi 0, %s685
    %s703 = sphi 0, %s703
    %s705 = sphi 0, %s703
    %s706 = sphi 0, %s705
    %s720 = sphi 0, %s706
    %s724 = sphi 0, %s724
    %s726 = sphi 0, %s724
    %s727 = sphi 0, %s726
    %s741 = sphi 0, %s727
    %s745 = sphi 0, %s745
    %s747 = sphi 0, %s745
    %s748 = sphi 0, %s747
    %s762 = sphi 0, %s748
    %s766 = sphi 0, %s766
    %s768 = sphi 0, %s766
    %s769 = sphi 0, %s768
    %s783 = sphi 0, %s769
    %s787 = sphi 0, %s787
    %s789 = sphi 0, %s787
    %s790 = sphi 0, %s789
    %s804 = sphi 0, %s790
    %s808 = sphi 0, %s808
    %s810 = sphi 0, %s808
    %s811 = sphi 0, %s810
    %s825 = sphi 0, %s811
    %s829 = sphi 0, %s829
    %s831 = sphi 0, %s829
    %s832 = sphi 0, %s831
    %s846 = sphi 0, %s832
    %s850 = sphi 0, %s850
    %s852 = sphi 0, %s850
    %s853 = sphi 0, %s852
    %s867 = sphi 0, %s853
    %s873 = sphi 0, %s875
    %s876 = sphi 0, %s873
    %s877 = sphi 0, %s876
    %s893 = sphi 0, %s877
  $region4: #{unet_forward.1} parent=0 // loop_header_branch
    %84 = sbr.rel (%p82) target = $region8
  $region5: #{unet_forward.1} parent=0 // loop_body
    %s86 = ssub.s32 %s81, 1
    %s87 = ssub.s32 %s81, 2
    %s88 = sadd.s32 %s81, 1
    %s89 = ssub.s32 %s81, %s88
    %p90 = scmp.eq.s32.totalorder %s89, 0
    %s92 = sadd.s32 %s91, 1
    %s93 = scalar_select %p90, %s91, %s92
    %p96 = pneg %p90
    %p97 = scmp.eq.s32.totalorder %s81, 1
    %p98 = por %p96, %p97
    %p99 = scmp.ne.s32.totalorder %s91, %s94
    %p100 = scmp.eq.s32.totalorder %s81, 0
    %p101 = por %p99, %p100
    %p102 = scmp.ne.s32.totalorder %s91, %s94
    %p103 = scmp.eq.s32.totalorder %s86, 1
    %p104 = por %p102, %p103
    %p105 = scmp.ne.s32.totalorder %s94, %s95
    %p106 = scmp.eq.s32.totalorder %s86, 0
    %p107 = por %p105, %p106
    %p108 = scmp.ne.s32.totalorder %s94, %s95
    %p109 = scmp.eq.s32.totalorder %s87, 1
    %p110 = por %p108, %p109
    %p112 = scmp.ne.s32.totalorder %s95, %s111
    %p113 = scmp.eq.s32.totalorder %s87, 0
    %p114 = por %p112, %p113
    %s116 = sadd.s32 %s115, 1
    %p119 = scmp.eq.s32.totalorder %s81, 1
    %p120 = scmp.ne.s32.totalorder %s115, %s117
    %p121 = scmp.eq.s32.totalorder %s81, 0
    %p122 = por %p120, %p121
    %p123 = scmp.ne.s32.totalorder %s115, %s117
    %p124 = scmp.eq.s32.totalorder %s86, 1
    %p125 = por %p123, %p124
    %p126 = scmp.ne.s32.totalorder %s117, %s118
    %p127 = scmp.eq.s32.totalorder %s86, 0
    %p128 = por %p126, %p127
    %p129 = scmp.ne.s32.totalorder %s117, %s118
    %p130 = scmp.eq.s32.totalorder %s87, 1
    %p131 = por %p129, %p130
    %p133 = scmp.ne.s32.totalorder %s118, %s132
    %p134 = scmp.eq.s32.totalorder %s87, 0
    %p135 = por %p133, %p134
    %s137 = sadd.s32 %s136, 1
    %p140 = scmp.eq.s32.totalorder %s81, 1
    %p141 = scmp.ne.s32.totalorder %s136, %s138
    %p142 = scmp.eq.s32.totalorder %s81, 0
    %p143 = por %p141, %p142
    %p144 = scmp.ne.s32.totalorder %s136, %s138
    %p145 = scmp.eq.s32.totalorder %s86, 1
    %p146 = por %p144, %p145
    %p147 = scmp.ne.s32.totalorder %s138, %s139
    %p148 = scmp.eq.s32.totalorder %s86, 0
    %p149 = por %p147, %p148
    %p150 = scmp.ne.s32.totalorder %s138, %s139
    %p151 = scmp.eq.s32.totalorder %s87, 1
    %p152 = por %p150, %p151
    %p154 = scmp.ne.s32.totalorder %s139, %s153
    %p155 = scmp.eq.s32.totalorder %s87, 0
    %p156 = por %p154, %p155
    %s158 = sadd.s32 %s157, 1
    %p161 = scmp.eq.s32.totalorder %s81, 1
    %p162 = scmp.ne.s32.totalorder %s157, %s159
    %p163 = scmp.eq.s32.totalorder %s81, 0
    %p164 = por %p162, %p163
    %p165 = scmp.ne.s32.totalorder %s157, %s159
    %p166 = scmp.eq.s32.totalorder %s86, 1
    %p167 = por %p165, %p166
    %p168 = scmp.ne.s32.totalorder %s159, %s160
    %p169 = scmp.eq.s32.totalorder %s86, 0
    %p170 = por %p168, %p169
    %p171 = scmp.ne.s32.totalorder %s159, %s160
    %p172 = scmp.eq.s32.totalorder %s87, 1
    %p173 = por %p171, %p172
    %p175 = scmp.ne.s32.totalorder %s160, %s174
    %p176 = scmp.eq.s32.totalorder %s87, 0
    %p177 = por %p175, %p176
    %s179 = sadd.s32 %s178, 1
    %p182 = scmp.eq.s32.totalorder %s81, 1
    %p183 = scmp.ne.s32.totalorder %s178, %s180
    %p184 = scmp.eq.s32.totalorder %s81, 0
    %p185 = por %p183, %p184
    %p186 = scmp.ne.s32.totalorder %s178, %s180
    %p187 = scmp.eq.s32.totalorder %s86, 1
    %p188 = por %p186, %p187
    %p189 = scmp.ne.s32.totalorder %s180, %s181
    %p190 = scmp.eq.s32.totalorder %s86, 0
    %p191 = por %p189, %p190
    %p192 = scmp.ne.s32.totalorder %s180, %s181
    %p193 = scmp.eq.s32.totalorder %s87, 1
    %p194 = por %p192, %p193
    %p196 = scmp.ne.s32.totalorder %s181, %s195
    %p197 = scmp.eq.s32.totalorder %s87, 0
    %p198 = por %p196, %p197
    %s200 = sadd.s32 %s199, 1
    %p203 = scmp.eq.s32.totalorder %s81, 1
    %p204 = scmp.ne.s32.totalorder %s199, %s201
    %p205 = scmp.eq.s32.totalorder %s81, 0
    %p206 = por %p204, %p205
    %p207 = scmp.ne.s32.totalorder %s199, %s201
    %p208 = scmp.eq.s32.totalorder %s86, 1
    %p209 = por %p207, %p208
    %p210 = scmp.ne.s32.totalorder %s201, %s202
    %p211 = scmp.eq.s32.totalorder %s86, 0
    %p212 = por %p210, %p211
    %p213 = scmp.ne.s32.totalorder %s201, %s202
    %p214 = scmp.eq.s32.totalorder %s87, 1
    %p215 = por %p213, %p214
    %p217 = scmp.ne.s32.totalorder %s202, %s216
    %p218 = scmp.eq.s32.totalorder %s87, 0
    %p219 = por %p217, %p218
    %s221 = sadd.s32 %s220, 1
    %p224 = scmp.eq.s32.totalorder %s81, 1
    %p225 = scmp.ne.s32.totalorder %s220, %s222
    %p226 = scmp.eq.s32.totalorder %s81, 0
    %p227 = por %p225, %p226
    %p228 = scmp.ne.s32.totalorder %s220, %s222
    %p229 = scmp.eq.s32.totalorder %s86, 1
    %p230 = por %p228, %p229
    %p231 = scmp.ne.s32.totalorder %s222, %s223
    %p232 = scmp.eq.s32.totalorder %s86, 0
    %p233 = por %p231, %p232
    %p234 = scmp.ne.s32.totalorder %s222, %s223
    %p235 = scmp.eq.s32.totalorder %s87, 1
    %p236 = por %p234, %p235
    %p238 = scmp.ne.s32.totalorder %s223, %s237
    %p239 = scmp.eq.s32.totalorder %s87, 0
    %p240 = por %p238, %p239
    %s242 = sadd.s32 %s241, 1
    %p245 = scmp.eq.s32.totalorder %s81, 1
    %p246 = scmp.ne.s32.totalorder %s241, %s243
    %p247 = scmp.eq.s32.totalorder %s81, 0
    %p248 = por %p246, %p247
    %p249 = scmp.ne.s32.totalorder %s241, %s243
    %p250 = scmp.eq.s32.totalorder %s86, 1
    %p251 = por %p249, %p250
    %p252 = scmp.ne.s32.totalorder %s243, %s244
    %p253 = scmp.eq.s32.totalorder %s86, 0
    %p254 = por %p252, %p253
    %p255 = scmp.ne.s32.totalorder %s243, %s244
    %p256 = scmp.eq.s32.totalorder %s87, 1
    %p257 = por %p255, %p256
    %p259 = scmp.ne.s32.totalorder %s244, %s258
    %p260 = scmp.eq.s32.totalorder %s87, 0
    %p261 = por %p259, %p260
    %s263 = sadd.s32 %s262, 1
    %p266 = scmp.eq.s32.totalorder %s81, 1
    %p267 = scmp.ne.s32.totalorder %s262, %s264
    %p268 = scmp.eq.s32.totalorder %s81, 0
    %p269 = por %p267, %p268
    %p270 = scmp.ne.s32.totalorder %s262, %s264
    %p271 = scmp.eq.s32.totalorder %s86, 1
    %p272 = por %p270, %p271
    %p273 = scmp.ne.s32.totalorder %s264, %s265
    %p274 = scmp.eq.s32.totalorder %s86, 0
    %p275 = por %p273, %p274
    %p276 = scmp.ne.s32.totalorder %s264, %s265
    %p277 = scmp.eq.s32.totalorder %s87, 1
    %p278 = por %p276, %p277
    %p280 = scmp.ne.s32.totalorder %s265, %s279
    %p281 = scmp.eq.s32.totalorder %s87, 0
    %p282 = por %p280, %p281
    %s284 = sadd.s32 %s283, 1
    %p287 = scmp.eq.s32.totalorder %s81, 1
    %p288 = scmp.ne.s32.totalorder %s283, %s285
    %p289 = scmp.eq.s32.totalorder %s81, 0
    %p290 = por %p288, %p289
    %p291 = scmp.ne.s32.totalorder %s283, %s285
    %p292 = scmp.eq.s32.totalorder %s86, 1
    %p293 = por %p291, %p292
    %p294 = scmp.ne.s32.totalorder %s285, %s286
    %p295 = scmp.eq.s32.totalorder %s86, 0
    %p296 = por %p294, %p295
    %p297 = scmp.ne.s32.totalorder %s285, %s286
    %p298 = scmp.eq.s32.totalorder %s87, 1
    %p299 = por %p297, %p298
    %p301 = scmp.ne.s32.totalorder %s286, %s300
    %p302 = scmp.eq.s32.totalorder %s87, 0
    %p303 = por %p301, %p302
    %s305 = sadd.s32 %s304, 1
    %p308 = scmp.eq.s32.totalorder %s81, 1
    %p309 = scmp.ne.s32.totalorder %s304, %s306
    %p310 = scmp.eq.s32.totalorder %s81, 0
    %p311 = por %p309, %p310
    %p312 = scmp.ne.s32.totalorder %s304, %s306
    %p313 = scmp.eq.s32.totalorder %s86, 1
    %p314 = por %p312, %p313
    %p315 = scmp.ne.s32.totalorder %s306, %s307
    %p316 = scmp.eq.s32.totalorder %s86, 0
    %p317 = por %p315, %p316
    %p318 = scmp.ne.s32.totalorder %s306, %s307
    %p319 = scmp.eq.s32.totalorder %s87, 1
    %p320 = por %p318, %p319
    %p322 = scmp.ne.s32.totalorder %s307, %s321
    %p323 = scmp.eq.s32.totalorder %s87, 0
    %p324 = por %p322, %p323
    %s326 = sadd.s32 %s325, 1
    %p329 = scmp.eq.s32.totalorder %s81, 1
    %p330 = scmp.ne.s32.totalorder %s325, %s327
    %p331 = scmp.eq.s32.totalorder %s81, 0
    %p332 = por %p330, %p331
    %p333 = scmp.ne.s32.totalorder %s325, %s327
    %p334 = scmp.eq.s32.totalorder %s86, 1
    %p335 = por %p333, %p334
    %p336 = scmp.ne.s32.totalorder %s327, %s328
    %p337 = scmp.eq.s32.totalorder %s86, 0
    %p338 = por %p336, %p337
    %p339 = scmp.ne.s32.totalorder %s327, %s328
    %p340 = scmp.eq.s32.totalorder %s87, 1
    %p341 = por %p339, %p340
    %p343 = scmp.ne.s32.totalorder %s328, %s342
    %p344 = scmp.eq.s32.totalorder %s87, 0
    %p345 = por %p343, %p344
    %s347 = sadd.s32 %s346, 1
    %p350 = scmp.eq.s32.totalorder %s81, 1
    %p351 = scmp.ne.s32.totalorder %s346, %s348
    %p352 = scmp.eq.s32.totalorder %s81, 0
    %p353 = por %p351, %p352
    %p354 = scmp.ne.s32.totalorder %s346, %s348
    %p355 = scmp.eq.s32.totalorder %s86, 1
    %p356 = por %p354, %p355
    %p357 = scmp.ne.s32.totalorder %s348, %s349
    %p358 = scmp.eq.s32.totalorder %s86, 0
    %p359 = por %p357, %p358
    %p360 = scmp.ne.s32.totalorder %s348, %s349
    %p361 = scmp.eq.s32.totalorder %s87, 1
    %p362 = por %p360, %p361
    %p364 = scmp.ne.s32.totalorder %s349, %s363
    %p365 = scmp.eq.s32.totalorder %s87, 0
    %p366 = por %p364, %p365
    %s368 = sadd.s32 %s367, 1
    %p371 = scmp.eq.s32.totalorder %s81, 1
    %p372 = scmp.ne.s32.totalorder %s367, %s369
    %p373 = scmp.eq.s32.totalorder %s81, 0
    %p374 = por %p372, %p373
    %p375 = scmp.ne.s32.totalorder %s367, %s369
    %p376 = scmp.eq.s32.totalorder %s86, 1
    %p377 = por %p375, %p376
    %p378 = scmp.ne.s32.totalorder %s369, %s370
    %p379 = scmp.eq.s32.totalorder %s86, 0
    %p380 = por %p378, %p379
    %p381 = scmp.ne.s32.totalorder %s369, %s370
    %p382 = scmp.eq.s32.totalorder %s87, 1
    %p383 = por %p381, %p382
    %p385 = scmp.ne.s32.totalorder %s370, %s384
    %p386 = scmp.eq.s32.totalorder %s87, 0
    %p387 = por %p385, %p386
    %s389 = sadd.s32 %s388, 1
    %p392 = scmp.eq.s32.totalorder %s81, 1
    %p393 = scmp.ne.s32.totalorder %s388, %s390
    %p394 = scmp.eq.s32.totalorder %s81, 0
    %p395 = por %p393, %p394
    %p396 = scmp.ne.s32.totalorder %s388, %s390
    %p397 = scmp.eq.s32.totalorder %s86, 1
    %p398 = por %p396, %p397
    %p399 = scmp.ne.s32.totalorder %s390, %s391
    %p400 = scmp.eq.s32.totalorder %s86, 0
    %p401 = por %p399, %p400
    %p402 = scmp.ne.s32.totalorder %s390, %s391
    %p403 = scmp.eq.s32.totalorder %s87, 1
    %p404 = por %p402, %p403
    %p406 = scmp.ne.s32.totalorder %s391, %s405
    %p407 = scmp.eq.s32.totalorder %s87, 0
    %p408 = por %p406, %p407
    %s410 = sadd.s32 %s409, 1
    %p413 = scmp.eq.s32.totalorder %s81, 1
    %p414 = scmp.ne.s32.totalorder %s409, %s411
    %p415 = scmp.eq.s32.totalorder %s81, 0
    %p416 = por %p414, %p415
    %p417 = scmp.ne.s32.totalorder %s409, %s411
    %p418 = scmp.eq.s32.totalorder %s86, 1
    %p419 = por %p417, %p418
    %p420 = scmp.ne.s32.totalorder %s411, %s412
    %p421 = scmp.eq.s32.totalorder %s86, 0
    %p422 = por %p420, %p421
    %p423 = scmp.ne.s32.totalorder %s411, %s412
    %p424 = scmp.eq.s32.totalorder %s87, 1
    %p425 = por %p423, %p424
    %p427 = scmp.ne.s32.totalorder %s412, %s426
    %p428 = scmp.eq.s32.totalorder %s87, 0
    %p429 = por %p427, %p428
    %s431 = sadd.s32 %s430, 1
    %p434 = scmp.eq.s32.totalorder %s81, 1
    %p435 = scmp.ne.s32.totalorder %s430, %s432
    %p436 = scmp.eq.s32.totalorder %s81, 0
    %p437 = por %p435, %p436
    %p438 = scmp.ne.s32.totalorder %s430, %s432
    %p439 = scmp.eq.s32.totalorder %s86, 1
    %p440 = por %p438, %p439
    %p441 = scmp.ne.s32.totalorder %s432, %s433
    %p442 = scmp.eq.s32.totalorder %s86, 0
    %p443 = por %p441, %p442
    %p444 = scmp.ne.s32.totalorder %s432, %s433
    %p445 = scmp.eq.s32.totalorder %s87, 1
    %p446 = por %p444, %p445
    %p448 = scmp.ne.s32.totalorder %s433, %s447
    %p449 = scmp.eq.s32.totalorder %s87, 0
    %p450 = por %p448, %p449
    %s452 = sadd.s32 %s451, 1
    %p455 = scmp.eq.s32.totalorder %s81, 1
    %p456 = scmp.ne.s32.totalorder %s451, %s453
    %p457 = scmp.eq.s32.totalorder %s81, 0
    %p458 = por %p456, %p457
    %p459 = scmp.ne.s32.totalorder %s451, %s453
    %p460 = scmp.eq.s32.totalorder %s86, 1
    %p461 = por %p459, %p460
    %p462 = scmp.ne.s32.totalorder %s453, %s454
    %p463 = scmp.eq.s32.totalorder %s86, 0
    %p464 = por %p462, %p463
    %p465 = scmp.ne.s32.totalorder %s453, %s454
    %p466 = scmp.eq.s32.totalorder %s87, 1
    %p467 = por %p465, %p466
    %p469 = scmp.ne.s32.totalorder %s454, %s468
    %p470 = scmp.eq.s32.totalorder %s87, 0
    %p471 = por %p469, %p470
    %s473 = sadd.s32 %s472, 1
    %p476 = scmp.eq.s32.totalorder %s81, 1
    %p477 = scmp.ne.s32.totalorder %s472, %s474
    %p478 = scmp.eq.s32.totalorder %s81, 0
    %p479 = por %p477, %p478
    %p480 = scmp.ne.s32.totalorder %s472, %s474
    %p481 = scmp.eq.s32.totalorder %s86, 1
    %p482 = por %p480, %p481
    %p483 = scmp.ne.s32.totalorder %s474, %s475
    %p484 = scmp.eq.s32.totalorder %s86, 0
    %p485 = por %p483, %p484
    %p486 = scmp.ne.s32.totalorder %s474, %s475
    %p487 = scmp.eq.s32.totalorder %s87, 1
    %p488 = por %p486, %p487
    %p490 = scmp.ne.s32.totalorder %s475, %s489
    %p491 = scmp.eq.s32.totalorder %s87, 0
    %p492 = por %p490, %p491
    %s494 = sadd.s32 %s493, 1
    %p497 = scmp.eq.s32.totalorder %s81, 1
    %p498 = scmp.ne.s32.totalorder %s493, %s495
    %p499 = scmp.eq.s32.totalorder %s81, 0
    %p500 = por %p498, %p499
    %p501 = scmp.ne.s32.totalorder %s493, %s495
    %p502 = scmp.eq.s32.totalorder %s86, 1
    %p503 = por %p501, %p502
    %p504 = scmp.ne.s32.totalorder %s495, %s496
    %p505 = scmp.eq.s32.totalorder %s86, 0
    %p506 = por %p504, %p505
    %p507 = scmp.ne.s32.totalorder %s495, %s496
    %p508 = scmp.eq.s32.totalorder %s87, 1
    %p509 = por %p507, %p508
    %p511 = scmp.ne.s32.totalorder %s496, %s510
    %p512 = scmp.eq.s32.totalorder %s87, 0
    %p513 = por %p511, %p512
    %s515 = sadd.s32 %s514, 1
    %p518 = scmp.eq.s32.totalorder %s81, 1
    %p519 = scmp.ne.s32.totalorder %s514, %s516
    %p520 = scmp.eq.s32.totalorder %s81, 0
    %p521 = por %p519, %p520
    %p522 = scmp.ne.s32.totalorder %s514, %s516
    %p523 = scmp.eq.s32.totalorder %s86, 1
    %p524 = por %p522, %p523
    %p525 = scmp.ne.s32.totalorder %s516, %s517
    %p526 = scmp.eq.s32.totalorder %s86, 0
    %p527 = por %p525, %p526
    %p528 = scmp.ne.s32.totalorder %s516, %s517
    %p529 = scmp.eq.s32.totalorder %s87, 1
    %p530 = por %p528, %p529
    %p532 = scmp.ne.s32.totalorder %s517, %s531
    %p533 = scmp.eq.s32.totalorder %s87, 0
    %p534 = por %p532, %p533
    %s536 = sadd.s32 %s535, 1
    %p539 = scmp.eq.s32.totalorder %s81, 1
    %p540 = scmp.ne.s32.totalorder %s535, %s537
    %p541 = scmp.eq.s32.totalorder %s81, 0
    %p542 = por %p540, %p541
    %p543 = scmp.ne.s32.totalorder %s535, %s537
    %p544 = scmp.eq.s32.totalorder %s86, 1
    %p545 = por %p543, %p544
    %p546 = scmp.ne.s32.totalorder %s537, %s538
    %p547 = scmp.eq.s32.totalorder %s86, 0
    %p548 = por %p546, %p547
    %p549 = scmp.ne.s32.totalorder %s537, %s538
    %p550 = scmp.eq.s32.totalorder %s87, 1
    %p551 = por %p549, %p550
    %p553 = scmp.ne.s32.totalorder %s538, %s552
    %p554 = scmp.eq.s32.totalorder %s87, 0
    %p555 = por %p553, %p554
    %s557 = sadd.s32 %s556, 1
    %p560 = scmp.eq.s32.totalorder %s81, 1
    %p561 = scmp.ne.s32.totalorder %s556, %s558
    %p562 = scmp.eq.s32.totalorder %s81, 0
    %p563 = por %p561, %p562
    %p564 = scmp.ne.s32.totalorder %s556, %s558
    %p565 = scmp.eq.s32.totalorder %s86, 1
    %p566 = por %p564, %p565
    %p567 = scmp.ne.s32.totalorder %s558, %s559
    %p568 = scmp.eq.s32.totalorder %s86, 0
    %p569 = por %p567, %p568
    %p570 = scmp.ne.s32.totalorder %s558, %s559
    %p571 = scmp.eq.s32.totalorder %s87, 1
    %p572 = por %p570, %p571
    %p574 = scmp.ne.s32.totalorder %s559, %s573
    %p575 = scmp.eq.s32.totalorder %s87, 0
    %p576 = por %p574, %p575
    %s578 = sadd.s32 %s577, 1
    %p581 = scmp.eq.s32.totalorder %s81, 1
    %p582 = scmp.ne.s32.totalorder %s577, %s579
    %p583 = scmp.eq.s32.totalorder %s81, 0
    %p584 = por %p582, %p583
    %p585 = scmp.ne.s32.totalorder %s577, %s579
    %p586 = scmp.eq.s32.totalorder %s86, 1
    %p587 = por %p585, %p586
    %p588 = scmp.ne.s32.totalorder %s579, %s580
    %p589 = scmp.eq.s32.totalorder %s86, 0
    %p590 = por %p588, %p589
    %p591 = scmp.ne.s32.totalorder %s579, %s580
    %p592 = scmp.eq.s32.totalorder %s87, 1
    %p593 = por %p591, %p592
    %p595 = scmp.ne.s32.totalorder %s580, %s594
    %p596 = scmp.eq.s32.totalorder %s87, 0
    %p597 = por %p595, %p596
    %s599 = sadd.s32 %s598, 1
    %p602 = scmp.eq.s32.totalorder %s81, 1
    %p603 = scmp.ne.s32.totalorder %s598, %s600
    %p604 = scmp.eq.s32.totalorder %s81, 0
    %p605 = por %p603, %p604
    %p606 = scmp.ne.s32.totalorder %s598, %s600
    %p607 = scmp.eq.s32.totalorder %s86, 1
    %p608 = por %p606, %p607
    %p609 = scmp.ne.s32.totalorder %s600, %s601
    %p610 = scmp.eq.s32.totalorder %s86, 0
    %p611 = por %p609, %p610
    %p612 = scmp.ne.s32.totalorder %s600, %s601
    %p613 = scmp.eq.s32.totalorder %s87, 1
    %p614 = por %p612, %p613
    %p616 = scmp.ne.s32.totalorder %s601, %s615
    %p617 = scmp.eq.s32.totalorder %s87, 0
    %p618 = por %p616, %p617
    %s620 = sadd.s32 %s619, 1
    %p623 = scmp.eq.s32.totalorder %s81, 1
    %p624 = scmp.ne.s32.totalorder %s619, %s621
    %p625 = scmp.eq.s32.totalorder %s81, 0
    %p626 = por %p624, %p625
    %p627 = scmp.ne.s32.totalorder %s619, %s621
    %p628 = scmp.eq.s32.totalorder %s86, 1
    %p629 = por %p627, %p628
    %p630 = scmp.ne.s32.totalorder %s621, %s622
    %p631 = scmp.eq.s32.totalorder %s86, 0
    %p632 = por %p630, %p631
    %p633 = scmp.ne.s32.totalorder %s621, %s622
    %p634 = scmp.eq.s32.totalorder %s87, 1
    %p635 = por %p633, %p634
    %p637 = scmp.ne.s32.totalorder %s622, %s636
    %p638 = scmp.eq.s32.totalorder %s87, 0
    %p639 = por %p637, %p638
    %s641 = sadd.s32 %s640, 1
    %p644 = scmp.eq.s32.totalorder %s81, 1
    %p645 = scmp.ne.s32.totalorder %s640, %s642
    %p646 = scmp.eq.s32.totalorder %s81, 0
    %p647 = por %p645, %p646
    %p648 = scmp.ne.s32.totalorder %s640, %s642
    %p649 = scmp.eq.s32.totalorder %s86, 1
    %p650 = por %p648, %p649
    %p651 = scmp.ne.s32.totalorder %s642, %s643
    %p652 = scmp.eq.s32.totalorder %s86, 0
    %p653 = por %p651, %p652
    %p654 = scmp.ne.s32.totalorder %s642, %s643
    %p655 = scmp.eq.s32.totalorder %s87, 1
    %p656 = por %p654, %p655
    %p658 = scmp.ne.s32.totalorder %s643, %s657
    %p659 = scmp.eq.s32.totalorder %s87, 0
    %p660 = por %p658, %p659
    %s662 = sadd.s32 %s661, 1
    %p665 = scmp.eq.s32.totalorder %s81, 1
    %p666 = scmp.ne.s32.totalorder %s661, %s663
    %p667 = scmp.eq.s32.totalorder %s81, 0
    %p668 = por %p666, %p667
    %p669 = scmp.ne.s32.totalorder %s661, %s663
    %p670 = scmp.eq.s32.totalorder %s86, 1
    %p671 = por %p669, %p670
    %p672 = scmp.ne.s32.totalorder %s663, %s664
    %p673 = scmp.eq.s32.totalorder %s86, 0
    %p674 = por %p672, %p673
    %p675 = scmp.ne.s32.totalorder %s663, %s664
    %p676 = scmp.eq.s32.totalorder %s87, 1
    %p677 = por %p675, %p676
    %p679 = scmp.ne.s32.totalorder %s664, %s678
    %p680 = scmp.eq.s32.totalorder %s87, 0
    %p681 = por %p679, %p680
    %s683 = sadd.s32 %s682, 1
    %p686 = scmp.eq.s32.totalorder %s81, 1
    %p687 = scmp.ne.s32.totalorder %s682, %s684
    %p688 = scmp.eq.s32.totalorder %s81, 0
    %p689 = por %p687, %p688
    %p690 = scmp.ne.s32.totalorder %s682, %s684
    %p691 = scmp.eq.s32.totalorder %s86, 1
    %p692 = por %p690, %p691
    %p693 = scmp.ne.s32.totalorder %s684, %s685
    %p694 = scmp.eq.s32.totalorder %s86, 0
    %p695 = por %p693, %p694
    %p696 = scmp.ne.s32.totalorder %s684, %s685
    %p697 = scmp.eq.s32.totalorder %s87, 1
    %p698 = por %p696, %p697
    %p700 = scmp.ne.s32.totalorder %s685, %s699
    %p701 = scmp.eq.s32.totalorder %s87, 0
    %p702 = por %p700, %p701
    %s704 = sadd.s32 %s703, 1
    %p707 = scmp.eq.s32.totalorder %s81, 1
    %p708 = scmp.ne.s32.totalorder %s703, %s705
    %p709 = scmp.eq.s32.totalorder %s81, 0
    %p710 = por %p708, %p709
    %p711 = scmp.ne.s32.totalorder %s703, %s705
    %p712 = scmp.eq.s32.totalorder %s86, 1
    %p713 = por %p711, %p712
    %p714 = scmp.ne.s32.totalorder %s705, %s706
    %p715 = scmp.eq.s32.totalorder %s86, 0
    %p716 = por %p714, %p715
    %p717 = scmp.ne.s32.totalorder %s705, %s706
    %p718 = scmp.eq.s32.totalorder %s87, 1
    %p719 = por %p717, %p718
    %p721 = scmp.ne.s32.totalorder %s706, %s720
    %p722 = scmp.eq.s32.totalorder %s87, 0
    %p723 = por %p721, %p722
    %s725 = sadd.s32 %s724, 1
    %p728 = scmp.eq.s32.totalorder %s81, 1
    %p729 = scmp.ne.s32.totalorder %s724, %s726
    %p730 = scmp.eq.s32.totalorder %s81, 0
    %p731 = por %p729, %p730
    %p732 = scmp.ne.s32.totalorder %s724, %s726
    %p733 = scmp.eq.s32.totalorder %s86, 1
    %p734 = por %p732, %p733
    %p735 = scmp.ne.s32.totalorder %s726, %s727
    %p736 = scmp.eq.s32.totalorder %s86, 0
    %p737 = por %p735, %p736
    %p738 = scmp.ne.s32.totalorder %s726, %s727
    %p739 = scmp.eq.s32.totalorder %s87, 1
    %p740 = por %p738, %p739
    %p742 = scmp.ne.s32.totalorder %s727, %s741
    %p743 = scmp.eq.s32.totalorder %s87, 0
    %p744 = por %p742, %p743
    %s746 = sadd.s32 %s745, 1
    %p749 = scmp.eq.s32.totalorder %s81, 1
    %p750 = scmp.ne.s32.totalorder %s745, %s747
    %p751 = scmp.eq.s32.totalorder %s81, 0
    %p752 = por %p750, %p751
    %p753 = scmp.ne.s32.totalorder %s745, %s747
    %p754 = scmp.eq.s32.totalorder %s86, 1
    %p755 = por %p753, %p754
    %p756 = scmp.ne.s32.totalorder %s747, %s748
    %p757 = scmp.eq.s32.totalorder %s86, 0
    %p758 = por %p756, %p757
    %p759 = scmp.ne.s32.totalorder %s747, %s748
    %p760 = scmp.eq.s32.totalorder %s87, 1
    %p761 = por %p759, %p760
    %p763 = scmp.ne.s32.totalorder %s748, %s762
    %p764 = scmp.eq.s32.totalorder %s87, 0
    %p765 = por %p763, %p764
    %s767 = sadd.s32 %s766, 1
    %p770 = scmp.eq.s32.totalorder %s81, 1
    %p771 = scmp.ne.s32.totalorder %s766, %s768
    %p772 = scmp.eq.s32.totalorder %s81, 0
    %p773 = por %p771, %p772
    %p774 = scmp.ne.s32.totalorder %s766, %s768
    %p775 = scmp.eq.s32.totalorder %s86, 1
    %p776 = por %p774, %p775
    %p777 = scmp.ne.s32.totalorder %s768, %s769
    %p778 = scmp.eq.s32.totalorder %s86, 0
    %p779 = por %p777, %p778
    %p780 = scmp.ne.s32.totalorder %s768, %s769
    %p781 = scmp.eq.s32.totalorder %s87, 1
    %p782 = por %p780, %p781
    %p784 = scmp.ne.s32.totalorder %s769, %s783
    %p785 = scmp.eq.s32.totalorder %s87, 0
    %p786 = por %p784, %p785
    %s788 = sadd.s32 %s787, 1
    %p791 = scmp.eq.s32.totalorder %s81, 1
    %p792 = scmp.ne.s32.totalorder %s787, %s789
    %p793 = scmp.eq.s32.totalorder %s81, 0
    %p794 = por %p792, %p793
    %p795 = scmp.ne.s32.totalorder %s787, %s789
    %p796 = scmp.eq.s32.totalorder %s86, 1
    %p797 = por %p795, %p796
    %p798 = scmp.ne.s32.totalorder %s789, %s790
    %p799 = scmp.eq.s32.totalorder %s86, 0
    %p800 = por %p798, %p799
    %p801 = scmp.ne.s32.totalorder %s789, %s790
    %p802 = scmp.eq.s32.totalorder %s87, 1
    %p803 = por %p801, %p802
    %p805 = scmp.ne.s32.totalorder %s790, %s804
    %p806 = scmp.eq.s32.totalorder %s87, 0
    %p807 = por %p805, %p806
    %s809 = sadd.s32 %s808, 1
    %p812 = scmp.eq.s32.totalorder %s81, 1
    %p813 = scmp.ne.s32.totalorder %s808, %s810
    %p814 = scmp.eq.s32.totalorder %s81, 0
    %p815 = por %p813, %p814
    %p816 = scmp.ne.s32.totalorder %s808, %s810
    %p817 = scmp.eq.s32.totalorder %s86, 1
    %p818 = por %p816, %p817
    %p819 = scmp.ne.s32.totalorder %s810, %s811
    %p820 = scmp.eq.s32.totalorder %s86, 0
    %p821 = por %p819, %p820
    %p822 = scmp.ne.s32.totalorder %s810, %s811
    %p823 = scmp.eq.s32.totalorder %s87, 1
    %p824 = por %p822, %p823
    %p826 = scmp.ne.s32.totalorder %s811, %s825
    %p827 = scmp.eq.s32.totalorder %s87, 0
    %p828 = por %p826, %p827
    %s830 = sadd.s32 %s829, 1
    %p833 = scmp.eq.s32.totalorder %s81, 1
    %p834 = scmp.ne.s32.totalorder %s829, %s831
    %p835 = scmp.eq.s32.totalorder %s81, 0
    %p836 = por %p834, %p835
    %p837 = scmp.ne.s32.totalorder %s829, %s831
    %p838 = scmp.eq.s32.totalorder %s86, 1
    %p839 = por %p837, %p838
    %p840 = scmp.ne.s32.totalorder %s831, %s832
    %p841 = scmp.eq.s32.totalorder %s86, 0
    %p842 = por %p840, %p841
    %p843 = scmp.ne.s32.totalorder %s831, %s832
    %p844 = scmp.eq.s32.totalorder %s87, 1
    %p845 = por %p843, %p844
    %p847 = scmp.ne.s32.totalorder %s832, %s846
    %p848 = scmp.eq.s32.totalorder %s87, 0
    %p849 = por %p847, %p848
    %s851 = sadd.s32 %s850, 1
    %p854 = scmp.eq.s32.totalorder %s81, 1
    %p855 = scmp.ne.s32.totalorder %s850, %s852
    %p856 = scmp.eq.s32.totalorder %s81, 0
    %p857 = por %p855, %p856
    %p858 = scmp.ne.s32.totalorder %s850, %s852
    %p859 = scmp.eq.s32.totalorder %s86, 1
    %p860 = por %p858, %p859
    %p861 = scmp.ne.s32.totalorder %s852, %s853
    %p862 = scmp.eq.s32.totalorder %s86, 0
    %p863 = por %p861, %p862
    %p864 = scmp.ne.s32.totalorder %s852, %s853
    %p865 = scmp.eq.s32.totalorder %s87, 1
    %p866 = por %p864, %p865
    %p868 = scmp.ne.s32.totalorder %s853, %s867
    %p869 = scmp.eq.s32.totalorder %s87, 0
    %p870 = por %p868, %p869
    %s871 = ssub.s32 %s81, %s88
    %p872 = scmp.eq.s32.totalorder %s871, 0
    %s874 = sadd.s32 %s873, 1
    %s875 = scalar_select %p872, %s873, %s874
    %p878 = pneg %p872
    %p879 = scmp.eq.s32.totalorder %s81, 1
    %p880 = por %p878, %p879
    %p881 = scmp.ne.s32.totalorder %s873, %s876
    %p882 = scmp.eq.s32.totalorder %s81, 0
    %p883 = por %p881, %p882
    %p884 = scmp.ne.s32.totalorder %s873, %s876
    %p885 = scmp.eq.s32.totalorder %s86, 1
    %p886 = por %p884, %p885
    %p887 = scmp.ne.s32.totalorder %s876, %s877
    %p888 = scmp.eq.s32.totalorder %s86, 0
    %p889 = por %p887, %p888
    %p890 = scmp.ne.s32.totalorder %s876, %s877
    %p891 = scmp.eq.s32.totalorder %s87, 1
    %p892 = por %p890, %p891
    %p894 = scmp.ne.s32.totalorder %s877, %s893
    %p895 = scmp.eq.s32.totalorder %s87, 0
    %p896 = por %p894, %p895
    %p897 = scmp.le.s32.totalorder 1, %s81
    %p898 = scmp.lt.s32.totalorder %s81, 3
    %p899 = pnand %p897, %p898
    %p900 = pneg %p899
    // Predicated region
    $region9: #{unet_forward.1} parent=5 // pred_check
      _
    $region10: #{unet_forward.1} parent=5 // pred_check_branch
      %902 = sbr.rel (%p899) target = $region12
    $region11: #{unet_forward.1} parent=5 // pred_region
      %s903 = ssub.s32 %s81, 1
      // Predicated region
      $region13: #{unet_forward.1} parent=11 // pred_check
        %p904 = pneg %p128
      $region14: #{unet_forward.1} parent=11 // pred_check_branch
        %906 = sbr.rel (%p904) target = $region16
      $region15: #{unet_forward.1} parent=11 // pred_region
        _
      $region16: #{unet_forward.1} parent=11 // pred_fallthru
        _
      // Predicated region
      $region17: #{unet_forward.1} parent=11 // pred_check
        %p907 = pneg %p149
      $region18: #{unet_forward.1} parent=11 // pred_check_branch
        %909 = sbr.rel (%p907) target = $region20
      $region19: #{unet_forward.1} parent=11 // pred_region
        _
      $region20: #{unet_forward.1} parent=11 // pred_fallthru
        _
      // Predicated region
      $region21: #{unet_forward.1} parent=11 // pred_check
        %p910 = pneg %p170
      $region22: #{unet_forward.1} parent=11 // pred_check_branch
        %912 = sbr.rel (%p910) target = $region24
      $region23: #{unet_forward.1} parent=11 // pred_region
        _
      $region24: #{unet_forward.1} parent=11 // pred_fallthru
        _
      // Predicated region
      $region25: #{unet_forward.1} parent=11 // pred_check
        %p913 = pneg %p191
      $region26: #{unet_forward.1} parent=11 // pred_check_branch
        %915 = sbr.rel (%p913) target = $region28
      $region27: #{unet_forward.1} parent=11 // pred_region
        _
      $region28: #{unet_forward.1} parent=11 // pred_fallthru
        _
      // Predicated region
      $region29: #{unet_forward.1} parent=11 // pred_check
        %p916 = pneg %p212
      $region30: #{unet_forward.1} parent=11 // pred_check_branch
        %918 = sbr.rel (%p916) target = $region32
      $region31: #{unet_forward.1} parent=11 // pred_region
        _
      $region32: #{unet_forward.1} parent=11 // pred_fallthru
        _
      // Predicated region
      $region33: #{unet_forward.1} parent=11 // pred_check
        %p919 = pneg %p233
      $region34: #{unet_forward.1} parent=11 // pred_check_branch
        %921 = sbr.rel (%p919) target = $region36
      $region35: #{unet_forward.1} parent=11 // pred_region
        _
      $region36: #{unet_forward.1} parent=11 // pred_fallthru
        _
      // Predicated region
      $region37: #{unet_forward.1} parent=11 // pred_check
        %p922 = pneg %p254
      $region38: #{unet_forward.1} parent=11 // pred_check_branch
        %924 = sbr.rel (%p922) target = $region40
      $region39: #{unet_forward.1} parent=11 // pred_region
        _
      $region40: #{unet_forward.1} parent=11 // pred_fallthru
        _
      // Predicated region
      $region41: #{unet_forward.1} parent=11 // pred_check
        %p925 = pneg %p275
      $region42: #{unet_forward.1} parent=11 // pred_check_branch
        %927 = sbr.rel (%p925) target = $region44
      $region43: #{unet_forward.1} parent=11 // pred_region
        _
      $region44: #{unet_forward.1} parent=11 // pred_fallthru
        _
      // Predicated region
      $region45: #{unet_forward.1} parent=11 // pred_check
        %p928 = pneg %p296
      $region46: #{unet_forward.1} parent=11 // pred_check_branch
        %930 = sbr.rel (%p928) target = $region48
      $region47: #{unet_forward.1} parent=11 // pred_region
        _
      $region48: #{unet_forward.1} parent=11 // pred_fallthru
        _
      // Predicated region
      $region49: #{unet_forward.1} parent=11 // pred_check
        %p931 = pneg %p317
      $region50: #{unet_forward.1} parent=11 // pred_check_branch
        %933 = sbr.rel (%p931) target = $region52
      $region51: #{unet_forward.1} parent=11 // pred_region
        _
      $region52: #{unet_forward.1} parent=11 // pred_fallthru
        _
      // Predicated region
      $region53: #{unet_forward.1} parent=11 // pred_check
        %p934 = pneg %p338
      $region54: #{unet_forward.1} parent=11 // pred_check_branch
        %936 = sbr.rel (%p934) target = $region56
      $region55: #{unet_forward.1} parent=11 // pred_region
        _
      $region56: #{unet_forward.1} parent=11 // pred_fallthru
        _
      // Predicated region
      $region57: #{unet_forward.1} parent=11 // pred_check
        %p937 = pneg %p359
      $region58: #{unet_forward.1} parent=11 // pred_check_branch
        %939 = sbr.rel (%p937) target = $region60
      $region59: #{unet_forward.1} parent=11 // pred_region
        _
      $region60: #{unet_forward.1} parent=11 // pred_fallthru
        _
      // Predicated region
      $region61: #{unet_forward.1} parent=11 // pred_check
        %p940 = pneg %p380
      $region62: #{unet_forward.1} parent=11 // pred_check_branch
        %942 = sbr.rel (%p940) target = $region64
      $region63: #{unet_forward.1} parent=11 // pred_region
        _
      $region64: #{unet_forward.1} parent=11 // pred_fallthru
        _
      // Predicated region
      $region65: #{unet_forward.1} parent=11 // pred_check
        %p943 = pneg %p401
      $region66: #{unet_forward.1} parent=11 // pred_check_branch
        %945 = sbr.rel (%p943) target = $region68
      $region67: #{unet_forward.1} parent=11 // pred_region
        _
      $region68: #{unet_forward.1} parent=11 // pred_fallthru
        _
      // Predicated region
      $region69: #{unet_forward.1} parent=11 // pred_check
        %p946 = pneg %p422
      $region70: #{unet_forward.1} parent=11 // pred_check_branch
        %948 = sbr.rel (%p946) target = $region72
      $region71: #{unet_forward.1} parent=11 // pred_region
        _
      $region72: #{unet_forward.1} parent=11 // pred_fallthru
        _
      // Predicated region
      $region73: #{unet_forward.1} parent=11 // pred_check
        %p949 = pneg %p443
      $region74: #{unet_forward.1} parent=11 // pred_check_branch
        %951 = sbr.rel (%p949) target = $region76
      $region75: #{unet_forward.1} parent=11 // pred_region
        _
      $region76: #{unet_forward.1} parent=11 // pred_fallthru
        _
      // Predicated region
      $region77: #{unet_forward.1} parent=11 // pred_check
        %p952 = pneg %p464
      $region78: #{unet_forward.1} parent=11 // pred_check_branch
        %954 = sbr.rel (%p952) target = $region80
      $region79: #{unet_forward.1} parent=11 // pred_region
        _
      $region80: #{unet_forward.1} parent=11 // pred_fallthru
        _
      // Predicated region
      $region81: #{unet_forward.1} parent=11 // pred_check
        %p955 = pneg %p485
      $region82: #{unet_forward.1} parent=11 // pred_check_branch
        %957 = sbr.rel (%p955) target = $region84
      $region83: #{unet_forward.1} parent=11 // pred_region
        _
      $region84: #{unet_forward.1} parent=11 // pred_fallthru
        _
      // Predicated region
      $region85: #{unet_forward.1} parent=11 // pred_check
        %p958 = pneg %p506
      $region86: #{unet_forward.1} parent=11 // pred_check_branch
        %960 = sbr.rel (%p958) target = $region88
      $region87: #{unet_forward.1} parent=11 // pred_region
        _
      $region88: #{unet_forward.1} parent=11 // pred_fallthru
        _
      // Predicated region
      $region89: #{unet_forward.1} parent=11 // pred_check
        %p961 = pneg %p527
      $region90: #{unet_forward.1} parent=11 // pred_check_branch
        %963 = sbr.rel (%p961) target = $region92
      $region91: #{unet_forward.1} parent=11 // pred_region
        _
      $region92: #{unet_forward.1} parent=11 // pred_fallthru
        _
      // Predicated region
      $region93: #{unet_forward.1} parent=11 // pred_check
        %p964 = pneg %p548
      $region94: #{unet_forward.1} parent=11 // pred_check_branch
        %966 = sbr.rel (%p964) target = $region96
      $region95: #{unet_forward.1} parent=11 // pred_region
        _
      $region96: #{unet_forward.1} parent=11 // pred_fallthru
        _
      // Predicated region
      $region97: #{unet_forward.1} parent=11 // pred_check
        %p967 = pneg %p569
      $region98: #{unet_forward.1} parent=11 // pred_check_branch
        %969 = sbr.rel (%p967) target = $region100
      $region99: #{unet_forward.1} parent=11 // pred_region
        _
      $region100: #{unet_forward.1} parent=11 // pred_fallthru
        _
      // Predicated region
      $region101: #{unet_forward.1} parent=11 // pred_check
        %p970 = pneg %p590
      $region102: #{unet_forward.1} parent=11 // pred_check_branch
        %972 = sbr.rel (%p970) target = $region104
      $region103: #{unet_forward.1} parent=11 // pred_region
        _
      $region104: #{unet_forward.1} parent=11 // pred_fallthru
        _
      // Predicated region
      $region105: #{unet_forward.1} parent=11 // pred_check
        %p973 = pneg %p611
      $region106: #{unet_forward.1} parent=11 // pred_check_branch
        %975 = sbr.rel (%p973) target = $region108
      $region107: #{unet_forward.1} parent=11 // pred_region
        _
      $region108: #{unet_forward.1} parent=11 // pred_fallthru
        _
      // Predicated region
      $region109: #{unet_forward.1} parent=11 // pred_check
        %p976 = pneg %p632
      $region110: #{unet_forward.1} parent=11 // pred_check_branch
        %978 = sbr.rel (%p976) target = $region112
      $region111: #{unet_forward.1} parent=11 // pred_region
        _
      $region112: #{unet_forward.1} parent=11 // pred_fallthru
        _
      // Predicated region
      $region113: #{unet_forward.1} parent=11 // pred_check
        %p979 = pneg %p653
      $region114: #{unet_forward.1} parent=11 // pred_check_branch
        %981 = sbr.rel (%p979) target = $region116
      $region115: #{unet_forward.1} parent=11 // pred_region
        _
      $region116: #{unet_forward.1} parent=11 // pred_fallthru
        _
      // Predicated region
      $region117: #{unet_forward.1} parent=11 // pred_check
        %p982 = pneg %p674
      $region118: #{unet_forward.1} parent=11 // pred_check_branch
        %984 = sbr.rel (%p982) target = $region120
      $region119: #{unet_forward.1} parent=11 // pred_region
        _
      $region120: #{unet_forward.1} parent=11 // pred_fallthru
        _
      // Predicated region
      $region121: #{unet_forward.1} parent=11 // pred_check
        %p985 = pneg %p695
      $region122: #{unet_forward.1} parent=11 // pred_check_branch
        %987 = sbr.rel (%p985) target = $region124
      $region123: #{unet_forward.1} parent=11 // pred_region
        _
      $region124: #{unet_forward.1} parent=11 // pred_fallthru
        _
      // Predicated region
      $region125: #{unet_forward.1} parent=11 // pred_check
        %p988 = pneg %p716
      $region126: #{unet_forward.1} parent=11 // pred_check_branch
        %990 = sbr.rel (%p988) target = $region128
      $region127: #{unet_forward.1} parent=11 // pred_region
        _
      $region128: #{unet_forward.1} parent=11 // pred_fallthru
        _
      // Predicated region
      $region129: #{unet_forward.1} parent=11 // pred_check
        %p991 = pneg %p737
      $region130: #{unet_forward.1} parent=11 // pred_check_branch
        %993 = sbr.rel (%p991) target = $region132
      $region131: #{unet_forward.1} parent=11 // pred_region
        _
      $region132: #{unet_forward.1} parent=11 // pred_fallthru
        _
      // Predicated region
      $region133: #{unet_forward.1} parent=11 // pred_check
        %p994 = pneg %p758
      $region134: #{unet_forward.1} parent=11 // pred_check_branch
        %996 = sbr.rel (%p994) target = $region136
      $region135: #{unet_forward.1} parent=11 // pred_region
        _
      $region136: #{unet_forward.1} parent=11 // pred_fallthru
        _
      // Predicated region
      $region137: #{unet_forward.1} parent=11 // pred_check
        %p997 = pneg %p779
      $region138: #{unet_forward.1} parent=11 // pred_check_branch
        %999 = sbr.rel (%p997) target = $region140
      $region139: #{unet_forward.1} parent=11 // pred_region
        _
      $region140: #{unet_forward.1} parent=11 // pred_fallthru
        _
      // Predicated region
      $region141: #{unet_forward.1} parent=11 // pred_check
        %p1000 = pneg %p800
      $region142: #{unet_forward.1} parent=11 // pred_check_branch
        %1002 = sbr.rel (%p1000) target = $region144
      $region143: #{unet_forward.1} parent=11 // pred_region
        _
      $region144: #{unet_forward.1} parent=11 // pred_fallthru
        _
      // Predicated region
      $region145: #{unet_forward.1} parent=11 // pred_check
        %p1003 = pneg %p821
      $region146: #{unet_forward.1} parent=11 // pred_check_branch
        %1005 = sbr.rel (%p1003) target = $region148
      $region147: #{unet_forward.1} parent=11 // pred_region
        _
      $region148: #{unet_forward.1} parent=11 // pred_fallthru
        _
      // Predicated region
      $region149: #{unet_forward.1} parent=11 // pred_check
        %p1006 = pneg %p842
      $region150: #{unet_forward.1} parent=11 // pred_check_branch
        %1008 = sbr.rel (%p1006) target = $region152
      $region151: #{unet_forward.1} parent=11 // pred_region
        _
      $region152: #{unet_forward.1} parent=11 // pred_fallthru
        _
      // Predicated region
      $region153: #{unet_forward.1} parent=11 // pred_check
        %p1009 = pneg %p863
      $region154: #{unet_forward.1} parent=11 // pred_check_branch
        %1011 = sbr.rel (%p1009) target = $region156
      $region155: #{unet_forward.1} parent=11 // pred_region
        _
      $region156: #{unet_forward.1} parent=11 // pred_fallthru
        _
    $region12: #{unet_forward.1} parent=5 // pred_fallthru
      _
    %p1012 = scmp.lt.s32.totalorder %s81, 2
    // Predicated region
    $region157: #{unet_forward.1} parent=5 // pred_check
      %p1013 = pneg %p1012
    $region158: #{unet_forward.1} parent=5 // pred_check_branch
      %1015 = sbr.rel (%p1013) target = $region160
    $region159: #{unet_forward.1} parent=5 // pred_region
      // Predicated region
      $region161: #{unet_forward.1} parent=159 // pred_check
        %p1016 = pneg %p101
      $region162: #{unet_forward.1} parent=159 // pred_check_branch
        %1018 = sbr.rel (%p1016) target = $region164
      $region163: #{unet_forward.1} parent=159 // pred_region
        %p1019 = scmp.lt.s32.totalorder %s81, 1
        %s1020 = scalar_select %p1019, %s81, 1
        %s1021 = smul.addr %s1020, 8
        %s1022 = scalar_lea.vmem %s1, %s1021
      $region164: #{unet_forward.1} parent=159 // pred_fallthru
        _
    $region160: #{unet_forward.1} parent=5 // pred_fallthru
      _
    %p1023 = scmp.le.s32.totalorder 1, %s81
    %p1024 = scmp.lt.s32.totalorder %s81, 3
    %p1025 = pnand %p1023, %p1024
    %p1026 = pneg %p1025
    // Predicated region
    $region165: #{unet_forward.1} parent=5 // pred_check
      _
    $region166: #{unet_forward.1} parent=5 // pred_check_branch
      %1028 = sbr.rel (%p1025) target = $region168
    $region167: #{unet_forward.1} parent=5 // pred_region
      %s1029 = ssub.s32 %s81, 1
      %p1030 = scmp.lt.s32.totalorder %s86, 1
      %s1031 = scalar_select %p1030, %s86, 1
      %s1032 = smul.addr %s1031, 8
      %s1033 = scalar_lea.vmem %s1, %s1032
      %p1034 = pneg %p107
      %p1035 = pneg %p104
      %p1036 = pneg %p128
      %p1037 = pneg %p125
      %p1038 = pneg %p149
      %p1039 = pneg %p146
      %p1040 = pneg %p170
      %p1041 = pneg %p167
      %p1042 = pneg %p191
      %p1043 = pneg %p188
      %p1044 = pneg %p212
      %p1045 = pneg %p209
      %p1046 = pneg %p233
      %p1047 = pneg %p230
      %p1048 = pneg %p254
      %p1049 = pneg %p251
      %p1050 = pneg %p275
      %p1051 = pneg %p272
      %p1052 = pneg %p296
      %p1053 = pneg %p293
      %p1054 = pneg %p317
      %p1055 = pneg %p314
      %p1056 = pneg %p338
      %p1057 = pneg %p335
      %p1058 = pneg %p359
      %p1059 = pneg %p356
      %p1060 = pneg %p380
      %p1061 = pneg %p377
      %p1062 = pneg %p401
      %p1063 = pneg %p398
      %p1064 = pneg %p422
      %p1065 = pneg %p419
      %p1066 = pneg %p443
      %p1067 = pneg %p440
      %p1068 = pneg %p464
      %p1069 = pneg %p461
      %p1070 = pneg %p485
      %p1071 = pneg %p482
      %p1072 = pneg %p506
      %p1073 = pneg %p503
      %p1074 = pneg %p527
      %p1075 = pneg %p524
      %p1076 = pneg %p548
      %p1077 = pneg %p545
      %p1078 = pneg %p569
      %p1079 = pneg %p566
      %p1080 = pneg %p590
      %p1081 = pneg %p587
      %p1082 = pneg %p611
      %p1083 = pneg %p608
      %p1084 = pneg %p632
      %p1085 = pneg %p629
      %p1086 = pneg %p653
      %p1087 = pneg %p650
      %p1088 = pneg %p674
      %p1089 = pneg %p671
      %p1090 = pneg %p695
      %p1091 = pneg %p692
      %p1092 = pneg %p716
      %p1093 = pneg %p713
      %p1094 = pneg %p737
      %p1095 = pneg %p734
      %p1096 = pneg %p758
      %p1097 = pneg %p755
      %p1098 = pneg %p779
      %p1099 = pneg %p776
      %p1100 = pneg %p800
      %p1101 = pneg %p797
      %p1102 = pneg %p821
      %p1103 = pneg %p818
      %p1104 = pneg %p842
      %p1105 = pneg %p839
      %p1106 = pneg %p863
      %p1107 = pneg %p860
      %p1108 = pneg %p889
      %p1109 = pneg %p886
      %p1110 = scmp.lt.s32.totalorder %s86, 1
      %s1111 = scalar_select %p1110, %s86, 1
      %s1112 = smul.addr %s1111, 8
      %s1113 = scalar_lea.vmem %s75, %s1112
      %p1114 = scmp.lt.s32.totalorder %s86, 1
      %s1115 = scalar_select %p1114, %s86, 1
      %s1116 = smul.addr %s1115, 8
      %s1117 = scalar_lea.vmem %s1, %s1116
      %p1118 = scmp.lt.s32.totalorder %s86, 1
      %s1119 = scalar_select %p1118, %s86, 1
      %s1120 = smul.addr %s1119, 8
      %s1121 = scalar_lea.vmem %s75, %s1120
      %v1122 = vld [vmem:[%s1117] sm:$0xff]
      %1123 = vxpose.xlu0.b32.start [1/16] %v1122, 128
      %1124 = vxpose.xlu0.b32.cont [2/16] 0.0, 128
      %1125 = vxpose.xlu0.b32.cont [3/16] 0.0, 128
      %1126 = vxpose.xlu0.b32.cont [4/16] 0.0, 128
      %1127 = vxpose.xlu0.b32.cont [5/16] 0.0, 128
      %1128 = vxpose.xlu0.b32.cont [6/16] 0.0, 128
      %1129 = vxpose.xlu0.b32.cont [7/16] 0.0, 128
      %1130 = vxpose.xlu0.b32.cont [8/16] 0.0, 128
      %1131 = vxpose.xlu0.b32.cont [9/16] 0.0, 128
      %1132 = vxpose.xlu0.b32.cont [10/16] 0.0, 128
      %1133 = vxpose.xlu0.b32.cont [11/16] 0.0, 128
      %1134 = vxpose.xlu0.b32.cont [12/16] 0.0, 128
      %1135 = vxpose.xlu0.b32.cont [13/16] 0.0, 128
      %1136 = vxpose.xlu0.b32.cont [14/16] 0.0, 128
      %1137 = vxpose.xlu0.b32.cont [15/16] 0.0, 128
      %1138 = vxpose.xlu0.b32.end [16/16] 0.0, 128
      %v1139 = vpop.trf.xlu0
      %v1140 = vpop.trf.xlu0
      %v1141 = vpop.trf.xlu0
      %v1142 = vpop.trf.xlu0
      %v1143 = vpop.trf.xlu0
      %v1144 = vpop.trf.xlu0
      %v1145 = vpop.trf.xlu0
      %v1146 = vpop.trf.xlu0
      %v1147 = vpop.trf.xlu0
      %v1148 = vpop.trf.xlu0
      %v1149 = vpop.trf.xlu0
      %v1150 = vpop.trf.xlu0
      %v1151 = vpop.trf.xlu0
      %v1152 = vpop.trf.xlu0
      %v1153 = vpop.trf.xlu0
      %v1154 = vpop.trf.xlu0
      %vm1163 = vcmask 1041408
      %v1164 = vrot.slane %v1139, 6
      %v1165 = vrot.slane %v1140, 6
      %v1166 = vsel %vm1163, %v1164, %v1165
      %v1167 = vrot.slane %v1141, 6
      %v1168 = vsel %vm1163, %v1165, %v1167
      %v1169 = vrot.slane %v1142, 6
      %v1170 = vsel %vm1163, %v1167, %v1169
      %v1171 = vrot.slane %v1143, 6
      %v1172 = vsel %vm1163, %v1169, %v1171
      %v1173 = vrot.slane %v1144, 6
      %v1174 = vsel %vm1163, %v1171, %v1173
      %v1175 = vrot.slane %v1145, 6
      %v1176 = vsel %vm1163, %v1173, %v1175
      %v1177 = vrot.slane %v1146, 6
      %v1178 = vsel %vm1163, %v1175, %v1177
      %v1187 = vsel %vm1163, 0.0, %v1164
      %vm1188 = vcmask 1040384
      %v1189 = vrot.slane %v1139, 7
      %v1190 = vrot.slane %v1140, 7
      %v1191 = vsel %vm1188, %v1189, %v1190
      %v1192 = vrot.slane %v1141, 7
      %v1193 = vsel %vm1188, %v1190, %v1192
      %v1194 = vrot.slane %v1142, 7
      %v1195 = vsel %vm1188, %v1192, %v1194
      %v1196 = vrot.slane %v1143, 7
      %v1197 = vsel %vm1188, %v1194, %v1196
      %v1198 = vrot.slane %v1144, 7
      %v1199 = vsel %vm1188, %v1196, %v1198
      %v1200 = vrot.slane %v1145, 7
      %v1201 = vsel %vm1188, %v1198, %v1200
      %v1202 = vrot.slane %v1146, 7
      %v1203 = vsel %vm1188, %v1200, %v1202
      %v1205 = vsel %vm1188, 0.0, %v1189
      %vm1206 = vcmask 1046528
      %v1207 = vrot.slane %v1139, 1
      %v1208 = vrot.slane %v1140, 1
      %v1209 = vsel %vm1206, %v1207, %v1208
      %v1210 = vrot.slane %v1141, 1
      %v1211 = vsel %vm1206, %v1208, %v1210
      %v1212 = vrot.slane %v1142, 1
      %v1213 = vsel %vm1206, %v1210, %v1212
      %v1214 = vrot.slane %v1143, 1
      %v1215 = vsel %vm1206, %v1212, %v1214
      %v1216 = vrot.slane %v1144, 1
      %v1217 = vsel %vm1206, %v1214, %v1216
      %v1218 = vrot.slane %v1145, 1
      %v1219 = vsel %vm1206, %v1216, %v1218
      %v1220 = vrot.slane %v1146, 1
      %v1221 = vsel %vm1206, %v1218, %v1220
      %v1223 = vsel %vm1206, %v1220, 0.0
      %vm1224 = vcmask 1045504
      %v1225 = vrot.slane %v1139, 2
      %v1226 = vrot.slane %v1140, 2
      %v1227 = vsel %vm1224, %v1225, %v1226
      %v1228 = vrot.slane %v1141, 2
      %v1229 = vsel %vm1224, %v1226, %v1228
      %v1230 = vrot.slane %v1142, 2
      %v1231 = vsel %vm1224, %v1228, %v1230
      %v1232 = vrot.slane %v1143, 2
      %v1233 = vsel %vm1224, %v1230, %v1232
      %v1234 = vrot.slane %v1144, 2
      %v1235 = vsel %vm1224, %v1232, %v1234
      %v1236 = vrot.slane %v1145, 2
      %v1237 = vsel %vm1224, %v1234, %v1236
      %v1238 = vrot.slane %v1146, 2
      %v1239 = vsel %vm1224, %v1236, %v1238
      %v1241 = vsel %vm1224, %v1238, 0.0
      %1243 = vrot.lane.b32.xlu0 %v1205, 8
      %v1244 = vpop.permute.xlu0 %1243
      %1245 = vrot.lane.b32.xlu0 %v1191, 8
      %v1246 = vpop.permute.xlu0 %1245
      %1247 = vrot.lane.b32.xlu0 %v1193, 8
      %v1248 = vpop.permute.xlu0 %1247
      %1249 = vrot.lane.b32.xlu0 %v1195, 8
      %v1250 = vpop.permute.xlu0 %1249
      %1251 = vrot.lane.b32.xlu0 %v1197, 8
      %v1252 = vpop.permute.xlu0 %1251
      %1253 = vrot.lane.b32.xlu0 %v1199, 8
      %v1254 = vpop.permute.xlu0 %1253
      %1255 = vrot.lane.b32.xlu0 %v1201, 8
      %v1256 = vpop.permute.xlu0 %1255
      %1257 = vrot.lane.b32.xlu0 %v1203, 8
      %v1258 = vpop.permute.xlu0 %1257
      %1267 = vrot.lane.b32.xlu0 %v1139, 16
      %v1268 = vpop.permute.xlu0 %1267
      %1269 = vrot.lane.b32.xlu0 %v1140, 16
      %v1270 = vpop.permute.xlu0 %1269
      %1271 = vrot.lane.b32.xlu0 %v1141, 16
      %v1272 = vpop.permute.xlu0 %1271
      %1273 = vrot.lane.b32.xlu0 %v1142, 16
      %v1274 = vpop.permute.xlu0 %1273
      %1275 = vrot.lane.b32.xlu0 %v1143, 16
      %v1276 = vpop.permute.xlu0 %1275
      %1277 = vrot.lane.b32.xlu0 %v1144, 16
      %v1278 = vpop.permute.xlu0 %1277
      %1279 = vrot.lane.b32.xlu0 %v1145, 16
      %v1280 = vpop.permute.xlu0 %1279
      %1281 = vrot.lane.b32.xlu0 %v1146, 16
      %v1282 = vpop.permute.xlu0 %1281
      %1292 = vrot.lane.b32.xlu0 %v1209, 24
      %v1293 = vpop.permute.xlu0 %1292
      %1294 = vrot.lane.b32.xlu0 %v1211, 24
      %v1295 = vpop.permute.xlu0 %1294
      %1296 = vrot.lane.b32.xlu0 %v1213, 24
      %v1297 = vpop.permute.xlu0 %1296
      %1298 = vrot.lane.b32.xlu0 %v1215, 24
      %v1299 = vpop.permute.xlu0 %1298
      %1300 = vrot.lane.b32.xlu0 %v1217, 24
      %v1301 = vpop.permute.xlu0 %1300
      %1302 = vrot.lane.b32.xlu0 %v1219, 24
      %v1303 = vpop.permute.xlu0 %1302
      %1304 = vrot.lane.b32.xlu0 %v1221, 24
      %v1305 = vpop.permute.xlu0 %1304
      %1306 = vrot.lane.b32.xlu0 %v1223, 24
      %v1307 = vpop.permute.xlu0 %1306
      %1317 = vrot.lane.b32.xlu0 %v1227, 32
      %v1318 = vpop.permute.xlu0 %1317
      %1319 = vrot.lane.b32.xlu0 %v1229, 32
      %v1320 = vpop.permute.xlu0 %1319
      %1321 = vrot.lane.b32.xlu0 %v1231, 32
      %v1322 = vpop.permute.xlu0 %1321
      %1323 = vrot.lane.b32.xlu0 %v1233, 32
      %v1324 = vpop.permute.xlu0 %1323
      %1325 = vrot.lane.b32.xlu0 %v1235, 32
      %v1326 = vpop.permute.xlu0 %1325
      %1327 = vrot.lane.b32.xlu0 %v1237, 32
      %v1328 = vpop.permute.xlu0 %1327
      %1329 = vrot.lane.b32.xlu0 %v1239, 32
      %v1330 = vpop.permute.xlu0 %1329
      %1331 = vrot.lane.b32.xlu0 %v1241, 32
      %v1332 = vpop.permute.xlu0 %1331
      %vm1341 = vcmask 64512
      %v1342 = vsel %vm1341, %v1187, %v1244
      %v1343 = vsel %vm1341, %v1166, %v1246
      %v1344 = vsel %vm1341, %v1168, %v1248
      %v1345 = vsel %vm1341, %v1170, %v1250
      %v1346 = vsel %vm1341, %v1172, %v1252
      %v1347 = vsel %vm1341, %v1174, %v1254
      %v1348 = vsel %vm1341, %v1176, %v1256
      %v1349 = vsel %vm1341, %v1178, %v1258
      %vm1350 = vcmask 130048
      %v1351 = vsel %vm1350, %v1342, %v1268
      %v1352 = vsel %vm1350, %v1343, %v1270
      %v1353 = vsel %vm1350, %v1344, %v1272
      %v1354 = vsel %vm1350, %v1345, %v1274
      %v1355 = vsel %vm1350, %v1346, %v1276
      %v1356 = vsel %vm1350, %v1347, %v1278
      %v1357 = vsel %vm1350, %v1348, %v1280
      %v1358 = vsel %vm1350, %v1349, %v1282
      %vm1359 = vcmask 195584
      %v1360 = vsel %vm1359, %v1351, %v1293
      %v1361 = vsel %vm1359, %v1352, %v1295
      %v1362 = vsel %vm1359, %v1353, %v1297
      %v1363 = vsel %vm1359, %v1354, %v1299
      %v1364 = vsel %vm1359, %v1355, %v1301
      %v1365 = vsel %vm1359, %v1356, %v1303
      %v1366 = vsel %vm1359, %v1357, %v1305
      %v1367 = vsel %vm1359, %v1358, %v1307
      %vm1368 = vcmask 261120
      %v1369 = vsel %vm1368, %v1360, %v1318
      %v1370 = vsel %vm1368, %v1361, %v1320
      %v1371 = vsel %vm1368, %v1362, %v1322
      %v1372 = vsel %vm1368, %v1363, %v1324
      %v1373 = vsel %vm1368, %v1364, %v1326
      %v1374 = vsel %vm1368, %v1365, %v1328
      %v1375 = vsel %vm1368, %v1366, %v1330
      %v1376 = vsel %vm1368, %v1367, %v1332
      %v1377 = vld [vmem:[%s3] sm:$0xff]
      %v1378 = vld [vmem:[%s3 + $0x8] sm:$0xff]
      %v1379 = vld [vmem:[%s3 + $0x10] sm:$0xff]
      %v1380 = vld [vmem:[%s3 + $0x18] sm:$0xff]
      %v1381 = vld [vmem:[%s3 + $0x20] sm:$0xff]
      %v1382 = vld [vmem:[%s5] sm:$0x1]
      %v1384 = vlaneseq
      %v1385 = vshrl.u32 %v1384, 7
      %v1386 = vsub.s32 0, %v1385
      %v1387 = vrot.slane %v1382, %v1386
      %vm1389 = vcmask 326656
      %v1391 = vsel %vm1389, %v1369, 0
      %v1394 = vsel %vm1389, %v1370, 0
      %v1397 = vsel %vm1389, %v1371, 0
      %v1400 = vsel %vm1389, %v1372, 0
      %v1403 = vsel %vm1389, %v1373, 0
      %v1406 = vsel %vm1389, %v1374, 0
      %v1409 = vsel %vm1389, %v1375, 0
      %v1412 = vsel %vm1389, %v1376, 0
      %1414 = vmatprep.subr.mxu0 0.0
      %1415 = vmatpush1.msra.mxu0 0.0
      %1416 = vmatprep.subr.mxu0 0.0
      %1417 = vmatpush1.msra.mxu0 0.0
      %1418 = vmatprep.subr.mxu0 0.0
      %1419 = vmatpush1.msra.mxu0 0.0
      %1420 = vmatprep.subr.mxu0 0.0
      %1421 = vmatpush1.msra.mxu0 0.0
      %1422 = vmatprep.subr.mxu0 0.0
      %1423 = vmatpush1.msra.mxu0 0.0
      %1424 = vmatprep.subr.mxu0 0.0
      %1425 = vmatpush1.msra.mxu0 0.0
      %1426 = vmatprep.subr.mxu0 0.0
      %1427 = vmatpush1.msra.mxu0 0.0
      %1428 = vmatprep.subr.mxu0 0.0
      %1429 = vmatpush1.msra.mxu0 0.0
      %1430 = vmatprep.subr.mxu0 0.0
      %1431 = vmatpush1.msra.mxu0 0.0
      %1432 = vmatprep.subr.mxu0 0.0
      %1433 = vmatpush1.msra.mxu0 0.0
      %1434 = vmatprep.subr.mxu0 0.0
      %1435 = vmatpush1.msra.mxu0 0.0
      %1436 = vmatprep.subr.mxu0 0.0
      %1437 = vmatpush1.msra.mxu0 %v1381
      %1438 = vmatprep.subr.mxu0 0.0
      %1439 = vmatpush1.msra.mxu0 %v1380
      %1440 = vmatprep.subr.mxu0 0.0
      %1441 = vmatpush1.msra.mxu0 %v1379
      %1442 = vmatprep.subr.mxu0 0.0
      %1443 = vmatpush1.msra.mxu0 %v1378
      %1444 = vmatprep.subr.mxu0 0.0
      %1445 = vmatpush1.msra.mxu0 %v1377
      %1446 = vmatprep.subr.mxu0 0.0
      %1447 = vmatpush2.msra.mxu0 0.0
      %1448 = vmatprep.subr.mxu0 0.0
      %1449 = vmatpush2.msra.mxu0 0.0
      %1450 = vmatprep.subr.mxu0 0.0
      %1451 = vmatpush2.msra.mxu0 0.0
      %1452 = vmatprep.subr.mxu0 0.0
      %1453 = vmatpush2.msra.mxu0 0.0
      %1454 = vmatprep.subr.mxu0 0.0
      %1455 = vmatpush2.msra.mxu0 0.0
      %1456 = vmatprep.subr.mxu0 0.0
      %1457 = vmatpush2.msra.mxu0 0.0
      %1458 = vmatprep.subr.mxu0 0.0
      %1459 = vmatpush2.msra.mxu0 0.0
      %1460 = vmatprep.subr.mxu0 0.0
      %1461 = vmatpush2.msra.mxu0 0.0
      %1462 = vmatprep.subr.mxu0 0.0
      %1463 = vmatpush2.msra.mxu0 0.0
      %1464 = vmatprep.subr.mxu0 0.0
      %1465 = vmatpush2.msra.mxu0 0.0
      %1466 = vmatprep.subr.mxu0 0.0
      %1467 = vmatpush2.msra.mxu0 0.0
      %1468 = vmatprep.subr.mxu0 0.0
      %1469 = vmatpush2.msra.mxu0 0.0
      %1470 = vmatprep.subr.mxu0 0.0
      %1471 = vmatpush2.msra.mxu0 0.0
      %1472 = vmatprep.subr.mxu0 0.0
      %1473 = vmatpush2.msra.mxu0 0.0
      %1474 = vmatprep.subr.mxu0 0.0
      %1475 = vmatpush2.msra.mxu0 0.0
      %1476 = vmatprep.subr.mxu0 0.0
      %1477 = vmatpush2.msra.mxu0 0.0
      %1478 = vmatprep.mubr.f32.mxu0 0.0
      %1479 = vmatmul.mubr.f32.gmra.mxu0 %v1391
      %v1480 = vpop.f32.mrf.mxu0
      %v1481 = vadd.f32 %v1387, %v1480
      %v1482 = vpop.f32.mrf.mxu0
      %1483 = vmatprep.mubr.f32.mxu0 0.0
      %1484 = vmatmul.mubr.f32.gmra.mxu0 %v1394
      %v1485 = vpop.f32.mrf.mxu0
      %v1486 = vadd.f32 %v1387, %v1485
      %v1487 = vpop.f32.mrf.mxu0
      %1488 = vmatprep.mubr.f32.mxu0 0.0
      %1489 = vmatmul.mubr.f32.gmra.mxu0 %v1397
      %v1490 = vpop.f32.mrf.mxu0
      %v1491 = vadd.f32 %v1387, %v1490
      %v1492 = vpop.f32.mrf.mxu0
      %1493 = vmatprep.mubr.f32.mxu0 0.0
      %1494 = vmatmul.mubr.f32.gmra.mxu0 %v1400
      %v1495 = vpop.f32.mrf.mxu0
      %v1496 = vadd.f32 %v1387, %v1495
      %v1497 = vpop.f32.mrf.mxu0
      %1498 = vmatprep.mubr.f32.mxu0 0.0
      %1499 = vmatmul.mubr.f32.gmra.mxu0 %v1403
      %v1500 = vpop.f32.mrf.mxu0
      %v1501 = vadd.f32 %v1387, %v1500
      %v1502 = vpop.f32.mrf.mxu0
      %1503 = vmatprep.mubr.f32.mxu0 0.0
      %1504 = vmatmul.mubr.f32.gmra.mxu0 %v1406
      %v1505 = vpop.f32.mrf.mxu0
      %v1506 = vadd.f32 %v1387, %v1505
      %v1507 = vpop.f32.mrf.mxu0
      %1508 = vmatprep.mubr.f32.mxu0 0.0
      %1509 = vmatmul.mubr.f32.gmra.mxu0 %v1409
      %v1510 = vpop.f32.mrf.mxu0
      %v1511 = vadd.f32 %v1387, %v1510
      %v1512 = vpop.f32.mrf.mxu0
      %1513 = vmatprep.mubr.f32.mxu0 0.0
      %1514 = vmatmul.mubr.f32.gmra.mxu0 %v1412
      %v1515 = vpop.f32.mrf.mxu0
      %v1516 = vadd.f32 %v1387, %v1515
      %v1517 = vpop.f32.mrf.mxu0
      %1518 = vdwg.mxu0
      %v1519 = vmax.f32 %v1481, 0.0
      %v1520 = vmax.f32 %v1486, 0.0
      %v1521 = vmax.f32 %v1491, 0.0
      %v1522 = vmax.f32 %v1496, 0.0
      %v1523 = vmax.f32 %v1501, 0.0
      %v1524 = vmax.f32 %v1506, 0.0
      %v1525 = vmax.f32 %v1511, 0.0
      %v1526 = vmax.f32 %v1516, 0.0
      %vm1535 = vcmask 1043456
      %v1536 = vrot.slane %v1519, 4
      %v1537 = vrot.slane %v1520, 4
      %v1538 = vsel %vm1535, %v1536, %v1537
      %v1539 = vrot.slane %v1521, 4
      %v1540 = vsel %vm1535, %v1537, %v1539
      %v1541 = vrot.slane %v1522, 4
      %v1542 = vsel %vm1535, %v1539, %v1541
      %v1543 = vrot.slane %v1523, 4
      %v1544 = vsel %vm1535, %v1541, %v1543
      %v1545 = vrot.slane %v1524, 4
      %v1546 = vsel %vm1535, %v1543, %v1545
      %v1547 = vrot.slane %v1525, 4
      %v1548 = vsel %vm1535, %v1545, %v1547
      %v1549 = vrot.slane %v1526, 4
      %v1550 = vsel %vm1535, %v1547, %v1549
      %v1559 = vsel %vm1535, 0.0, %v1536
      %v1560 = vrot.slane %v1519, 6
      %v1561 = vrot.slane %v1520, 6
      %v1562 = vsel %vm1163, %v1560, %v1561
      %v1563 = vrot.slane %v1521, 6
      %v1564 = vsel %vm1163, %v1561, %v1563
      %v1565 = vrot.slane %v1522, 6
      %v1566 = vsel %vm1163, %v1563, %v1565
      %v1567 = vrot.slane %v1523, 6
      %v1568 = vsel %vm1163, %v1565, %v1567
      %v1569 = vrot.slane %v1524, 6
      %v1570 = vsel %vm1163, %v1567, %v1569
      %v1571 = vrot.slane %v1525, 6
      %v1572 = vsel %vm1163, %v1569, %v1571
      %v1573 = vrot.slane %v1526, 6
      %v1574 = vsel %vm1163, %v1571, %v1573
      %v1583 = vsel %vm1163, 0.0, %v1560
      %v1584 = vrot.slane %v1519, 2
      %v1585 = vrot.slane %v1520, 2
      %v1586 = vsel %vm1224, %v1584, %v1585
      %v1587 = vrot.slane %v1521, 2
      %v1588 = vsel %vm1224, %v1585, %v1587
      %v1589 = vrot.slane %v1522, 2
      %v1590 = vsel %vm1224, %v1587, %v1589
      %v1591 = vrot.slane %v1523, 2
      %v1592 = vsel %vm1224, %v1589, %v1591
      %v1593 = vrot.slane %v1524, 2
      %v1594 = vsel %vm1224, %v1591, %v1593
      %v1595 = vrot.slane %v1525, 2
      %v1596 = vsel %vm1224, %v1593, %v1595
      %v1597 = vrot.slane %v1526, 2
      %v1598 = vsel %vm1224, %v1595, %v1597
      %v1600 = vsel %vm1224, %v1597, 0.0
      %v1602 = vsel %vm1535, %v1549, 0.0
      %1604 = vrot.lane.b32.xlu0 %v1583, 8
      %v1605 = vpop.permute.xlu0 %1604
      %1606 = vrot.lane.b32.xlu0 %v1562, 8
      %v1607 = vpop.permute.xlu0 %1606
      %1608 = vrot.lane.b32.xlu0 %v1564, 8
      %v1609 = vpop.permute.xlu0 %1608
      %1610 = vrot.lane.b32.xlu0 %v1566, 8
      %v1611 = vpop.permute.xlu0 %1610
      %1612 = vrot.lane.b32.xlu0 %v1568, 8
      %v1613 = vpop.permute.xlu0 %1612
      %1614 = vrot.lane.b32.xlu0 %v1570, 8
      %v1615 = vpop.permute.xlu0 %1614
      %1616 = vrot.lane.b32.xlu0 %v1572, 8
      %v1617 = vpop.permute.xlu0 %1616
      %1618 = vrot.lane.b32.xlu0 %v1574, 8
      %v1619 = vpop.permute.xlu0 %1618
      %1628 = vrot.lane.b32.xlu0 %v1519, 16
      %v1629 = vpop.permute.xlu0 %1628
      %1630 = vrot.lane.b32.xlu0 %v1520, 16
      %v1631 = vpop.permute.xlu0 %1630
      %1632 = vrot.lane.b32.xlu0 %v1521, 16
      %v1633 = vpop.permute.xlu0 %1632
      %1634 = vrot.lane.b32.xlu0 %v1522, 16
      %v1635 = vpop.permute.xlu0 %1634
      %1636 = vrot.lane.b32.xlu0 %v1523, 16
      %v1637 = vpop.permute.xlu0 %1636
      %1638 = vrot.lane.b32.xlu0 %v1524, 16
      %v1639 = vpop.permute.xlu0 %1638
      %1640 = vrot.lane.b32.xlu0 %v1525, 16
      %v1641 = vpop.permute.xlu0 %1640
      %1642 = vrot.lane.b32.xlu0 %v1526, 16
      %v1643 = vpop.permute.xlu0 %1642
      %1653 = vrot.lane.b32.xlu0 %v1586, 24
      %v1654 = vpop.permute.xlu0 %1653
      %1655 = vrot.lane.b32.xlu0 %v1588, 24
      %v1656 = vpop.permute.xlu0 %1655
      %1657 = vrot.lane.b32.xlu0 %v1590, 24
      %v1658 = vpop.permute.xlu0 %1657
      %1659 = vrot.lane.b32.xlu0 %v1592, 24
      %v1660 = vpop.permute.xlu0 %1659
      %1661 = vrot.lane.b32.xlu0 %v1594, 24
      %v1662 = vpop.permute.xlu0 %1661
      %1663 = vrot.lane.b32.xlu0 %v1596, 24
      %v1664 = vpop.permute.xlu0 %1663
      %1665 = vrot.lane.b32.xlu0 %v1598, 24
      %v1666 = vpop.permute.xlu0 %1665
      %1667 = vrot.lane.b32.xlu0 %v1600, 24
      %v1668 = vpop.permute.xlu0 %1667
      %1678 = vrot.lane.b32.xlu0 %v1538, 32
      %v1679 = vpop.permute.xlu0 %1678
      %1680 = vrot.lane.b32.xlu0 %v1540, 32
      %v1681 = vpop.permute.xlu0 %1680
      %1682 = vrot.lane.b32.xlu0 %v1542, 32
      %v1683 = vpop.permute.xlu0 %1682
      %1684 = vrot.lane.b32.xlu0 %v1544, 32
      %v1685 = vpop.permute.xlu0 %1684
      %1686 = vrot.lane.b32.xlu0 %v1546, 32
      %v1687 = vpop.permute.xlu0 %1686
      %1688 = vrot.lane.b32.xlu0 %v1548, 32
      %v1689 = vpop.permute.xlu0 %1688
      %1690 = vrot.lane.b32.xlu0 %v1550, 32
      %v1691 = vpop.permute.xlu0 %1690
      %1692 = vrot.lane.b32.xlu0 %v1602, 32
      %v1693 = vpop.permute.xlu0 %1692
      %v1702 = vsel %vm1341, %v1559, %v1605
      %v1703 = vsel %vm1341, %v1538, %v1607
      %v1704 = vsel %vm1341, %v1540, %v1609
      %v1705 = vsel %vm1341, %v1542, %v1611
      %v1706 = vsel %vm1341, %v1544, %v1613
      %v1707 = vsel %vm1341, %v1546, %v1615
      %v1708 = vsel %vm1341, %v1548, %v1617
      %v1709 = vsel %vm1341, %v1550, %v1619
      %v1710 = vsel %vm1350, %v1702, %v1629
      %v1711 = vsel %vm1350, %v1703, %v1631
      %v1712 = vsel %vm1350, %v1704, %v1633
      %v1713 = vsel %vm1350, %v1705, %v1635
      %v1714 = vsel %vm1350, %v1706, %v1637
      %v1715 = vsel %vm1350, %v1707, %v1639
      %v1716 = vsel %vm1350, %v1708, %v1641
      %v1717 = vsel %vm1350, %v1709, %v1643
      %v1718 = vsel %vm1359, %v1710, %v1654
      %v1719 = vsel %vm1359, %v1711, %v1656
      %v1720 = vsel %vm1359, %v1712, %v1658
      %v1721 = vsel %vm1359, %v1713, %v1660
      %v1722 = vsel %vm1359, %v1714, %v1662
      %v1723 = vsel %vm1359, %v1715, %v1664
      %v1724 = vsel %vm1359, %v1716, %v1666
      %v1725 = vsel %vm1359, %v1717, %v1668
      %v1726 = vsel %vm1368, %v1718, %v1679
      %v1727 = vsel %vm1368, %v1719, %v1681
      %v1728 = vsel %vm1368, %v1720, %v1683
      %v1729 = vsel %vm1368, %v1721, %v1685
      %v1730 = vsel %vm1368, %v1722, %v1687
      %v1731 = vsel %vm1368, %v1723, %v1689
      %v1732 = vsel %vm1368, %v1724, %v1691
      %v1733 = vsel %vm1368, %v1725, %v1693
      %v1734 = vld [vmem:[%s7] sm:$0xff]
      %v1735 = vld [vmem:[%s7 + $0x8] sm:$0xff]
      %v1736 = vld [vmem:[%s7 + $0x10] sm:$0xff]
      %v1737 = vld [vmem:[%s7 + $0x18] sm:$0xff]
      %v1738 = vld [vmem:[%s7 + $0x20] sm:$0xff]
      %v1739 = vld [vmem:[%s9] sm:$0x1]
      %v1741 = vlaneseq
      %v1742 = vshrl.u32 %v1741, 7
      %v1743 = vsub.s32 0, %v1742
      %v1744 = vrot.slane %v1739, %v1743
      %v1747 = vsel %vm1389, %v1726, 0
      %v1750 = vsel %vm1389, %v1727, 0
      %v1753 = vsel %vm1389, %v1728, 0
      %v1756 = vsel %vm1389, %v1729, 0
      %v1759 = vsel %vm1389, %v1730, 0
      %v1762 = vsel %vm1389, %v1731, 0
      %v1765 = vsel %vm1389, %v1732, 0
      %v1768 = vsel %vm1389, %v1733, 0
      %1770 = vmatprep.subr.mxu0 0.0
      %1771 = vmatpush1.msra.mxu0 0.0
      %1772 = vmatprep.subr.mxu0 0.0
      %1773 = vmatpush1.msra.mxu0 0.0
      %1774 = vmatprep.subr.mxu0 0.0
      %1775 = vmatpush1.msra.mxu0 0.0
      %1776 = vmatprep.subr.mxu0 0.0
      %1777 = vmatpush1.msra.mxu0 0.0
      %1778 = vmatprep.subr.mxu0 0.0
      %1779 = vmatpush1.msra.mxu0 0.0
      %1780 = vmatprep.subr.mxu0 0.0
      %1781 = vmatpush1.msra.mxu0 0.0
      %1782 = vmatprep.subr.mxu0 0.0
      %1783 = vmatpush1.msra.mxu0 0.0
      %1784 = vmatprep.subr.mxu0 0.0
      %1785 = vmatpush1.msra.mxu0 0.0
      %1786 = vmatprep.subr.mxu0 0.0
      %1787 = vmatpush1.msra.mxu0 0.0
      %1788 = vmatprep.subr.mxu0 0.0
      %1789 = vmatpush1.msra.mxu0 0.0
      %1790 = vmatprep.subr.mxu0 0.0
      %1791 = vmatpush1.msra.mxu0 0.0
      %1792 = vmatprep.subr.mxu0 0.0
      %1793 = vmatpush1.msra.mxu0 %v1738
      %1794 = vmatprep.subr.mxu0 0.0
      %1795 = vmatpush1.msra.mxu0 %v1737
      %1796 = vmatprep.subr.mxu0 0.0
      %1797 = vmatpush1.msra.mxu0 %v1736
      %1798 = vmatprep.subr.mxu0 0.0
      %1799 = vmatpush1.msra.mxu0 %v1735
      %1800 = vmatprep.subr.mxu0 0.0
      %1801 = vmatpush1.msra.mxu0 %v1734
      %1802 = vmatprep.subr.mxu0 0.0
      %1803 = vmatpush2.msra.mxu0 0.0
      %1804 = vmatprep.subr.mxu0 0.0
      %1805 = vmatpush2.msra.mxu0 0.0
      %1806 = vmatprep.subr.mxu0 0.0
      %1807 = vmatpush2.msra.mxu0 0.0
      %1808 = vmatprep.subr.mxu0 0.0
      %1809 = vmatpush2.msra.mxu0 0.0
      %1810 = vmatprep.subr.mxu0 0.0
      %1811 = vmatpush2.msra.mxu0 0.0
      %1812 = vmatprep.subr.mxu0 0.0
      %1813 = vmatpush2.msra.mxu0 0.0
      %1814 = vmatprep.subr.mxu0 0.0
      %1815 = vmatpush2.msra.mxu0 0.0
      %1816 = vmatprep.subr.mxu0 0.0
      %1817 = vmatpush2.msra.mxu0 0.0
      %1818 = vmatprep.subr.mxu0 0.0
      %1819 = vmatpush2.msra.mxu0 0.0
      %1820 = vmatprep.subr.mxu0 0.0
      %1821 = vmatpush2.msra.mxu0 0.0
      %1822 = vmatprep.subr.mxu0 0.0
      %1823 = vmatpush2.msra.mxu0 0.0
      %1824 = vmatprep.subr.mxu0 0.0
      %1825 = vmatpush2.msra.mxu0 0.0
      %1826 = vmatprep.subr.mxu0 0.0
      %1827 = vmatpush2.msra.mxu0 0.0
      %1828 = vmatprep.subr.mxu0 0.0
      %1829 = vmatpush2.msra.mxu0 0.0
      %1830 = vmatprep.subr.mxu0 0.0
      %1831 = vmatpush2.msra.mxu0 0.0
      %1832 = vmatprep.subr.mxu0 0.0
      %1833 = vmatpush2.msra.mxu0 0.0
      %1834 = vmatprep.mubr.f32.mxu0 0.0
      %1835 = vmatmul.mubr.f32.gmra.mxu0 %v1747
      %v1836 = vpop.f32.mrf.mxu0
      %v1837 = vadd.f32 %v1744, %v1836
      %v1838 = vpop.f32.mrf.mxu0
      %1839 = vmatprep.mubr.f32.mxu0 0.0
      %1840 = vmatmul.mubr.f32.gmra.mxu0 %v1750
      %v1841 = vpop.f32.mrf.mxu0
      %v1842 = vadd.f32 %v1744, %v1841
      %v1843 = vpop.f32.mrf.mxu0
      %1844 = vmatprep.mubr.f32.mxu0 0.0
      %1845 = vmatmul.mubr.f32.gmra.mxu0 %v1753
      %v1846 = vpop.f32.mrf.mxu0
      %v1847 = vadd.f32 %v1744, %v1846
      %v1848 = vpop.f32.mrf.mxu0
      %1849 = vmatprep.mubr.f32.mxu0 0.0
      %1850 = vmatmul.mubr.f32.gmra.mxu0 %v1756
      %v1851 = vpop.f32.mrf.mxu0
      %v1852 = vadd.f32 %v1744, %v1851
      %v1853 = vpop.f32.mrf.mxu0
      %1854 = vmatprep.mubr.f32.mxu0 0.0
      %1855 = vmatmul.mubr.f32.gmra.mxu0 %v1759
      %v1856 = vpop.f32.mrf.mxu0
      %v1857 = vadd.f32 %v1744, %v1856
      %v1858 = vpop.f32.mrf.mxu0
      %1859 = vmatprep.mubr.f32.mxu0 0.0
      %1860 = vmatmul.mubr.f32.gmra.mxu0 %v1762
      %v1861 = vpop.f32.mrf.mxu0
      %v1862 = vadd.f32 %v1744, %v1861
      %v1863 = vpop.f32.mrf.mxu0
      %1864 = vmatprep.mubr.f32.mxu0 0.0
      %1865 = vmatmul.mubr.f32.gmra.mxu0 %v1765
      %v1866 = vpop.f32.mrf.mxu0
      %v1867 = vadd.f32 %v1744, %v1866
      %v1868 = vpop.f32.mrf.mxu0
      %1869 = vmatprep.mubr.f32.mxu0 0.0
      %1870 = vmatmul.mubr.f32.gmra.mxu0 %v1768
      %v1871 = vpop.f32.mrf.mxu0
      %v1872 = vadd.f32 %v1744, %v1871
      %v1873 = vpop.f32.mrf.mxu0
      %1874 = vdwg.mxu0
      %v1875 = vmax.f32 %v1837, 0.0
      %v1876 = vmax.f32 %v1842, 0.0
      %v1877 = vmax.f32 %v1847, 0.0
      %v1878 = vmax.f32 %v1852, 0.0
      %v1879 = vmax.f32 %v1857, 0.0
      %v1880 = vmax.f32 %v1862, 0.0
      %v1881 = vmax.f32 %v1867, 0.0
      %v1882 = vmax.f32 %v1872, 0.0
      %v1891 = vrot.slane %v1875, 4
      %v1892 = vrot.slane %v1876, 4
      %v1893 = vsel %vm1535, %v1891, %v1892
      %v1894 = vrot.slane %v1877, 4
      %v1895 = vsel %vm1535, %v1892, %v1894
      %v1896 = vrot.slane %v1878, 4
      %v1897 = vsel %vm1535, %v1894, %v1896
      %v1898 = vrot.slane %v1879, 4
      %v1899 = vsel %vm1535, %v1896, %v1898
      %v1900 = vrot.slane %v1880, 4
      %v1901 = vsel %vm1535, %v1898, %v1900
      %v1902 = vrot.slane %v1881, 4
      %v1903 = vsel %vm1535, %v1900, %v1902
      %v1904 = vrot.slane %v1882, 4
      %v1905 = vsel %vm1535, %v1902, %v1904
      %v1914 = vsel %vm1535, 0.0, %v1891
      %v1916 = vsel %vm1535, %v1904, 0.0
      %1918 = vrot.lane.b32.xlu0 %v1914, 16
      %v1919 = vpop.permute.xlu0 %1918
      %1920 = vrot.lane.b32.xlu0 %v1893, 16
      %v1921 = vpop.permute.xlu0 %1920
      %1922 = vrot.lane.b32.xlu0 %v1895, 16
      %v1923 = vpop.permute.xlu0 %1922
      %1924 = vrot.lane.b32.xlu0 %v1897, 16
      %v1925 = vpop.permute.xlu0 %1924
      %1926 = vrot.lane.b32.xlu0 %v1899, 16
      %v1927 = vpop.permute.xlu0 %1926
      %1928 = vrot.lane.b32.xlu0 %v1901, 16
      %v1929 = vpop.permute.xlu0 %1928
      %1930 = vrot.lane.b32.xlu0 %v1903, 16
      %v1931 = vpop.permute.xlu0 %1930
      %1932 = vrot.lane.b32.xlu0 %v1905, 16
      %v1933 = vpop.permute.xlu0 %1932
      %1942 = vrot.lane.b32.xlu0 %v1875, 32
      %v1943 = vpop.permute.xlu0 %1942
      %1944 = vrot.lane.b32.xlu0 %v1876, 32
      %v1945 = vpop.permute.xlu0 %1944
      %1946 = vrot.lane.b32.xlu0 %v1877, 32
      %v1947 = vpop.permute.xlu0 %1946
      %1948 = vrot.lane.b32.xlu0 %v1878, 32
      %v1949 = vpop.permute.xlu0 %1948
      %1950 = vrot.lane.b32.xlu0 %v1879, 32
      %v1951 = vpop.permute.xlu0 %1950
      %1952 = vrot.lane.b32.xlu0 %v1880, 32
      %v1953 = vpop.permute.xlu0 %1952
      %1954 = vrot.lane.b32.xlu0 %v1881, 32
      %v1955 = vpop.permute.xlu0 %1954
      %1956 = vrot.lane.b32.xlu0 %v1882, 32
      %v1957 = vpop.permute.xlu0 %1956
      %1967 = vrot.lane.b32.xlu0 %v1893, 48
      %v1968 = vpop.permute.xlu0 %1967
      %1969 = vrot.lane.b32.xlu0 %v1895, 48
      %v1970 = vpop.permute.xlu0 %1969
      %1971 = vrot.lane.b32.xlu0 %v1897, 48
      %v1972 = vpop.permute.xlu0 %1971
      %1973 = vrot.lane.b32.xlu0 %v1899, 48
      %v1974 = vpop.permute.xlu0 %1973
      %1975 = vrot.lane.b32.xlu0 %v1901, 48
      %v1976 = vpop.permute.xlu0 %1975
      %1977 = vrot.lane.b32.xlu0 %v1903, 48
      %v1978 = vpop.permute.xlu0 %1977
      %1979 = vrot.lane.b32.xlu0 %v1905, 48
      %v1980 = vpop.permute.xlu0 %1979
      %1981 = vrot.lane.b32.xlu0 %v1916, 48
      %v1982 = vpop.permute.xlu0 %1981
      %1992 = vrot.lane.b32.xlu0 %v1876, 64
      %v1993 = vpop.permute.xlu0 %1992
      %1994 = vrot.lane.b32.xlu0 %v1877, 64
      %v1995 = vpop.permute.xlu0 %1994
      %1996 = vrot.lane.b32.xlu0 %v1878, 64
      %v1997 = vpop.permute.xlu0 %1996
      %1998 = vrot.lane.b32.xlu0 %v1879, 64
      %v1999 = vpop.permute.xlu0 %1998
      %2000 = vrot.lane.b32.xlu0 %v1880, 64
      %v2001 = vpop.permute.xlu0 %2000
      %2002 = vrot.lane.b32.xlu0 %v1881, 64
      %v2003 = vpop.permute.xlu0 %2002
      %2004 = vrot.lane.b32.xlu0 %v1882, 64
      %v2005 = vpop.permute.xlu0 %2004
      %2006 = vrot.lane.b32.xlu0 0.0, 64
      %v2007 = vpop.permute.xlu0 %2006
      %v2016 = vsel %vm1350, 0.0, %v1919
      %v2017 = vsel %vm1350, %v1875, %v1921
      %v2018 = vsel %vm1350, %v1876, %v1923
      %v2019 = vsel %vm1350, %v1877, %v1925
      %v2020 = vsel %vm1350, %v1878, %v1927
      %v2021 = vsel %vm1350, %v1879, %v1929
      %v2022 = vsel %vm1350, %v1880, %v1931
      %v2023 = vsel %vm1350, %v1881, %v1933
      %v2024 = vsel %vm1368, %v2016, %v1943
      %v2025 = vsel %vm1368, %v2017, %v1945
      %v2026 = vsel %vm1368, %v2018, %v1947
      %v2027 = vsel %vm1368, %v2019, %v1949
      %v2028 = vsel %vm1368, %v2020, %v1951
      %v2029 = vsel %vm1368, %v2021, %v1953
      %v2030 = vsel %vm1368, %v2022, %v1955
      %v2031 = vsel %vm1368, %v2023, %v1957
      %vm2032 = vcmask 392192
      %v2033 = vsel %vm2032, %v2024, %v1968
      %v2034 = vsel %vm2032, %v2025, %v1970
      %v2035 = vsel %vm2032, %v2026, %v1972
      %v2036 = vsel %vm2032, %v2027, %v1974
      %v2037 = vsel %vm2032, %v2028, %v1976
      %v2038 = vsel %vm2032, %v2029, %v1978
      %v2039 = vsel %vm2032, %v2030, %v1980
      %v2040 = vsel %vm2032, %v2031, %v1982
      %vm2041 = vcmask 523264
      %v2042 = vsel %vm2041, %v2033, %v1993
      %v2043 = vsel %vm2041, %v2034, %v1995
      %v2044 = vsel %vm2041, %v2035, %v1997
      %v2045 = vsel %vm2041, %v2036, %v1999
      %v2046 = vsel %vm2041, %v2037, %v2001
      %v2047 = vsel %vm2041, %v2038, %v2003
      %v2048 = vsel %vm2041, %v2039, %v2005
      %v2049 = vsel %vm2041, %v2040, %v2007
      %v2050 = vld [vmem:[%s11] sm:$0xff]
      %v2051 = vld [vmem:[%s11 + $0x8] sm:$0xff]
      %v2052 = vld [vmem:[%s11 + $0x10] sm:$0xff]
      %v2053 = vld [vmem:[%s11 + $0x18] sm:$0xff]
      %v2054 = vld [vmem:[%s11 + $0x20] sm:$0xff]
      %v2055 = vld [vmem:[%s11 + $0x28] sm:$0xff]
      %v2056 = vld [vmem:[%s11 + $0x30] sm:$0xff]
      %v2057 = vld [vmem:[%s11 + $0x38] sm:$0xff]
      %v2058 = vld [vmem:[%s11 + $0x40] sm:$0xff]
      %v2059 = vld [vmem:[%s11 + $0x48] sm:$0xff]
      %v2060 = vld [vmem:[%s13] sm:$0x1]
      %v2062 = vlaneseq
      %v2063 = vshrl.u32 %v2062, 7
      %v2064 = vsub.s32 0, %v2063
      %v2065 = vrot.slane %v2060, %v2064
      %vm2067 = vcmask 654336
      %v2069 = vsel %vm2067, %v2042, 0
      %v2072 = vsel %vm2067, %v2043, 0
      %v2075 = vsel %vm2067, %v2044, 0
      %v2078 = vsel %vm2067, %v2045, 0
      %v2081 = vsel %vm2067, %v2046, 0
      %v2084 = vsel %vm2067, %v2047, 0
      %v2087 = vsel %vm2067, %v2048, 0
      %v2090 = vsel %vm2067, %v2049, 0
      %2092 = vmatprep.subr.mxu0 0.0
      %2093 = vmatpush1.msra.mxu0 0.0
      %2094 = vmatprep.subr.mxu0 0.0
      %2095 = vmatpush1.msra.mxu0 0.0
      %2096 = vmatprep.subr.mxu0 0.0
      %2097 = vmatpush1.msra.mxu0 0.0
      %2098 = vmatprep.subr.mxu0 0.0
      %2099 = vmatpush1.msra.mxu0 0.0
      %2100 = vmatprep.subr.mxu0 0.0
      %2101 = vmatpush1.msra.mxu0 0.0
      %2102 = vmatprep.subr.mxu0 0.0
      %2103 = vmatpush1.msra.mxu0 0.0
      %2104 = vmatprep.subr.mxu0 0.0
      %2105 = vmatpush1.msra.mxu0 %v2059
      %2106 = vmatprep.subr.mxu0 0.0
      %2107 = vmatpush1.msra.mxu0 %v2058
      %2108 = vmatprep.subr.mxu0 0.0
      %2109 = vmatpush1.msra.mxu0 %v2057
      %2110 = vmatprep.subr.mxu0 0.0
      %2111 = vmatpush1.msra.mxu0 %v2056
      %2112 = vmatprep.subr.mxu0 0.0
      %2113 = vmatpush1.msra.mxu0 %v2055
      %2114 = vmatprep.subr.mxu0 0.0
      %2115 = vmatpush1.msra.mxu0 %v2054
      %2116 = vmatprep.subr.mxu0 0.0
      %2117 = vmatpush1.msra.mxu0 %v2053
      %2118 = vmatprep.subr.mxu0 0.0
      %2119 = vmatpush1.msra.mxu0 %v2052
      %2120 = vmatprep.subr.mxu0 0.0
      %2121 = vmatpush1.msra.mxu0 %v2051
      %2122 = vmatprep.subr.mxu0 0.0
      %2123 = vmatpush1.msra.mxu0 %v2050
      %2124 = vmatprep.subr.mxu0 0.0
      %2125 = vmatpush2.msra.mxu0 0.0
      %2126 = vmatprep.subr.mxu0 0.0
      %2127 = vmatpush2.msra.mxu0 0.0
      %2128 = vmatprep.subr.mxu0 0.0
      %2129 = vmatpush2.msra.mxu0 0.0
      %2130 = vmatprep.subr.mxu0 0.0
      %2131 = vmatpush2.msra.mxu0 0.0
      %2132 = vmatprep.subr.mxu0 0.0
      %2133 = vmatpush2.msra.mxu0 0.0
      %2134 = vmatprep.subr.mxu0 0.0
      %2135 = vmatpush2.msra.mxu0 0.0
      %2136 = vmatprep.subr.mxu0 0.0
      %2137 = vmatpush2.msra.mxu0 0.0
      %2138 = vmatprep.subr.mxu0 0.0
      %2139 = vmatpush2.msra.mxu0 0.0
      %2140 = vmatprep.subr.mxu0 0.0
      %2141 = vmatpush2.msra.mxu0 0.0
      %2142 = vmatprep.subr.mxu0 0.0
      %2143 = vmatpush2.msra.mxu0 0.0
      %2144 = vmatprep.subr.mxu0 0.0
      %2145 = vmatpush2.msra.mxu0 0.0
      %2146 = vmatprep.subr.mxu0 0.0
      %2147 = vmatpush2.msra.mxu0 0.0
      %2148 = vmatprep.subr.mxu0 0.0
      %2149 = vmatpush2.msra.mxu0 0.0
      %2150 = vmatprep.subr.mxu0 0.0
      %2151 = vmatpush2.msra.mxu0 0.0
      %2152 = vmatprep.subr.mxu0 0.0
      %2153 = vmatpush2.msra.mxu0 0.0
      %2154 = vmatprep.subr.mxu0 0.0
      %2155 = vmatpush2.msra.mxu0 0.0
      %2156 = vmatprep.mubr.f32.mxu0 0.0
      %2157 = vmatmul.mubr.f32.gmra.mxu0 %v2069
      %v2158 = vpop.f32.mrf.mxu0
      %v2159 = vadd.f32 %v2065, %v2158
      %v2160 = vpop.f32.mrf.mxu0
      %2161 = vmatprep.mubr.f32.mxu0 0.0
      %2162 = vmatmul.mubr.f32.gmra.mxu0 %v2072
      %v2163 = vpop.f32.mrf.mxu0
      %v2164 = vadd.f32 %v2065, %v2163
      %v2165 = vpop.f32.mrf.mxu0
      %2166 = vmatprep.mubr.f32.mxu0 0.0
      %2167 = vmatmul.mubr.f32.gmra.mxu0 %v2075
      %v2168 = vpop.f32.mrf.mxu0
      %v2169 = vadd.f32 %v2065, %v2168
      %v2170 = vpop.f32.mrf.mxu0
      %2171 = vmatprep.mubr.f32.mxu0 0.0
      %2172 = vmatmul.mubr.f32.gmra.mxu0 %v2078
      %v2173 = vpop.f32.mrf.mxu0
      %v2174 = vadd.f32 %v2065, %v2173
      %v2175 = vpop.f32.mrf.mxu0
      %2176 = vmatprep.mubr.f32.mxu0 0.0
      %2177 = vmatmul.mubr.f32.gmra.mxu0 %v2081
      %v2178 = vpop.f32.mrf.mxu0
      %v2179 = vadd.f32 %v2065, %v2178
      %v2180 = vpop.f32.mrf.mxu0
      %2181 = vmatprep.mubr.f32.mxu0 0.0
      %2182 = vmatmul.mubr.f32.gmra.mxu0 %v2084
      %v2183 = vpop.f32.mrf.mxu0
      %v2184 = vadd.f32 %v2065, %v2183
      %v2185 = vpop.f32.mrf.mxu0
      %2186 = vmatprep.mubr.f32.mxu0 0.0
      %2187 = vmatmul.mubr.f32.gmra.mxu0 %v2087
      %v2188 = vpop.f32.mrf.mxu0
      %v2189 = vadd.f32 %v2065, %v2188
      %v2190 = vpop.f32.mrf.mxu0
      %2191 = vmatprep.mubr.f32.mxu0 0.0
      %2192 = vmatmul.mubr.f32.gmra.mxu0 %v2090
      %v2193 = vpop.f32.mrf.mxu0
      %v2194 = vadd.f32 %v2065, %v2193
      %v2195 = vpop.f32.mrf.mxu0
      %2196 = vdwg.mxu0
      %v2197 = vmax.f32 %v2159, 0.0
      %v2198 = vmax.f32 %v2164, 0.0
      %v2199 = vmax.f32 %v2169, 0.0
      %v2200 = vmax.f32 %v2174, 0.0
      %v2201 = vmax.f32 %v2179, 0.0
      %v2202 = vmax.f32 %v2184, 0.0
      %v2203 = vmax.f32 %v2189, 0.0
      %v2204 = vmax.f32 %v2194, 0.0
      %2212 = vrot.lane.b32.xlu0 0.0, 16
      %v2213 = vpop.permute.xlu0 %2212
      %2214 = vrot.lane.b32.xlu0 %v2197, 16
      %v2215 = vpop.permute.xlu0 %2214
      %2216 = vrot.lane.b32.xlu0 %v2198, 16
      %v2217 = vpop.permute.xlu0 %2216
      %2218 = vrot.lane.b32.xlu0 %v2199, 16
      %v2219 = vpop.permute.xlu0 %2218
      %2220 = vrot.lane.b32.xlu0 %v2200, 16
      %v2221 = vpop.permute.xlu0 %2220
      %2222 = vrot.lane.b32.xlu0 %v2201, 16
      %v2223 = vpop.permute.xlu0 %2222
      %2224 = vrot.lane.b32.xlu0 %v2202, 16
      %v2225 = vpop.permute.xlu0 %2224
      %2226 = vrot.lane.b32.xlu0 %v2203, 16
      %v2227 = vpop.permute.xlu0 %2226
      %2237 = vrot.lane.b32.xlu0 %v2197, 32
      %v2238 = vpop.permute.xlu0 %2237
      %2239 = vrot.lane.b32.xlu0 %v2198, 32
      %v2240 = vpop.permute.xlu0 %2239
      %2241 = vrot.lane.b32.xlu0 %v2199, 32
      %v2242 = vpop.permute.xlu0 %2241
      %2243 = vrot.lane.b32.xlu0 %v2200, 32
      %v2244 = vpop.permute.xlu0 %2243
      %2245 = vrot.lane.b32.xlu0 %v2201, 32
      %v2246 = vpop.permute.xlu0 %2245
      %2247 = vrot.lane.b32.xlu0 %v2202, 32
      %v2248 = vpop.permute.xlu0 %2247
      %2249 = vrot.lane.b32.xlu0 %v2203, 32
      %v2250 = vpop.permute.xlu0 %2249
      %2251 = vrot.lane.b32.xlu0 %v2204, 32
      %v2252 = vpop.permute.xlu0 %2251
      %2261 = vrot.lane.b32.xlu0 %v2198, 48
      %v2262 = vpop.permute.xlu0 %2261
      %2263 = vrot.lane.b32.xlu0 %v2199, 48
      %v2264 = vpop.permute.xlu0 %2263
      %2265 = vrot.lane.b32.xlu0 %v2200, 48
      %v2266 = vpop.permute.xlu0 %2265
      %2267 = vrot.lane.b32.xlu0 %v2201, 48
      %v2268 = vpop.permute.xlu0 %2267
      %2269 = vrot.lane.b32.xlu0 %v2202, 48
      %v2270 = vpop.permute.xlu0 %2269
      %2271 = vrot.lane.b32.xlu0 %v2203, 48
      %v2272 = vpop.permute.xlu0 %2271
      %2273 = vrot.lane.b32.xlu0 %v2204, 48
      %v2274 = vpop.permute.xlu0 %2273
      %2275 = vrot.lane.b32.xlu0 0.0, 48
      %v2276 = vpop.permute.xlu0 %2275
      %2285 = vrot.lane.b32.xlu0 %v2199, 64
      %v2286 = vpop.permute.xlu0 %2285
      %2287 = vrot.lane.b32.xlu0 %v2200, 64
      %v2288 = vpop.permute.xlu0 %2287
      %2289 = vrot.lane.b32.xlu0 %v2201, 64
      %v2290 = vpop.permute.xlu0 %2289
      %2291 = vrot.lane.b32.xlu0 %v2202, 64
      %v2292 = vpop.permute.xlu0 %2291
      %2293 = vrot.lane.b32.xlu0 %v2203, 64
      %v2294 = vpop.permute.xlu0 %2293
      %2295 = vrot.lane.b32.xlu0 %v2204, 64
      %v2296 = vpop.permute.xlu0 %2295
      %v2303 = vsel %vm1350, 0.0, %v2213
      %v2304 = vsel %vm1350, 0.0, %v2215
      %v2305 = vsel %vm1350, %v2197, %v2217
      %v2306 = vsel %vm1350, %v2198, %v2219
      %v2307 = vsel %vm1350, %v2199, %v2221
      %v2308 = vsel %vm1350, %v2200, %v2223
      %v2309 = vsel %vm1350, %v2201, %v2225
      %v2310 = vsel %vm1350, %v2202, %v2227
      %v2311 = vsel %vm1368, %v2303, %v2238
      %v2312 = vsel %vm1368, %v2304, %v2240
      %v2313 = vsel %vm1368, %v2305, %v2242
      %v2314 = vsel %vm1368, %v2306, %v2244
      %v2315 = vsel %vm1368, %v2307, %v2246
      %v2316 = vsel %vm1368, %v2308, %v2248
      %v2317 = vsel %vm1368, %v2309, %v2250
      %v2318 = vsel %vm1368, %v2310, %v2252
      %v2319 = vsel %vm2032, %v2311, %v2262
      %v2320 = vsel %vm2032, %v2312, %v2264
      %v2321 = vsel %vm2032, %v2313, %v2266
      %v2322 = vsel %vm2032, %v2314, %v2268
      %v2323 = vsel %vm2032, %v2315, %v2270
      %v2324 = vsel %vm2032, %v2316, %v2272
      %v2325 = vsel %vm2032, %v2317, %v2274
      %v2326 = vsel %vm2032, %v2318, %v2276
      %v2327 = vsel %vm2041, %v2319, %v2286
      %v2328 = vsel %vm2041, %v2320, %v2288
      %v2329 = vsel %vm2041, %v2321, %v2290
      %v2330 = vsel %vm2041, %v2322, %v2292
      %v2331 = vsel %vm2041, %v2323, %v2294
      %v2332 = vsel %vm2041, %v2324, %v2296
      %v2333 = vsel %vm2041, %v2325, %v2007
      %v2334 = vsel %vm2041, %v2326, %v2007
      %v2335 = vld [vmem:[%s15] sm:$0xff]
      %v2336 = vld [vmem:[%s15 + $0x8] sm:$0xff]
      %v2337 = vld [vmem:[%s15 + $0x10] sm:$0xff]
      %v2338 = vld [vmem:[%s15 + $0x18] sm:$0xff]
      %v2339 = vld [vmem:[%s15 + $0x20] sm:$0xff]
      %v2340 = vld [vmem:[%s15 + $0x28] sm:$0xff]
      %v2341 = vld [vmem:[%s15 + $0x30] sm:$0xff]
      %v2342 = vld [vmem:[%s15 + $0x38] sm:$0xff]
      %v2343 = vld [vmem:[%s15 + $0x40] sm:$0xff]
      %v2344 = vld [vmem:[%s15 + $0x48] sm:$0xff]
      %v2345 = vld [vmem:[%s17] sm:$0x1]
      %v2347 = vlaneseq
      %v2348 = vshrl.u32 %v2347, 7
      %v2349 = vsub.s32 0, %v2348
      %v2350 = vrot.slane %v2345, %v2349
      %v2353 = vsel %vm2067, %v2327, 0
      %v2356 = vsel %vm2067, %v2328, 0
      %v2359 = vsel %vm2067, %v2329, 0
      %v2362 = vsel %vm2067, %v2330, 0
      %v2365 = vsel %vm2067, %v2331, 0
      %v2368 = vsel %vm2067, %v2332, 0
      %v2371 = vsel %vm2067, %v2333, 0
      %v2374 = vsel %vm2067, %v2334, 0
      %2376 = vmatprep.subr.mxu0 0.0
      %2377 = vmatpush1.msra.mxu0 0.0
      %2378 = vmatprep.subr.mxu0 0.0
      %2379 = vmatpush1.msra.mxu0 0.0
      %2380 = vmatprep.subr.mxu0 0.0
      %2381 = vmatpush1.msra.mxu0 0.0
      %2382 = vmatprep.subr.mxu0 0.0
      %2383 = vmatpush1.msra.mxu0 0.0
      %2384 = vmatprep.subr.mxu0 0.0
      %2385 = vmatpush1.msra.mxu0 0.0
      %2386 = vmatprep.subr.mxu0 0.0
      %2387 = vmatpush1.msra.mxu0 0.0
      %2388 = vmatprep.subr.mxu0 0.0
      %2389 = vmatpush1.msra.mxu0 %v2344
      %2390 = vmatprep.subr.mxu0 0.0
      %2391 = vmatpush1.msra.mxu0 %v2343
      %2392 = vmatprep.subr.mxu0 0.0
      %2393 = vmatpush1.msra.mxu0 %v2342
      %2394 = vmatprep.subr.mxu0 0.0
      %2395 = vmatpush1.msra.mxu0 %v2341
      %2396 = vmatprep.subr.mxu0 0.0
      %2397 = vmatpush1.msra.mxu0 %v2340
      %2398 = vmatprep.subr.mxu0 0.0
      %2399 = vmatpush1.msra.mxu0 %v2339
      %2400 = vmatprep.subr.mxu0 0.0
      %2401 = vmatpush1.msra.mxu0 %v2338
      %2402 = vmatprep.subr.mxu0 0.0
      %2403 = vmatpush1.msra.mxu0 %v2337
      %2404 = vmatprep.subr.mxu0 0.0
      %2405 = vmatpush1.msra.mxu0 %v2336
      %2406 = vmatprep.subr.mxu0 0.0
      %2407 = vmatpush1.msra.mxu0 %v2335
      %2408 = vmatprep.subr.mxu0 0.0
      %2409 = vmatpush2.msra.mxu0 0.0
      %2410 = vmatprep.subr.mxu0 0.0
      %2411 = vmatpush2.msra.mxu0 0.0
      %2412 = vmatprep.subr.mxu0 0.0
      %2413 = vmatpush2.msra.mxu0 0.0
      %2414 = vmatprep.subr.mxu0 0.0
      %2415 = vmatpush2.msra.mxu0 0.0
      %2416 = vmatprep.subr.mxu0 0.0
      %2417 = vmatpush2.msra.mxu0 0.0
      %2418 = vmatprep.subr.mxu0 0.0
      %2419 = vmatpush2.msra.mxu0 0.0
      %2420 = vmatprep.subr.mxu0 0.0
      %2421 = vmatpush2.msra.mxu0 0.0
      %2422 = vmatprep.subr.mxu0 0.0
      %2423 = vmatpush2.msra.mxu0 0.0
      %2424 = vmatprep.subr.mxu0 0.0
      %2425 = vmatpush2.msra.mxu0 0.0
      %2426 = vmatprep.subr.mxu0 0.0
      %2427 = vmatpush2.msra.mxu0 0.0
      %2428 = vmatprep.subr.mxu0 0.0
      %2429 = vmatpush2.msra.mxu0 0.0
      %2430 = vmatprep.subr.mxu0 0.0
      %2431 = vmatpush2.msra.mxu0 0.0
      %2432 = vmatprep.subr.mxu0 0.0
      %2433 = vmatpush2.msra.mxu0 0.0
      %2434 = vmatprep.subr.mxu0 0.0
      %2435 = vmatpush2.msra.mxu0 0.0
      %2436 = vmatprep.subr.mxu0 0.0
      %2437 = vmatpush2.msra.mxu0 0.0
      %2438 = vmatprep.subr.mxu0 0.0
      %2439 = vmatpush2.msra.mxu0 0.0
      %2440 = vmatprep.mubr.f32.mxu0 0.0
      %2441 = vmatmul.mubr.f32.gmra.mxu0 %v2353
      %v2442 = vpop.f32.mrf.mxu0
      %v2443 = vadd.f32 %v2350, %v2442
      %v2444 = vpop.f32.mrf.mxu0
      %2445 = vmatprep.mubr.f32.mxu0 0.0
      %2446 = vmatmul.mubr.f32.gmra.mxu0 %v2356
      %v2447 = vpop.f32.mrf.mxu0
      %v2448 = vadd.f32 %v2350, %v2447
      %v2449 = vpop.f32.mrf.mxu0
      %2450 = vmatprep.mubr.f32.mxu0 0.0
      %2451 = vmatmul.mubr.f32.gmra.mxu0 %v2359
      %v2452 = vpop.f32.mrf.mxu0
      %v2453 = vadd.f32 %v2350, %v2452
      %v2454 = vpop.f32.mrf.mxu0
      %2455 = vmatprep.mubr.f32.mxu0 0.0
      %2456 = vmatmul.mubr.f32.gmra.mxu0 %v2362
      %v2457 = vpop.f32.mrf.mxu0
      %v2458 = vadd.f32 %v2350, %v2457
      %v2459 = vpop.f32.mrf.mxu0
      %2460 = vmatprep.mubr.f32.mxu0 0.0
      %2461 = vmatmul.mubr.f32.gmra.mxu0 %v2365
      %v2462 = vpop.f32.mrf.mxu0
      %v2463 = vadd.f32 %v2350, %v2462
      %v2464 = vpop.f32.mrf.mxu0
      %2465 = vmatprep.mubr.f32.mxu0 0.0
      %2466 = vmatmul.mubr.f32.gmra.mxu0 %v2368
      %v2467 = vpop.f32.mrf.mxu0
      %v2468 = vadd.f32 %v2350, %v2467
      %v2469 = vpop.f32.mrf.mxu0
      %2470 = vmatprep.mubr.f32.mxu0 0.0
      %2471 = vmatmul.mubr.f32.gmra.mxu0 %v2371
      %v2472 = vpop.f32.mrf.mxu0
      %v2473 = vadd.f32 %v2350, %v2472
      %v2474 = vpop.f32.mrf.mxu0
      %2475 = vmatprep.mubr.f32.mxu0 0.0
      %2476 = vmatmul.mubr.f32.gmra.mxu0 %v2374
      %v2477 = vpop.f32.mrf.mxu0
      %v2478 = vadd.f32 %v2350, %v2477
      %v2479 = vpop.f32.mrf.mxu0
      %2480 = vdwg.mxu0
      %v2481 = vmax.f32 %v2443, 0.0
      %v2482 = vmax.f32 %v2448, 0.0
      %v2483 = vmax.f32 %v2453, 0.0
      %v2484 = vmax.f32 %v2458, 0.0
      %v2485 = vmax.f32 %v2463, 0.0
      %v2486 = vmax.f32 %v2468, 0.0
      %v2487 = vmax.f32 %v2473, 0.0
      %v2488 = vmax.f32 %v2478, 0.0
      %2495 = vrot.lane.b32.xlu0 0.0, 32
      %v2496 = vpop.permute.xlu0 %2495
      %2497 = vrot.lane.b32.xlu0 %v2481, 32
      %v2498 = vpop.permute.xlu0 %2497
      %2499 = vrot.lane.b32.xlu0 %v2482, 32
      %v2500 = vpop.permute.xlu0 %2499
      %2501 = vrot.lane.b32.xlu0 %v2483, 32
      %v2502 = vpop.permute.xlu0 %2501
      %2503 = vrot.lane.b32.xlu0 %v2484, 32
      %v2504 = vpop.permute.xlu0 %2503
      %2505 = vrot.lane.b32.xlu0 %v2485, 32
      %v2506 = vpop.permute.xlu0 %2505
      %2507 = vrot.lane.b32.xlu0 %v2486, 32
      %v2508 = vpop.permute.xlu0 %2507
      %2518 = vrot.lane.b32.xlu0 %v2481, 64
      %v2519 = vpop.permute.xlu0 %2518
      %2520 = vrot.lane.b32.xlu0 %v2482, 64
      %v2521 = vpop.permute.xlu0 %2520
      %2522 = vrot.lane.b32.xlu0 %v2483, 64
      %v2523 = vpop.permute.xlu0 %2522
      %2524 = vrot.lane.b32.xlu0 %v2484, 64
      %v2525 = vpop.permute.xlu0 %2524
      %2526 = vrot.lane.b32.xlu0 %v2485, 64
      %v2527 = vpop.permute.xlu0 %2526
      %2528 = vrot.lane.b32.xlu0 %v2486, 64
      %v2529 = vpop.permute.xlu0 %2528
      %2530 = vrot.lane.b32.xlu0 %v2487, 64
      %v2531 = vpop.permute.xlu0 %2530
      %2532 = vrot.lane.b32.xlu0 %v2488, 64
      %v2533 = vpop.permute.xlu0 %2532
      %2542 = vrot.lane.b32.xlu0 %v2483, 96
      %v2543 = vpop.permute.xlu0 %2542
      %2544 = vrot.lane.b32.xlu0 %v2484, 96
      %v2545 = vpop.permute.xlu0 %2544
      %2546 = vrot.lane.b32.xlu0 %v2485, 96
      %v2547 = vpop.permute.xlu0 %2546
      %2548 = vrot.lane.b32.xlu0 %v2486, 96
      %v2549 = vpop.permute.xlu0 %2548
      %2550 = vrot.lane.b32.xlu0 %v2487, 96
      %v2551 = vpop.permute.xlu0 %2550
      %2552 = vrot.lane.b32.xlu0 %v2488, 96
      %v2553 = vpop.permute.xlu0 %2552
      %2554 = vrot.lane.b32.xlu0 0.0, 96
      %v2555 = vpop.permute.xlu0 %2554
      %v2563 = vsel %vm1368, 0.0, %v2496
      %v2564 = vsel %vm1368, 0.0, %v2498
      %v2565 = vsel %vm1368, 0.0, %v2500
      %v2566 = vsel %vm1368, %v2481, %v2502
      %v2567 = vsel %vm1368, %v2482, %v2504
      %v2568 = vsel %vm1368, %v2483, %v2506
      %v2569 = vsel %vm1368, %v2484, %v2508
      %v2570 = vsel %vm2041, %v2563, %v2519
      %v2571 = vsel %vm2041, %v2563, %v2521
      %v2572 = vsel %vm2041, %v2564, %v2523
      %v2573 = vsel %vm2041, %v2565, %v2525
      %v2574 = vsel %vm2041, %v2566, %v2527
      %v2575 = vsel %vm2041, %v2567, %v2529
      %v2576 = vsel %vm2041, %v2568, %v2531
      %v2577 = vsel %vm2041, %v2569, %v2533
      %vm2578 = vcmask 785408
      %v2579 = vsel %vm2578, %v2570, %v2543
      %v2580 = vsel %vm2578, %v2571, %v2545
      %v2581 = vsel %vm2578, %v2572, %v2547
      %v2582 = vsel %vm2578, %v2573, %v2549
      %v2583 = vsel %vm2578, %v2574, %v2551
      %v2584 = vsel %vm2578, %v2575, %v2553
      %v2585 = vsel %vm2578, %v2576, %v2555
      %v2586 = vsel %vm2578, %v2577, %v2555
      %v2587 = vld [vmem:[%s19] sm:$0xff]
      %v2588 = vld [vmem:[%s19 + $0x8] sm:$0xff]
      %v2589 = vld [vmem:[%s19 + $0x10] sm:$0xff]
      %v2590 = vld [vmem:[%s19 + $0x18] sm:$0xff]
      %v2591 = vld [vmem:[%s19 + $0x20] sm:$0xff]
      %v2592 = vld [vmem:[%s19 + $0x28] sm:$0xff]
      %v2593 = vld [vmem:[%s19 + $0x30] sm:$0xff]
      %v2594 = vld [vmem:[%s19 + $0x38] sm:$0xff]
      %v2595 = vld [vmem:[%s19 + $0x40] sm:$0xff]
      %v2596 = vld [vmem:[%s19 + $0x48] sm:$0xff]
      %v2597 = vld [vmem:[%s19 + $0x50] sm:$0xff]
      %v2598 = vld [vmem:[%s19 + $0x58] sm:$0xff]
      %v2599 = vld [vmem:[%s19 + $0x60] sm:$0xff]
      %v2600 = vld [vmem:[%s19 + $0x68] sm:$0xff]
      %v2601 = vld [vmem:[%s19 + $0x70] sm:$0xff]
      %v2602 = vld [vmem:[%s19 + $0x78] sm:$0xff]
      %v2603 = vld [vmem:[%s19 + $0x80] sm:$0xff]
      %v2604 = vld [vmem:[%s19 + $0x88] sm:$0xff]
      %v2605 = vld [vmem:[%s19 + $0x90] sm:$0xff]
      %v2606 = vld [vmem:[%s19 + $0x98] sm:$0xff]
      %v2607 = vld [vmem:[%s21] sm:$0x1]
      %v2609 = vlaneseq
      %v2610 = vshrl.u32 %v2609, 7
      %v2611 = vsub.s32 0, %v2610
      %v2612 = vrot.slane %v2607, %v2611
      %v2614 = vsel %vm1368, %v2485, 0
      %v2616 = vsel %vm1368, %v2486, 0
      %v2618 = vsel %vm1368, %v2487, 0
      %v2620 = vsel %vm1368, %v2488, 0
      %v2622 = vsel %vm1368, 0.0, 0
      %2624 = vmatprep.subr.mxu0 0.0
      %2625 = vmatpush1.msra.mxu0 %v2602
      %2626 = vmatprep.subr.mxu0 0.0
      %2627 = vmatpush1.msra.mxu0 %v2601
      %2628 = vmatprep.subr.mxu0 0.0
      %2629 = vmatpush1.msra.mxu0 %v2600
      %2630 = vmatprep.subr.mxu0 0.0
      %2631 = vmatpush1.msra.mxu0 %v2599
      %2632 = vmatprep.subr.mxu0 0.0
      %2633 = vmatpush1.msra.mxu0 %v2598
      %2634 = vmatprep.subr.mxu0 0.0
      %2635 = vmatpush1.msra.mxu0 %v2597
      %2636 = vmatprep.subr.mxu0 0.0
      %2637 = vmatpush1.msra.mxu0 %v2596
      %2638 = vmatprep.subr.mxu0 0.0
      %2639 = vmatpush1.msra.mxu0 %v2595
      %2640 = vmatprep.subr.mxu0 0.0
      %2641 = vmatpush1.msra.mxu0 %v2594
      %2642 = vmatprep.subr.mxu0 0.0
      %2643 = vmatpush1.msra.mxu0 %v2593
      %2644 = vmatprep.subr.mxu0 0.0
      %2645 = vmatpush1.msra.mxu0 %v2592
      %2646 = vmatprep.subr.mxu0 0.0
      %2647 = vmatpush1.msra.mxu0 %v2591
      %2648 = vmatprep.subr.mxu0 0.0
      %2649 = vmatpush1.msra.mxu0 %v2590
      %2650 = vmatprep.subr.mxu0 0.0
      %2651 = vmatpush1.msra.mxu0 %v2589
      %2652 = vmatprep.subr.mxu0 0.0
      %2653 = vmatpush1.msra.mxu0 %v2588
      %2654 = vmatprep.subr.mxu0 0.0
      %2655 = vmatpush1.msra.mxu0 %v2587
      %2656 = vmatprep.subr.mxu0 0.0
      %2657 = vmatpush2.msra.mxu0 0.0
      %2658 = vmatprep.subr.mxu0 0.0
      %2659 = vmatpush2.msra.mxu0 0.0
      %2660 = vmatprep.subr.mxu0 0.0
      %2661 = vmatpush2.msra.mxu0 0.0
      %2662 = vmatprep.subr.mxu0 0.0
      %2663 = vmatpush2.msra.mxu0 0.0
      %2664 = vmatprep.subr.mxu0 0.0
      %2665 = vmatpush2.msra.mxu0 0.0
      %2666 = vmatprep.subr.mxu0 0.0
      %2667 = vmatpush2.msra.mxu0 0.0
      %2668 = vmatprep.subr.mxu0 0.0
      %2669 = vmatpush2.msra.mxu0 0.0
      %2670 = vmatprep.subr.mxu0 0.0
      %2671 = vmatpush2.msra.mxu0 0.0
      %2672 = vmatprep.subr.mxu0 0.0
      %2673 = vmatpush2.msra.mxu0 0.0
      %2674 = vmatprep.subr.mxu0 0.0
      %2675 = vmatpush2.msra.mxu0 0.0
      %2676 = vmatprep.subr.mxu0 0.0
      %2677 = vmatpush2.msra.mxu0 0.0
      %2678 = vmatprep.subr.mxu0 0.0
      %2679 = vmatpush2.msra.mxu0 0.0
      %2680 = vmatprep.subr.mxu0 0.0
      %2681 = vmatpush2.msra.mxu0 %v2606
      %2682 = vmatprep.subr.mxu0 0.0
      %2683 = vmatpush2.msra.mxu0 %v2605
      %2684 = vmatprep.subr.mxu0 0.0
      %2685 = vmatpush2.msra.mxu0 %v2604
      %2686 = vmatprep.subr.mxu0 0.0
      %2687 = vmatpush2.msra.mxu0 %v2603
      %2688 = vmatprep.mubr.f32.mxu0 %v2614
      %2689 = vmatmul.mubr.f32.gmra.mxu0 %v2579
      %v2690 = vpop.f32.mrf.mxu0
      %v2691 = vadd.f32 %v2612, %v2690
      %v2692 = vpop.f32.mrf.mxu0
      %2693 = vmatprep.mubr.f32.mxu0 %v2616
      %2694 = vmatmul.mubr.f32.gmra.mxu0 %v2580
      %v2695 = vpop.f32.mrf.mxu0
      %v2696 = vadd.f32 %v2612, %v2695
      %v2697 = vpop.f32.mrf.mxu0
      %2698 = vmatprep.mubr.f32.mxu0 %v2618
      %2699 = vmatmul.mubr.f32.gmra.mxu0 %v2581
      %v2700 = vpop.f32.mrf.mxu0
      %v2701 = vadd.f32 %v2612, %v2700
      %v2702 = vpop.f32.mrf.mxu0
      %2703 = vmatprep.mubr.f32.mxu0 %v2620
      %2704 = vmatmul.mubr.f32.gmra.mxu0 %v2582
      %v2705 = vpop.f32.mrf.mxu0
      %v2706 = vadd.f32 %v2612, %v2705
      %v2707 = vpop.f32.mrf.mxu0
      %2708 = vmatprep.mubr.f32.mxu0 %v2622
      %2709 = vmatmul.mubr.f32.gmra.mxu0 %v2583
      %v2710 = vpop.f32.mrf.mxu0
      %v2711 = vadd.f32 %v2612, %v2710
      %v2712 = vpop.f32.mrf.mxu0
      %2713 = vmatprep.mubr.f32.mxu0 %v2622
      %2714 = vmatmul.mubr.f32.gmra.mxu0 %v2584
      %v2715 = vpop.f32.mrf.mxu0
      %v2716 = vadd.f32 %v2612, %v2715
      %v2717 = vpop.f32.mrf.mxu0
      %2718 = vmatprep.mubr.f32.mxu0 %v2622
      %2719 = vmatmul.mubr.f32.gmra.mxu0 %v2585
      %v2720 = vpop.f32.mrf.mxu0
      %v2721 = vadd.f32 %v2612, %v2720
      %v2722 = vpop.f32.mrf.mxu0
      %2723 = vmatprep.mubr.f32.mxu0 %v2622
      %2724 = vmatmul.mubr.f32.gmra.mxu0 %v2586
      %v2725 = vpop.f32.mrf.mxu0
      %v2726 = vadd.f32 %v2612, %v2725
      %v2727 = vpop.f32.mrf.mxu0
      %2728 = vdwg.mxu0
      %v2729 = vmax.f32 %v2691, 0.0
      %v2730 = vmax.f32 %v2696, 0.0
      %v2731 = vmax.f32 %v2701, 0.0
      %v2732 = vmax.f32 %v2706, 0.0
      %v2733 = vmax.f32 %v2711, 0.0
      %v2734 = vmax.f32 %v2716, 0.0
      %v2735 = vmax.f32 %v2721, 0.0
      %v2736 = vmax.f32 %v2726, 0.0
      %2741 = vrot.lane.b32.xlu0 %v2729, 32
      %v2742 = vpop.permute.xlu0 %2741
      %2743 = vrot.lane.b32.xlu0 %v2730, 32
      %v2744 = vpop.permute.xlu0 %2743
      %2745 = vrot.lane.b32.xlu0 %v2731, 32
      %v2746 = vpop.permute.xlu0 %2745
      %2747 = vrot.lane.b32.xlu0 %v2732, 32
      %v2748 = vpop.permute.xlu0 %2747
      %2757 = vrot.lane.b32.xlu0 %v2729, 64
      %v2758 = vpop.permute.xlu0 %2757
      %2759 = vrot.lane.b32.xlu0 %v2730, 64
      %v2760 = vpop.permute.xlu0 %2759
      %2761 = vrot.lane.b32.xlu0 %v2731, 64
      %v2762 = vpop.permute.xlu0 %2761
      %2763 = vrot.lane.b32.xlu0 %v2732, 64
      %v2764 = vpop.permute.xlu0 %2763
      %2765 = vrot.lane.b32.xlu0 %v2733, 64
      %v2766 = vpop.permute.xlu0 %2765
      %2767 = vrot.lane.b32.xlu0 %v2734, 64
      %v2768 = vpop.permute.xlu0 %2767
      %2769 = vrot.lane.b32.xlu0 %v2735, 64
      %v2770 = vpop.permute.xlu0 %2769
      %2771 = vrot.lane.b32.xlu0 %v2736, 64
      %v2772 = vpop.permute.xlu0 %2771
      %2781 = vrot.lane.b32.xlu0 %v2733, 96
      %v2782 = vpop.permute.xlu0 %2781
      %2783 = vrot.lane.b32.xlu0 %v2734, 96
      %v2784 = vpop.permute.xlu0 %2783
      %2785 = vrot.lane.b32.xlu0 %v2735, 96
      %v2786 = vpop.permute.xlu0 %2785
      %2787 = vrot.lane.b32.xlu0 %v2736, 96
      %v2788 = vpop.permute.xlu0 %2787
      %v2793 = vsel %vm1368, 0.0, %v2742
      %v2794 = vsel %vm1368, 0.0, %v2744
      %v2795 = vsel %vm1368, 0.0, %v2746
      %v2796 = vsel %vm1368, 0.0, %v2748
      %v2797 = vsel %vm2041, %v2563, %v2758
      %v2798 = vsel %vm2041, %v2563, %v2760
      %v2799 = vsel %vm2041, %v2563, %v2762
      %v2800 = vsel %vm2041, %v2563, %v2764
      %v2801 = vsel %vm2041, %v2793, %v2766
      %v2802 = vsel %vm2041, %v2794, %v2768
      %v2803 = vsel %vm2041, %v2795, %v2770
      %v2804 = vsel %vm2041, %v2796, %v2772
      %v2805 = vsel %vm2578, %v2797, %v2782
      %v2806 = vsel %vm2578, %v2798, %v2784
      %v2807 = vsel %vm2578, %v2799, %v2786
      %v2808 = vsel %vm2578, %v2800, %v2788
      %v2809 = vsel %vm2578, %v2801, %v2555
      %v2810 = vsel %vm2578, %v2802, %v2555
      %v2811 = vsel %vm2578, %v2803, %v2555
      %v2812 = vsel %vm2578, %v2804, %v2555
      %v2813 = vld [vmem:[%s23] sm:$0xff]
      %v2814 = vld [vmem:[%s23 + $0x8] sm:$0xff]
      %v2815 = vld [vmem:[%s23 + $0x10] sm:$0xff]
      %v2816 = vld [vmem:[%s23 + $0x18] sm:$0xff]
      %v2817 = vld [vmem:[%s23 + $0x20] sm:$0xff]
      %v2818 = vld [vmem:[%s23 + $0x28] sm:$0xff]
      %v2819 = vld [vmem:[%s23 + $0x30] sm:$0xff]
      %v2820 = vld [vmem:[%s23 + $0x38] sm:$0xff]
      %v2821 = vld [vmem:[%s23 + $0x40] sm:$0xff]
      %v2822 = vld [vmem:[%s23 + $0x48] sm:$0xff]
      %v2823 = vld [vmem:[%s23 + $0x50] sm:$0xff]
      %v2824 = vld [vmem:[%s23 + $0x58] sm:$0xff]
      %v2825 = vld [vmem:[%s23 + $0x60] sm:$0xff]
      %v2826 = vld [vmem:[%s23 + $0x68] sm:$0xff]
      %v2827 = vld [vmem:[%s23 + $0x70] sm:$0xff]
      %v2828 = vld [vmem:[%s23 + $0x78] sm:$0xff]
      %v2829 = vld [vmem:[%s23 + $0x80] sm:$0xff]
      %v2830 = vld [vmem:[%s23 + $0x88] sm:$0xff]
      %v2831 = vld [vmem:[%s23 + $0x90] sm:$0xff]
      %v2832 = vld [vmem:[%s23 + $0x98] sm:$0xff]
      %v2833 = vld [vmem:[%s25] sm:$0x1]
      %v2835 = vlaneseq
      %v2836 = vshrl.u32 %v2835, 7
      %v2837 = vsub.s32 0, %v2836
      %v2838 = vrot.slane %v2833, %v2837
      %2840 = vmatprep.subr.mxu0 0.0
      %2841 = vmatpush1.msra.mxu0 %v2828
      %2842 = vmatprep.subr.mxu0 0.0
      %2843 = vmatpush1.msra.mxu0 %v2827
      %2844 = vmatprep.subr.mxu0 0.0
      %2845 = vmatpush1.msra.mxu0 %v2826
      %2846 = vmatprep.subr.mxu0 0.0
      %2847 = vmatpush1.msra.mxu0 %v2825
      %2848 = vmatprep.subr.mxu0 0.0
      %2849 = vmatpush1.msra.mxu0 %v2824
      %2850 = vmatprep.subr.mxu0 0.0
      %2851 = vmatpush1.msra.mxu0 %v2823
      %2852 = vmatprep.subr.mxu0 0.0
      %2853 = vmatpush1.msra.mxu0 %v2822
      %2854 = vmatprep.subr.mxu0 0.0
      %2855 = vmatpush1.msra.mxu0 %v2821
      %2856 = vmatprep.subr.mxu0 0.0
      %2857 = vmatpush1.msra.mxu0 %v2820
      %2858 = vmatprep.subr.mxu0 0.0
      %2859 = vmatpush1.msra.mxu0 %v2819
      %2860 = vmatprep.subr.mxu0 0.0
      %2861 = vmatpush1.msra.mxu0 %v2818
      %2862 = vmatprep.subr.mxu0 0.0
      %2863 = vmatpush1.msra.mxu0 %v2817
      %2864 = vmatprep.subr.mxu0 0.0
      %2865 = vmatpush1.msra.mxu0 %v2816
      %2866 = vmatprep.subr.mxu0 0.0
      %2867 = vmatpush1.msra.mxu0 %v2815
      %2868 = vmatprep.subr.mxu0 0.0
      %2869 = vmatpush1.msra.mxu0 %v2814
      %2870 = vmatprep.subr.mxu0 0.0
      %2871 = vmatpush1.msra.mxu0 %v2813
      %2872 = vmatprep.subr.mxu0 0.0
      %2873 = vmatpush2.msra.mxu0 0.0
      %2874 = vmatprep.subr.mxu0 0.0
      %2875 = vmatpush2.msra.mxu0 0.0
      %2876 = vmatprep.subr.mxu0 0.0
      %2877 = vmatpush2.msra.mxu0 0.0
      %2878 = vmatprep.subr.mxu0 0.0
      %2879 = vmatpush2.msra.mxu0 0.0
      %2880 = vmatprep.subr.mxu0 0.0
      %2881 = vmatpush2.msra.mxu0 0.0
      %2882 = vmatprep.subr.mxu0 0.0
      %2883 = vmatpush2.msra.mxu0 0.0
      %2884 = vmatprep.subr.mxu0 0.0
      %2885 = vmatpush2.msra.mxu0 0.0
      %2886 = vmatprep.subr.mxu0 0.0
      %2887 = vmatpush2.msra.mxu0 0.0
      %2888 = vmatprep.subr.mxu0 0.0
      %2889 = vmatpush2.msra.mxu0 0.0
      %2890 = vmatprep.subr.mxu0 0.0
      %2891 = vmatpush2.msra.mxu0 0.0
      %2892 = vmatprep.subr.mxu0 0.0
      %2893 = vmatpush2.msra.mxu0 0.0
      %2894 = vmatprep.subr.mxu0 0.0
      %2895 = vmatpush2.msra.mxu0 0.0
      %2896 = vmatprep.subr.mxu0 0.0
      %2897 = vmatpush2.msra.mxu0 %v2832
      %2898 = vmatprep.subr.mxu0 0.0
      %2899 = vmatpush2.msra.mxu0 %v2831
      %2900 = vmatprep.subr.mxu0 0.0
      %2901 = vmatpush2.msra.mxu0 %v2830
      %2902 = vmatprep.subr.mxu0 0.0
      %2903 = vmatpush2.msra.mxu0 %v2829
      %2904 = vmatprep.mubr.f32.mxu0 %v2622
      %2905 = vmatmul.mubr.f32.gmra.mxu0 %v2805
      %v2906 = vpop.f32.mrf.mxu0
      %v2907 = vadd.f32 %v2838, %v2906
      %v2908 = vpop.f32.mrf.mxu0
      %2909 = vmatprep.mubr.f32.mxu0 %v2622
      %2910 = vmatmul.mubr.f32.gmra.mxu0 %v2806
      %v2911 = vpop.f32.mrf.mxu0
      %v2912 = vadd.f32 %v2838, %v2911
      %v2913 = vpop.f32.mrf.mxu0
      %2914 = vmatprep.mubr.f32.mxu0 %v2622
      %2915 = vmatmul.mubr.f32.gmra.mxu0 %v2807
      %v2916 = vpop.f32.mrf.mxu0
      %v2917 = vadd.f32 %v2838, %v2916
      %v2918 = vpop.f32.mrf.mxu0
      %2919 = vmatprep.mubr.f32.mxu0 %v2622
      %2920 = vmatmul.mubr.f32.gmra.mxu0 %v2808
      %v2921 = vpop.f32.mrf.mxu0
      %v2922 = vadd.f32 %v2838, %v2921
      %v2923 = vpop.f32.mrf.mxu0
      %2924 = vmatprep.mubr.f32.mxu0 %v2622
      %2925 = vmatmul.mubr.f32.gmra.mxu0 %v2809
      %v2926 = vpop.f32.mrf.mxu0
      %v2927 = vadd.f32 %v2838, %v2926
      %v2928 = vpop.f32.mrf.mxu0
      %2929 = vmatprep.mubr.f32.mxu0 %v2622
      %2930 = vmatmul.mubr.f32.gmra.mxu0 %v2810
      %v2931 = vpop.f32.mrf.mxu0
      %v2932 = vadd.f32 %v2838, %v2931
      %v2933 = vpop.f32.mrf.mxu0
      %2934 = vmatprep.mubr.f32.mxu0 %v2622
      %2935 = vmatmul.mubr.f32.gmra.mxu0 %v2811
      %v2936 = vpop.f32.mrf.mxu0
      %v2937 = vadd.f32 %v2838, %v2936
      %v2938 = vpop.f32.mrf.mxu0
      %2939 = vmatprep.mubr.f32.mxu0 %v2622
      %2940 = vmatmul.mubr.f32.gmra.mxu0 %v2812
      %v2941 = vpop.f32.mrf.mxu0
      %v2942 = vadd.f32 %v2838, %v2941
      %v2943 = vpop.f32.mrf.mxu0
      %2944 = vdwg.mxu0
      %v2945 = vmax.f32 %v2907, 0.0
      %v2946 = vmax.f32 %v2912, 0.0
      %v2947 = vmax.f32 %v2917, 0.0
      %v2948 = vmax.f32 %v2922, 0.0
      %v2949 = vmax.f32 %v2927, 0.0
      %v2950 = vmax.f32 %v2932, 0.0
      %v2951 = vmax.f32 %v2937, 0.0
      %v2952 = vmax.f32 %v2942, 0.0
      %2961 = vrot.lane.b32.xlu0 %v2945, 64
      %v2962 = vpop.permute.xlu0 %2961
      %2963 = vrot.lane.b32.xlu0 %v2946, 64
      %v2964 = vpop.permute.xlu0 %2963
      %2965 = vrot.lane.b32.xlu0 %v2947, 64
      %v2966 = vpop.permute.xlu0 %2965
      %2967 = vrot.lane.b32.xlu0 %v2948, 64
      %v2968 = vpop.permute.xlu0 %2967
      %2969 = vrot.lane.b32.xlu0 %v2949, 64
      %v2970 = vpop.permute.xlu0 %2969
      %2971 = vrot.lane.b32.xlu0 %v2950, 64
      %v2972 = vpop.permute.xlu0 %2971
      %2973 = vrot.lane.b32.xlu0 %v2951, 64
      %v2974 = vpop.permute.xlu0 %2973
      %2975 = vrot.lane.b32.xlu0 %v2952, 64
      %v2976 = vpop.permute.xlu0 %2975
      %v2985 = vsel %vm2041, 0.0, %v2962
      %v2986 = vsel %vm2041, 0.0, %v2964
      %v2987 = vsel %vm2041, 0.0, %v2966
      %v2988 = vsel %vm2041, 0.0, %v2968
      %v2989 = vsel %vm2041, 0.0, %v2970
      %v2990 = vsel %vm2041, 0.0, %v2972
      %v2991 = vsel %vm2041, 0.0, %v2974
      %v2992 = vsel %vm2041, 0.0, %v2976
      %v2993 = vsel %vm2041, %v2945, %v2007
      %v2994 = vsel %vm2041, %v2946, %v2007
      %v2995 = vsel %vm2041, %v2947, %v2007
      %v2996 = vsel %vm2041, %v2948, %v2007
      %v2997 = vld [vmem:[%s27] sm:$0xff]
      %v2998 = vld [vmem:[%s27 + $0x8] sm:$0xff]
      %v2999 = vld [vmem:[%s27 + $0x10] sm:$0xff]
      %v3000 = vld [vmem:[%s27 + $0x18] sm:$0xff]
      %v3001 = vld [vmem:[%s27 + $0x20] sm:$0xff]
      %v3002 = vld [vmem:[%s27 + $0x28] sm:$0xff]
      %v3003 = vld [vmem:[%s27 + $0x30] sm:$0xff]
      %v3004 = vld [vmem:[%s27 + $0x38] sm:$0xff]
      %v3005 = vld [vmem:[%s27 + $0x40] sm:$0xff]
      %v3006 = vld [vmem:[%s27 + $0x48] sm:$0xff]
      %v3007 = vld [vmem:[%s27 + $0x50] sm:$0xff]
      %v3008 = vld [vmem:[%s27 + $0x58] sm:$0xff]
      %v3009 = vld [vmem:[%s27 + $0x60] sm:$0xff]
      %v3010 = vld [vmem:[%s27 + $0x68] sm:$0xff]
      %v3011 = vld [vmem:[%s27 + $0x70] sm:$0xff]
      %v3012 = vld [vmem:[%s27 + $0x78] sm:$0xff]
      %v3013 = vld [vmem:[%s27 + $0x80] sm:$0xff]
      %v3014 = vld [vmem:[%s27 + $0x88] sm:$0xff]
      %v3015 = vld [vmem:[%s27 + $0x90] sm:$0xff]
      %v3016 = vld [vmem:[%s27 + $0x98] sm:$0xff]
      %v3017 = vld [vmem:[%s27 + $0xa0] sm:$0xff]
      %v3018 = vld [vmem:[%s27 + $0xa8] sm:$0xff]
      %v3019 = vld [vmem:[%s27 + $0xb0] sm:$0xff]
      %v3020 = vld [vmem:[%s27 + $0xb8] sm:$0xff]
      %v3021 = vsel %vm2041, 0.0, 0
      %3023 = vmatprep.subr.mxu0 0.0
      %3024 = vmatpush1.msra.mxu0 %v3012
      %3025 = vmatprep.subr.mxu0 0.0
      %3026 = vmatpush1.msra.mxu0 %v3011
      %3027 = vmatprep.subr.mxu0 0.0
      %3028 = vmatpush1.msra.mxu0 %v3010
      %3029 = vmatprep.subr.mxu0 0.0
      %3030 = vmatpush1.msra.mxu0 %v3009
      %3031 = vmatprep.subr.mxu0 0.0
      %3032 = vmatpush1.msra.mxu0 %v3008
      %3033 = vmatprep.subr.mxu0 0.0
      %3034 = vmatpush1.msra.mxu0 %v3007
      %3035 = vmatprep.subr.mxu0 0.0
      %3036 = vmatpush1.msra.mxu0 %v3006
      %3037 = vmatprep.subr.mxu0 0.0
      %3038 = vmatpush1.msra.mxu0 %v3005
      %3039 = vmatprep.subr.mxu0 0.0
      %3040 = vmatpush1.msra.mxu0 %v3004
      %3041 = vmatprep.subr.mxu0 0.0
      %3042 = vmatpush1.msra.mxu0 %v3003
      %3043 = vmatprep.subr.mxu0 0.0
      %3044 = vmatpush1.msra.mxu0 %v3002
      %3045 = vmatprep.subr.mxu0 0.0
      %3046 = vmatpush1.msra.mxu0 %v3001
      %3047 = vmatprep.subr.mxu0 0.0
      %3048 = vmatpush1.msra.mxu0 %v3000
      %3049 = vmatprep.subr.mxu0 0.0
      %3050 = vmatpush1.msra.mxu0 %v2999
      %3051 = vmatprep.subr.mxu0 0.0
      %3052 = vmatpush1.msra.mxu0 %v2998
      %3053 = vmatprep.subr.mxu0 0.0
      %3054 = vmatpush1.msra.mxu0 %v2997
      %3055 = vmatprep.subr.mxu0 0.0
      %3056 = vmatpush2.msra.mxu0 0.0
      %3057 = vmatprep.subr.mxu0 0.0
      %3058 = vmatpush2.msra.mxu0 0.0
      %3059 = vmatprep.subr.mxu0 0.0
      %3060 = vmatpush2.msra.mxu0 0.0
      %3061 = vmatprep.subr.mxu0 0.0
      %3062 = vmatpush2.msra.mxu0 0.0
      %3063 = vmatprep.subr.mxu0 0.0
      %3064 = vmatpush2.msra.mxu0 0.0
      %3065 = vmatprep.subr.mxu0 0.0
      %3066 = vmatpush2.msra.mxu0 0.0
      %3067 = vmatprep.subr.mxu0 0.0
      %3068 = vmatpush2.msra.mxu0 0.0
      %3069 = vmatprep.subr.mxu0 0.0
      %3070 = vmatpush2.msra.mxu0 0.0
      %3071 = vmatprep.subr.mxu0 0.0
      %3072 = vmatpush2.msra.mxu0 %v3020
      %3073 = vmatprep.subr.mxu0 0.0
      %3074 = vmatpush2.msra.mxu0 %v3019
      %3075 = vmatprep.subr.mxu0 0.0
      %3076 = vmatpush2.msra.mxu0 %v3018
      %3077 = vmatprep.subr.mxu0 0.0
      %3078 = vmatpush2.msra.mxu0 %v3017
      %3079 = vmatprep.subr.mxu0 0.0
      %3080 = vmatpush2.msra.mxu0 %v3016
      %3081 = vmatprep.subr.mxu0 0.0
      %3082 = vmatpush2.msra.mxu0 %v3015
      %3083 = vmatprep.subr.mxu0 0.0
      %3084 = vmatpush2.msra.mxu0 %v3014
      %3085 = vmatprep.subr.mxu0 0.0
      %3086 = vmatpush2.msra.mxu0 %v3013
      %3087 = vmatprep.mubr.f32.mxu0 %v3021
      %3088 = vmatmul.mubr.f32.gmra.mxu0 %v2985
      %v3089 = vpop.f32.mrf.mxu0
      %v3090 = vadd.f32 0.0, %v3089
      %v3091 = vpop.f32.mrf.mxu0
      %3092 = vmatprep.mubr.f32.mxu0 %v3021
      %3093 = vmatmul.mubr.f32.gmra.mxu0 %v2986
      %v3094 = vpop.f32.mrf.mxu0
      %v3095 = vadd.f32 0.0, %v3094
      %v3096 = vpop.f32.mrf.mxu0
      %3097 = vmatprep.mubr.f32.mxu0 %v3021
      %3098 = vmatmul.mubr.f32.gmra.mxu0 %v2987
      %v3099 = vpop.f32.mrf.mxu0
      %v3100 = vadd.f32 0.0, %v3099
      %v3101 = vpop.f32.mrf.mxu0
      %3102 = vmatprep.mubr.f32.mxu0 %v3021
      %3103 = vmatmul.mubr.f32.gmra.mxu0 %v2988
      %v3104 = vpop.f32.mrf.mxu0
      %v3105 = vadd.f32 0.0, %v3104
      %v3106 = vpop.f32.mrf.mxu0
      %3107 = vmatprep.mubr.f32.mxu0 %v3021
      %3108 = vmatmul.mubr.f32.gmra.mxu0 %v2989
      %v3109 = vpop.f32.mrf.mxu0
      %v3110 = vadd.f32 0.0, %v3109
      %v3111 = vpop.f32.mrf.mxu0
      %3112 = vmatprep.mubr.f32.mxu0 %v3021
      %3113 = vmatmul.mubr.f32.gmra.mxu0 %v2990
      %v3114 = vpop.f32.mrf.mxu0
      %v3115 = vadd.f32 0.0, %v3114
      %v3116 = vpop.f32.mrf.mxu0
      %3117 = vmatprep.mubr.f32.mxu0 %v3021
      %3118 = vmatmul.mubr.f32.gmra.mxu0 %v2991
      %v3119 = vpop.f32.mrf.mxu0
      %v3120 = vadd.f32 0.0, %v3119
      %v3121 = vpop.f32.mrf.mxu0
      %3122 = vmatprep.mubr.f32.mxu0 %v3021
      %3123 = vmatmul.mubr.f32.gmra.mxu0 %v2992
      %v3124 = vpop.f32.mrf.mxu0
      %v3125 = vadd.f32 0.0, %v3124
      %v3126 = vpop.f32.mrf.mxu0
      %3127 = vdwg.mxu0
      %v3128 = vld [vmem:[%s29] sm:$0xff]
      %v3129 = vld [vmem:[%s29 + $0x8] sm:$0xff]
      %v3130 = vld [vmem:[%s29 + $0x10] sm:$0xff]
      %v3131 = vld [vmem:[%s29 + $0x18] sm:$0xff]
      %v3132 = vld [vmem:[%s29 + $0x20] sm:$0xff]
      %v3133 = vld [vmem:[%s29 + $0x28] sm:$0xff]
      %v3134 = vld [vmem:[%s29 + $0x30] sm:$0xff]
      %v3135 = vld [vmem:[%s29 + $0x38] sm:$0xff]
      %v3136 = vld [vmem:[%s29 + $0x40] sm:$0xff]
      %v3137 = vld [vmem:[%s29 + $0x48] sm:$0xff]
      %v3138 = vld [vmem:[%s29 + $0x50] sm:$0xff]
      %v3139 = vld [vmem:[%s29 + $0x58] sm:$0xff]
      %v3140 = vld [vmem:[%s29 + $0x60] sm:$0xff]
      %v3141 = vld [vmem:[%s29 + $0x68] sm:$0xff]
      %v3142 = vld [vmem:[%s29 + $0x70] sm:$0xff]
      %v3143 = vld [vmem:[%s29 + $0x78] sm:$0xff]
      %3144 = vmatprep.subr.mxu0 0.0
      %3145 = vmatpush1.msra.mxu0 %v3143
      %3146 = vmatprep.subr.mxu0 0.0
      %3147 = vmatpush1.msra.mxu0 %v3142
      %3148 = vmatprep.subr.mxu0 0.0
      %3149 = vmatpush1.msra.mxu0 %v3141
      %3150 = vmatprep.subr.mxu0 0.0
      %3151 = vmatpush1.msra.mxu0 %v3140
      %3152 = vmatprep.subr.mxu0 0.0
      %3153 = vmatpush1.msra.mxu0 %v3139
      %3154 = vmatprep.subr.mxu0 0.0
      %3155 = vmatpush1.msra.mxu0 %v3138
      %3156 = vmatprep.subr.mxu0 0.0
      %3157 = vmatpush1.msra.mxu0 %v3137
      %3158 = vmatprep.subr.mxu0 0.0
      %3159 = vmatpush1.msra.mxu0 %v3136
      %3160 = vmatprep.subr.mxu0 0.0
      %3161 = vmatpush1.msra.mxu0 %v3135
      %3162 = vmatprep.subr.mxu0 0.0
      %3163 = vmatpush1.msra.mxu0 %v3134
      %3164 = vmatprep.subr.mxu0 0.0
      %3165 = vmatpush1.msra.mxu0 %v3133
      %3166 = vmatprep.subr.mxu0 0.0
      %3167 = vmatpush1.msra.mxu0 %v3132
      %3168 = vmatprep.subr.mxu0 0.0
      %3169 = vmatpush1.msra.mxu0 %v3131
      %3170 = vmatprep.subr.mxu0 0.0
      %3171 = vmatpush1.msra.mxu0 %v3130
      %3172 = vmatprep.subr.mxu0 0.0
      %3173 = vmatpush1.msra.mxu0 %v3129
      %3174 = vmatprep.subr.mxu0 0.0
      %3175 = vmatpush1.msra.mxu0 %v3128
      %3176 = vmatprep.subr.mxu0 0.0
      %3177 = vmatpush2.msra.mxu0 0.0
      %3178 = vmatprep.subr.mxu0 0.0
      %3179 = vmatpush2.msra.mxu0 0.0
      %3180 = vmatprep.subr.mxu0 0.0
      %3181 = vmatpush2.msra.mxu0 0.0
      %3182 = vmatprep.subr.mxu0 0.0
      %3183 = vmatpush2.msra.mxu0 0.0
      %3184 = vmatprep.subr.mxu0 0.0
      %3185 = vmatpush2.msra.mxu0 0.0
      %3186 = vmatprep.subr.mxu0 0.0
      %3187 = vmatpush2.msra.mxu0 0.0
      %3188 = vmatprep.subr.mxu0 0.0
      %3189 = vmatpush2.msra.mxu0 0.0
      %3190 = vmatprep.subr.mxu0 0.0
      %3191 = vmatpush2.msra.mxu0 0.0
      %3192 = vmatprep.subr.mxu0 0.0
      %3193 = vmatpush2.msra.mxu0 0.0
      %3194 = vmatprep.subr.mxu0 0.0
      %3195 = vmatpush2.msra.mxu0 0.0
      %3196 = vmatprep.subr.mxu0 0.0
      %3197 = vmatpush2.msra.mxu0 0.0
      %3198 = vmatprep.subr.mxu0 0.0
      %3199 = vmatpush2.msra.mxu0 0.0
      %3200 = vmatprep.subr.mxu0 0.0
      %3201 = vmatpush2.msra.mxu0 0.0
      %3202 = vmatprep.subr.mxu0 0.0
      %3203 = vmatpush2.msra.mxu0 0.0
      %3204 = vmatprep.subr.mxu0 0.0
      %3205 = vmatpush2.msra.mxu0 0.0
      %3206 = vmatprep.subr.mxu0 0.0
      %3207 = vmatpush2.msra.mxu0 0.0
      %3208 = vmatprep.mubr.f32.mxu0 0.0
      %3209 = vmatmul.mubr.f32.gmra.mxu0 %v2989
      %v3210 = vpop.f32.mrf.mxu0
      %v3211 = vadd.f32 0.0, %v3210
      %v3212 = vpop.f32.mrf.mxu0
      %3213 = vmatprep.mubr.f32.mxu0 0.0
      %3214 = vmatmul.mubr.f32.gmra.mxu0 %v2990
      %v3215 = vpop.f32.mrf.mxu0
      %v3216 = vadd.f32 0.0, %v3215
      %v3217 = vpop.f32.mrf.mxu0
      %3218 = vmatprep.mubr.f32.mxu0 0.0
      %3219 = vmatmul.mubr.f32.gmra.mxu0 %v2991
      %v3220 = vpop.f32.mrf.mxu0
      %v3221 = vadd.f32 0.0, %v3220
      %v3222 = vpop.f32.mrf.mxu0
      %3223 = vmatprep.mubr.f32.mxu0 0.0
      %3224 = vmatmul.mubr.f32.gmra.mxu0 %v2992
      %v3225 = vpop.f32.mrf.mxu0
      %v3226 = vadd.f32 0.0, %v3225
      %v3227 = vpop.f32.mrf.mxu0
      %3228 = vmatprep.mubr.f32.mxu0 0.0
      %3229 = vmatmul.mubr.f32.gmra.mxu0 %v2993
      %v3230 = vpop.f32.mrf.mxu0
      %v3231 = vadd.f32 0.0, %v3230
      %v3232 = vpop.f32.mrf.mxu0
      %3233 = vmatprep.mubr.f32.mxu0 0.0
      %3234 = vmatmul.mubr.f32.gmra.mxu0 %v2994
      %v3235 = vpop.f32.mrf.mxu0
      %v3236 = vadd.f32 0.0, %v3235
      %v3237 = vpop.f32.mrf.mxu0
      %3238 = vmatprep.mubr.f32.mxu0 0.0
      %3239 = vmatmul.mubr.f32.gmra.mxu0 %v2995
      %v3240 = vpop.f32.mrf.mxu0
      %v3241 = vadd.f32 0.0, %v3240
      %v3242 = vpop.f32.mrf.mxu0
      %3243 = vmatprep.mubr.f32.mxu0 0.0
      %3244 = vmatmul.mubr.f32.gmra.mxu0 %v2996
      %v3245 = vpop.f32.mrf.mxu0
      %v3246 = vadd.f32 0.0, %v3245
      %v3247 = vpop.f32.mrf.mxu0
      %3248 = vdwg.mxu0
      %v3249 = vld [vmem:[%s33] sm:$0xff]
      %v3250 = vld [vmem:[%s33 + $0x8] sm:$0xff]
      %v3251 = vld [vmem:[%s33 + $0x10] sm:$0xff]
      %v3252 = vld [vmem:[%s33 + $0x18] sm:$0xff]
      %v3253 = vld [vmem:[%s33 + $0x20] sm:$0xff]
      %v3254 = vld [vmem:[%s33 + $0x28] sm:$0xff]
      %v3255 = vld [vmem:[%s33 + $0x30] sm:$0xff]
      %v3256 = vld [vmem:[%s33 + $0x38] sm:$0xff]
      %3258 = vset.pattern.permute.xlu0 0
      %3259 = vperm.xlu0 %3258, %v3249
      %v3260 = vpop.permute.xlu0 %3259
      %3263 = vset.pattern.permute.xlu0 0
      %3264 = vperm.xlu0 %3263, %v3250
      %v3265 = vpop.permute.xlu0 %3264
      %3268 = vset.pattern.permute.xlu0 0
      %3269 = vperm.xlu0 %3268, %v3251
      %v3270 = vpop.permute.xlu0 %3269
      %3273 = vset.pattern.permute.xlu0 0
      %3274 = vperm.xlu0 %3273, %v3252
      %v3275 = vpop.permute.xlu0 %3274
      %3278 = vset.pattern.permute.xlu0 0
      %3279 = vperm.xlu0 %3278, %v3253
      %v3280 = vpop.permute.xlu0 %3279
      %3283 = vset.pattern.permute.xlu0 0
      %3284 = vperm.xlu0 %3283, %v3254
      %v3285 = vpop.permute.xlu0 %3284
      %3288 = vset.pattern.permute.xlu0 0
      %3289 = vperm.xlu0 %3288, %v3255
      %v3290 = vpop.permute.xlu0 %3289
      %3293 = vset.pattern.permute.xlu0 0
      %3294 = vperm.xlu0 %3293, %v3256
      %v3295 = vpop.permute.xlu0 %3294
      %v3297 = vmul.f32 %v3260, %v3090
      %v3298 = vmul.f32 %v3265, %v3095
      %v3299 = vmul.f32 %v3270, %v3100
      %v3300 = vmul.f32 %v3275, %v3105
      %v3301 = vmul.f32 %v3280, %v3110
      %v3302 = vmul.f32 %v3285, %v3115
      %v3303 = vmul.f32 %v3290, %v3120
      %v3304 = vmul.f32 %v3295, %v3125
      %v3305 = vsub.f32 1.0, %v3249
      %v3306 = vsub.f32 1.0, %v3250
      %v3307 = vsub.f32 1.0, %v3251
      %v3308 = vsub.f32 1.0, %v3252
      %v3309 = vsub.f32 1.0, %v3253
      %v3310 = vsub.f32 1.0, %v3254
      %v3311 = vsub.f32 1.0, %v3255
      %v3312 = vsub.f32 1.0, %v3256
      %3314 = vset.pattern.permute.xlu0 0
      %3315 = vperm.xlu0 %3314, %v3305
      %v3316 = vpop.permute.xlu0 %3315
      %3319 = vset.pattern.permute.xlu0 0
      %3320 = vperm.xlu0 %3319, %v3306
      %v3321 = vpop.permute.xlu0 %3320
      %3324 = vset.pattern.permute.xlu0 0
      %3325 = vperm.xlu0 %3324, %v3307
      %v3326 = vpop.permute.xlu0 %3325
      %3329 = vset.pattern.permute.xlu0 0
      %3330 = vperm.xlu0 %3329, %v3308
      %v3331 = vpop.permute.xlu0 %3330
      %3334 = vset.pattern.permute.xlu0 0
      %3335 = vperm.xlu0 %3334, %v3309
      %v3336 = vpop.permute.xlu0 %3335
      %3339 = vset.pattern.permute.xlu0 0
      %3340 = vperm.xlu0 %3339, %v3310
      %v3341 = vpop.permute.xlu0 %3340
      %3344 = vset.pattern.permute.xlu0 0
      %3345 = vperm.xlu0 %3344, %v3311
      %v3346 = vpop.permute.xlu0 %3345
      %3349 = vset.pattern.permute.xlu0 0
      %3350 = vperm.xlu0 %3349, %v3312
      %v3351 = vpop.permute.xlu0 %3350
      %v3353 = vmul.f32 %v3316, %v3211
      %v3354 = vmul.f32 %v3321, %v3216
      %v3355 = vmul.f32 %v3326, %v3221
      %v3356 = vmul.f32 %v3331, %v3226
      %v3357 = vmul.f32 %v3336, %v3231
      %v3358 = vmul.f32 %v3341, %v3236
      %v3359 = vmul.f32 %v3346, %v3241
      %v3360 = vmul.f32 %v3351, %v3246
      %v3361 = vadd.f32 %v3297, %v3353
      %v3362 = vadd.f32 %v3298, %v3354
      %v3363 = vadd.f32 %v3299, %v3355
      %v3364 = vadd.f32 %v3300, %v3356
      %v3365 = vadd.f32 %v3301, %v3357
      %v3366 = vadd.f32 %v3302, %v3358
      %v3367 = vadd.f32 %v3303, %v3359
      %v3368 = vadd.f32 %v3304, %v3360
      %v3369 = vld [vmem:[%s31] sm:$0x1]
      %v3371 = vlaneseq
      %v3372 = vshrl.u32 %v3371, 7
      %v3373 = vsub.s32 0, %v3372
      %v3374 = vrot.slane %v3369, %v3373
      %v3376 = vadd.f32 %v3361, %v3374
      %v3377 = vadd.f32 %v3362, %v3374
      %v3378 = vadd.f32 %v3363, %v3374
      %v3379 = vadd.f32 %v3364, %v3374
      %v3380 = vadd.f32 %v3365, %v3374
      %v3381 = vadd.f32 %v3366, %v3374
      %v3382 = vadd.f32 %v3367, %v3374
      %v3383 = vadd.f32 %v3368, %v3374
      %v3384 = vmax.f32 %v3376, 0.0
      %v3385 = vmax.f32 %v3377, 0.0
      %v3386 = vmax.f32 %v3378, 0.0
      %v3387 = vmax.f32 %v3379, 0.0
      %v3388 = vmax.f32 %v3380, 0.0
      %v3389 = vmax.f32 %v3381, 0.0
      %v3390 = vmax.f32 %v3382, 0.0
      %v3391 = vmax.f32 %v3383, 0.0
      %3392 = vrot.lane.b32.xlu0 %v2733, 32
      %v3393 = vpop.permute.xlu0 %3392
      %3394 = vrot.lane.b32.xlu0 %v2734, 32
      %v3395 = vpop.permute.xlu0 %3394
      %3396 = vrot.lane.b32.xlu0 %v2735, 32
      %v3397 = vpop.permute.xlu0 %3396
      %3398 = vrot.lane.b32.xlu0 %v2736, 32
      %v3399 = vpop.permute.xlu0 %3398
      %3408 = vrot.lane.b32.xlu0 %v3384, 96
      %v3409 = vpop.permute.xlu0 %3408
      %3410 = vrot.lane.b32.xlu0 %v3385, 96
      %v3411 = vpop.permute.xlu0 %3410
      %3412 = vrot.lane.b32.xlu0 %v3386, 96
      %v3413 = vpop.permute.xlu0 %3412
      %3414 = vrot.lane.b32.xlu0 %v3387, 96
      %v3415 = vpop.permute.xlu0 %3414
      %3424 = vrot.lane.b32.xlu0 %v3388, 32
      %v3425 = vpop.permute.xlu0 %3424
      %3426 = vrot.lane.b32.xlu0 %v3389, 32
      %v3427 = vpop.permute.xlu0 %3426
      %3428 = vrot.lane.b32.xlu0 %v3390, 32
      %v3429 = vpop.permute.xlu0 %3428
      %3430 = vrot.lane.b32.xlu0 %v3391, 32
      %v3431 = vpop.permute.xlu0 %3430
      %v3436 = vsel %vm1368, %v2729, %v3393
      %v3437 = vsel %vm1368, %v2730, %v3395
      %v3438 = vsel %vm1368, %v2731, %v3397
      %v3439 = vsel %vm1368, %v2732, %v3399
      %v3440 = vsel %vm2041, %v3436, %v2007
      %v3441 = vsel %vm2041, %v3437, %v2007
      %v3442 = vsel %vm2041, %v3438, %v2007
      %v3443 = vsel %vm2041, %v3439, %v2007
      %v3444 = vsel %vm2578, %v3440, %v3409
      %v3445 = vsel %vm2578, %v3441, %v3411
      %v3446 = vsel %vm2578, %v3442, %v3413
      %v3447 = vsel %vm2578, %v3443, %v3415
      %v3448 = vsel %vm1368, %v3384, %v3425
      %v3449 = vsel %vm1368, %v3385, %v3427
      %v3450 = vsel %vm1368, %v3386, %v3429
      %v3451 = vsel %vm1368, %v3387, %v3431
      %v3452 = vsel %vm1368, %v3388, %v2496
      %v3453 = vsel %vm1368, %v3389, %v2496
      %v3454 = vsel %vm1368, %v3390, %v2496
      %v3455 = vsel %vm1368, %v3391, %v2496
      %3456 = vrot.lane.b32.xlu0 %v3384, 64
      %v3457 = vpop.permute.xlu0 %3456
      %3458 = vrot.lane.b32.xlu0 %v3385, 64
      %v3459 = vpop.permute.xlu0 %3458
      %3460 = vrot.lane.b32.xlu0 %v3386, 64
      %v3461 = vpop.permute.xlu0 %3460
      %3462 = vrot.lane.b32.xlu0 %v3387, 64
      %v3463 = vpop.permute.xlu0 %3462
      %3464 = vrot.lane.b32.xlu0 %v3388, 64
      %v3465 = vpop.permute.xlu0 %3464
      %3466 = vrot.lane.b32.xlu0 %v3389, 64
      %v3467 = vpop.permute.xlu0 %3466
      %3474 = vrot.lane.b32.xlu0 %v3388, 96
      %v3475 = vpop.permute.xlu0 %3474
      %3476 = vrot.lane.b32.xlu0 %v3389, 96
      %v3477 = vpop.permute.xlu0 %3476
      %3478 = vrot.lane.b32.xlu0 %v3390, 96
      %v3479 = vpop.permute.xlu0 %3478
      %3480 = vrot.lane.b32.xlu0 %v3391, 96
      %v3481 = vpop.permute.xlu0 %3480
      %v3486 = vsel %vm1368, %v2733, %v2496
      %v3487 = vsel %vm1368, %v2734, %v2496
      %v3488 = vsel %vm2041, %v2795, %v2007
      %v3489 = vsel %vm2041, %v2796, %v2007
      %v3490 = vsel %vm2041, %v3436, %v3457
      %v3491 = vsel %vm2041, %v3437, %v3459
      %v3492 = vsel %vm2041, %v3438, %v3461
      %v3493 = vsel %vm2041, %v3439, %v3463
      %v3494 = vsel %vm2041, %v3486, %v3465
      %v3495 = vsel %vm2041, %v3487, %v3467
      %v3496 = vsel %vm2578, %v3488, %v3413
      %v3497 = vsel %vm2578, %v3489, %v3415
      %v3498 = vsel %vm2578, %v3490, %v3475
      %v3499 = vsel %vm2578, %v3491, %v3477
      %v3500 = vsel %vm2578, %v3492, %v3479
      %v3501 = vsel %vm2578, %v3493, %v3481
      %v3502 = vsel %vm2578, %v3494, %v2555
      %v3503 = vsel %vm2578, %v3495, %v2555
      %v3504 = vld [vmem:[%s35] sm:$0xff]
      %v3505 = vld [vmem:[%s35 + $0x8] sm:$0xff]
      %v3506 = vld [vmem:[%s35 + $0x10] sm:$0xff]
      %v3507 = vld [vmem:[%s35 + $0x18] sm:$0xff]
      %v3508 = vld [vmem:[%s35 + $0x20] sm:$0xff]
      %v3509 = vld [vmem:[%s35 + $0x28] sm:$0xff]
      %v3510 = vld [vmem:[%s35 + $0x30] sm:$0xff]
      %v3511 = vld [vmem:[%s35 + $0x38] sm:$0xff]
      %v3512 = vld [vmem:[%s35 + $0x40] sm:$0xff]
      %v3513 = vld [vmem:[%s35 + $0x48] sm:$0xff]
      %v3514 = vld [vmem:[%s35 + $0x50] sm:$0xff]
      %v3515 = vld [vmem:[%s35 + $0x58] sm:$0xff]
      %v3516 = vld [vmem:[%s35 + $0x60] sm:$0xff]
      %v3517 = vld [vmem:[%s35 + $0x68] sm:$0xff]
      %v3518 = vld [vmem:[%s35 + $0x70] sm:$0xff]
      %v3519 = vld [vmem:[%s35 + $0x78] sm:$0xff]
      %v3520 = vld [vmem:[%s35 + $0x80] sm:$0xff]
      %v3521 = vld [vmem:[%s35 + $0x88] sm:$0xff]
      %v3522 = vld [vmem:[%s35 + $0x90] sm:$0xff]
      %v3523 = vld [vmem:[%s35 + $0x98] sm:$0xff]
      %v3524 = vld [vmem:[%s35 + $0xa0] sm:$0xff]
      %v3525 = vld [vmem:[%s35 + $0xa8] sm:$0xff]
      %v3526 = vld [vmem:[%s35 + $0xb0] sm:$0xff]
      %v3527 = vld [vmem:[%s35 + $0xb8] sm:$0xff]
      %v3529 = vsel %vm2041, %v3448, 0
      %v3532 = vsel %vm2041, %v3449, 0
      %v3535 = vsel %vm2041, %v3450, 0
      %v3538 = vsel %vm2041, %v3451, 0
      %v3541 = vsel %vm2041, %v3452, 0
      %v3544 = vsel %vm2041, %v3453, 0
      %v3547 = vsel %vm2041, %v3454, 0
      %v3550 = vsel %vm2041, %v3455, 0
      %3552 = vmatprep.subr.mxu0 0.0
      %3553 = vmatpush1.msra.mxu0 %v3519
      %3554 = vmatprep.subr.mxu0 0.0
      %3555 = vmatpush1.msra.mxu0 %v3518
      %3556 = vmatprep.subr.mxu0 0.0
      %3557 = vmatpush1.msra.mxu0 %v3517
      %3558 = vmatprep.subr.mxu0 0.0
      %3559 = vmatpush1.msra.mxu0 %v3516
      %3560 = vmatprep.subr.mxu0 0.0
      %3561 = vmatpush1.msra.mxu0 %v3515
      %3562 = vmatprep.subr.mxu0 0.0
      %3563 = vmatpush1.msra.mxu0 %v3514
      %3564 = vmatprep.subr.mxu0 0.0
      %3565 = vmatpush1.msra.mxu0 %v3513
      %3566 = vmatprep.subr.mxu0 0.0
      %3567 = vmatpush1.msra.mxu0 %v3512
      %3568 = vmatprep.subr.mxu0 0.0
      %3569 = vmatpush1.msra.mxu0 %v3511
      %3570 = vmatprep.subr.mxu0 0.0
      %3571 = vmatpush1.msra.mxu0 %v3510
      %3572 = vmatprep.subr.mxu0 0.0
      %3573 = vmatpush1.msra.mxu0 %v3509
      %3574 = vmatprep.subr.mxu0 0.0
      %3575 = vmatpush1.msra.mxu0 %v3508
      %3576 = vmatprep.subr.mxu0 0.0
      %3577 = vmatpush1.msra.mxu0 %v3507
      %3578 = vmatprep.subr.mxu0 0.0
      %3579 = vmatpush1.msra.mxu0 %v3506
      %3580 = vmatprep.subr.mxu0 0.0
      %3581 = vmatpush1.msra.mxu0 %v3505
      %3582 = vmatprep.subr.mxu0 0.0
      %3583 = vmatpush1.msra.mxu0 %v3504
      %3584 = vmatprep.subr.mxu0 0.0
      %3585 = vmatpush2.msra.mxu0 0.0
      %3586 = vmatprep.subr.mxu0 0.0
      %3587 = vmatpush2.msra.mxu0 0.0
      %3588 = vmatprep.subr.mxu0 0.0
      %3589 = vmatpush2.msra.mxu0 0.0
      %3590 = vmatprep.subr.mxu0 0.0
      %3591 = vmatpush2.msra.mxu0 0.0
      %3592 = vmatprep.subr.mxu0 0.0
      %3593 = vmatpush2.msra.mxu0 0.0
      %3594 = vmatprep.subr.mxu0 0.0
      %3595 = vmatpush2.msra.mxu0 0.0
      %3596 = vmatprep.subr.mxu0 0.0
      %3597 = vmatpush2.msra.mxu0 0.0
      %3598 = vmatprep.subr.mxu0 0.0
      %3599 = vmatpush2.msra.mxu0 0.0
      %3600 = vmatprep.subr.mxu0 0.0
      %3601 = vmatpush2.msra.mxu0 %v3527
      %3602 = vmatprep.subr.mxu0 0.0
      %3603 = vmatpush2.msra.mxu0 %v3526
      %3604 = vmatprep.subr.mxu0 0.0
      %3605 = vmatpush2.msra.mxu0 %v3525
      %3606 = vmatprep.subr.mxu0 0.0
      %3607 = vmatpush2.msra.mxu0 %v3524
      %3608 = vmatprep.subr.mxu0 0.0
      %3609 = vmatpush2.msra.mxu0 %v3523
      %3610 = vmatprep.subr.mxu0 0.0
      %3611 = vmatpush2.msra.mxu0 %v3522
      %3612 = vmatprep.subr.mxu0 0.0
      %3613 = vmatpush2.msra.mxu0 %v3521
      %3614 = vmatprep.subr.mxu0 0.0
      %3615 = vmatpush2.msra.mxu0 %v3520
      %3616 = vmatprep.mubr.f32.mxu0 %v3529
      %3617 = vmatmul.mubr.f32.gmra.mxu0 %v2809
      %v3618 = vpop.f32.mrf.mxu0
      %v3619 = vadd.f32 0.0, %v3618
      %v3620 = vpop.f32.mrf.mxu0
      %3621 = vmatprep.mubr.f32.mxu0 %v3532
      %3622 = vmatmul.mubr.f32.gmra.mxu0 %v2810
      %v3623 = vpop.f32.mrf.mxu0
      %v3624 = vadd.f32 0.0, %v3623
      %v3625 = vpop.f32.mrf.mxu0
      %3626 = vmatprep.mubr.f32.mxu0 %v3535
      %3627 = vmatmul.mubr.f32.gmra.mxu0 %v2811
      %v3628 = vpop.f32.mrf.mxu0
      %v3629 = vadd.f32 0.0, %v3628
      %v3630 = vpop.f32.mrf.mxu0
      %3631 = vmatprep.mubr.f32.mxu0 %v3538
      %3632 = vmatmul.mubr.f32.gmra.mxu0 %v2812
      %v3633 = vpop.f32.mrf.mxu0
      %v3634 = vadd.f32 0.0, %v3633
      %v3635 = vpop.f32.mrf.mxu0
      %3636 = vmatprep.mubr.f32.mxu0 %v3541
      %3637 = vmatmul.mubr.f32.gmra.mxu0 %v3444
      %v3638 = vpop.f32.mrf.mxu0
      %v3639 = vadd.f32 0.0, %v3638
      %v3640 = vpop.f32.mrf.mxu0
      %3641 = vmatprep.mubr.f32.mxu0 %v3544
      %3642 = vmatmul.mubr.f32.gmra.mxu0 %v3445
      %v3643 = vpop.f32.mrf.mxu0
      %v3644 = vadd.f32 0.0, %v3643
      %v3645 = vpop.f32.mrf.mxu0
      %3646 = vmatprep.mubr.f32.mxu0 %v3547
      %3647 = vmatmul.mubr.f32.gmra.mxu0 %v3446
      %v3648 = vpop.f32.mrf.mxu0
      %v3649 = vadd.f32 0.0, %v3648
      %v3650 = vpop.f32.mrf.mxu0
      %3651 = vmatprep.mubr.f32.mxu0 %v3550
      %3652 = vmatmul.mubr.f32.gmra.mxu0 %v3447
      %v3653 = vpop.f32.mrf.mxu0
      %v3654 = vadd.f32 0.0, %v3653
      %v3655 = vpop.f32.mrf.mxu0
      %3656 = vdwg.mxu0
      %v3657 = vld [vmem:[%s37] sm:$0xff]
      %v3658 = vld [vmem:[%s37 + $0x8] sm:$0xff]
      %v3659 = vld [vmem:[%s37 + $0x10] sm:$0xff]
      %v3660 = vld [vmem:[%s37 + $0x18] sm:$0xff]
      %v3661 = vld [vmem:[%s37 + $0x20] sm:$0xff]
      %v3662 = vld [vmem:[%s37 + $0x28] sm:$0xff]
      %v3663 = vld [vmem:[%s37 + $0x30] sm:$0xff]
      %v3664 = vld [vmem:[%s37 + $0x38] sm:$0xff]
      %v3665 = vld [vmem:[%s37 + $0x40] sm:$0xff]
      %v3666 = vld [vmem:[%s37 + $0x48] sm:$0xff]
      %v3667 = vld [vmem:[%s37 + $0x50] sm:$0xff]
      %v3668 = vld [vmem:[%s37 + $0x58] sm:$0xff]
      %v3669 = vld [vmem:[%s37 + $0x60] sm:$0xff]
      %v3670 = vld [vmem:[%s37 + $0x68] sm:$0xff]
      %v3671 = vld [vmem:[%s37 + $0x70] sm:$0xff]
      %v3672 = vld [vmem:[%s37 + $0x78] sm:$0xff]
      %3673 = vmatprep.subr.mxu0 0.0
      %3674 = vmatpush1.msra.mxu0 %v3672
      %3675 = vmatprep.subr.mxu0 0.0
      %3676 = vmatpush1.msra.mxu0 %v3671
      %3677 = vmatprep.subr.mxu0 0.0
      %3678 = vmatpush1.msra.mxu0 %v3670
      %3679 = vmatprep.subr.mxu0 0.0
      %3680 = vmatpush1.msra.mxu0 %v3669
      %3681 = vmatprep.subr.mxu0 0.0
      %3682 = vmatpush1.msra.mxu0 %v3668
      %3683 = vmatprep.subr.mxu0 0.0
      %3684 = vmatpush1.msra.mxu0 %v3667
      %3685 = vmatprep.subr.mxu0 0.0
      %3686 = vmatpush1.msra.mxu0 %v3666
      %3687 = vmatprep.subr.mxu0 0.0
      %3688 = vmatpush1.msra.mxu0 %v3665
      %3689 = vmatprep.subr.mxu0 0.0
      %3690 = vmatpush1.msra.mxu0 %v3664
      %3691 = vmatprep.subr.mxu0 0.0
      %3692 = vmatpush1.msra.mxu0 %v3663
      %3693 = vmatprep.subr.mxu0 0.0
      %3694 = vmatpush1.msra.mxu0 %v3662
      %3695 = vmatprep.subr.mxu0 0.0
      %3696 = vmatpush1.msra.mxu0 %v3661
      %3697 = vmatprep.subr.mxu0 0.0
      %3698 = vmatpush1.msra.mxu0 %v3660
      %3699 = vmatprep.subr.mxu0 0.0
      %3700 = vmatpush1.msra.mxu0 %v3659
      %3701 = vmatprep.subr.mxu0 0.0
      %3702 = vmatpush1.msra.mxu0 %v3658
      %3703 = vmatprep.subr.mxu0 0.0
      %3704 = vmatpush1.msra.mxu0 %v3657
      %3705 = vmatprep.subr.mxu0 0.0
      %3706 = vmatpush2.msra.mxu0 0.0
      %3707 = vmatprep.subr.mxu0 0.0
      %3708 = vmatpush2.msra.mxu0 0.0
      %3709 = vmatprep.subr.mxu0 0.0
      %3710 = vmatpush2.msra.mxu0 0.0
      %3711 = vmatprep.subr.mxu0 0.0
      %3712 = vmatpush2.msra.mxu0 0.0
      %3713 = vmatprep.subr.mxu0 0.0
      %3714 = vmatpush2.msra.mxu0 0.0
      %3715 = vmatprep.subr.mxu0 0.0
      %3716 = vmatpush2.msra.mxu0 0.0
      %3717 = vmatprep.subr.mxu0 0.0
      %3718 = vmatpush2.msra.mxu0 0.0
      %3719 = vmatprep.subr.mxu0 0.0
      %3720 = vmatpush2.msra.mxu0 0.0
      %3721 = vmatprep.subr.mxu0 0.0
      %3722 = vmatpush2.msra.mxu0 0.0
      %3723 = vmatprep.subr.mxu0 0.0
      %3724 = vmatpush2.msra.mxu0 0.0
      %3725 = vmatprep.subr.mxu0 0.0
      %3726 = vmatpush2.msra.mxu0 0.0
      %3727 = vmatprep.subr.mxu0 0.0
      %3728 = vmatpush2.msra.mxu0 0.0
      %3729 = vmatprep.subr.mxu0 0.0
      %3730 = vmatpush2.msra.mxu0 0.0
      %3731 = vmatprep.subr.mxu0 0.0
      %3732 = vmatpush2.msra.mxu0 0.0
      %3733 = vmatprep.subr.mxu0 0.0
      %3734 = vmatpush2.msra.mxu0 0.0
      %3735 = vmatprep.subr.mxu0 0.0
      %3736 = vmatpush2.msra.mxu0 0.0
      %3737 = vmatprep.mubr.f32.mxu0 0.0
      %3738 = vmatmul.mubr.f32.gmra.mxu0 %v3496
      %v3739 = vpop.f32.mrf.mxu0
      %v3740 = vadd.f32 0.0, %v3739
      %v3741 = vpop.f32.mrf.mxu0
      %3742 = vmatprep.mubr.f32.mxu0 0.0
      %3743 = vmatmul.mubr.f32.gmra.mxu0 %v3497
      %v3744 = vpop.f32.mrf.mxu0
      %v3745 = vadd.f32 0.0, %v3744
      %v3746 = vpop.f32.mrf.mxu0
      %3747 = vmatprep.mubr.f32.mxu0 0.0
      %3748 = vmatmul.mubr.f32.gmra.mxu0 %v3498
      %v3749 = vpop.f32.mrf.mxu0
      %v3750 = vadd.f32 0.0, %v3749
      %v3751 = vpop.f32.mrf.mxu0
      %3752 = vmatprep.mubr.f32.mxu0 0.0
      %3753 = vmatmul.mubr.f32.gmra.mxu0 %v3499
      %v3754 = vpop.f32.mrf.mxu0
      %v3755 = vadd.f32 0.0, %v3754
      %v3756 = vpop.f32.mrf.mxu0
      %3757 = vmatprep.mubr.f32.mxu0 0.0
      %3758 = vmatmul.mubr.f32.gmra.mxu0 %v3500
      %v3759 = vpop.f32.mrf.mxu0
      %v3760 = vadd.f32 0.0, %v3759
      %v3761 = vpop.f32.mrf.mxu0
      %3762 = vmatprep.mubr.f32.mxu0 0.0
      %3763 = vmatmul.mubr.f32.gmra.mxu0 %v3501
      %v3764 = vpop.f32.mrf.mxu0
      %v3765 = vadd.f32 0.0, %v3764
      %v3766 = vpop.f32.mrf.mxu0
      %3767 = vmatprep.mubr.f32.mxu0 0.0
      %3768 = vmatmul.mubr.f32.gmra.mxu0 %v3502
      %v3769 = vpop.f32.mrf.mxu0
      %v3770 = vadd.f32 0.0, %v3769
      %v3771 = vpop.f32.mrf.mxu0
      %3772 = vmatprep.mubr.f32.mxu0 0.0
      %3773 = vmatmul.mubr.f32.gmra.mxu0 %v3503
      %v3774 = vpop.f32.mrf.mxu0
      %v3775 = vadd.f32 0.0, %v3774
      %v3776 = vpop.f32.mrf.mxu0
      %3777 = vdwg.mxu0
      %v3778 = vld [vmem:[%s41] sm:$0xff]
      %v3779 = vld [vmem:[%s41 + $0x8] sm:$0xff]
      %v3780 = vld [vmem:[%s41 + $0x10] sm:$0xff]
      %v3781 = vld [vmem:[%s41 + $0x18] sm:$0xff]
      %v3782 = vld [vmem:[%s41 + $0x20] sm:$0xff]
      %v3783 = vld [vmem:[%s41 + $0x28] sm:$0xff]
      %v3784 = vld [vmem:[%s41 + $0x30] sm:$0xff]
      %v3785 = vld [vmem:[%s41 + $0x38] sm:$0xff]
      %3787 = vset.pattern.permute.xlu0 0
      %3788 = vperm.xlu0 %3787, %v3778
      %v3789 = vpop.permute.xlu0 %3788
      %3792 = vset.pattern.permute.xlu0 0
      %3793 = vperm.xlu0 %3792, %v3779
      %v3794 = vpop.permute.xlu0 %3793
      %3797 = vset.pattern.permute.xlu0 0
      %3798 = vperm.xlu0 %3797, %v3780
      %v3799 = vpop.permute.xlu0 %3798
      %3802 = vset.pattern.permute.xlu0 0
      %3803 = vperm.xlu0 %3802, %v3781
      %v3804 = vpop.permute.xlu0 %3803
      %3807 = vset.pattern.permute.xlu0 0
      %3808 = vperm.xlu0 %3807, %v3782
      %v3809 = vpop.permute.xlu0 %3808
      %3812 = vset.pattern.permute.xlu0 0
      %3813 = vperm.xlu0 %3812, %v3783
      %v3814 = vpop.permute.xlu0 %3813
      %3817 = vset.pattern.permute.xlu0 0
      %3818 = vperm.xlu0 %3817, %v3784
      %v3819 = vpop.permute.xlu0 %3818
      %3822 = vset.pattern.permute.xlu0 0
      %3823 = vperm.xlu0 %3822, %v3785
      %v3824 = vpop.permute.xlu0 %3823
      %v3826 = vmul.f32 %v3789, %v3619
      %v3827 = vmul.f32 %v3794, %v3624
      %v3828 = vmul.f32 %v3799, %v3629
      %v3829 = vmul.f32 %v3804, %v3634
      %v3830 = vmul.f32 %v3809, %v3639
      %v3831 = vmul.f32 %v3814, %v3644
      %v3832 = vmul.f32 %v3819, %v3649
      %v3833 = vmul.f32 %v3824, %v3654
      %v3834 = vsub.f32 1.0, %v3778
      %v3835 = vsub.f32 1.0, %v3779
      %v3836 = vsub.f32 1.0, %v3780
      %v3837 = vsub.f32 1.0, %v3781
      %v3838 = vsub.f32 1.0, %v3782
      %v3839 = vsub.f32 1.0, %v3783
      %v3840 = vsub.f32 1.0, %v3784
      %v3841 = vsub.f32 1.0, %v3785
      %3843 = vset.pattern.permute.xlu0 0
      %3844 = vperm.xlu0 %3843, %v3834
      %v3845 = vpop.permute.xlu0 %3844
      %3848 = vset.pattern.permute.xlu0 0
      %3849 = vperm.xlu0 %3848, %v3835
      %v3850 = vpop.permute.xlu0 %3849
      %3853 = vset.pattern.permute.xlu0 0
      %3854 = vperm.xlu0 %3853, %v3836
      %v3855 = vpop.permute.xlu0 %3854
      %3858 = vset.pattern.permute.xlu0 0
      %3859 = vperm.xlu0 %3858, %v3837
      %v3860 = vpop.permute.xlu0 %3859
      %3863 = vset.pattern.permute.xlu0 0
      %3864 = vperm.xlu0 %3863, %v3838
      %v3865 = vpop.permute.xlu0 %3864
      %3868 = vset.pattern.permute.xlu0 0
      %3869 = vperm.xlu0 %3868, %v3839
      %v3870 = vpop.permute.xlu0 %3869
      %3873 = vset.pattern.permute.xlu0 0
      %3874 = vperm.xlu0 %3873, %v3840
      %v3875 = vpop.permute.xlu0 %3874
      %3878 = vset.pattern.permute.xlu0 0
      %3879 = vperm.xlu0 %3878, %v3841
      %v3880 = vpop.permute.xlu0 %3879
      %v3882 = vmul.f32 %v3845, %v3740
      %v3883 = vmul.f32 %v3850, %v3745
      %v3884 = vmul.f32 %v3855, %v3750
      %v3885 = vmul.f32 %v3860, %v3755
      %v3886 = vmul.f32 %v3865, %v3760
      %v3887 = vmul.f32 %v3870, %v3765
      %v3888 = vmul.f32 %v3875, %v3770
      %v3889 = vmul.f32 %v3880, %v3775
      %v3890 = vadd.f32 %v3826, %v3882
      %v3891 = vadd.f32 %v3827, %v3883
      %v3892 = vadd.f32 %v3828, %v3884
      %v3893 = vadd.f32 %v3829, %v3885
      %v3894 = vadd.f32 %v3830, %v3886
      %v3895 = vadd.f32 %v3831, %v3887
      %v3896 = vadd.f32 %v3832, %v3888
      %v3897 = vadd.f32 %v3833, %v3889
      %v3898 = vld [vmem:[%s39] sm:$0x1]
      %v3900 = vlaneseq
      %v3901 = vshrl.u32 %v3900, 7
      %v3902 = vsub.s32 0, %v3901
      %v3903 = vrot.slane %v3898, %v3902
      %v3905 = vadd.f32 %v3890, %v3903
      %v3906 = vadd.f32 %v3891, %v3903
      %v3907 = vadd.f32 %v3892, %v3903
      %v3908 = vadd.f32 %v3893, %v3903
      %v3909 = vadd.f32 %v3894, %v3903
      %v3910 = vadd.f32 %v3895, %v3903
      %v3911 = vadd.f32 %v3896, %v3903
      %v3912 = vadd.f32 %v3897, %v3903
      %v3913 = vmax.f32 %v3905, 0.0
      %v3914 = vmax.f32 %v3906, 0.0
      %v3915 = vmax.f32 %v3907, 0.0
      %v3916 = vmax.f32 %v3908, 0.0
      %v3917 = vmax.f32 %v3909, 0.0
      %v3918 = vmax.f32 %v3910, 0.0
      %v3919 = vmax.f32 %v3911, 0.0
      %v3920 = vmax.f32 %v3912, 0.0
      %3921 = vrot.lane.b32.xlu0 %v2487, 32
      %v3922 = vpop.permute.xlu0 %3921
      %3923 = vrot.lane.b32.xlu0 %v2488, 32
      %v3924 = vpop.permute.xlu0 %3923
      %3933 = vrot.lane.b32.xlu0 %v3913, 96
      %v3934 = vpop.permute.xlu0 %3933
      %3935 = vrot.lane.b32.xlu0 %v3914, 96
      %v3936 = vpop.permute.xlu0 %3935
      %3937 = vrot.lane.b32.xlu0 %v3915, 96
      %v3938 = vpop.permute.xlu0 %3937
      %3939 = vrot.lane.b32.xlu0 %v3916, 96
      %v3940 = vpop.permute.xlu0 %3939
      %3941 = vrot.lane.b32.xlu0 %v3917, 96
      %v3942 = vpop.permute.xlu0 %3941
      %3943 = vrot.lane.b32.xlu0 %v3918, 96
      %v3944 = vpop.permute.xlu0 %3943
      %3953 = vrot.lane.b32.xlu0 %v3915, 32
      %v3954 = vpop.permute.xlu0 %3953
      %3955 = vrot.lane.b32.xlu0 %v3916, 32
      %v3956 = vpop.permute.xlu0 %3955
      %3957 = vrot.lane.b32.xlu0 %v3917, 32
      %v3958 = vpop.permute.xlu0 %3957
      %3959 = vrot.lane.b32.xlu0 %v3918, 32
      %v3960 = vpop.permute.xlu0 %3959
      %3961 = vrot.lane.b32.xlu0 %v3919, 32
      %v3962 = vpop.permute.xlu0 %3961
      %3963 = vrot.lane.b32.xlu0 %v3920, 32
      %v3964 = vpop.permute.xlu0 %3963
      %v3971 = vsel %vm1368, %v2485, %v3922
      %v3972 = vsel %vm1368, %v2486, %v3924
      %v3973 = vsel %vm2041, %v3971, %v2007
      %v3974 = vsel %vm2041, %v3972, %v2007
      %v3975 = vsel %vm2578, %v2572, %v2555
      %v3976 = vsel %vm2578, %v2573, %v2555
      %v3977 = vsel %vm2578, %v2574, %v3934
      %v3978 = vsel %vm2578, %v2575, %v3936
      %v3979 = vsel %vm2578, %v2576, %v3938
      %v3980 = vsel %vm2578, %v2577, %v3940
      %v3981 = vsel %vm2578, %v3973, %v3942
      %v3982 = vsel %vm2578, %v3974, %v3944
      %v3983 = vsel %vm1368, %v3913, %v3954
      %v3984 = vsel %vm1368, %v3914, %v3956
      %v3985 = vsel %vm1368, %v3915, %v3958
      %v3986 = vsel %vm1368, %v3916, %v3960
      %v3987 = vsel %vm1368, %v3917, %v3962
      %v3988 = vsel %vm1368, %v3918, %v3964
      %v3989 = vsel %vm1368, %v3919, %v2496
      %v3990 = vsel %vm1368, %v3920, %v2496
      %3991 = vrot.lane.b32.xlu0 %v3913, 64
      %v3992 = vpop.permute.xlu0 %3991
      %3993 = vrot.lane.b32.xlu0 %v3914, 64
      %v3994 = vpop.permute.xlu0 %3993
      %3995 = vrot.lane.b32.xlu0 %v3915, 64
      %v3996 = vpop.permute.xlu0 %3995
      %3997 = vrot.lane.b32.xlu0 %v3916, 64
      %v3998 = vpop.permute.xlu0 %3997
      %3999 = vrot.lane.b32.xlu0 %v3917, 64
      %v4000 = vpop.permute.xlu0 %3999
      %4001 = vrot.lane.b32.xlu0 %v3918, 64
      %v4002 = vpop.permute.xlu0 %4001
      %4003 = vrot.lane.b32.xlu0 %v3919, 64
      %v4004 = vpop.permute.xlu0 %4003
      %4012 = vrot.lane.b32.xlu0 %v3919, 96
      %v4013 = vpop.permute.xlu0 %4012
      %4014 = vrot.lane.b32.xlu0 %v3920, 96
      %v4015 = vpop.permute.xlu0 %4014
      %v4018 = vsel %vm1368, %v2487, %v2496
      %v4019 = vsel %vm2041, %v2565, %v2007
      %v4020 = vsel %vm2041, %v2566, %v3992
      %v4021 = vsel %vm2041, %v2567, %v3994
      %v4022 = vsel %vm2041, %v2568, %v3996
      %v4023 = vsel %vm2041, %v2569, %v3998
      %v4024 = vsel %vm2041, %v3971, %v4000
      %v4025 = vsel %vm2041, %v3972, %v4002
      %v4026 = vsel %vm2041, %v4018, %v4004
      %v4027 = vsel %vm2578, %v4019, %v3936
      %v4028 = vsel %vm2578, %v4020, %v3938
      %v4029 = vsel %vm2578, %v4021, %v3940
      %v4030 = vsel %vm2578, %v4022, %v3942
      %v4031 = vsel %vm2578, %v4023, %v3944
      %v4032 = vsel %vm2578, %v4024, %v4013
      %v4033 = vsel %vm2578, %v4025, %v4015
      %v4034 = vsel %vm2578, %v4026, %v2555
      %v4035 = vld [vmem:[%s43] sm:$0xff]
      %v4036 = vld [vmem:[%s43 + $0x8] sm:$0xff]
      %v4037 = vld [vmem:[%s43 + $0x10] sm:$0xff]
      %v4038 = vld [vmem:[%s43 + $0x18] sm:$0xff]
      %v4039 = vld [vmem:[%s43 + $0x20] sm:$0xff]
      %v4040 = vld [vmem:[%s43 + $0x28] sm:$0xff]
      %v4041 = vld [vmem:[%s43 + $0x30] sm:$0xff]
      %v4042 = vld [vmem:[%s43 + $0x38] sm:$0xff]
      %v4043 = vld [vmem:[%s43 + $0x40] sm:$0xff]
      %v4044 = vld [vmem:[%s43 + $0x48] sm:$0xff]
      %v4045 = vld [vmem:[%s43 + $0x50] sm:$0xff]
      %v4046 = vld [vmem:[%s43 + $0x58] sm:$0xff]
      %v4047 = vld [vmem:[%s43 + $0x60] sm:$0xff]
      %v4048 = vld [vmem:[%s43 + $0x68] sm:$0xff]
      %v4049 = vld [vmem:[%s43 + $0x70] sm:$0xff]
      %v4050 = vld [vmem:[%s43 + $0x78] sm:$0xff]
      %v4051 = vld [vmem:[%s43 + $0x80] sm:$0xff]
      %v4052 = vld [vmem:[%s43 + $0x88] sm:$0xff]
      %v4053 = vld [vmem:[%s43 + $0x90] sm:$0xff]
      %v4054 = vld [vmem:[%s43 + $0x98] sm:$0xff]
      %v4055 = vld [vmem:[%s43 + $0xa0] sm:$0xff]
      %v4056 = vld [vmem:[%s43 + $0xa8] sm:$0xff]
      %v4057 = vld [vmem:[%s43 + $0xb0] sm:$0xff]
      %v4058 = vld [vmem:[%s43 + $0xb8] sm:$0xff]
      %v4060 = vsel %vm2041, %v3983, 0
      %v4063 = vsel %vm2041, %v3984, 0
      %v4066 = vsel %vm2041, %v3985, 0
      %v4069 = vsel %vm2041, %v3986, 0
      %v4072 = vsel %vm2041, %v3987, 0
      %v4075 = vsel %vm2041, %v3988, 0
      %v4078 = vsel %vm2041, %v3989, 0
      %v4081 = vsel %vm2041, %v3990, 0
      %4083 = vmatprep.subr.mxu0 0.0
      %4084 = vmatpush1.msra.mxu0 %v4050
      %4085 = vmatprep.subr.mxu0 0.0
      %4086 = vmatpush1.msra.mxu0 %v4049
      %4087 = vmatprep.subr.mxu0 0.0
      %4088 = vmatpush1.msra.mxu0 %v4048
      %4089 = vmatprep.subr.mxu0 0.0
      %4090 = vmatpush1.msra.mxu0 %v4047
      %4091 = vmatprep.subr.mxu0 0.0
      %4092 = vmatpush1.msra.mxu0 %v4046
      %4093 = vmatprep.subr.mxu0 0.0
      %4094 = vmatpush1.msra.mxu0 %v4045
      %4095 = vmatprep.subr.mxu0 0.0
      %4096 = vmatpush1.msra.mxu0 %v4044
      %4097 = vmatprep.subr.mxu0 0.0
      %4098 = vmatpush1.msra.mxu0 %v4043
      %4099 = vmatprep.subr.mxu0 0.0
      %4100 = vmatpush1.msra.mxu0 %v4042
      %4101 = vmatprep.subr.mxu0 0.0
      %4102 = vmatpush1.msra.mxu0 %v4041
      %4103 = vmatprep.subr.mxu0 0.0
      %4104 = vmatpush1.msra.mxu0 %v4040
      %4105 = vmatprep.subr.mxu0 0.0
      %4106 = vmatpush1.msra.mxu0 %v4039
      %4107 = vmatprep.subr.mxu0 0.0
      %4108 = vmatpush1.msra.mxu0 %v4038
      %4109 = vmatprep.subr.mxu0 0.0
      %4110 = vmatpush1.msra.mxu0 %v4037
      %4111 = vmatprep.subr.mxu0 0.0
      %4112 = vmatpush1.msra.mxu0 %v4036
      %4113 = vmatprep.subr.mxu0 0.0
      %4114 = vmatpush1.msra.mxu0 %v4035
      %4115 = vmatprep.subr.mxu0 0.0
      %4116 = vmatpush2.msra.mxu0 0.0
      %4117 = vmatprep.subr.mxu0 0.0
      %4118 = vmatpush2.msra.mxu0 0.0
      %4119 = vmatprep.subr.mxu0 0.0
      %4120 = vmatpush2.msra.mxu0 0.0
      %4121 = vmatprep.subr.mxu0 0.0
      %4122 = vmatpush2.msra.mxu0 0.0
      %4123 = vmatprep.subr.mxu0 0.0
      %4124 = vmatpush2.msra.mxu0 0.0
      %4125 = vmatprep.subr.mxu0 0.0
      %4126 = vmatpush2.msra.mxu0 0.0
      %4127 = vmatprep.subr.mxu0 0.0
      %4128 = vmatpush2.msra.mxu0 0.0
      %4129 = vmatprep.subr.mxu0 0.0
      %4130 = vmatpush2.msra.mxu0 0.0
      %4131 = vmatprep.subr.mxu0 0.0
      %4132 = vmatpush2.msra.mxu0 %v4058
      %4133 = vmatprep.subr.mxu0 0.0
      %4134 = vmatpush2.msra.mxu0 %v4057
      %4135 = vmatprep.subr.mxu0 0.0
      %4136 = vmatpush2.msra.mxu0 %v4056
      %4137 = vmatprep.subr.mxu0 0.0
      %4138 = vmatpush2.msra.mxu0 %v4055
      %4139 = vmatprep.subr.mxu0 0.0
      %4140 = vmatpush2.msra.mxu0 %v4054
      %4141 = vmatprep.subr.mxu0 0.0
      %4142 = vmatpush2.msra.mxu0 %v4053
      %4143 = vmatprep.subr.mxu0 0.0
      %4144 = vmatpush2.msra.mxu0 %v4052
      %4145 = vmatprep.subr.mxu0 0.0
      %4146 = vmatpush2.msra.mxu0 %v4051
      %4147 = vmatprep.mubr.f32.mxu0 %v4060
      %4148 = vmatmul.mubr.f32.gmra.mxu0 %v3975
      %v4149 = vpop.f32.mrf.mxu0
      %v4150 = vadd.f32 0.0, %v4149
      %v4151 = vpop.f32.mrf.mxu0
      %4152 = vmatprep.mubr.f32.mxu0 %v4063
      %4153 = vmatmul.mubr.f32.gmra.mxu0 %v3976
      %v4154 = vpop.f32.mrf.mxu0
      %v4155 = vadd.f32 0.0, %v4154
      %v4156 = vpop.f32.mrf.mxu0
      %4157 = vmatprep.mubr.f32.mxu0 %v4066
      %4158 = vmatmul.mubr.f32.gmra.mxu0 %v3977
      %v4159 = vpop.f32.mrf.mxu0
      %v4160 = vadd.f32 0.0, %v4159
      %v4161 = vpop.f32.mrf.mxu0
      %4162 = vmatprep.mubr.f32.mxu0 %v4069
      %4163 = vmatmul.mubr.f32.gmra.mxu0 %v3978
      %v4164 = vpop.f32.mrf.mxu0
      %v4165 = vadd.f32 0.0, %v4164
      %v4166 = vpop.f32.mrf.mxu0
      %4167 = vmatprep.mubr.f32.mxu0 %v4072
      %4168 = vmatmul.mubr.f32.gmra.mxu0 %v3979
      %v4169 = vpop.f32.mrf.mxu0
      %v4170 = vadd.f32 0.0, %v4169
      %v4171 = vpop.f32.mrf.mxu0
      %4172 = vmatprep.mubr.f32.mxu0 %v4075
      %4173 = vmatmul.mubr.f32.gmra.mxu0 %v3980
      %v4174 = vpop.f32.mrf.mxu0
      %v4175 = vadd.f32 0.0, %v4174
      %v4176 = vpop.f32.mrf.mxu0
      %4177 = vmatprep.mubr.f32.mxu0 %v4078
      %4178 = vmatmul.mubr.f32.gmra.mxu0 %v3981
      %v4179 = vpop.f32.mrf.mxu0
      %v4180 = vadd.f32 0.0, %v4179
      %v4181 = vpop.f32.mrf.mxu0
      %4182 = vmatprep.mubr.f32.mxu0 %v4081
      %4183 = vmatmul.mubr.f32.gmra.mxu0 %v3982
      %v4184 = vpop.f32.mrf.mxu0
      %v4185 = vadd.f32 0.0, %v4184
      %v4186 = vpop.f32.mrf.mxu0
      %4187 = vdwg.mxu0
      %v4188 = vld [vmem:[%s45] sm:$0xff]
      %v4189 = vld [vmem:[%s45 + $0x8] sm:$0xff]
      %v4190 = vld [vmem:[%s45 + $0x10] sm:$0xff]
      %v4191 = vld [vmem:[%s45 + $0x18] sm:$0xff]
      %v4192 = vld [vmem:[%s45 + $0x20] sm:$0xff]
      %v4193 = vld [vmem:[%s45 + $0x28] sm:$0xff]
      %v4194 = vld [vmem:[%s45 + $0x30] sm:$0xff]
      %v4195 = vld [vmem:[%s45 + $0x38] sm:$0xff]
      %v4196 = vld [vmem:[%s45 + $0x40] sm:$0xff]
      %v4197 = vld [vmem:[%s45 + $0x48] sm:$0xff]
      %v4198 = vld [vmem:[%s45 + $0x50] sm:$0xff]
      %v4199 = vld [vmem:[%s45 + $0x58] sm:$0xff]
      %v4200 = vld [vmem:[%s45 + $0x60] sm:$0xff]
      %v4201 = vld [vmem:[%s45 + $0x68] sm:$0xff]
      %v4202 = vld [vmem:[%s45 + $0x70] sm:$0xff]
      %v4203 = vld [vmem:[%s45 + $0x78] sm:$0xff]
      %4204 = vmatprep.subr.mxu0 0.0
      %4205 = vmatpush1.msra.mxu0 %v4203
      %4206 = vmatprep.subr.mxu0 0.0
      %4207 = vmatpush1.msra.mxu0 %v4202
      %4208 = vmatprep.subr.mxu0 0.0
      %4209 = vmatpush1.msra.mxu0 %v4201
      %4210 = vmatprep.subr.mxu0 0.0
      %4211 = vmatpush1.msra.mxu0 %v4200
      %4212 = vmatprep.subr.mxu0 0.0
      %4213 = vmatpush1.msra.mxu0 %v4199
      %4214 = vmatprep.subr.mxu0 0.0
      %4215 = vmatpush1.msra.mxu0 %v4198
      %4216 = vmatprep.subr.mxu0 0.0
      %4217 = vmatpush1.msra.mxu0 %v4197
      %4218 = vmatprep.subr.mxu0 0.0
      %4219 = vmatpush1.msra.mxu0 %v4196
      %4220 = vmatprep.subr.mxu0 0.0
      %4221 = vmatpush1.msra.mxu0 %v4195
      %4222 = vmatprep.subr.mxu0 0.0
      %4223 = vmatpush1.msra.mxu0 %v4194
      %4224 = vmatprep.subr.mxu0 0.0
      %4225 = vmatpush1.msra.mxu0 %v4193
      %4226 = vmatprep.subr.mxu0 0.0
      %4227 = vmatpush1.msra.mxu0 %v4192
      %4228 = vmatprep.subr.mxu0 0.0
      %4229 = vmatpush1.msra.mxu0 %v4191
      %4230 = vmatprep.subr.mxu0 0.0
      %4231 = vmatpush1.msra.mxu0 %v4190
      %4232 = vmatprep.subr.mxu0 0.0
      %4233 = vmatpush1.msra.mxu0 %v4189
      %4234 = vmatprep.subr.mxu0 0.0
      %4235 = vmatpush1.msra.mxu0 %v4188
      %4236 = vmatprep.subr.mxu0 0.0
      %4237 = vmatpush2.msra.mxu0 0.0
      %4238 = vmatprep.subr.mxu0 0.0
      %4239 = vmatpush2.msra.mxu0 0.0
      %4240 = vmatprep.subr.mxu0 0.0
      %4241 = vmatpush2.msra.mxu0 0.0
      %4242 = vmatprep.subr.mxu0 0.0
      %4243 = vmatpush2.msra.mxu0 0.0
      %4244 = vmatprep.subr.mxu0 0.0
      %4245 = vmatpush2.msra.mxu0 0.0
      %4246 = vmatprep.subr.mxu0 0.0
      %4247 = vmatpush2.msra.mxu0 0.0
      %4248 = vmatprep.subr.mxu0 0.0
      %4249 = vmatpush2.msra.mxu0 0.0
      %4250 = vmatprep.subr.mxu0 0.0
      %4251 = vmatpush2.msra.mxu0 0.0
      %4252 = vmatprep.subr.mxu0 0.0
      %4253 = vmatpush2.msra.mxu0 0.0
      %4254 = vmatprep.subr.mxu0 0.0
      %4255 = vmatpush2.msra.mxu0 0.0
      %4256 = vmatprep.subr.mxu0 0.0
      %4257 = vmatpush2.msra.mxu0 0.0
      %4258 = vmatprep.subr.mxu0 0.0
      %4259 = vmatpush2.msra.mxu0 0.0
      %4260 = vmatprep.subr.mxu0 0.0
      %4261 = vmatpush2.msra.mxu0 0.0
      %4262 = vmatprep.subr.mxu0 0.0
      %4263 = vmatpush2.msra.mxu0 0.0
      %4264 = vmatprep.subr.mxu0 0.0
      %4265 = vmatpush2.msra.mxu0 0.0
      %4266 = vmatprep.subr.mxu0 0.0
      %4267 = vmatpush2.msra.mxu0 0.0
      %4268 = vmatprep.mubr.f32.mxu0 0.0
      %4269 = vmatmul.mubr.f32.gmra.mxu0 %v4027
      %v4270 = vpop.f32.mrf.mxu0
      %v4271 = vadd.f32 0.0, %v4270
      %v4272 = vpop.f32.mrf.mxu0
      %4273 = vmatprep.mubr.f32.mxu0 0.0
      %4274 = vmatmul.mubr.f32.gmra.mxu0 %v4028
      %v4275 = vpop.f32.mrf.mxu0
      %v4276 = vadd.f32 0.0, %v4275
      %v4277 = vpop.f32.mrf.mxu0
      %4278 = vmatprep.mubr.f32.mxu0 0.0
      %4279 = vmatmul.mubr.f32.gmra.mxu0 %v4029
      %v4280 = vpop.f32.mrf.mxu0
      %v4281 = vadd.f32 0.0, %v4280
      %v4282 = vpop.f32.mrf.mxu0
      %4283 = vmatprep.mubr.f32.mxu0 0.0
      %4284 = vmatmul.mubr.f32.gmra.mxu0 %v4030
      %v4285 = vpop.f32.mrf.mxu0
      %v4286 = vadd.f32 0.0, %v4285
      %v4287 = vpop.f32.mrf.mxu0
      %4288 = vmatprep.mubr.f32.mxu0 0.0
      %4289 = vmatmul.mubr.f32.gmra.mxu0 %v4031
      %v4290 = vpop.f32.mrf.mxu0
      %v4291 = vadd.f32 0.0, %v4290
      %v4292 = vpop.f32.mrf.mxu0
      %4293 = vmatprep.mubr.f32.mxu0 0.0
      %4294 = vmatmul.mubr.f32.gmra.mxu0 %v4032
      %v4295 = vpop.f32.mrf.mxu0
      %v4296 = vadd.f32 0.0, %v4295
      %v4297 = vpop.f32.mrf.mxu0
      %4298 = vmatprep.mubr.f32.mxu0 0.0
      %4299 = vmatmul.mubr.f32.gmra.mxu0 %v4033
      %v4300 = vpop.f32.mrf.mxu0
      %v4301 = vadd.f32 0.0, %v4300
      %v4302 = vpop.f32.mrf.mxu0
      %4303 = vmatprep.mubr.f32.mxu0 0.0
      %4304 = vmatmul.mubr.f32.gmra.mxu0 %v4034
      %v4305 = vpop.f32.mrf.mxu0
      %v4306 = vadd.f32 0.0, %v4305
      %v4307 = vpop.f32.mrf.mxu0
      %4308 = vdwg.mxu0
      %v4309 = vld [vmem:[%s49] sm:$0xff]
      %v4310 = vld [vmem:[%s49 + $0x8] sm:$0xff]
      %v4311 = vld [vmem:[%s49 + $0x10] sm:$0xff]
      %v4312 = vld [vmem:[%s49 + $0x18] sm:$0xff]
      %v4313 = vld [vmem:[%s49 + $0x20] sm:$0xff]
      %v4314 = vld [vmem:[%s49 + $0x28] sm:$0xff]
      %v4315 = vld [vmem:[%s49 + $0x30] sm:$0xff]
      %v4316 = vld [vmem:[%s49 + $0x38] sm:$0xff]
      %4318 = vset.pattern.permute.xlu0 0
      %4319 = vperm.xlu0 %4318, %v4309
      %v4320 = vpop.permute.xlu0 %4319
      %4323 = vset.pattern.permute.xlu0 0
      %4324 = vperm.xlu0 %4323, %v4310
      %v4325 = vpop.permute.xlu0 %4324
      %4328 = vset.pattern.permute.xlu0 0
      %4329 = vperm.xlu0 %4328, %v4311
      %v4330 = vpop.permute.xlu0 %4329
      %4333 = vset.pattern.permute.xlu0 0
      %4334 = vperm.xlu0 %4333, %v4312
      %v4335 = vpop.permute.xlu0 %4334
      %4338 = vset.pattern.permute.xlu0 0
      %4339 = vperm.xlu0 %4338, %v4313
      %v4340 = vpop.permute.xlu0 %4339
      %4343 = vset.pattern.permute.xlu0 0
      %4344 = vperm.xlu0 %4343, %v4314
      %v4345 = vpop.permute.xlu0 %4344
      %4348 = vset.pattern.permute.xlu0 0
      %4349 = vperm.xlu0 %4348, %v4315
      %v4350 = vpop.permute.xlu0 %4349
      %4353 = vset.pattern.permute.xlu0 0
      %4354 = vperm.xlu0 %4353, %v4316
      %v4355 = vpop.permute.xlu0 %4354
      %v4357 = vmul.f32 %v4320, %v4150
      %v4358 = vmul.f32 %v4325, %v4155
      %v4359 = vmul.f32 %v4330, %v4160
      %v4360 = vmul.f32 %v4335, %v4165
      %v4361 = vmul.f32 %v4340, %v4170
      %v4362 = vmul.f32 %v4345, %v4175
      %v4363 = vmul.f32 %v4350, %v4180
      %v4364 = vmul.f32 %v4355, %v4185
      %v4365 = vsub.f32 1.0, %v4309
      %v4366 = vsub.f32 1.0, %v4310
      %v4367 = vsub.f32 1.0, %v4311
      %v4368 = vsub.f32 1.0, %v4312
      %v4369 = vsub.f32 1.0, %v4313
      %v4370 = vsub.f32 1.0, %v4314
      %v4371 = vsub.f32 1.0, %v4315
      %v4372 = vsub.f32 1.0, %v4316
      %4374 = vset.pattern.permute.xlu0 0
      %4375 = vperm.xlu0 %4374, %v4365
      %v4376 = vpop.permute.xlu0 %4375
      %4379 = vset.pattern.permute.xlu0 0
      %4380 = vperm.xlu0 %4379, %v4366
      %v4381 = vpop.permute.xlu0 %4380
      %4384 = vset.pattern.permute.xlu0 0
      %4385 = vperm.xlu0 %4384, %v4367
      %v4386 = vpop.permute.xlu0 %4385
      %4389 = vset.pattern.permute.xlu0 0
      %4390 = vperm.xlu0 %4389, %v4368
      %v4391 = vpop.permute.xlu0 %4390
      %4394 = vset.pattern.permute.xlu0 0
      %4395 = vperm.xlu0 %4394, %v4369
      %v4396 = vpop.permute.xlu0 %4395
      %4399 = vset.pattern.permute.xlu0 0
      %4400 = vperm.xlu0 %4399, %v4370
      %v4401 = vpop.permute.xlu0 %4400
      %4404 = vset.pattern.permute.xlu0 0
      %4405 = vperm.xlu0 %4404, %v4371
      %v4406 = vpop.permute.xlu0 %4405
      %4409 = vset.pattern.permute.xlu0 0
      %4410 = vperm.xlu0 %4409, %v4372
      %v4411 = vpop.permute.xlu0 %4410
      %v4413 = vmul.f32 %v4376, %v4271
      %v4414 = vmul.f32 %v4381, %v4276
      %v4415 = vmul.f32 %v4386, %v4281
      %v4416 = vmul.f32 %v4391, %v4286
      %v4417 = vmul.f32 %v4396, %v4291
      %v4418 = vmul.f32 %v4401, %v4296
      %v4419 = vmul.f32 %v4406, %v4301
      %v4420 = vmul.f32 %v4411, %v4306
      %v4421 = vadd.f32 %v4357, %v4413
      %v4422 = vadd.f32 %v4358, %v4414
      %v4423 = vadd.f32 %v4359, %v4415
      %v4424 = vadd.f32 %v4360, %v4416
      %v4425 = vadd.f32 %v4361, %v4417
      %v4426 = vadd.f32 %v4362, %v4418
      %v4427 = vadd.f32 %v4363, %v4419
      %v4428 = vadd.f32 %v4364, %v4420
      %v4429 = vld [vmem:[%s47] sm:$0x1]
      %v4431 = vlaneseq
      %v4432 = vshrl.u32 %v4431, 7
      %v4433 = vsub.s32 0, %v4432
      %v4434 = vrot.slane %v4429, %v4433
      %v4436 = vadd.f32 %v4421, %v4434
      %v4437 = vadd.f32 %v4422, %v4434
      %v4438 = vadd.f32 %v4423, %v4434
      %v4439 = vadd.f32 %v4424, %v4434
      %v4440 = vadd.f32 %v4425, %v4434
      %v4441 = vadd.f32 %v4426, %v4434
      %v4442 = vadd.f32 %v4427, %v4434
      %v4443 = vadd.f32 %v4428, %v4434
      %v4444 = vmax.f32 %v4436, 0.0
      %v4445 = vmax.f32 %v4437, 0.0
      %v4446 = vmax.f32 %v4438, 0.0
      %v4447 = vmax.f32 %v4439, 0.0
      %v4448 = vmax.f32 %v4440, 0.0
      %v4449 = vmax.f32 %v4441, 0.0
      %v4450 = vmax.f32 %v4442, 0.0
      %v4451 = vmax.f32 %v4443, 0.0
      %v4452 = vrot.slane %v2197, 4
      %v4453 = vrot.slane %v2198, 4
      %v4454 = vsel %vm1535, %v4452, %v4453
      %v4455 = vrot.slane %v2199, 4
      %v4456 = vsel %vm1535, %v4453, %v4455
      %v4457 = vrot.slane %v2200, 4
      %v4458 = vsel %vm1535, %v4455, %v4457
      %v4459 = vrot.slane %v2201, 4
      %v4460 = vsel %vm1535, %v4457, %v4459
      %v4461 = vrot.slane %v2202, 4
      %v4462 = vsel %vm1535, %v4459, %v4461
      %v4463 = vrot.slane %v2203, 4
      %v4464 = vsel %vm1535, %v4461, %v4463
      %v4465 = vrot.slane %v2204, 4
      %v4466 = vsel %vm1535, %v4463, %v4465
      %v4475 = vsel %vm1535, 0.0, %v4452
      %v4477 = vsel %vm1535, %v4465, 0.0
      %v4486 = vrot.slane %v4444, 4
      %v4487 = vrot.slane %v4445, 4
      %v4488 = vsel %vm1535, %v4486, %v4487
      %v4489 = vrot.slane %v4446, 4
      %v4490 = vsel %vm1535, %v4487, %v4489
      %v4491 = vrot.slane %v4447, 4
      %v4492 = vsel %vm1535, %v4489, %v4491
      %v4493 = vrot.slane %v4448, 4
      %v4494 = vsel %vm1535, %v4491, %v4493
      %v4495 = vrot.slane %v4449, 4
      %v4496 = vsel %vm1535, %v4493, %v4495
      %v4497 = vrot.slane %v4450, 4
      %v4498 = vsel %vm1535, %v4495, %v4497
      %v4499 = vrot.slane %v4451, 4
      %v4500 = vsel %vm1535, %v4497, %v4499
      %v4502 = vsel %vm1535, 0.0, %v4486
      %v4504 = vsel %vm1535, %v4499, 0.0
      %4505 = vrot.lane.b32.xlu0 %v2204, 16
      %v4506 = vpop.permute.xlu0 %4505
      %4508 = vrot.lane.b32.xlu0 %v4444, 48
      %v4509 = vpop.permute.xlu0 %4508
      %4510 = vrot.lane.b32.xlu0 %v4445, 48
      %v4511 = vpop.permute.xlu0 %4510
      %4512 = vrot.lane.b32.xlu0 %v4446, 48
      %v4513 = vpop.permute.xlu0 %4512
      %4514 = vrot.lane.b32.xlu0 %v4447, 48
      %v4515 = vpop.permute.xlu0 %4514
      %4516 = vrot.lane.b32.xlu0 %v4448, 48
      %v4517 = vpop.permute.xlu0 %4516
      %4518 = vrot.lane.b32.xlu0 %v4449, 48
      %v4519 = vpop.permute.xlu0 %4518
      %4520 = vrot.lane.b32.xlu0 %v4450, 48
      %v4521 = vpop.permute.xlu0 %4520
      %4529 = vrot.lane.b32.xlu0 %v4444, 64
      %v4530 = vpop.permute.xlu0 %4529
      %4531 = vrot.lane.b32.xlu0 %v4445, 64
      %v4532 = vpop.permute.xlu0 %4531
      %4533 = vrot.lane.b32.xlu0 %v4446, 64
      %v4534 = vpop.permute.xlu0 %4533
      %4535 = vrot.lane.b32.xlu0 %v4447, 64
      %v4536 = vpop.permute.xlu0 %4535
      %4537 = vrot.lane.b32.xlu0 %v4448, 64
      %v4538 = vpop.permute.xlu0 %4537
      %4539 = vrot.lane.b32.xlu0 %v4449, 64
      %v4540 = vpop.permute.xlu0 %4539
      %4541 = vrot.lane.b32.xlu0 %v4450, 64
      %v4542 = vpop.permute.xlu0 %4541
      %4543 = vrot.lane.b32.xlu0 %v4451, 64
      %v4544 = vpop.permute.xlu0 %4543
      %4553 = vrot.lane.b32.xlu0 %v4445, 80
      %v4554 = vpop.permute.xlu0 %4553
      %4555 = vrot.lane.b32.xlu0 %v4446, 80
      %v4556 = vpop.permute.xlu0 %4555
      %4557 = vrot.lane.b32.xlu0 %v4447, 80
      %v4558 = vpop.permute.xlu0 %4557
      %4559 = vrot.lane.b32.xlu0 %v4448, 80
      %v4560 = vpop.permute.xlu0 %4559
      %4561 = vrot.lane.b32.xlu0 %v4449, 80
      %v4562 = vpop.permute.xlu0 %4561
      %4563 = vrot.lane.b32.xlu0 %v4450, 80
      %v4564 = vpop.permute.xlu0 %4563
      %4565 = vrot.lane.b32.xlu0 %v4451, 80
      %v4566 = vpop.permute.xlu0 %4565
      %4567 = vrot.lane.b32.xlu0 0.0, 80
      %v4568 = vpop.permute.xlu0 %4567
      %v4577 = vsel %vm1350, %v2203, %v4506
      %v4578 = vsel %vm1368, %v4577, %v2496
      %v4579 = vsel %vm2032, %v2312, %v2276
      %v4580 = vsel %vm2032, %v2313, %v4509
      %v4581 = vsel %vm2032, %v2314, %v4511
      %v4582 = vsel %vm2032, %v2315, %v4513
      %v4583 = vsel %vm2032, %v2316, %v4515
      %v4584 = vsel %vm2032, %v2317, %v4517
      %v4585 = vsel %vm2032, %v2318, %v4519
      %v4586 = vsel %vm2032, %v4578, %v4521
      %v4587 = vsel %vm2041, %v4579, %v4530
      %v4588 = vsel %vm2041, %v4580, %v4532
      %v4589 = vsel %vm2041, %v4581, %v4534
      %v4590 = vsel %vm2041, %v4582, %v4536
      %v4591 = vsel %vm2041, %v4583, %v4538
      %v4592 = vsel %vm2041, %v4584, %v4540
      %v4593 = vsel %vm2041, %v4585, %v4542
      %v4594 = vsel %vm2041, %v4586, %v4544
      %v4595 = vsel %vm2067, %v4587, %v4554
      %v4596 = vsel %vm2067, %v4588, %v4556
      %v4597 = vsel %vm2067, %v4589, %v4558
      %v4598 = vsel %vm2067, %v4590, %v4560
      %v4599 = vsel %vm2067, %v4591, %v4562
      %v4600 = vsel %vm2067, %v4592, %v4564
      %v4601 = vsel %vm2067, %v4593, %v4566
      %v4602 = vsel %vm2067, %v4594, %v4568
      %4604 = vrot.lane.b32.xlu0 %v4454, 16
      %v4605 = vpop.permute.xlu0 %4604
      %4606 = vrot.lane.b32.xlu0 %v4456, 16
      %v4607 = vpop.permute.xlu0 %4606
      %4608 = vrot.lane.b32.xlu0 %v4458, 16
      %v4609 = vpop.permute.xlu0 %4608
      %4610 = vrot.lane.b32.xlu0 %v4460, 16
      %v4611 = vpop.permute.xlu0 %4610
      %4612 = vrot.lane.b32.xlu0 %v4462, 16
      %v4613 = vpop.permute.xlu0 %4612
      %4614 = vrot.lane.b32.xlu0 %v4464, 16
      %v4615 = vpop.permute.xlu0 %4614
      %4616 = vrot.lane.b32.xlu0 %v4466, 16
      %v4617 = vpop.permute.xlu0 %4616
      %4618 = vrot.lane.b32.xlu0 %v4477, 16
      %v4619 = vpop.permute.xlu0 %4618
      %4629 = vrot.lane.b32.xlu0 %v4502, 32
      %v4630 = vpop.permute.xlu0 %4629
      %4631 = vrot.lane.b32.xlu0 %v4488, 32
      %v4632 = vpop.permute.xlu0 %4631
      %4633 = vrot.lane.b32.xlu0 %v4490, 32
      %v4634 = vpop.permute.xlu0 %4633
      %4635 = vrot.lane.b32.xlu0 %v4492, 32
      %v4636 = vpop.permute.xlu0 %4635
      %4637 = vrot.lane.b32.xlu0 %v4494, 32
      %v4638 = vpop.permute.xlu0 %4637
      %4639 = vrot.lane.b32.xlu0 %v4496, 32
      %v4640 = vpop.permute.xlu0 %4639
      %4641 = vrot.lane.b32.xlu0 %v4498, 32
      %v4642 = vpop.permute.xlu0 %4641
      %4643 = vrot.lane.b32.xlu0 %v4500, 32
      %v4644 = vpop.permute.xlu0 %4643
      %4654 = vrot.lane.b32.xlu0 %v4488, 48
      %v4655 = vpop.permute.xlu0 %4654
      %4656 = vrot.lane.b32.xlu0 %v4490, 48
      %v4657 = vpop.permute.xlu0 %4656
      %4658 = vrot.lane.b32.xlu0 %v4492, 48
      %v4659 = vpop.permute.xlu0 %4658
      %4660 = vrot.lane.b32.xlu0 %v4494, 48
      %v4661 = vpop.permute.xlu0 %4660
      %4662 = vrot.lane.b32.xlu0 %v4496, 48
      %v4663 = vpop.permute.xlu0 %4662
      %4664 = vrot.lane.b32.xlu0 %v4498, 48
      %v4665 = vpop.permute.xlu0 %4664
      %4666 = vrot.lane.b32.xlu0 %v4500, 48
      %v4667 = vpop.permute.xlu0 %4666
      %4668 = vrot.lane.b32.xlu0 %v4504, 48
      %v4669 = vpop.permute.xlu0 %4668
      %v4678 = vsel %vm1350, %v4475, %v4605
      %v4679 = vsel %vm1350, %v4454, %v4607
      %v4680 = vsel %vm1350, %v4456, %v4609
      %v4681 = vsel %vm1350, %v4458, %v4611
      %v4682 = vsel %vm1350, %v4460, %v4613
      %v4683 = vsel %vm1350, %v4462, %v4615
      %v4684 = vsel %vm1350, %v4464, %v4617
      %v4685 = vsel %vm1350, %v4466, %v4619
      %v4686 = vsel %vm1368, %v4678, %v4630
      %v4687 = vsel %vm1368, %v4679, %v4632
      %v4688 = vsel %vm1368, %v4680, %v4634
      %v4689 = vsel %vm1368, %v4681, %v4636
      %v4690 = vsel %vm1368, %v4682, %v4638
      %v4691 = vsel %vm1368, %v4683, %v4640
      %v4692 = vsel %vm1368, %v4684, %v4642
      %v4693 = vsel %vm1368, %v4685, %v4644
      %v4694 = vsel %vm2032, %v4686, %v4655
      %v4695 = vsel %vm2032, %v4687, %v4657
      %v4696 = vsel %vm2032, %v4688, %v4659
      %v4697 = vsel %vm2032, %v4689, %v4661
      %v4698 = vsel %vm2032, %v4690, %v4663
      %v4699 = vsel %vm2032, %v4691, %v4665
      %v4700 = vsel %vm2032, %v4692, %v4667
      %v4701 = vsel %vm2032, %v4693, %v4669
      %v4702 = vld [vmem:[%s51] sm:$0xff]
      %v4703 = vld [vmem:[%s51 + $0x8] sm:$0xff]
      %v4704 = vld [vmem:[%s51 + $0x10] sm:$0xff]
      %v4705 = vld [vmem:[%s51 + $0x18] sm:$0xff]
      %v4706 = vld [vmem:[%s51 + $0x20] sm:$0xff]
      %v4707 = vld [vmem:[%s51 + $0x28] sm:$0xff]
      %v4708 = vld [vmem:[%s51 + $0x30] sm:$0xff]
      %v4709 = vld [vmem:[%s51 + $0x38] sm:$0xff]
      %v4710 = vld [vmem:[%s51 + $0x40] sm:$0xff]
      %v4711 = vld [vmem:[%s51 + $0x48] sm:$0xff]
      %v4712 = vld [vmem:[%s51 + $0x50] sm:$0xff]
      %v4713 = vld [vmem:[%s51 + $0x58] sm:$0xff]
      %v4715 = vsel %vm2578, %v4595, 0
      %v4718 = vsel %vm2578, %v4596, 0
      %v4721 = vsel %vm2578, %v4597, 0
      %v4724 = vsel %vm2578, %v4598, 0
      %v4727 = vsel %vm2578, %v4599, 0
      %v4730 = vsel %vm2578, %v4600, 0
      %v4733 = vsel %vm2578, %v4601, 0
      %v4736 = vsel %vm2578, %v4602, 0
      %4738 = vmatprep.subr.mxu0 0.0
      %4739 = vmatpush1.msra.mxu0 0.0
      %4740 = vmatprep.subr.mxu0 0.0
      %4741 = vmatpush1.msra.mxu0 0.0
      %4742 = vmatprep.subr.mxu0 0.0
      %4743 = vmatpush1.msra.mxu0 0.0
      %4744 = vmatprep.subr.mxu0 0.0
      %4745 = vmatpush1.msra.mxu0 0.0
      %4746 = vmatprep.subr.mxu0 0.0
      %4747 = vmatpush1.msra.mxu0 %v4713
      %4748 = vmatprep.subr.mxu0 0.0
      %4749 = vmatpush1.msra.mxu0 %v4712
      %4750 = vmatprep.subr.mxu0 0.0
      %4751 = vmatpush1.msra.mxu0 %v4711
      %4752 = vmatprep.subr.mxu0 0.0
      %4753 = vmatpush1.msra.mxu0 %v4710
      %4754 = vmatprep.subr.mxu0 0.0
      %4755 = vmatpush1.msra.mxu0 %v4709
      %4756 = vmatprep.subr.mxu0 0.0
      %4757 = vmatpush1.msra.mxu0 %v4708
      %4758 = vmatprep.subr.mxu0 0.0
      %4759 = vmatpush1.msra.mxu0 %v4707
      %4760 = vmatprep.subr.mxu0 0.0
      %4761 = vmatpush1.msra.mxu0 %v4706
      %4762 = vmatprep.subr.mxu0 0.0
      %4763 = vmatpush1.msra.mxu0 %v4705
      %4764 = vmatprep.subr.mxu0 0.0
      %4765 = vmatpush1.msra.mxu0 %v4704
      %4766 = vmatprep.subr.mxu0 0.0
      %4767 = vmatpush1.msra.mxu0 %v4703
      %4768 = vmatprep.subr.mxu0 0.0
      %4769 = vmatpush1.msra.mxu0 %v4702
      %4770 = vmatprep.subr.mxu0 0.0
      %4771 = vmatpush2.msra.mxu0 0.0
      %4772 = vmatprep.subr.mxu0 0.0
      %4773 = vmatpush2.msra.mxu0 0.0
      %4774 = vmatprep.subr.mxu0 0.0
      %4775 = vmatpush2.msra.mxu0 0.0
      %4776 = vmatprep.subr.mxu0 0.0
      %4777 = vmatpush2.msra.mxu0 0.0
      %4778 = vmatprep.subr.mxu0 0.0
      %4779 = vmatpush2.msra.mxu0 0.0
      %4780 = vmatprep.subr.mxu0 0.0
      %4781 = vmatpush2.msra.mxu0 0.0
      %4782 = vmatprep.subr.mxu0 0.0
      %4783 = vmatpush2.msra.mxu0 0.0
      %4784 = vmatprep.subr.mxu0 0.0
      %4785 = vmatpush2.msra.mxu0 0.0
      %4786 = vmatprep.subr.mxu0 0.0
      %4787 = vmatpush2.msra.mxu0 0.0
      %4788 = vmatprep.subr.mxu0 0.0
      %4789 = vmatpush2.msra.mxu0 0.0
      %4790 = vmatprep.subr.mxu0 0.0
      %4791 = vmatpush2.msra.mxu0 0.0
      %4792 = vmatprep.subr.mxu0 0.0
      %4793 = vmatpush2.msra.mxu0 0.0
      %4794 = vmatprep.subr.mxu0 0.0
      %4795 = vmatpush2.msra.mxu0 0.0
      %4796 = vmatprep.subr.mxu0 0.0
      %4797 = vmatpush2.msra.mxu0 0.0
      %4798 = vmatprep.subr.mxu0 0.0
      %4799 = vmatpush2.msra.mxu0 0.0
      %4800 = vmatprep.subr.mxu0 0.0
      %4801 = vmatpush2.msra.mxu0 0.0
      %4802 = vmatprep.mubr.f32.mxu0 0.0
      %4803 = vmatmul.mubr.f32.gmra.mxu0 %v4715
      %v4804 = vpop.f32.mrf.mxu0
      %v4805 = vadd.f32 0.0, %v4804
      %v4806 = vpop.f32.mrf.mxu0
      %4807 = vmatprep.mubr.f32.mxu0 0.0
      %4808 = vmatmul.mubr.f32.gmra.mxu0 %v4718
      %v4809 = vpop.f32.mrf.mxu0
      %v4810 = vadd.f32 0.0, %v4809
      %v4811 = vpop.f32.mrf.mxu0
      %4812 = vmatprep.mubr.f32.mxu0 0.0
      %4813 = vmatmul.mubr.f32.gmra.mxu0 %v4721
      %v4814 = vpop.f32.mrf.mxu0
      %v4815 = vadd.f32 0.0, %v4814
      %v4816 = vpop.f32.mrf.mxu0
      %4817 = vmatprep.mubr.f32.mxu0 0.0
      %4818 = vmatmul.mubr.f32.gmra.mxu0 %v4724
      %v4819 = vpop.f32.mrf.mxu0
      %v4820 = vadd.f32 0.0, %v4819
      %v4821 = vpop.f32.mrf.mxu0
      %4822 = vmatprep.mubr.f32.mxu0 0.0
      %4823 = vmatmul.mubr.f32.gmra.mxu0 %v4727
      %v4824 = vpop.f32.mrf.mxu0
      %v4825 = vadd.f32 0.0, %v4824
      %v4826 = vpop.f32.mrf.mxu0
      %4827 = vmatprep.mubr.f32.mxu0 0.0
      %4828 = vmatmul.mubr.f32.gmra.mxu0 %v4730
      %v4829 = vpop.f32.mrf.mxu0
      %v4830 = vadd.f32 0.0, %v4829
      %v4831 = vpop.f32.mrf.mxu0
      %4832 = vmatprep.mubr.f32.mxu0 0.0
      %4833 = vmatmul.mubr.f32.gmra.mxu0 %v4733
      %v4834 = vpop.f32.mrf.mxu0
      %v4835 = vadd.f32 0.0, %v4834
      %v4836 = vpop.f32.mrf.mxu0
      %4837 = vmatprep.mubr.f32.mxu0 0.0
      %4838 = vmatmul.mubr.f32.gmra.mxu0 %v4736
      %v4839 = vpop.f32.mrf.mxu0
      %v4840 = vadd.f32 0.0, %v4839
      %v4841 = vpop.f32.mrf.mxu0
      %4842 = vdwg.mxu0
      %v4843 = vld [vmem:[%s53] sm:$0xff]
      %v4844 = vld [vmem:[%s53 + $0x8] sm:$0xff]
      %v4845 = vld [vmem:[%s53 + $0x10] sm:$0xff]
      %v4846 = vld [vmem:[%s53 + $0x18] sm:$0xff]
      %v4847 = vld [vmem:[%s53 + $0x20] sm:$0xff]
      %v4848 = vld [vmem:[%s53 + $0x28] sm:$0xff]
      %v4849 = vld [vmem:[%s53 + $0x30] sm:$0xff]
      %v4850 = vld [vmem:[%s53 + $0x38] sm:$0xff]
      %v4852 = vsel %vm2041, %v4694, 0
      %v4855 = vsel %vm2041, %v4695, 0
      %v4858 = vsel %vm2041, %v4696, 0
      %v4861 = vsel %vm2041, %v4697, 0
      %v4864 = vsel %vm2041, %v4698, 0
      %v4867 = vsel %vm2041, %v4699, 0
      %v4870 = vsel %vm2041, %v4700, 0
      %v4873 = vsel %vm2041, %v4701, 0
      %4875 = vmatprep.subr.mxu0 0.0
      %4876 = vmatpush1.msra.mxu0 0.0
      %4877 = vmatprep.subr.mxu0 0.0
      %4878 = vmatpush1.msra.mxu0 0.0
      %4879 = vmatprep.subr.mxu0 0.0
      %4880 = vmatpush1.msra.mxu0 0.0
      %4881 = vmatprep.subr.mxu0 0.0
      %4882 = vmatpush1.msra.mxu0 0.0
      %4883 = vmatprep.subr.mxu0 0.0
      %4884 = vmatpush1.msra.mxu0 0.0
      %4885 = vmatprep.subr.mxu0 0.0
      %4886 = vmatpush1.msra.mxu0 0.0
      %4887 = vmatprep.subr.mxu0 0.0
      %4888 = vmatpush1.msra.mxu0 0.0
      %4889 = vmatprep.subr.mxu0 0.0
      %4890 = vmatpush1.msra.mxu0 0.0
      %4891 = vmatprep.subr.mxu0 0.0
      %4892 = vmatpush1.msra.mxu0 %v4850
      %4893 = vmatprep.subr.mxu0 0.0
      %4894 = vmatpush1.msra.mxu0 %v4849
      %4895 = vmatprep.subr.mxu0 0.0
      %4896 = vmatpush1.msra.mxu0 %v4848
      %4897 = vmatprep.subr.mxu0 0.0
      %4898 = vmatpush1.msra.mxu0 %v4847
      %4899 = vmatprep.subr.mxu0 0.0
      %4900 = vmatpush1.msra.mxu0 %v4846
      %4901 = vmatprep.subr.mxu0 0.0
      %4902 = vmatpush1.msra.mxu0 %v4845
      %4903 = vmatprep.subr.mxu0 0.0
      %4904 = vmatpush1.msra.mxu0 %v4844
      %4905 = vmatprep.subr.mxu0 0.0
      %4906 = vmatpush1.msra.mxu0 %v4843
      %4907 = vmatprep.subr.mxu0 0.0
      %4908 = vmatpush2.msra.mxu0 0.0
      %4909 = vmatprep.subr.mxu0 0.0
      %4910 = vmatpush2.msra.mxu0 0.0
      %4911 = vmatprep.subr.mxu0 0.0
      %4912 = vmatpush2.msra.mxu0 0.0
      %4913 = vmatprep.subr.mxu0 0.0
      %4914 = vmatpush2.msra.mxu0 0.0
      %4915 = vmatprep.subr.mxu0 0.0
      %4916 = vmatpush2.msra.mxu0 0.0
      %4917 = vmatprep.subr.mxu0 0.0
      %4918 = vmatpush2.msra.mxu0 0.0
      %4919 = vmatprep.subr.mxu0 0.0
      %4920 = vmatpush2.msra.mxu0 0.0
      %4921 = vmatprep.subr.mxu0 0.0
      %4922 = vmatpush2.msra.mxu0 0.0
      %4923 = vmatprep.subr.mxu0 0.0
      %4924 = vmatpush2.msra.mxu0 0.0
      %4925 = vmatprep.subr.mxu0 0.0
      %4926 = vmatpush2.msra.mxu0 0.0
      %4927 = vmatprep.subr.mxu0 0.0
      %4928 = vmatpush2.msra.mxu0 0.0
      %4929 = vmatprep.subr.mxu0 0.0
      %4930 = vmatpush2.msra.mxu0 0.0
      %4931 = vmatprep.subr.mxu0 0.0
      %4932 = vmatpush2.msra.mxu0 0.0
      %4933 = vmatprep.subr.mxu0 0.0
      %4934 = vmatpush2.msra.mxu0 0.0
      %4935 = vmatprep.subr.mxu0 0.0
      %4936 = vmatpush2.msra.mxu0 0.0
      %4937 = vmatprep.subr.mxu0 0.0
      %4938 = vmatpush2.msra.mxu0 0.0
      %4939 = vmatprep.mubr.f32.mxu0 0.0
      %4940 = vmatmul.mubr.f32.gmra.mxu0 %v4852
      %v4941 = vpop.f32.mrf.mxu0
      %v4942 = vadd.f32 0.0, %v4941
      %v4943 = vpop.f32.mrf.mxu0
      %4944 = vmatprep.mubr.f32.mxu0 0.0
      %4945 = vmatmul.mubr.f32.gmra.mxu0 %v4855
      %v4946 = vpop.f32.mrf.mxu0
      %v4947 = vadd.f32 0.0, %v4946
      %v4948 = vpop.f32.mrf.mxu0
      %4949 = vmatprep.mubr.f32.mxu0 0.0
      %4950 = vmatmul.mubr.f32.gmra.mxu0 %v4858
      %v4951 = vpop.f32.mrf.mxu0
      %v4952 = vadd.f32 0.0, %v4951
      %v4953 = vpop.f32.mrf.mxu0
      %4954 = vmatprep.mubr.f32.mxu0 0.0
      %4955 = vmatmul.mubr.f32.gmra.mxu0 %v4861
      %v4956 = vpop.f32.mrf.mxu0
      %v4957 = vadd.f32 0.0, %v4956
      %v4958 = vpop.f32.mrf.mxu0
      %4959 = vmatprep.mubr.f32.mxu0 0.0
      %4960 = vmatmul.mubr.f32.gmra.mxu0 %v4864
      %v4961 = vpop.f32.mrf.mxu0
      %v4962 = vadd.f32 0.0, %v4961
      %v4963 = vpop.f32.mrf.mxu0
      %4964 = vmatprep.mubr.f32.mxu0 0.0
      %4965 = vmatmul.mubr.f32.gmra.mxu0 %v4867
      %v4966 = vpop.f32.mrf.mxu0
      %v4967 = vadd.f32 0.0, %v4966
      %v4968 = vpop.f32.mrf.mxu0
      %4969 = vmatprep.mubr.f32.mxu0 0.0
      %4970 = vmatmul.mubr.f32.gmra.mxu0 %v4870
      %v4971 = vpop.f32.mrf.mxu0
      %v4972 = vadd.f32 0.0, %v4971
      %v4973 = vpop.f32.mrf.mxu0
      %4974 = vmatprep.mubr.f32.mxu0 0.0
      %4975 = vmatmul.mubr.f32.gmra.mxu0 %v4873
      %v4976 = vpop.f32.mrf.mxu0
      %v4977 = vadd.f32 0.0, %v4976
      %v4978 = vpop.f32.mrf.mxu0
      %4979 = vdwg.mxu0
      %v4980 = vld [vmem:[%s57] sm:$0xff]
      %v4981 = vld [vmem:[%s57 + $0x8] sm:$0xff]
      %v4982 = vld [vmem:[%s57 + $0x10] sm:$0xff]
      %v4983 = vld [vmem:[%s57 + $0x18] sm:$0xff]
      %v4984 = vld [vmem:[%s57 + $0x20] sm:$0xff]
      %v4985 = vld [vmem:[%s57 + $0x28] sm:$0xff]
      %v4986 = vld [vmem:[%s57 + $0x30] sm:$0xff]
      %v4987 = vld [vmem:[%s57 + $0x38] sm:$0xff]
      %4989 = vset.pattern.permute.xlu0 0
      %4990 = vperm.xlu0 %4989, %v4980
      %v4991 = vpop.permute.xlu0 %4990
      %4994 = vset.pattern.permute.xlu0 0
      %4995 = vperm.xlu0 %4994, %v4981
      %v4996 = vpop.permute.xlu0 %4995
      %4999 = vset.pattern.permute.xlu0 0
      %5000 = vperm.xlu0 %4999, %v4982
      %v5001 = vpop.permute.xlu0 %5000
      %5004 = vset.pattern.permute.xlu0 0
      %5005 = vperm.xlu0 %5004, %v4983
      %v5006 = vpop.permute.xlu0 %5005
      %5009 = vset.pattern.permute.xlu0 0
      %5010 = vperm.xlu0 %5009, %v4984
      %v5011 = vpop.permute.xlu0 %5010
      %5014 = vset.pattern.permute.xlu0 0
      %5015 = vperm.xlu0 %5014, %v4985
      %v5016 = vpop.permute.xlu0 %5015
      %5019 = vset.pattern.permute.xlu0 0
      %5020 = vperm.xlu0 %5019, %v4986
      %v5021 = vpop.permute.xlu0 %5020
      %5024 = vset.pattern.permute.xlu0 0
      %5025 = vperm.xlu0 %5024, %v4987
      %v5026 = vpop.permute.xlu0 %5025
      %v5028 = vmul.f32 %v4991, %v4805
      %v5029 = vmul.f32 %v4996, %v4810
      %v5030 = vmul.f32 %v5001, %v4815
      %v5031 = vmul.f32 %v5006, %v4820
      %v5032 = vmul.f32 %v5011, %v4825
      %v5033 = vmul.f32 %v5016, %v4830
      %v5034 = vmul.f32 %v5021, %v4835
      %v5035 = vmul.f32 %v5026, %v4840
      %v5036 = vsub.f32 1.0, %v4980
      %v5037 = vsub.f32 1.0, %v4981
      %v5038 = vsub.f32 1.0, %v4982
      %v5039 = vsub.f32 1.0, %v4983
      %v5040 = vsub.f32 1.0, %v4984
      %v5041 = vsub.f32 1.0, %v4985
      %v5042 = vsub.f32 1.0, %v4986
      %v5043 = vsub.f32 1.0, %v4987
      %5045 = vset.pattern.permute.xlu0 0
      %5046 = vperm.xlu0 %5045, %v5036
      %v5047 = vpop.permute.xlu0 %5046
      %5050 = vset.pattern.permute.xlu0 0
      %5051 = vperm.xlu0 %5050, %v5037
      %v5052 = vpop.permute.xlu0 %5051
      %5055 = vset.pattern.permute.xlu0 0
      %5056 = vperm.xlu0 %5055, %v5038
      %v5057 = vpop.permute.xlu0 %5056
      %5060 = vset.pattern.permute.xlu0 0
      %5061 = vperm.xlu0 %5060, %v5039
      %v5062 = vpop.permute.xlu0 %5061
      %5065 = vset.pattern.permute.xlu0 0
      %5066 = vperm.xlu0 %5065, %v5040
      %v5067 = vpop.permute.xlu0 %5066
      %5070 = vset.pattern.permute.xlu0 0
      %5071 = vperm.xlu0 %5070, %v5041
      %v5072 = vpop.permute.xlu0 %5071
      %5075 = vset.pattern.permute.xlu0 0
      %5076 = vperm.xlu0 %5075, %v5042
      %v5077 = vpop.permute.xlu0 %5076
      %5080 = vset.pattern.permute.xlu0 0
      %5081 = vperm.xlu0 %5080, %v5043
      %v5082 = vpop.permute.xlu0 %5081
      %v5084 = vmul.f32 %v5047, %v4942
      %v5085 = vmul.f32 %v5052, %v4947
      %v5086 = vmul.f32 %v5057, %v4952
      %v5087 = vmul.f32 %v5062, %v4957
      %v5088 = vmul.f32 %v5067, %v4962
      %v5089 = vmul.f32 %v5072, %v4967
      %v5090 = vmul.f32 %v5077, %v4972
      %v5091 = vmul.f32 %v5082, %v4977
      %v5092 = vadd.f32 %v5028, %v5084
      %v5093 = vadd.f32 %v5029, %v5085
      %v5094 = vadd.f32 %v5030, %v5086
      %v5095 = vadd.f32 %v5031, %v5087
      %v5096 = vadd.f32 %v5032, %v5088
      %v5097 = vadd.f32 %v5033, %v5089
      %v5098 = vadd.f32 %v5034, %v5090
      %v5099 = vadd.f32 %v5035, %v5091
      %v5100 = vld [vmem:[%s55] sm:$0x1]
      %v5102 = vlaneseq
      %v5103 = vshrl.u32 %v5102, 7
      %v5104 = vsub.s32 0, %v5103
      %v5105 = vrot.slane %v5100, %v5104
      %v5107 = vadd.f32 %v5092, %v5105
      %v5108 = vadd.f32 %v5093, %v5105
      %v5109 = vadd.f32 %v5094, %v5105
      %v5110 = vadd.f32 %v5095, %v5105
      %v5111 = vadd.f32 %v5096, %v5105
      %v5112 = vadd.f32 %v5097, %v5105
      %v5113 = vadd.f32 %v5098, %v5105
      %v5114 = vadd.f32 %v5099, %v5105
      %v5115 = vmax.f32 %v5107, 0.0
      %v5116 = vmax.f32 %v5108, 0.0
      %v5117 = vmax.f32 %v5109, 0.0
      %v5118 = vmax.f32 %v5110, 0.0
      %v5119 = vmax.f32 %v5111, 0.0
      %v5120 = vmax.f32 %v5112, 0.0
      %v5121 = vmax.f32 %v5113, 0.0
      %v5122 = vmax.f32 %v5114, 0.0
      %v5123 = vrot.slane %v1875, 6
      %v5124 = vrot.slane %v1876, 6
      %v5125 = vsel %vm1163, %v5123, %v5124
      %v5126 = vrot.slane %v1877, 6
      %v5127 = vsel %vm1163, %v5124, %v5126
      %v5128 = vrot.slane %v1878, 6
      %v5129 = vsel %vm1163, %v5126, %v5128
      %v5130 = vrot.slane %v1879, 6
      %v5131 = vsel %vm1163, %v5128, %v5130
      %v5132 = vrot.slane %v1880, 6
      %v5133 = vsel %vm1163, %v5130, %v5132
      %v5134 = vrot.slane %v1881, 6
      %v5135 = vsel %vm1163, %v5132, %v5134
      %v5136 = vrot.slane %v1882, 6
      %v5137 = vsel %vm1163, %v5134, %v5136
      %v5146 = vsel %vm1163, 0.0, %v5123
      %v5147 = vrot.slane %v1875, 2
      %v5148 = vrot.slane %v1876, 2
      %v5149 = vsel %vm1224, %v5147, %v5148
      %v5150 = vrot.slane %v1877, 2
      %v5151 = vsel %vm1224, %v5148, %v5150
      %v5152 = vrot.slane %v1878, 2
      %v5153 = vsel %vm1224, %v5150, %v5152
      %v5154 = vrot.slane %v1879, 2
      %v5155 = vsel %vm1224, %v5152, %v5154
      %v5156 = vrot.slane %v1880, 2
      %v5157 = vsel %vm1224, %v5154, %v5156
      %v5158 = vrot.slane %v1881, 2
      %v5159 = vsel %vm1224, %v5156, %v5158
      %v5160 = vrot.slane %v1882, 2
      %v5161 = vsel %vm1224, %v5158, %v5160
      %v5163 = vsel %vm1224, %v5160, 0.0
      %v5172 = vrot.slane %v5115, 4
      %v5173 = vrot.slane %v5116, 4
      %v5174 = vsel %vm1535, %v5172, %v5173
      %v5175 = vrot.slane %v5117, 4
      %v5176 = vsel %vm1535, %v5173, %v5175
      %v5177 = vrot.slane %v5118, 4
      %v5178 = vsel %vm1535, %v5175, %v5177
      %v5179 = vrot.slane %v5119, 4
      %v5180 = vsel %vm1535, %v5177, %v5179
      %v5181 = vrot.slane %v5120, 4
      %v5182 = vsel %vm1535, %v5179, %v5181
      %v5183 = vrot.slane %v5121, 4
      %v5184 = vsel %vm1535, %v5181, %v5183
      %v5185 = vrot.slane %v5122, 4
      %v5186 = vsel %vm1535, %v5183, %v5185
      %v5188 = vsel %vm1535, 0.0, %v5172
      %v5190 = vsel %vm1535, %v5185, 0.0
      %v5191 = vrot.slane %v5115, 6
      %v5192 = vrot.slane %v5116, 6
      %v5193 = vsel %vm1163, %v5191, %v5192
      %v5194 = vrot.slane %v5117, 6
      %v5195 = vsel %vm1163, %v5192, %v5194
      %v5196 = vrot.slane %v5118, 6
      %v5197 = vsel %vm1163, %v5194, %v5196
      %v5198 = vrot.slane %v5119, 6
      %v5199 = vsel %vm1163, %v5196, %v5198
      %v5200 = vrot.slane %v5120, 6
      %v5201 = vsel %vm1163, %v5198, %v5200
      %v5202 = vrot.slane %v5121, 6
      %v5203 = vsel %vm1163, %v5200, %v5202
      %v5204 = vrot.slane %v5122, 6
      %v5205 = vsel %vm1163, %v5202, %v5204
      %v5207 = vsel %vm1163, 0.0, %v5191
      %v5208 = vrot.slane %v5115, 2
      %v5209 = vrot.slane %v5116, 2
      %v5210 = vsel %vm1224, %v5208, %v5209
      %v5211 = vrot.slane %v5117, 2
      %v5212 = vsel %vm1224, %v5209, %v5211
      %v5213 = vrot.slane %v5118, 2
      %v5214 = vsel %vm1224, %v5211, %v5213
      %v5215 = vrot.slane %v5119, 2
      %v5216 = vsel %vm1224, %v5213, %v5215
      %v5217 = vrot.slane %v5120, 2
      %v5218 = vsel %vm1224, %v5215, %v5217
      %v5219 = vrot.slane %v5121, 2
      %v5220 = vsel %vm1224, %v5217, %v5219
      %v5221 = vrot.slane %v5122, 2
      %v5222 = vsel %vm1224, %v5219, %v5221
      %v5224 = vsel %vm1224, %v5221, 0.0
      %5225 = vrot.lane.b32.xlu0 %v1875, 16
      %v5226 = vpop.permute.xlu0 %5225
      %5227 = vrot.lane.b32.xlu0 %v1876, 16
      %v5228 = vpop.permute.xlu0 %5227
      %5229 = vrot.lane.b32.xlu0 %v1877, 16
      %v5230 = vpop.permute.xlu0 %5229
      %5231 = vrot.lane.b32.xlu0 %v1878, 16
      %v5232 = vpop.permute.xlu0 %5231
      %5233 = vrot.lane.b32.xlu0 %v1879, 16
      %v5234 = vpop.permute.xlu0 %5233
      %5235 = vrot.lane.b32.xlu0 %v1880, 16
      %v5236 = vpop.permute.xlu0 %5235
      %5237 = vrot.lane.b32.xlu0 %v1881, 16
      %v5238 = vpop.permute.xlu0 %5237
      %5239 = vrot.lane.b32.xlu0 %v1882, 16
      %v5240 = vpop.permute.xlu0 %5239
      %5249 = vrot.lane.b32.xlu0 %v1893, 32
      %v5250 = vpop.permute.xlu0 %5249
      %5251 = vrot.lane.b32.xlu0 %v1895, 32
      %v5252 = vpop.permute.xlu0 %5251
      %5253 = vrot.lane.b32.xlu0 %v1897, 32
      %v5254 = vpop.permute.xlu0 %5253
      %5255 = vrot.lane.b32.xlu0 %v1899, 32
      %v5256 = vpop.permute.xlu0 %5255
      %5257 = vrot.lane.b32.xlu0 %v1901, 32
      %v5258 = vpop.permute.xlu0 %5257
      %5259 = vrot.lane.b32.xlu0 %v1903, 32
      %v5260 = vpop.permute.xlu0 %5259
      %5261 = vrot.lane.b32.xlu0 %v1905, 32
      %v5262 = vpop.permute.xlu0 %5261
      %5263 = vrot.lane.b32.xlu0 %v1916, 32
      %v5264 = vpop.permute.xlu0 %5263
      %5274 = vrot.lane.b32.xlu0 %v5188, 48
      %v5275 = vpop.permute.xlu0 %5274
      %5276 = vrot.lane.b32.xlu0 %v5174, 48
      %v5277 = vpop.permute.xlu0 %5276
      %5278 = vrot.lane.b32.xlu0 %v5176, 48
      %v5279 = vpop.permute.xlu0 %5278
      %5280 = vrot.lane.b32.xlu0 %v5178, 48
      %v5281 = vpop.permute.xlu0 %5280
      %5282 = vrot.lane.b32.xlu0 %v5180, 48
      %v5283 = vpop.permute.xlu0 %5282
      %5284 = vrot.lane.b32.xlu0 %v5182, 48
      %v5285 = vpop.permute.xlu0 %5284
      %5286 = vrot.lane.b32.xlu0 %v5184, 48
      %v5287 = vpop.permute.xlu0 %5286
      %5288 = vrot.lane.b32.xlu0 %v5186, 48
      %v5289 = vpop.permute.xlu0 %5288
      %5298 = vrot.lane.b32.xlu0 %v5115, 64
      %v5299 = vpop.permute.xlu0 %5298
      %5300 = vrot.lane.b32.xlu0 %v5116, 64
      %v5301 = vpop.permute.xlu0 %5300
      %5302 = vrot.lane.b32.xlu0 %v5117, 64
      %v5303 = vpop.permute.xlu0 %5302
      %5304 = vrot.lane.b32.xlu0 %v5118, 64
      %v5305 = vpop.permute.xlu0 %5304
      %5306 = vrot.lane.b32.xlu0 %v5119, 64
      %v5307 = vpop.permute.xlu0 %5306
      %5308 = vrot.lane.b32.xlu0 %v5120, 64
      %v5309 = vpop.permute.xlu0 %5308
      %5310 = vrot.lane.b32.xlu0 %v5121, 64
      %v5311 = vpop.permute.xlu0 %5310
      %5312 = vrot.lane.b32.xlu0 %v5122, 64
      %v5313 = vpop.permute.xlu0 %5312
      %5323 = vrot.lane.b32.xlu0 %v5174, 80
      %v5324 = vpop.permute.xlu0 %5323
      %5325 = vrot.lane.b32.xlu0 %v5176, 80
      %v5326 = vpop.permute.xlu0 %5325
      %5327 = vrot.lane.b32.xlu0 %v5178, 80
      %v5328 = vpop.permute.xlu0 %5327
      %5329 = vrot.lane.b32.xlu0 %v5180, 80
      %v5330 = vpop.permute.xlu0 %5329
      %5331 = vrot.lane.b32.xlu0 %v5182, 80
      %v5332 = vpop.permute.xlu0 %5331
      %5333 = vrot.lane.b32.xlu0 %v5184, 80
      %v5334 = vpop.permute.xlu0 %5333
      %5335 = vrot.lane.b32.xlu0 %v5186, 80
      %v5336 = vpop.permute.xlu0 %5335
      %5337 = vrot.lane.b32.xlu0 %v5190, 80
      %v5338 = vpop.permute.xlu0 %5337
      %v5347 = vsel %vm1350, %v1914, %v5226
      %v5348 = vsel %vm1350, %v1893, %v5228
      %v5349 = vsel %vm1350, %v1895, %v5230
      %v5350 = vsel %vm1350, %v1897, %v5232
      %v5351 = vsel %vm1350, %v1899, %v5234
      %v5352 = vsel %vm1350, %v1901, %v5236
      %v5353 = vsel %vm1350, %v1903, %v5238
      %v5354 = vsel %vm1350, %v1905, %v5240
      %v5355 = vsel %vm1368, %v5347, %v5250
      %v5356 = vsel %vm1368, %v5348, %v5252
      %v5357 = vsel %vm1368, %v5349, %v5254
      %v5358 = vsel %vm1368, %v5350, %v5256
      %v5359 = vsel %vm1368, %v5351, %v5258
      %v5360 = vsel %vm1368, %v5352, %v5260
      %v5361 = vsel %vm1368, %v5353, %v5262
      %v5362 = vsel %vm1368, %v5354, %v5264
      %v5363 = vsel %vm2032, %v5355, %v5275
      %v5364 = vsel %vm2032, %v5356, %v5277
      %v5365 = vsel %vm2032, %v5357, %v5279
      %v5366 = vsel %vm2032, %v5358, %v5281
      %v5367 = vsel %vm2032, %v5359, %v5283
      %v5368 = vsel %vm2032, %v5360, %v5285
      %v5369 = vsel %vm2032, %v5361, %v5287
      %v5370 = vsel %vm2032, %v5362, %v5289
      %v5371 = vsel %vm2041, %v5363, %v5299
      %v5372 = vsel %vm2041, %v5364, %v5301
      %v5373 = vsel %vm2041, %v5365, %v5303
      %v5374 = vsel %vm2041, %v5366, %v5305
      %v5375 = vsel %vm2041, %v5367, %v5307
      %v5376 = vsel %vm2041, %v5368, %v5309
      %v5377 = vsel %vm2041, %v5369, %v5311
      %v5378 = vsel %vm2041, %v5370, %v5313
      %v5379 = vsel %vm2067, %v5371, %v5324
      %v5380 = vsel %vm2067, %v5372, %v5326
      %v5381 = vsel %vm2067, %v5373, %v5328
      %v5382 = vsel %vm2067, %v5374, %v5330
      %v5383 = vsel %vm2067, %v5375, %v5332
      %v5384 = vsel %vm2067, %v5376, %v5334
      %v5385 = vsel %vm2067, %v5377, %v5336
      %v5386 = vsel %vm2067, %v5378, %v5338
      %5388 = vrot.lane.b32.xlu0 %v5149, 16
      %v5389 = vpop.permute.xlu0 %5388
      %5390 = vrot.lane.b32.xlu0 %v5151, 16
      %v5391 = vpop.permute.xlu0 %5390
      %5392 = vrot.lane.b32.xlu0 %v5153, 16
      %v5393 = vpop.permute.xlu0 %5392
      %5394 = vrot.lane.b32.xlu0 %v5155, 16
      %v5395 = vpop.permute.xlu0 %5394
      %5396 = vrot.lane.b32.xlu0 %v5157, 16
      %v5397 = vpop.permute.xlu0 %5396
      %5398 = vrot.lane.b32.xlu0 %v5159, 16
      %v5399 = vpop.permute.xlu0 %5398
      %5400 = vrot.lane.b32.xlu0 %v5161, 16
      %v5401 = vpop.permute.xlu0 %5400
      %5402 = vrot.lane.b32.xlu0 %v5163, 16
      %v5403 = vpop.permute.xlu0 %5402
      %5413 = vrot.lane.b32.xlu0 %v5207, 32
      %v5414 = vpop.permute.xlu0 %5413
      %5415 = vrot.lane.b32.xlu0 %v5193, 32
      %v5416 = vpop.permute.xlu0 %5415
      %5417 = vrot.lane.b32.xlu0 %v5195, 32
      %v5418 = vpop.permute.xlu0 %5417
      %5419 = vrot.lane.b32.xlu0 %v5197, 32
      %v5420 = vpop.permute.xlu0 %5419
      %5421 = vrot.lane.b32.xlu0 %v5199, 32
      %v5422 = vpop.permute.xlu0 %5421
      %5423 = vrot.lane.b32.xlu0 %v5201, 32
      %v5424 = vpop.permute.xlu0 %5423
      %5425 = vrot.lane.b32.xlu0 %v5203, 32
      %v5426 = vpop.permute.xlu0 %5425
      %5427 = vrot.lane.b32.xlu0 %v5205, 32
      %v5428 = vpop.permute.xlu0 %5427
      %5438 = vrot.lane.b32.xlu0 %v5210, 48
      %v5439 = vpop.permute.xlu0 %5438
      %5440 = vrot.lane.b32.xlu0 %v5212, 48
      %v5441 = vpop.permute.xlu0 %5440
      %5442 = vrot.lane.b32.xlu0 %v5214, 48
      %v5443 = vpop.permute.xlu0 %5442
      %5444 = vrot.lane.b32.xlu0 %v5216, 48
      %v5445 = vpop.permute.xlu0 %5444
      %5446 = vrot.lane.b32.xlu0 %v5218, 48
      %v5447 = vpop.permute.xlu0 %5446
      %5448 = vrot.lane.b32.xlu0 %v5220, 48
      %v5449 = vpop.permute.xlu0 %5448
      %5450 = vrot.lane.b32.xlu0 %v5222, 48
      %v5451 = vpop.permute.xlu0 %5450
      %5452 = vrot.lane.b32.xlu0 %v5224, 48
      %v5453 = vpop.permute.xlu0 %5452
      %v5462 = vsel %vm1350, %v5146, %v5389
      %v5463 = vsel %vm1350, %v5125, %v5391
      %v5464 = vsel %vm1350, %v5127, %v5393
      %v5465 = vsel %vm1350, %v5129, %v5395
      %v5466 = vsel %vm1350, %v5131, %v5397
      %v5467 = vsel %vm1350, %v5133, %v5399
      %v5468 = vsel %vm1350, %v5135, %v5401
      %v5469 = vsel %vm1350, %v5137, %v5403
      %v5470 = vsel %vm1368, %v5462, %v5414
      %v5471 = vsel %vm1368, %v5463, %v5416
      %v5472 = vsel %vm1368, %v5464, %v5418
      %v5473 = vsel %vm1368, %v5465, %v5420
      %v5474 = vsel %vm1368, %v5466, %v5422
      %v5475 = vsel %vm1368, %v5467, %v5424
      %v5476 = vsel %vm1368, %v5468, %v5426
      %v5477 = vsel %vm1368, %v5469, %v5428
      %v5478 = vsel %vm2032, %v5470, %v5439
      %v5479 = vsel %vm2032, %v5471, %v5441
      %v5480 = vsel %vm2032, %v5472, %v5443
      %v5481 = vsel %vm2032, %v5473, %v5445
      %v5482 = vsel %vm2032, %v5474, %v5447
      %v5483 = vsel %vm2032, %v5475, %v5449
      %v5484 = vsel %vm2032, %v5476, %v5451
      %v5485 = vsel %vm2032, %v5477, %v5453
      %v5486 = vld [vmem:[%s59] sm:$0xff]
      %v5487 = vld [vmem:[%s59 + $0x8] sm:$0xff]
      %v5488 = vld [vmem:[%s59 + $0x10] sm:$0xff]
      %v5489 = vld [vmem:[%s59 + $0x18] sm:$0xff]
      %v5490 = vld [vmem:[%s59 + $0x20] sm:$0xff]
      %v5491 = vld [vmem:[%s59 + $0x28] sm:$0xff]
      %v5492 = vld [vmem:[%s59 + $0x30] sm:$0xff]
      %v5493 = vld [vmem:[%s59 + $0x38] sm:$0xff]
      %v5494 = vld [vmem:[%s59 + $0x40] sm:$0xff]
      %v5495 = vld [vmem:[%s59 + $0x48] sm:$0xff]
      %v5496 = vld [vmem:[%s59 + $0x50] sm:$0xff]
      %v5497 = vld [vmem:[%s59 + $0x58] sm:$0xff]
      %v5499 = vsel %vm2578, %v5379, 0
      %v5502 = vsel %vm2578, %v5380, 0
      %v5505 = vsel %vm2578, %v5381, 0
      %v5508 = vsel %vm2578, %v5382, 0
      %v5511 = vsel %vm2578, %v5383, 0
      %v5514 = vsel %vm2578, %v5384, 0
      %v5517 = vsel %vm2578, %v5385, 0
      %v5520 = vsel %vm2578, %v5386, 0
      %5522 = vmatprep.subr.mxu0 0.0
      %5523 = vmatpush1.msra.mxu0 0.0
      %5524 = vmatprep.subr.mxu0 0.0
      %5525 = vmatpush1.msra.mxu0 0.0
      %5526 = vmatprep.subr.mxu0 0.0
      %5527 = vmatpush1.msra.mxu0 0.0
      %5528 = vmatprep.subr.mxu0 0.0
      %5529 = vmatpush1.msra.mxu0 0.0
      %5530 = vmatprep.subr.mxu0 0.0
      %5531 = vmatpush1.msra.mxu0 %v5497
      %5532 = vmatprep.subr.mxu0 0.0
      %5533 = vmatpush1.msra.mxu0 %v5496
      %5534 = vmatprep.subr.mxu0 0.0
      %5535 = vmatpush1.msra.mxu0 %v5495
      %5536 = vmatprep.subr.mxu0 0.0
      %5537 = vmatpush1.msra.mxu0 %v5494
      %5538 = vmatprep.subr.mxu0 0.0
      %5539 = vmatpush1.msra.mxu0 %v5493
      %5540 = vmatprep.subr.mxu0 0.0
      %5541 = vmatpush1.msra.mxu0 %v5492
      %5542 = vmatprep.subr.mxu0 0.0
      %5543 = vmatpush1.msra.mxu0 %v5491
      %5544 = vmatprep.subr.mxu0 0.0
      %5545 = vmatpush1.msra.mxu0 %v5490
      %5546 = vmatprep.subr.mxu0 0.0
      %5547 = vmatpush1.msra.mxu0 %v5489
      %5548 = vmatprep.subr.mxu0 0.0
      %5549 = vmatpush1.msra.mxu0 %v5488
      %5550 = vmatprep.subr.mxu0 0.0
      %5551 = vmatpush1.msra.mxu0 %v5487
      %5552 = vmatprep.subr.mxu0 0.0
      %5553 = vmatpush1.msra.mxu0 %v5486
      %5554 = vmatprep.subr.mxu0 0.0
      %5555 = vmatpush2.msra.mxu0 0.0
      %5556 = vmatprep.subr.mxu0 0.0
      %5557 = vmatpush2.msra.mxu0 0.0
      %5558 = vmatprep.subr.mxu0 0.0
      %5559 = vmatpush2.msra.mxu0 0.0
      %5560 = vmatprep.subr.mxu0 0.0
      %5561 = vmatpush2.msra.mxu0 0.0
      %5562 = vmatprep.subr.mxu0 0.0
      %5563 = vmatpush2.msra.mxu0 0.0
      %5564 = vmatprep.subr.mxu0 0.0
      %5565 = vmatpush2.msra.mxu0 0.0
      %5566 = vmatprep.subr.mxu0 0.0
      %5567 = vmatpush2.msra.mxu0 0.0
      %5568 = vmatprep.subr.mxu0 0.0
      %5569 = vmatpush2.msra.mxu0 0.0
      %5570 = vmatprep.subr.mxu0 0.0
      %5571 = vmatpush2.msra.mxu0 0.0
      %5572 = vmatprep.subr.mxu0 0.0
      %5573 = vmatpush2.msra.mxu0 0.0
      %5574 = vmatprep.subr.mxu0 0.0
      %5575 = vmatpush2.msra.mxu0 0.0
      %5576 = vmatprep.subr.mxu0 0.0
      %5577 = vmatpush2.msra.mxu0 0.0
      %5578 = vmatprep.subr.mxu0 0.0
      %5579 = vmatpush2.msra.mxu0 0.0
      %5580 = vmatprep.subr.mxu0 0.0
      %5581 = vmatpush2.msra.mxu0 0.0
      %5582 = vmatprep.subr.mxu0 0.0
      %5583 = vmatpush2.msra.mxu0 0.0
      %5584 = vmatprep.subr.mxu0 0.0
      %5585 = vmatpush2.msra.mxu0 0.0
      %5586 = vmatprep.mubr.f32.mxu0 0.0
      %5587 = vmatmul.mubr.f32.gmra.mxu0 %v5499
      %v5588 = vpop.f32.mrf.mxu0
      %v5589 = vadd.f32 0.0, %v5588
      %v5590 = vpop.f32.mrf.mxu0
      %5591 = vmatprep.mubr.f32.mxu0 0.0
      %5592 = vmatmul.mubr.f32.gmra.mxu0 %v5502
      %v5593 = vpop.f32.mrf.mxu0
      %v5594 = vadd.f32 0.0, %v5593
      %v5595 = vpop.f32.mrf.mxu0
      %5596 = vmatprep.mubr.f32.mxu0 0.0
      %5597 = vmatmul.mubr.f32.gmra.mxu0 %v5505
      %v5598 = vpop.f32.mrf.mxu0
      %v5599 = vadd.f32 0.0, %v5598
      %v5600 = vpop.f32.mrf.mxu0
      %5601 = vmatprep.mubr.f32.mxu0 0.0
      %5602 = vmatmul.mubr.f32.gmra.mxu0 %v5508
      %v5603 = vpop.f32.mrf.mxu0
      %v5604 = vadd.f32 0.0, %v5603
      %v5605 = vpop.f32.mrf.mxu0
      %5606 = vmatprep.mubr.f32.mxu0 0.0
      %5607 = vmatmul.mubr.f32.gmra.mxu0 %v5511
      %v5608 = vpop.f32.mrf.mxu0
      %v5609 = vadd.f32 0.0, %v5608
      %v5610 = vpop.f32.mrf.mxu0
      %5611 = vmatprep.mubr.f32.mxu0 0.0
      %5612 = vmatmul.mubr.f32.gmra.mxu0 %v5514
      %v5613 = vpop.f32.mrf.mxu0
      %v5614 = vadd.f32 0.0, %v5613
      %v5615 = vpop.f32.mrf.mxu0
      %5616 = vmatprep.mubr.f32.mxu0 0.0
      %5617 = vmatmul.mubr.f32.gmra.mxu0 %v5517
      %v5618 = vpop.f32.mrf.mxu0
      %v5619 = vadd.f32 0.0, %v5618
      %v5620 = vpop.f32.mrf.mxu0
      %5621 = vmatprep.mubr.f32.mxu0 0.0
      %5622 = vmatmul.mubr.f32.gmra.mxu0 %v5520
      %v5623 = vpop.f32.mrf.mxu0
      %v5624 = vadd.f32 0.0, %v5623
      %v5625 = vpop.f32.mrf.mxu0
      %5626 = vdwg.mxu0
      %v5627 = vld [vmem:[%s61] sm:$0xff]
      %v5628 = vld [vmem:[%s61 + $0x8] sm:$0xff]
      %v5629 = vld [vmem:[%s61 + $0x10] sm:$0xff]
      %v5630 = vld [vmem:[%s61 + $0x18] sm:$0xff]
      %v5631 = vld [vmem:[%s61 + $0x20] sm:$0xff]
      %v5632 = vld [vmem:[%s61 + $0x28] sm:$0xff]
      %v5633 = vld [vmem:[%s61 + $0x30] sm:$0xff]
      %v5634 = vld [vmem:[%s61 + $0x38] sm:$0xff]
      %v5636 = vsel %vm2041, %v5478, 0
      %v5639 = vsel %vm2041, %v5479, 0
      %v5642 = vsel %vm2041, %v5480, 0
      %v5645 = vsel %vm2041, %v5481, 0
      %v5648 = vsel %vm2041, %v5482, 0
      %v5651 = vsel %vm2041, %v5483, 0
      %v5654 = vsel %vm2041, %v5484, 0
      %v5657 = vsel %vm2041, %v5485, 0
      %5659 = vmatprep.subr.mxu0 0.0
      %5660 = vmatpush1.msra.mxu0 0.0
      %5661 = vmatprep.subr.mxu0 0.0
      %5662 = vmatpush1.msra.mxu0 0.0
      %5663 = vmatprep.subr.mxu0 0.0
      %5664 = vmatpush1.msra.mxu0 0.0
      %5665 = vmatprep.subr.mxu0 0.0
      %5666 = vmatpush1.msra.mxu0 0.0
      %5667 = vmatprep.subr.mxu0 0.0
      %5668 = vmatpush1.msra.mxu0 0.0
      %5669 = vmatprep.subr.mxu0 0.0
      %5670 = vmatpush1.msra.mxu0 0.0
      %5671 = vmatprep.subr.mxu0 0.0
      %5672 = vmatpush1.msra.mxu0 0.0
      %5673 = vmatprep.subr.mxu0 0.0
      %5674 = vmatpush1.msra.mxu0 0.0
      %5675 = vmatprep.subr.mxu0 0.0
      %5676 = vmatpush1.msra.mxu0 %v5634
      %5677 = vmatprep.subr.mxu0 0.0
      %5678 = vmatpush1.msra.mxu0 %v5633
      %5679 = vmatprep.subr.mxu0 0.0
      %5680 = vmatpush1.msra.mxu0 %v5632
      %5681 = vmatprep.subr.mxu0 0.0
      %5682 = vmatpush1.msra.mxu0 %v5631
      %5683 = vmatprep.subr.mxu0 0.0
      %5684 = vmatpush1.msra.mxu0 %v5630
      %5685 = vmatprep.subr.mxu0 0.0
      %5686 = vmatpush1.msra.mxu0 %v5629
      %5687 = vmatprep.subr.mxu0 0.0
      %5688 = vmatpush1.msra.mxu0 %v5628
      %5689 = vmatprep.subr.mxu0 0.0
      %5690 = vmatpush1.msra.mxu0 %v5627
      %5691 = vmatprep.subr.mxu0 0.0
      %5692 = vmatpush2.msra.mxu0 0.0
      %5693 = vmatprep.subr.mxu0 0.0
      %5694 = vmatpush2.msra.mxu0 0.0
      %5695 = vmatprep.subr.mxu0 0.0
      %5696 = vmatpush2.msra.mxu0 0.0
      %5697 = vmatprep.subr.mxu0 0.0
      %5698 = vmatpush2.msra.mxu0 0.0
      %5699 = vmatprep.subr.mxu0 0.0
      %5700 = vmatpush2.msra.mxu0 0.0
      %5701 = vmatprep.subr.mxu0 0.0
      %5702 = vmatpush2.msra.mxu0 0.0
      %5703 = vmatprep.subr.mxu0 0.0
      %5704 = vmatpush2.msra.mxu0 0.0
      %5705 = vmatprep.subr.mxu0 0.0
      %5706 = vmatpush2.msra.mxu0 0.0
      %5707 = vmatprep.subr.mxu0 0.0
      %5708 = vmatpush2.msra.mxu0 0.0
      %5709 = vmatprep.subr.mxu0 0.0
      %5710 = vmatpush2.msra.mxu0 0.0
      %5711 = vmatprep.subr.mxu0 0.0
      %5712 = vmatpush2.msra.mxu0 0.0
      %5713 = vmatprep.subr.mxu0 0.0
      %5714 = vmatpush2.msra.mxu0 0.0
      %5715 = vmatprep.subr.mxu0 0.0
      %5716 = vmatpush2.msra.mxu0 0.0
      %5717 = vmatprep.subr.mxu0 0.0
      %5718 = vmatpush2.msra.mxu0 0.0
      %5719 = vmatprep.subr.mxu0 0.0
      %5720 = vmatpush2.msra.mxu0 0.0
      %5721 = vmatprep.subr.mxu0 0.0
      %5722 = vmatpush2.msra.mxu0 0.0
      %5723 = vmatprep.mubr.f32.mxu0 0.0
      %5724 = vmatmul.mubr.f32.gmra.mxu0 %v5636
      %v5725 = vpop.f32.mrf.mxu0
      %v5726 = vadd.f32 0.0, %v5725
      %v5727 = vpop.f32.mrf.mxu0
      %5728 = vmatprep.mubr.f32.mxu0 0.0
      %5729 = vmatmul.mubr.f32.gmra.mxu0 %v5639
      %v5730 = vpop.f32.mrf.mxu0
      %v5731 = vadd.f32 0.0, %v5730
      %v5732 = vpop.f32.mrf.mxu0
      %5733 = vmatprep.mubr.f32.mxu0 0.0
      %5734 = vmatmul.mubr.f32.gmra.mxu0 %v5642
      %v5735 = vpop.f32.mrf.mxu0
      %v5736 = vadd.f32 0.0, %v5735
      %v5737 = vpop.f32.mrf.mxu0
      %5738 = vmatprep.mubr.f32.mxu0 0.0
      %5739 = vmatmul.mubr.f32.gmra.mxu0 %v5645
      %v5740 = vpop.f32.mrf.mxu0
      %v5741 = vadd.f32 0.0, %v5740
      %v5742 = vpop.f32.mrf.mxu0
      %5743 = vmatprep.mubr.f32.mxu0 0.0
      %5744 = vmatmul.mubr.f32.gmra.mxu0 %v5648
      %v5745 = vpop.f32.mrf.mxu0
      %v5746 = vadd.f32 0.0, %v5745
      %v5747 = vpop.f32.mrf.mxu0
      %5748 = vmatprep.mubr.f32.mxu0 0.0
      %5749 = vmatmul.mubr.f32.gmra.mxu0 %v5651
      %v5750 = vpop.f32.mrf.mxu0
      %v5751 = vadd.f32 0.0, %v5750
      %v5752 = vpop.f32.mrf.mxu0
      %5753 = vmatprep.mubr.f32.mxu0 0.0
      %5754 = vmatmul.mubr.f32.gmra.mxu0 %v5654
      %v5755 = vpop.f32.mrf.mxu0
      %v5756 = vadd.f32 0.0, %v5755
      %v5757 = vpop.f32.mrf.mxu0
      %5758 = vmatprep.mubr.f32.mxu0 0.0
      %5759 = vmatmul.mubr.f32.gmra.mxu0 %v5657
      %v5760 = vpop.f32.mrf.mxu0
      %v5761 = vadd.f32 0.0, %v5760
      %v5762 = vpop.f32.mrf.mxu0
      %5763 = vdwg.mxu0
      %v5764 = vld [vmem:[%s65] sm:$0xff]
      %v5765 = vld [vmem:[%s65 + $0x8] sm:$0xff]
      %v5766 = vld [vmem:[%s65 + $0x10] sm:$0xff]
      %v5767 = vld [vmem:[%s65 + $0x18] sm:$0xff]
      %v5768 = vld [vmem:[%s65 + $0x20] sm:$0xff]
      %v5769 = vld [vmem:[%s65 + $0x28] sm:$0xff]
      %v5770 = vld [vmem:[%s65 + $0x30] sm:$0xff]
      %v5771 = vld [vmem:[%s65 + $0x38] sm:$0xff]
      %5773 = vset.pattern.permute.xlu0 0
      %5774 = vperm.xlu0 %5773, %v5764
      %v5775 = vpop.permute.xlu0 %5774
      %5778 = vset.pattern.permute.xlu0 0
      %5779 = vperm.xlu0 %5778, %v5765
      %v5780 = vpop.permute.xlu0 %5779
      %5783 = vset.pattern.permute.xlu0 0
      %5784 = vperm.xlu0 %5783, %v5766
      %v5785 = vpop.permute.xlu0 %5784
      %5788 = vset.pattern.permute.xlu0 0
      %5789 = vperm.xlu0 %5788, %v5767
      %v5790 = vpop.permute.xlu0 %5789
      %5793 = vset.pattern.permute.xlu0 0
      %5794 = vperm.xlu0 %5793, %v5768
      %v5795 = vpop.permute.xlu0 %5794
      %5798 = vset.pattern.permute.xlu0 0
      %5799 = vperm.xlu0 %5798, %v5769
      %v5800 = vpop.permute.xlu0 %5799
      %5803 = vset.pattern.permute.xlu0 0
      %5804 = vperm.xlu0 %5803, %v5770
      %v5805 = vpop.permute.xlu0 %5804
      %5808 = vset.pattern.permute.xlu0 0
      %5809 = vperm.xlu0 %5808, %v5771
      %v5810 = vpop.permute.xlu0 %5809
      %v5812 = vmul.f32 %v5775, %v5589
      %v5813 = vmul.f32 %v5780, %v5594
      %v5814 = vmul.f32 %v5785, %v5599
      %v5815 = vmul.f32 %v5790, %v5604
      %v5816 = vmul.f32 %v5795, %v5609
      %v5817 = vmul.f32 %v5800, %v5614
      %v5818 = vmul.f32 %v5805, %v5619
      %v5819 = vmul.f32 %v5810, %v5624
      %v5820 = vsub.f32 1.0, %v5764
      %v5821 = vsub.f32 1.0, %v5765
      %v5822 = vsub.f32 1.0, %v5766
      %v5823 = vsub.f32 1.0, %v5767
      %v5824 = vsub.f32 1.0, %v5768
      %v5825 = vsub.f32 1.0, %v5769
      %v5826 = vsub.f32 1.0, %v5770
      %v5827 = vsub.f32 1.0, %v5771
      %5829 = vset.pattern.permute.xlu0 0
      %5830 = vperm.xlu0 %5829, %v5820
      %v5831 = vpop.permute.xlu0 %5830
      %5834 = vset.pattern.permute.xlu0 0
      %5835 = vperm.xlu0 %5834, %v5821
      %v5836 = vpop.permute.xlu0 %5835
      %5839 = vset.pattern.permute.xlu0 0
      %5840 = vperm.xlu0 %5839, %v5822
      %v5841 = vpop.permute.xlu0 %5840
      %5844 = vset.pattern.permute.xlu0 0
      %5845 = vperm.xlu0 %5844, %v5823
      %v5846 = vpop.permute.xlu0 %5845
      %5849 = vset.pattern.permute.xlu0 0
      %5850 = vperm.xlu0 %5849, %v5824
      %v5851 = vpop.permute.xlu0 %5850
      %5854 = vset.pattern.permute.xlu0 0
      %5855 = vperm.xlu0 %5854, %v5825
      %v5856 = vpop.permute.xlu0 %5855
      %5859 = vset.pattern.permute.xlu0 0
      %5860 = vperm.xlu0 %5859, %v5826
      %v5861 = vpop.permute.xlu0 %5860
      %5864 = vset.pattern.permute.xlu0 0
      %5865 = vperm.xlu0 %5864, %v5827
      %v5866 = vpop.permute.xlu0 %5865
      %v5868 = vmul.f32 %v5831, %v5726
      %v5869 = vmul.f32 %v5836, %v5731
      %v5870 = vmul.f32 %v5841, %v5736
      %v5871 = vmul.f32 %v5846, %v5741
      %v5872 = vmul.f32 %v5851, %v5746
      %v5873 = vmul.f32 %v5856, %v5751
      %v5874 = vmul.f32 %v5861, %v5756
      %v5875 = vmul.f32 %v5866, %v5761
      %v5876 = vadd.f32 %v5812, %v5868
      %v5877 = vadd.f32 %v5813, %v5869
      %v5878 = vadd.f32 %v5814, %v5870
      %v5879 = vadd.f32 %v5815, %v5871
      %v5880 = vadd.f32 %v5816, %v5872
      %v5881 = vadd.f32 %v5817, %v5873
      %v5882 = vadd.f32 %v5818, %v5874
      %v5883 = vadd.f32 %v5819, %v5875
      %v5884 = vld [vmem:[%s63] sm:$0x1]
      %v5886 = vlaneseq
      %v5887 = vshrl.u32 %v5886, 7
      %v5888 = vsub.s32 0, %v5887
      %v5889 = vrot.slane %v5884, %v5888
      %v5891 = vadd.f32 %v5876, %v5889
      %v5892 = vadd.f32 %v5877, %v5889
      %v5893 = vadd.f32 %v5878, %v5889
      %v5894 = vadd.f32 %v5879, %v5889
      %v5895 = vadd.f32 %v5880, %v5889
      %v5896 = vadd.f32 %v5881, %v5889
      %v5897 = vadd.f32 %v5882, %v5889
      %v5898 = vadd.f32 %v5883, %v5889
      %v5899 = vmax.f32 %v5891, 0.0
      %v5900 = vmax.f32 %v5892, 0.0
      %v5901 = vmax.f32 %v5893, 0.0
      %v5902 = vmax.f32 %v5894, 0.0
      %v5903 = vmax.f32 %v5895, 0.0
      %v5904 = vmax.f32 %v5896, 0.0
      %v5905 = vmax.f32 %v5897, 0.0
      %v5906 = vmax.f32 %v5898, 0.0
      %v5907 = vrot.slane %v1519, 7
      %v5908 = vrot.slane %v1520, 7
      %v5909 = vsel %vm1188, %v5907, %v5908
      %v5910 = vrot.slane %v1521, 7
      %v5911 = vsel %vm1188, %v5908, %v5910
      %v5912 = vrot.slane %v1522, 7
      %v5913 = vsel %vm1188, %v5910, %v5912
      %v5914 = vrot.slane %v1523, 7
      %v5915 = vsel %vm1188, %v5912, %v5914
      %v5916 = vrot.slane %v1524, 7
      %v5917 = vsel %vm1188, %v5914, %v5916
      %v5918 = vrot.slane %v1525, 7
      %v5919 = vsel %vm1188, %v5916, %v5918
      %v5920 = vrot.slane %v1526, 7
      %v5921 = vsel %vm1188, %v5918, %v5920
      %v5930 = vsel %vm1188, 0.0, %v5907
      %v5931 = vrot.slane %v1519, 1
      %v5932 = vrot.slane %v1520, 1
      %v5933 = vsel %vm1206, %v5931, %v5932
      %v5934 = vrot.slane %v1521, 1
      %v5935 = vsel %vm1206, %v5932, %v5934
      %v5936 = vrot.slane %v1522, 1
      %v5937 = vsel %vm1206, %v5934, %v5936
      %v5938 = vrot.slane %v1523, 1
      %v5939 = vsel %vm1206, %v5936, %v5938
      %v5940 = vrot.slane %v1524, 1
      %v5941 = vsel %vm1206, %v5938, %v5940
      %v5942 = vrot.slane %v1525, 1
      %v5943 = vsel %vm1206, %v5940, %v5942
      %v5944 = vrot.slane %v1526, 1
      %v5945 = vsel %vm1206, %v5942, %v5944
      %v5947 = vsel %vm1206, %v5944, 0.0
      %v5956 = vrot.slane %v5899, 6
      %v5957 = vrot.slane %v5900, 6
      %v5958 = vsel %vm1163, %v5956, %v5957
      %v5959 = vrot.slane %v5901, 6
      %v5960 = vsel %vm1163, %v5957, %v5959
      %v5961 = vrot.slane %v5902, 6
      %v5962 = vsel %vm1163, %v5959, %v5961
      %v5963 = vrot.slane %v5903, 6
      %v5964 = vsel %vm1163, %v5961, %v5963
      %v5965 = vrot.slane %v5904, 6
      %v5966 = vsel %vm1163, %v5963, %v5965
      %v5967 = vrot.slane %v5905, 6
      %v5968 = vsel %vm1163, %v5965, %v5967
      %v5969 = vrot.slane %v5906, 6
      %v5970 = vsel %vm1163, %v5967, %v5969
      %v5972 = vsel %vm1163, 0.0, %v5956
      %v5973 = vrot.slane %v5899, 2
      %v5974 = vrot.slane %v5900, 2
      %v5975 = vsel %vm1224, %v5973, %v5974
      %v5976 = vrot.slane %v5901, 2
      %v5977 = vsel %vm1224, %v5974, %v5976
      %v5978 = vrot.slane %v5902, 2
      %v5979 = vsel %vm1224, %v5976, %v5978
      %v5980 = vrot.slane %v5903, 2
      %v5981 = vsel %vm1224, %v5978, %v5980
      %v5982 = vrot.slane %v5904, 2
      %v5983 = vsel %vm1224, %v5980, %v5982
      %v5984 = vrot.slane %v5905, 2
      %v5985 = vsel %vm1224, %v5982, %v5984
      %v5986 = vrot.slane %v5906, 2
      %v5987 = vsel %vm1224, %v5984, %v5986
      %v5989 = vsel %vm1224, %v5986, 0.0
      %v5990 = vrot.slane %v5899, 7
      %v5991 = vrot.slane %v5900, 7
      %v5992 = vsel %vm1188, %v5990, %v5991
      %v5993 = vrot.slane %v5901, 7
      %v5994 = vsel %vm1188, %v5991, %v5993
      %v5995 = vrot.slane %v5902, 7
      %v5996 = vsel %vm1188, %v5993, %v5995
      %v5997 = vrot.slane %v5903, 7
      %v5998 = vsel %vm1188, %v5995, %v5997
      %v5999 = vrot.slane %v5904, 7
      %v6000 = vsel %vm1188, %v5997, %v5999
      %v6001 = vrot.slane %v5905, 7
      %v6002 = vsel %vm1188, %v5999, %v6001
      %v6003 = vrot.slane %v5906, 7
      %v6004 = vsel %vm1188, %v6001, %v6003
      %v6006 = vsel %vm1188, 0.0, %v5990
      %v6007 = vrot.slane %v5899, 1
      %v6008 = vrot.slane %v5900, 1
      %v6009 = vsel %vm1206, %v6007, %v6008
      %v6010 = vrot.slane %v5901, 1
      %v6011 = vsel %vm1206, %v6008, %v6010
      %v6012 = vrot.slane %v5902, 1
      %v6013 = vsel %vm1206, %v6010, %v6012
      %v6014 = vrot.slane %v5903, 1
      %v6015 = vsel %vm1206, %v6012, %v6014
      %v6016 = vrot.slane %v5904, 1
      %v6017 = vsel %vm1206, %v6014, %v6016
      %v6018 = vrot.slane %v5905, 1
      %v6019 = vsel %vm1206, %v6016, %v6018
      %v6020 = vrot.slane %v5906, 1
      %v6021 = vsel %vm1206, %v6018, %v6020
      %v6023 = vsel %vm1206, %v6020, 0.0
      %6024 = vrot.lane.b32.xlu0 %v1519, 8
      %v6025 = vpop.permute.xlu0 %6024
      %6026 = vrot.lane.b32.xlu0 %v1520, 8
      %v6027 = vpop.permute.xlu0 %6026
      %6028 = vrot.lane.b32.xlu0 %v1521, 8
      %v6029 = vpop.permute.xlu0 %6028
      %6030 = vrot.lane.b32.xlu0 %v1522, 8
      %v6031 = vpop.permute.xlu0 %6030
      %6032 = vrot.lane.b32.xlu0 %v1523, 8
      %v6033 = vpop.permute.xlu0 %6032
      %6034 = vrot.lane.b32.xlu0 %v1524, 8
      %v6035 = vpop.permute.xlu0 %6034
      %6036 = vrot.lane.b32.xlu0 %v1525, 8
      %v6037 = vpop.permute.xlu0 %6036
      %6038 = vrot.lane.b32.xlu0 %v1526, 8
      %v6039 = vpop.permute.xlu0 %6038
      %6048 = vrot.lane.b32.xlu0 %v1586, 16
      %v6049 = vpop.permute.xlu0 %6048
      %6050 = vrot.lane.b32.xlu0 %v1588, 16
      %v6051 = vpop.permute.xlu0 %6050
      %6052 = vrot.lane.b32.xlu0 %v1590, 16
      %v6053 = vpop.permute.xlu0 %6052
      %6054 = vrot.lane.b32.xlu0 %v1592, 16
      %v6055 = vpop.permute.xlu0 %6054
      %6056 = vrot.lane.b32.xlu0 %v1594, 16
      %v6057 = vpop.permute.xlu0 %6056
      %6058 = vrot.lane.b32.xlu0 %v1596, 16
      %v6059 = vpop.permute.xlu0 %6058
      %6060 = vrot.lane.b32.xlu0 %v1598, 16
      %v6061 = vpop.permute.xlu0 %6060
      %6062 = vrot.lane.b32.xlu0 %v1600, 16
      %v6063 = vpop.permute.xlu0 %6062
      %6073 = vrot.lane.b32.xlu0 %v5972, 24
      %v6074 = vpop.permute.xlu0 %6073
      %6075 = vrot.lane.b32.xlu0 %v5958, 24
      %v6076 = vpop.permute.xlu0 %6075
      %6077 = vrot.lane.b32.xlu0 %v5960, 24
      %v6078 = vpop.permute.xlu0 %6077
      %6079 = vrot.lane.b32.xlu0 %v5962, 24
      %v6080 = vpop.permute.xlu0 %6079
      %6081 = vrot.lane.b32.xlu0 %v5964, 24
      %v6082 = vpop.permute.xlu0 %6081
      %6083 = vrot.lane.b32.xlu0 %v5966, 24
      %v6084 = vpop.permute.xlu0 %6083
      %6085 = vrot.lane.b32.xlu0 %v5968, 24
      %v6086 = vpop.permute.xlu0 %6085
      %6087 = vrot.lane.b32.xlu0 %v5970, 24
      %v6088 = vpop.permute.xlu0 %6087
      %6097 = vrot.lane.b32.xlu0 %v5899, 32
      %v6098 = vpop.permute.xlu0 %6097
      %6099 = vrot.lane.b32.xlu0 %v5900, 32
      %v6100 = vpop.permute.xlu0 %6099
      %6101 = vrot.lane.b32.xlu0 %v5901, 32
      %v6102 = vpop.permute.xlu0 %6101
      %6103 = vrot.lane.b32.xlu0 %v5902, 32
      %v6104 = vpop.permute.xlu0 %6103
      %6105 = vrot.lane.b32.xlu0 %v5903, 32
      %v6106 = vpop.permute.xlu0 %6105
      %6107 = vrot.lane.b32.xlu0 %v5904, 32
      %v6108 = vpop.permute.xlu0 %6107
      %6109 = vrot.lane.b32.xlu0 %v5905, 32
      %v6110 = vpop.permute.xlu0 %6109
      %6111 = vrot.lane.b32.xlu0 %v5906, 32
      %v6112 = vpop.permute.xlu0 %6111
      %6122 = vrot.lane.b32.xlu0 %v5975, 40
      %v6123 = vpop.permute.xlu0 %6122
      %6124 = vrot.lane.b32.xlu0 %v5977, 40
      %v6125 = vpop.permute.xlu0 %6124
      %6126 = vrot.lane.b32.xlu0 %v5979, 40
      %v6127 = vpop.permute.xlu0 %6126
      %6128 = vrot.lane.b32.xlu0 %v5981, 40
      %v6129 = vpop.permute.xlu0 %6128
      %6130 = vrot.lane.b32.xlu0 %v5983, 40
      %v6131 = vpop.permute.xlu0 %6130
      %6132 = vrot.lane.b32.xlu0 %v5985, 40
      %v6133 = vpop.permute.xlu0 %6132
      %6134 = vrot.lane.b32.xlu0 %v5987, 40
      %v6135 = vpop.permute.xlu0 %6134
      %6136 = vrot.lane.b32.xlu0 %v5989, 40
      %v6137 = vpop.permute.xlu0 %6136
      %v6146 = vsel %vm1341, %v1583, %v6025
      %v6147 = vsel %vm1341, %v1562, %v6027
      %v6148 = vsel %vm1341, %v1564, %v6029
      %v6149 = vsel %vm1341, %v1566, %v6031
      %v6150 = vsel %vm1341, %v1568, %v6033
      %v6151 = vsel %vm1341, %v1570, %v6035
      %v6152 = vsel %vm1341, %v1572, %v6037
      %v6153 = vsel %vm1341, %v1574, %v6039
      %v6154 = vsel %vm1350, %v6146, %v6049
      %v6155 = vsel %vm1350, %v6147, %v6051
      %v6156 = vsel %vm1350, %v6148, %v6053
      %v6157 = vsel %vm1350, %v6149, %v6055
      %v6158 = vsel %vm1350, %v6150, %v6057
      %v6159 = vsel %vm1350, %v6151, %v6059
      %v6160 = vsel %vm1350, %v6152, %v6061
      %v6161 = vsel %vm1350, %v6153, %v6063
      %v6162 = vsel %vm1359, %v6154, %v6074
      %v6163 = vsel %vm1359, %v6155, %v6076
      %v6164 = vsel %vm1359, %v6156, %v6078
      %v6165 = vsel %vm1359, %v6157, %v6080
      %v6166 = vsel %vm1359, %v6158, %v6082
      %v6167 = vsel %vm1359, %v6159, %v6084
      %v6168 = vsel %vm1359, %v6160, %v6086
      %v6169 = vsel %vm1359, %v6161, %v6088
      %v6170 = vsel %vm1368, %v6162, %v6098
      %v6171 = vsel %vm1368, %v6163, %v6100
      %v6172 = vsel %vm1368, %v6164, %v6102
      %v6173 = vsel %vm1368, %v6165, %v6104
      %v6174 = vsel %vm1368, %v6166, %v6106
      %v6175 = vsel %vm1368, %v6167, %v6108
      %v6176 = vsel %vm1368, %v6168, %v6110
      %v6177 = vsel %vm1368, %v6169, %v6112
      %v6178 = vsel %vm1389, %v6170, %v6123
      %v6179 = vsel %vm1389, %v6171, %v6125
      %v6180 = vsel %vm1389, %v6172, %v6127
      %v6181 = vsel %vm1389, %v6173, %v6129
      %v6182 = vsel %vm1389, %v6174, %v6131
      %v6183 = vsel %vm1389, %v6175, %v6133
      %v6184 = vsel %vm1389, %v6176, %v6135
      %v6185 = vsel %vm1389, %v6177, %v6137
      %6187 = vrot.lane.b32.xlu0 %v5933, 8
      %v6188 = vpop.permute.xlu0 %6187
      %6189 = vrot.lane.b32.xlu0 %v5935, 8
      %v6190 = vpop.permute.xlu0 %6189
      %6191 = vrot.lane.b32.xlu0 %v5937, 8
      %v6192 = vpop.permute.xlu0 %6191
      %6193 = vrot.lane.b32.xlu0 %v5939, 8
      %v6194 = vpop.permute.xlu0 %6193
      %6195 = vrot.lane.b32.xlu0 %v5941, 8
      %v6196 = vpop.permute.xlu0 %6195
      %6197 = vrot.lane.b32.xlu0 %v5943, 8
      %v6198 = vpop.permute.xlu0 %6197
      %6199 = vrot.lane.b32.xlu0 %v5945, 8
      %v6200 = vpop.permute.xlu0 %6199
      %6201 = vrot.lane.b32.xlu0 %v5947, 8
      %v6202 = vpop.permute.xlu0 %6201
      %6212 = vrot.lane.b32.xlu0 %v6006, 16
      %v6213 = vpop.permute.xlu0 %6212
      %6214 = vrot.lane.b32.xlu0 %v5992, 16
      %v6215 = vpop.permute.xlu0 %6214
      %6216 = vrot.lane.b32.xlu0 %v5994, 16
      %v6217 = vpop.permute.xlu0 %6216
      %6218 = vrot.lane.b32.xlu0 %v5996, 16
      %v6219 = vpop.permute.xlu0 %6218
      %6220 = vrot.lane.b32.xlu0 %v5998, 16
      %v6221 = vpop.permute.xlu0 %6220
      %6222 = vrot.lane.b32.xlu0 %v6000, 16
      %v6223 = vpop.permute.xlu0 %6222
      %6224 = vrot.lane.b32.xlu0 %v6002, 16
      %v6225 = vpop.permute.xlu0 %6224
      %6226 = vrot.lane.b32.xlu0 %v6004, 16
      %v6227 = vpop.permute.xlu0 %6226
      %6237 = vrot.lane.b32.xlu0 %v6009, 24
      %v6238 = vpop.permute.xlu0 %6237
      %6239 = vrot.lane.b32.xlu0 %v6011, 24
      %v6240 = vpop.permute.xlu0 %6239
      %6241 = vrot.lane.b32.xlu0 %v6013, 24
      %v6242 = vpop.permute.xlu0 %6241
      %6243 = vrot.lane.b32.xlu0 %v6015, 24
      %v6244 = vpop.permute.xlu0 %6243
      %6245 = vrot.lane.b32.xlu0 %v6017, 24
      %v6246 = vpop.permute.xlu0 %6245
      %6247 = vrot.lane.b32.xlu0 %v6019, 24
      %v6248 = vpop.permute.xlu0 %6247
      %6249 = vrot.lane.b32.xlu0 %v6021, 24
      %v6250 = vpop.permute.xlu0 %6249
      %6251 = vrot.lane.b32.xlu0 %v6023, 24
      %v6252 = vpop.permute.xlu0 %6251
      %v6261 = vsel %vm1341, %v5930, %v6188
      %v6262 = vsel %vm1341, %v5909, %v6190
      %v6263 = vsel %vm1341, %v5911, %v6192
      %v6264 = vsel %vm1341, %v5913, %v6194
      %v6265 = vsel %vm1341, %v5915, %v6196
      %v6266 = vsel %vm1341, %v5917, %v6198
      %v6267 = vsel %vm1341, %v5919, %v6200
      %v6268 = vsel %vm1341, %v5921, %v6202
      %v6269 = vsel %vm1350, %v6261, %v6213
      %v6270 = vsel %vm1350, %v6262, %v6215
      %v6271 = vsel %vm1350, %v6263, %v6217
      %v6272 = vsel %vm1350, %v6264, %v6219
      %v6273 = vsel %vm1350, %v6265, %v6221
      %v6274 = vsel %vm1350, %v6266, %v6223
      %v6275 = vsel %vm1350, %v6267, %v6225
      %v6276 = vsel %vm1350, %v6268, %v6227
      %v6277 = vsel %vm1359, %v6269, %v6238
      %v6278 = vsel %vm1359, %v6270, %v6240
      %v6279 = vsel %vm1359, %v6271, %v6242
      %v6280 = vsel %vm1359, %v6272, %v6244
      %v6281 = vsel %vm1359, %v6273, %v6246
      %v6282 = vsel %vm1359, %v6274, %v6248
      %v6283 = vsel %vm1359, %v6275, %v6250
      %v6284 = vsel %vm1359, %v6276, %v6252
      %v6285 = vld [vmem:[%s67] sm:$0xff]
      %v6286 = vld [vmem:[%s67 + $0x8] sm:$0xff]
      %v6287 = vld [vmem:[%s67 + $0x10] sm:$0xff]
      %v6288 = vld [vmem:[%s67 + $0x18] sm:$0xff]
      %v6289 = vld [vmem:[%s67 + $0x20] sm:$0xff]
      %v6290 = vld [vmem:[%s67 + $0x28] sm:$0xff]
      %v6292 = vsel %vm2032, %v6178, 0
      %v6295 = vsel %vm2032, %v6179, 0
      %v6298 = vsel %vm2032, %v6180, 0
      %v6301 = vsel %vm2032, %v6181, 0
      %v6304 = vsel %vm2032, %v6182, 0
      %v6307 = vsel %vm2032, %v6183, 0
      %v6310 = vsel %vm2032, %v6184, 0
      %v6313 = vsel %vm2032, %v6185, 0
      %6315 = vmatprep.subr.mxu0 0.0
      %6316 = vmatpush1.msra.mxu0 0.0
      %6317 = vmatprep.subr.mxu0 0.0
      %6318 = vmatpush1.msra.mxu0 0.0
      %6319 = vmatprep.subr.mxu0 0.0
      %6320 = vmatpush1.msra.mxu0 0.0
      %6321 = vmatprep.subr.mxu0 0.0
      %6322 = vmatpush1.msra.mxu0 0.0
      %6323 = vmatprep.subr.mxu0 0.0
      %6324 = vmatpush1.msra.mxu0 0.0
      %6325 = vmatprep.subr.mxu0 0.0
      %6326 = vmatpush1.msra.mxu0 0.0
      %6327 = vmatprep.subr.mxu0 0.0
      %6328 = vmatpush1.msra.mxu0 0.0
      %6329 = vmatprep.subr.mxu0 0.0
      %6330 = vmatpush1.msra.mxu0 0.0
      %6331 = vmatprep.subr.mxu0 0.0
      %6332 = vmatpush1.msra.mxu0 0.0
      %6333 = vmatprep.subr.mxu0 0.0
      %6334 = vmatpush1.msra.mxu0 0.0
      %6335 = vmatprep.subr.mxu0 0.0
      %6336 = vmatpush1.msra.mxu0 %v6290
      %6337 = vmatprep.subr.mxu0 0.0
      %6338 = vmatpush1.msra.mxu0 %v6289
      %6339 = vmatprep.subr.mxu0 0.0
      %6340 = vmatpush1.msra.mxu0 %v6288
      %6341 = vmatprep.subr.mxu0 0.0
      %6342 = vmatpush1.msra.mxu0 %v6287
      %6343 = vmatprep.subr.mxu0 0.0
      %6344 = vmatpush1.msra.mxu0 %v6286
      %6345 = vmatprep.subr.mxu0 0.0
      %6346 = vmatpush1.msra.mxu0 %v6285
      %6347 = vmatprep.subr.mxu0 0.0
      %6348 = vmatpush2.msra.mxu0 0.0
      %6349 = vmatprep.subr.mxu0 0.0
      %6350 = vmatpush2.msra.mxu0 0.0
      %6351 = vmatprep.subr.mxu0 0.0
      %6352 = vmatpush2.msra.mxu0 0.0
      %6353 = vmatprep.subr.mxu0 0.0
      %6354 = vmatpush2.msra.mxu0 0.0
      %6355 = vmatprep.subr.mxu0 0.0
      %6356 = vmatpush2.msra.mxu0 0.0
      %6357 = vmatprep.subr.mxu0 0.0
      %6358 = vmatpush2.msra.mxu0 0.0
      %6359 = vmatprep.subr.mxu0 0.0
      %6360 = vmatpush2.msra.mxu0 0.0
      %6361 = vmatprep.subr.mxu0 0.0
      %6362 = vmatpush2.msra.mxu0 0.0
      %6363 = vmatprep.subr.mxu0 0.0
      %6364 = vmatpush2.msra.mxu0 0.0
      %6365 = vmatprep.subr.mxu0 0.0
      %6366 = vmatpush2.msra.mxu0 0.0
      %6367 = vmatprep.subr.mxu0 0.0
      %6368 = vmatpush2.msra.mxu0 0.0
      %6369 = vmatprep.subr.mxu0 0.0
      %6370 = vmatpush2.msra.mxu0 0.0
      %6371 = vmatprep.subr.mxu0 0.0
      %6372 = vmatpush2.msra.mxu0 0.0
      %6373 = vmatprep.subr.mxu0 0.0
      %6374 = vmatpush2.msra.mxu0 0.0
      %6375 = vmatprep.subr.mxu0 0.0
      %6376 = vmatpush2.msra.mxu0 0.0
      %6377 = vmatprep.subr.mxu0 0.0
      %6378 = vmatpush2.msra.mxu0 0.0
      %6379 = vmatprep.mubr.f32.mxu0 0.0
      %6380 = vmatmul.mubr.f32.gmra.mxu0 %v6292
      %v6381 = vpop.f32.mrf.mxu0
      %v6382 = vadd.f32 0.0, %v6381
      %v6383 = vpop.f32.mrf.mxu0
      %6384 = vmatprep.mubr.f32.mxu0 0.0
      %6385 = vmatmul.mubr.f32.gmra.mxu0 %v6295
      %v6386 = vpop.f32.mrf.mxu0
      %v6387 = vadd.f32 0.0, %v6386
      %v6388 = vpop.f32.mrf.mxu0
      %6389 = vmatprep.mubr.f32.mxu0 0.0
      %6390 = vmatmul.mubr.f32.gmra.mxu0 %v6298
      %v6391 = vpop.f32.mrf.mxu0
      %v6392 = vadd.f32 0.0, %v6391
      %v6393 = vpop.f32.mrf.mxu0
      %6394 = vmatprep.mubr.f32.mxu0 0.0
      %6395 = vmatmul.mubr.f32.gmra.mxu0 %v6301
      %v6396 = vpop.f32.mrf.mxu0
      %v6397 = vadd.f32 0.0, %v6396
      %v6398 = vpop.f32.mrf.mxu0
      %6399 = vmatprep.mubr.f32.mxu0 0.0
      %6400 = vmatmul.mubr.f32.gmra.mxu0 %v6304
      %v6401 = vpop.f32.mrf.mxu0
      %v6402 = vadd.f32 0.0, %v6401
      %v6403 = vpop.f32.mrf.mxu0
      %6404 = vmatprep.mubr.f32.mxu0 0.0
      %6405 = vmatmul.mubr.f32.gmra.mxu0 %v6307
      %v6406 = vpop.f32.mrf.mxu0
      %v6407 = vadd.f32 0.0, %v6406
      %v6408 = vpop.f32.mrf.mxu0
      %6409 = vmatprep.mubr.f32.mxu0 0.0
      %6410 = vmatmul.mubr.f32.gmra.mxu0 %v6310
      %v6411 = vpop.f32.mrf.mxu0
      %v6412 = vadd.f32 0.0, %v6411
      %v6413 = vpop.f32.mrf.mxu0
      %6414 = vmatprep.mubr.f32.mxu0 0.0
      %6415 = vmatmul.mubr.f32.gmra.mxu0 %v6313
      %v6416 = vpop.f32.mrf.mxu0
      %v6417 = vadd.f32 0.0, %v6416
      %v6418 = vpop.f32.mrf.mxu0
      %6419 = vdwg.mxu0
      %v6420 = vld [vmem:[%s69] sm:$0xff]
      %v6421 = vld [vmem:[%s69 + $0x8] sm:$0xff]
      %v6422 = vld [vmem:[%s69 + $0x10] sm:$0xff]
      %v6423 = vld [vmem:[%s69 + $0x18] sm:$0xff]
      %v6425 = vsel %vm1368, %v6277, 0
      %v6428 = vsel %vm1368, %v6278, 0
      %v6431 = vsel %vm1368, %v6279, 0
      %v6434 = vsel %vm1368, %v6280, 0
      %v6437 = vsel %vm1368, %v6281, 0
      %v6440 = vsel %vm1368, %v6282, 0
      %v6443 = vsel %vm1368, %v6283, 0
      %v6446 = vsel %vm1368, %v6284, 0
      %6448 = vmatprep.subr.mxu0 0.0
      %6449 = vmatpush1.msra.mxu0 0.0
      %6450 = vmatprep.subr.mxu0 0.0
      %6451 = vmatpush1.msra.mxu0 0.0
      %6452 = vmatprep.subr.mxu0 0.0
      %6453 = vmatpush1.msra.mxu0 0.0
      %6454 = vmatprep.subr.mxu0 0.0
      %6455 = vmatpush1.msra.mxu0 0.0
      %6456 = vmatprep.subr.mxu0 0.0
      %6457 = vmatpush1.msra.mxu0 0.0
      %6458 = vmatprep.subr.mxu0 0.0
      %6459 = vmatpush1.msra.mxu0 0.0
      %6460 = vmatprep.subr.mxu0 0.0
      %6461 = vmatpush1.msra.mxu0 0.0
      %6462 = vmatprep.subr.mxu0 0.0
      %6463 = vmatpush1.msra.mxu0 0.0
      %6464 = vmatprep.subr.mxu0 0.0
      %6465 = vmatpush1.msra.mxu0 0.0
      %6466 = vmatprep.subr.mxu0 0.0
      %6467 = vmatpush1.msra.mxu0 0.0
      %6468 = vmatprep.subr.mxu0 0.0
      %6469 = vmatpush1.msra.mxu0 0.0
      %6470 = vmatprep.subr.mxu0 0.0
      %6471 = vmatpush1.msra.mxu0 0.0
      %6472 = vmatprep.subr.mxu0 0.0
      %6473 = vmatpush1.msra.mxu0 %v6423
      %6474 = vmatprep.subr.mxu0 0.0
      %6475 = vmatpush1.msra.mxu0 %v6422
      %6476 = vmatprep.subr.mxu0 0.0
      %6477 = vmatpush1.msra.mxu0 %v6421
      %6478 = vmatprep.subr.mxu0 0.0
      %6479 = vmatpush1.msra.mxu0 %v6420
      %6480 = vmatprep.subr.mxu0 0.0
      %6481 = vmatpush2.msra.mxu0 0.0
      %6482 = vmatprep.subr.mxu0 0.0
      %6483 = vmatpush2.msra.mxu0 0.0
      %6484 = vmatprep.subr.mxu0 0.0
      %6485 = vmatpush2.msra.mxu0 0.0
      %6486 = vmatprep.subr.mxu0 0.0
      %6487 = vmatpush2.msra.mxu0 0.0
      %6488 = vmatprep.subr.mxu0 0.0
      %6489 = vmatpush2.msra.mxu0 0.0
      %6490 = vmatprep.subr.mxu0 0.0
      %6491 = vmatpush2.msra.mxu0 0.0
      %6492 = vmatprep.subr.mxu0 0.0
      %6493 = vmatpush2.msra.mxu0 0.0
      %6494 = vmatprep.subr.mxu0 0.0
      %6495 = vmatpush2.msra.mxu0 0.0
      %6496 = vmatprep.subr.mxu0 0.0
      %6497 = vmatpush2.msra.mxu0 0.0
      %6498 = vmatprep.subr.mxu0 0.0
      %6499 = vmatpush2.msra.mxu0 0.0
      %6500 = vmatprep.subr.mxu0 0.0
      %6501 = vmatpush2.msra.mxu0 0.0
      %6502 = vmatprep.subr.mxu0 0.0
      %6503 = vmatpush2.msra.mxu0 0.0
      %6504 = vmatprep.subr.mxu0 0.0
      %6505 = vmatpush2.msra.mxu0 0.0
      %6506 = vmatprep.subr.mxu0 0.0
      %6507 = vmatpush2.msra.mxu0 0.0
      %6508 = vmatprep.subr.mxu0 0.0
      %6509 = vmatpush2.msra.mxu0 0.0
      %6510 = vmatprep.subr.mxu0 0.0
      %6511 = vmatpush2.msra.mxu0 0.0
      %6512 = vmatprep.mubr.f32.mxu0 0.0
      %6513 = vmatmul.mubr.f32.gmra.mxu0 %v6425
      %v6514 = vpop.f32.mrf.mxu0
      %v6515 = vadd.f32 0.0, %v6514
      %v6516 = vpop.f32.mrf.mxu0
      %6517 = vmatprep.mubr.f32.mxu0 0.0
      %6518 = vmatmul.mubr.f32.gmra.mxu0 %v6428
      %v6519 = vpop.f32.mrf.mxu0
      %v6520 = vadd.f32 0.0, %v6519
      %v6521 = vpop.f32.mrf.mxu0
      %6522 = vmatprep.mubr.f32.mxu0 0.0
      %6523 = vmatmul.mubr.f32.gmra.mxu0 %v6431
      %v6524 = vpop.f32.mrf.mxu0
      %v6525 = vadd.f32 0.0, %v6524
      %v6526 = vpop.f32.mrf.mxu0
      %6527 = vmatprep.mubr.f32.mxu0 0.0
      %6528 = vmatmul.mubr.f32.gmra.mxu0 %v6434
      %v6529 = vpop.f32.mrf.mxu0
      %v6530 = vadd.f32 0.0, %v6529
      %v6531 = vpop.f32.mrf.mxu0
      %6532 = vmatprep.mubr.f32.mxu0 0.0
      %6533 = vmatmul.mubr.f32.gmra.mxu0 %v6437
      %v6534 = vpop.f32.mrf.mxu0
      %v6535 = vadd.f32 0.0, %v6534
      %v6536 = vpop.f32.mrf.mxu0
      %6537 = vmatprep.mubr.f32.mxu0 0.0
      %6538 = vmatmul.mubr.f32.gmra.mxu0 %v6440
      %v6539 = vpop.f32.mrf.mxu0
      %v6540 = vadd.f32 0.0, %v6539
      %v6541 = vpop.f32.mrf.mxu0
      %6542 = vmatprep.mubr.f32.mxu0 0.0
      %6543 = vmatmul.mubr.f32.gmra.mxu0 %v6443
      %v6544 = vpop.f32.mrf.mxu0
      %v6545 = vadd.f32 0.0, %v6544
      %v6546 = vpop.f32.mrf.mxu0
      %6547 = vmatprep.mubr.f32.mxu0 0.0
      %6548 = vmatmul.mubr.f32.gmra.mxu0 %v6446
      %v6549 = vpop.f32.mrf.mxu0
      %v6550 = vadd.f32 0.0, %v6549
      %v6551 = vpop.f32.mrf.mxu0
      %6552 = vdwg.mxu0
      %v6553 = vld [vmem:[%s73] sm:$0xff]
      %v6554 = vld [vmem:[%s73 + $0x8] sm:$0xff]
      %v6555 = vld [vmem:[%s73 + $0x10] sm:$0xff]
      %v6556 = vld [vmem:[%s73 + $0x18] sm:$0xff]
      %v6557 = vld [vmem:[%s73 + $0x20] sm:$0xff]
      %v6558 = vld [vmem:[%s73 + $0x28] sm:$0xff]
      %v6559 = vld [vmem:[%s73 + $0x30] sm:$0xff]
      %v6560 = vld [vmem:[%s73 + $0x38] sm:$0xff]
      %6562 = vset.pattern.permute.xlu0 0
      %6563 = vperm.xlu0 %6562, %v6553
      %v6564 = vpop.permute.xlu0 %6563
      %6567 = vset.pattern.permute.xlu0 0
      %6568 = vperm.xlu0 %6567, %v6554
      %v6569 = vpop.permute.xlu0 %6568
      %6572 = vset.pattern.permute.xlu0 0
      %6573 = vperm.xlu0 %6572, %v6555
      %v6574 = vpop.permute.xlu0 %6573
      %6577 = vset.pattern.permute.xlu0 0
      %6578 = vperm.xlu0 %6577, %v6556
      %v6579 = vpop.permute.xlu0 %6578
      %6582 = vset.pattern.permute.xlu0 0
      %6583 = vperm.xlu0 %6582, %v6557
      %v6584 = vpop.permute.xlu0 %6583
      %6587 = vset.pattern.permute.xlu0 0
      %6588 = vperm.xlu0 %6587, %v6558
      %v6589 = vpop.permute.xlu0 %6588
      %6592 = vset.pattern.permute.xlu0 0
      %6593 = vperm.xlu0 %6592, %v6559
      %v6594 = vpop.permute.xlu0 %6593
      %6597 = vset.pattern.permute.xlu0 0
      %6598 = vperm.xlu0 %6597, %v6560
      %v6599 = vpop.permute.xlu0 %6598
      %v6601 = vmul.f32 %v6564, %v6382
      %v6602 = vmul.f32 %v6569, %v6387
      %v6603 = vmul.f32 %v6574, %v6392
      %v6604 = vmul.f32 %v6579, %v6397
      %v6605 = vmul.f32 %v6584, %v6402
      %v6606 = vmul.f32 %v6589, %v6407
      %v6607 = vmul.f32 %v6594, %v6412
      %v6608 = vmul.f32 %v6599, %v6417
      %v6609 = vsub.f32 1.0, %v6553
      %v6610 = vsub.f32 1.0, %v6554
      %v6611 = vsub.f32 1.0, %v6555
      %v6612 = vsub.f32 1.0, %v6556
      %v6613 = vsub.f32 1.0, %v6557
      %v6614 = vsub.f32 1.0, %v6558
      %v6615 = vsub.f32 1.0, %v6559
      %v6616 = vsub.f32 1.0, %v6560
      %6618 = vset.pattern.permute.xlu0 0
      %6619 = vperm.xlu0 %6618, %v6609
      %v6620 = vpop.permute.xlu0 %6619
      %6623 = vset.pattern.permute.xlu0 0
      %6624 = vperm.xlu0 %6623, %v6610
      %v6625 = vpop.permute.xlu0 %6624
      %6628 = vset.pattern.permute.xlu0 0
      %6629 = vperm.xlu0 %6628, %v6611
      %v6630 = vpop.permute.xlu0 %6629
      %6633 = vset.pattern.permute.xlu0 0
      %6634 = vperm.xlu0 %6633, %v6612
      %v6635 = vpop.permute.xlu0 %6634
      %6638 = vset.pattern.permute.xlu0 0
      %6639 = vperm.xlu0 %6638, %v6613
      %v6640 = vpop.permute.xlu0 %6639
      %6643 = vset.pattern.permute.xlu0 0
      %6644 = vperm.xlu0 %6643, %v6614
      %v6645 = vpop.permute.xlu0 %6644
      %6648 = vset.pattern.permute.xlu0 0
      %6649 = vperm.xlu0 %6648, %v6615
      %v6650 = vpop.permute.xlu0 %6649
      %6653 = vset.pattern.permute.xlu0 0
      %6654 = vperm.xlu0 %6653, %v6616
      %v6655 = vpop.permute.xlu0 %6654
      %v6657 = vmul.f32 %v6620, %v6515
      %v6658 = vmul.f32 %v6625, %v6520
      %v6659 = vmul.f32 %v6630, %v6525
      %v6660 = vmul.f32 %v6635, %v6530
      %v6661 = vmul.f32 %v6640, %v6535
      %v6662 = vmul.f32 %v6645, %v6540
      %v6663 = vmul.f32 %v6650, %v6545
      %v6664 = vmul.f32 %v6655, %v6550
      %v6665 = vadd.f32 %v6601, %v6657
      %v6666 = vadd.f32 %v6602, %v6658
      %v6667 = vadd.f32 %v6603, %v6659
      %v6668 = vadd.f32 %v6604, %v6660
      %v6669 = vadd.f32 %v6605, %v6661
      %v6670 = vadd.f32 %v6606, %v6662
      %v6671 = vadd.f32 %v6607, %v6663
      %v6672 = vadd.f32 %v6608, %v6664
      %v6673 = vld [vmem:[%s71] sm:$0x1]
      %v6675 = vlaneseq
      %v6676 = vshrl.u32 %v6675, 7
      %v6677 = vsub.s32 0, %v6676
      %v6678 = vrot.slane %v6673, %v6677
      %v6680 = vadd.f32 %v6665, %v6678
      %v6681 = vadd.f32 %v6666, %v6678
      %v6682 = vadd.f32 %v6667, %v6678
      %v6683 = vadd.f32 %v6668, %v6678
      %v6684 = vadd.f32 %v6669, %v6678
      %v6685 = vadd.f32 %v6670, %v6678
      %v6686 = vadd.f32 %v6671, %v6678
      %v6687 = vadd.f32 %v6672, %v6678
      %v6688 = vmax.f32 %v6680, 0.0
      %v6689 = vmax.f32 %v6681, 0.0
      %v6690 = vmax.f32 %v6682, 0.0
      %v6691 = vmax.f32 %v6683, 0.0
      %v6692 = vmax.f32 %v6684, 0.0
      %v6693 = vmax.f32 %v6685, 0.0
      %v6694 = vmax.f32 %v6686, 0.0
      %v6695 = vmax.f32 %v6687, 0.0
      %6696 = vxpose.xlu0.b32.start [1/16] %v6688, 128
      %6697 = vxpose.xlu0.b32.cont [2/16] %v6689, 128
      %6698 = vxpose.xlu0.b32.cont [3/16] %v6690, 128
      %6699 = vxpose.xlu0.b32.cont [4/16] %v6691, 128
      %6700 = vxpose.xlu0.b32.cont [5/16] %v6692, 128
      %6701 = vxpose.xlu0.b32.cont [6/16] %v6693, 128
      %6702 = vxpose.xlu0.b32.cont [7/16] %v6694, 128
      %6703 = vxpose.xlu0.b32.cont [8/16] %v6695, 128
      %6704 = vxpose.xlu0.b32.cont [9/16] 0.0, 128
      %6705 = vxpose.xlu0.b32.cont [10/16] 0.0, 128
      %6706 = vxpose.xlu0.b32.cont [11/16] 0.0, 128
      %6707 = vxpose.xlu0.b32.cont [12/16] 0.0, 128
      %6708 = vxpose.xlu0.b32.cont [13/16] 0.0, 128
      %6709 = vxpose.xlu0.b32.cont [14/16] 0.0, 128
      %6710 = vxpose.xlu0.b32.cont [15/16] 0.0, 128
      %6711 = vxpose.xlu0.b32.end [16/16] 0.0, 128
      %v6712 = vpop.trf.xlu0
      %v6713 = vpop.trf.xlu0
      %v6714 = vpop.trf.xlu0
      %v6715 = vpop.trf.xlu0
      %v6716 = vpop.trf.xlu0
      %v6717 = vpop.trf.xlu0
      %v6718 = vpop.trf.xlu0
      %v6719 = vpop.trf.xlu0
      %v6720 = vpop.trf.xlu0
      %v6721 = vpop.trf.xlu0
      %v6722 = vpop.trf.xlu0
      %v6723 = vpop.trf.xlu0
      %v6724 = vpop.trf.xlu0
      %v6725 = vpop.trf.xlu0
      %v6726 = vpop.trf.xlu0
      %v6727 = vpop.trf.xlu0
      %6728 = vst.msk [vmem:[%s1121] sm:$0xff] %vm2041, %v6712
      %p6729 = scmp.lt.s32.totalorder %s86, 1
      %s6730 = scalar_select %p6729, %s86, 1
      %s6731 = smul.addr %s6730, 8
      %s6732 = scalar_lea.vmem %s75, %s6731
      // Predicated region
      $region169: #{unet_forward.1} parent=167 // pred_check
        %p6733 = pneg %p886
      $region170: #{unet_forward.1} parent=167 // pred_check_branch
        %6735 = sbr.rel (%p6733) target = $region172
      $region171: #{unet_forward.1} parent=167 // pred_region
        _
      $region172: #{unet_forward.1} parent=167 // pred_fallthru
        _
    $region168: #{unet_forward.1} parent=5 // pred_fallthru
      _
    %p6736 = scmp.le.s32.totalorder 2, %s81
    // Predicated region
    $region173: #{unet_forward.1} parent=5 // pred_check
      %p6737 = pneg %p6736
    $region174: #{unet_forward.1} parent=5 // pred_check_branch
      %6739 = sbr.rel (%p6737) target = $region176
    $region175: #{unet_forward.1} parent=5 // pred_region
      %s6740 = ssub.s32 %s81, 2
      // Predicated region
      $region177: #{unet_forward.1} parent=175 // pred_check
        %p6741 = pneg %p892
      $region178: #{unet_forward.1} parent=175 // pred_check_branch
        %6743 = sbr.rel (%p6741) target = $region180
      $region179: #{unet_forward.1} parent=175 // pred_region
        %p6744 = scmp.lt.s32.totalorder %s87, 1
        %s6745 = scalar_select %p6744, %s87, 1
        %s6746 = smul.addr %s6745, 8
        %s6747 = scalar_lea.vmem %s75, %s6746
      $region180: #{unet_forward.1} parent=175 // pred_fallthru
        _
    $region176: #{unet_forward.1} parent=5 // pred_fallthru
      _
  $region6: #{unet_forward.1} parent=0 // loop_footer
    %s85 = sadd.s32 1, %s81
  $region7: #{unet_forward.1} parent=0 // loop_footer_branch
    %80 = sbr.rel target = $region3
  $region8: #{unet_forward.1} parent=0 // loop_exit
    _

</llo_original>
